<compile_context>
chip_gen: v6e
topology: v6e:2x2x1
jax: 0.10.0
libtpu: 0.0.40
codegen_flags: <defaults>
</compile_context>

<pallas_src>
import functools

import jax
import jax.numpy as jnp
from jax import lax
from jax.experimental import pallas as pl
from jax.experimental.pallas import tpu as pltpu


# ----------------------------------------------------------------------------
# Kernel
# ----------------------------------------------------------------------------
def _proto_kernel(x_ref, w_taps_ref, b_conv_ref, w_lin_ref, b_lin_ref,
                  pool_ref, onehot_ref, out_ref, *, wp, lp):
    """Fused backbone + prototypes + (-cdist) for ONE episode (one grid step).

    x_ref      : (C, Lpad)     bf16  zero-padded images, feature-major
                                      column  n*Hp*Wp + i*Wp + j  ==  xpad[n, c, i, j]
    w_taps_ref : (9, F, C)     bf16  conv weight per tap, t = kh*3 + kw
    b_conv_ref : (F, 1)        f32
    w_lin_ref  : (F, D)        f32
    b_lin_ref  : (1, D)        f32
    pool_ref   : (N, Lp)       f32   averaging matrix: 1/(H*W) on image n's valid
                                      output columns, 0 elsewhere (masks padding)
    onehot_ref : (K, NS)       f32   normalized per-class one-hot (mean weights)
    out_ref    : (NQ, K)       f32   -cdist(z_query, z_proto)
    """
    f32 = jnp.float32
    nt = (((1,), (1,)), ((), ()))          # contract both minor dims (rhs "transposed")

    # --- Conv3x3 SAME as 9 shifted-window matmuls (bf16 x bf16 -> f32 MXU) ----
    # Output lives on the padded-width extended domain; invalid columns carry
    # garbage that the pooling matrix zeroes out.
    conv = None
    for kh in range(3):
        for kw in range(3):
            t = kh * 3 + kw
            off = kh * wp + kw
            part = jnp.dot(w_taps_ref[t], x_ref[:, off:off + lp],
                           preferred_element_type=f32)            # (F, Lp)
            conv = part if conv is None else conv + part
    conv = jnp.maximum(conv + b_conv_ref[...], 0.0)               # (F, Lp)

    # --- Global average pool + batch-major bridge: ONE NT matmul --------------
    pooled = lax.dot_general(pool_ref[...], conv, nt,
                             preferred_element_type=f32)          # (N, F)

    # --- Linear embedding head ------------------------------------------------
    z = jnp.dot(pooled, w_lin_ref[...],
                preferred_element_type=f32) + b_lin_ref[...]      # (N, D)

    ns = onehot_ref.shape[1]
    z_s = z[:ns, :]                                               # (NS, D)
    z_q = z[ns:, :]                                               # (NQ, D)

    # --- Class prototypes: per-class mean of support embeddings ---------------
    z_proto = jnp.dot(onehot_ref[...], z_s,
                      preferred_element_type=f32)                 # (K, D)

    # --- scores = -cdist(z_query, z_proto) via |q|^2 + |p|^2 - 2 q.p ----------
    qn = jnp.sum(z_q * z_q, axis=1, keepdims=True)                # (NQ, 1)
    ones_row = jnp.ones((1, z_proto.shape[1]), f32)
    pn = lax.dot_general(ones_row, z_proto * z_proto, nt,
                         preferred_element_type=f32)              # (1, K)
    cross = lax.dot_general(z_q, z_proto, nt,
                            preferred_element_type=f32)           # (NQ, K)
    d2 = jnp.maximum(qn + pn - 2.0 * cross, 0.0)
    out_ref[...] = -jnp.sqrt(d2)                                  # sqrt -> EUP
    # TODO(synk): if a VJP is ever added, use sqrt(d2 + eps) to avoid inf grads at 0.


# ----------------------------------------------------------------------------
# Wrapper-side helpers (cheap XLA glue inside the jit)
# ----------------------------------------------------------------------------
def _prepare_padded_images(images):
    """(E, N, C, H, W) f32 -> (E, C, Lpad) bf16 feature-major padded slab."""
    e, n, c, h, w = images.shape
    hp, wp = h + 2, w + 2
    lp = n * hp * wp
    # Tail so every tap slice [off, off + lp) is in-bounds; round lanes to 128.
    lpad = ((lp + 2 * wp + 2 + 127) // 128) * 128
    xpad = jnp.pad(images, ((0, 0), (0, 0), (0, 0), (1, 1), (1, 1)))
    # TODO(synk): accept channel-major (C first) inputs to drop this transpose.
    xfm = xpad.transpose(0, 2, 1, 3, 4).reshape(e, c, lp)
    xfm = jnp.pad(xfm, ((0, 0), (0, 0), (0, lpad - lp)))
    return xfm.astype(jnp.bfloat16), lp, lpad, wp


def _pool_matrix(n_img, h, w):
    """(N, N*Hp*Wp) averaging matrix: 1/(H*W) on valid columns, 0 on padding."""
    hp, wp = h + 2, w + 2
    idx = jnp.arange(hp * wp)
    valid = ((idx // wp) < h) & ((idx % wp) < w)
    row = valid.astype(jnp.float32) / float(h * w)                 # (Hp*Wp,)
    eye = jnp.eye(n_img, dtype=jnp.float32)
    return (eye[:, :, None] * row[None, None, :]).reshape(n_img, n_img * hp * wp)


def _episode_onehot(labels, num_classes):
    # torch.unique semantics with a static class count (jittable). Assumes
    # exactly `num_classes` distinct labels are present in the episode.
    uniq = jnp.unique(labels, size=num_classes)
    onehot = (uniq[:, None] == labels[None, :]).astype(jnp.float32)
    return onehot / jnp.sum(onehot, axis=1, keepdims=True)


# ----------------------------------------------------------------------------
# Forward passes
# ----------------------------------------------------------------------------
@functools.partial(jax.jit, static_argnames=("num_classes",))
def prototypical_forward_batched(params, support_images, support_labels,
                                 query_images, *, num_classes):
    """Batched-episode forward. Shapes: support (E,NS,C,H,W), query (E,NQ,C,H,W)."""
    w_conv, b_conv, w_lin, b_lin = params
    e, ns, c, h, wd = support_images.shape
    nq = query_images.shape[1]
    n_img = ns + nq
    f = w_conv.shape[0]
    d = w_lin.shape[1]

    # One combined (support ++ query) backbone pass per episode.
    images = jnp.concatenate([support_images, query_images], axis=1).astype(jnp.float32)
    xfm, lp, lpad, wp = _prepare_padded_images(images)             # (E, C, Lpad) bf16

    # Per-tap conv weights: row t = (kh*3+kw) -> w_conv[:, :, kh, kw].
    w_taps = w_conv.transpose(2, 3, 0, 1).reshape(9, f, c).astype(jnp.bfloat16)
    b_conv2d = b_conv.reshape(f, 1).astype(jnp.float32)
    w_lin2d = w_lin.astype(jnp.float32)
    b_lin2d = b_lin.reshape(1, d).astype(jnp.float32)
    pool_mat = _pool_matrix(n_img, h, wd)                          # (N, Lp) f32
    onehot = jnp.stack([_episode_onehot(support_labels[i], num_classes)
                        for i in range(e)])                        # (E, K, NS)

    kernel = functools.partial(_proto_kernel, wp=wp, lp=lp)

    flops = e * (2 * f * (c * 9) * lp + 2 * n_img * f * lp + 2 * n_img * f * d
                 + 2 * num_classes * ns * d + 4 * nq * num_classes * d)
    bytes_accessed = (xfm.size * 2 + w_taps.size * 2 + pool_mat.size * 4
                      + onehot.size * 4
                      + (b_conv2d.size + w_lin2d.size + b_lin2d.size) * 4
                      + e * nq * num_classes * 4)
    cost = pl.CostEstimate(flops=flops, transcendentals=e * nq * num_classes,
                           bytes_accessed=bytes_accessed)

    # NOTE: per-episode VMEM footprint here is tiny (~0.2 MiB); if shapes grow,
    # tile the lane (N*Hp*Wp) dim and set vmem_limit_bytes (v7x has 64 MiB VMEM).
    return pl.pallas_call(
        kernel,
        out_shape=jax.ShapeDtypeStruct((e, nq, num_classes), jnp.float32),
        grid=(e,),
        in_specs=[
            pl.BlockSpec((None, c, lpad), lambda i: (i, 0, 0)),          # images
            pl.BlockSpec((9, f, c), lambda i: (0, 0, 0)),                # conv taps
            pl.BlockSpec((f, 1), lambda i: (0, 0)),                      # conv bias
            pl.BlockSpec((f, d), lambda i: (0, 0)),                      # linear W
            pl.BlockSpec((1, d), lambda i: (0, 0)),                      # linear b
            pl.BlockSpec((n_img, lp), lambda i: (0, 0)),                 # pool matrix
            pl.BlockSpec((None, num_classes, ns), lambda i: (i, 0, 0)),  # onehot
        ],
        out_specs=pl.BlockSpec((None, nq, num_classes), lambda i: (i, 0, 0)),
        compiler_params=pltpu.CompilerParams(dimension_semantics=("parallel",)),
        cost_estimate=cost,
    )(xfm, w_taps, b_conv2d, w_lin2d, b_lin2d, pool_mat, onehot)


def prototypical_forward(params, support_images, support_labels, query_images,
                         *, num_classes):
    """Single-episode forward mirroring the PyTorch module's signature."""
    return prototypical_forward_batched(
        params, support_images[None], support_labels[None], query_images[None],
        num_classes=num_classes)[0]


# ----------------------------------------------------------------------------
# Pure-JAX f32 reference (mirrors the PyTorch module semantics, one episode)
# ----------------------------------------------------------------------------
def _reference_forward(params, support_images, support_labels, query_images):
    w_conv, b_conv, w_lin, b_lin = params

    def backbone(x):
        y = lax.conv_general_dilated(
            x.astype(jnp.float32), w_conv.astype(jnp.float32),
            window_strides=(1, 1), padding="SAME",
            dimension_numbers=("NCHW", "OIHW", "NCHW"))
        y = jnp.maximum(y + b_conv.reshape(1, -1, 1, 1), 0.0)
        y = jnp.mean(y, axis=(2, 3))                               # global avg pool
        return y @ w_lin + b_lin.reshape(1, -1)

    z_support = backbone(support_images)
    z_query = backbone(query_images)
    unique_labels = jnp.unique(support_labels)
    z_proto = jnp.stack([z_support[support_labels == lbl].mean(0)
                         for lbl in unique_labels])
    d2 = (jnp.sum(z_query ** 2, -1, keepdims=True)
          + jnp.sum(z_proto ** 2, -1)[None, :]
          - 2.0 * z_query @ z_proto.T)
    return -jnp.sqrt(jnp.maximum(d2, 0.0))


# ----------------------------------------------------------------------------
# Demo / self-check
# ----------------------------------------------------------------------------
if __name__ == "__main__":
    # 2 episodes, 2-way / 3-shot support, 4 queries, 4-channel 16x16 scalograms.
    E, NS, NQ, C, H, W = 2, 6, 4, 4, 16, 16
    F, D, K = 8, 32, 2

    key = jax.random.PRNGKey(0)
    k_sup, k_qry, k1, k2, k3, k4 = jax.random.split(key, 6)

    support_labels = jnp.tile(jnp.array([0, 0, 0, 1, 1, 1], jnp.int32), (E, 1))
    query_class = jnp.tile(jnp.array([0, 1, 0, 1], jnp.int32), (E, 1))

    # Class-conditioned means so prototypes are genuinely separated.
    support_images = (jax.random.normal(k_sup, (E, NS, C, H, W), jnp.float32)
                      + 0.75 * support_labels[:, :, None, None, None])
    query_images = (jax.random.normal(k_qry, (E, NQ, C, H, W), jnp.float32)
                    + 0.75 * query_class[:, :, None, None, None])

    # Deterministic synthetic backbone parameters.
    w_conv = jax.random.normal(k1, (F, C, 3, 3), jnp.float32) * 0.1
    b_conv = jax.random.normal(k2, (F,), jnp.float32) * 0.05
    w_lin = jax.random.normal(k3, (F, D), jnp.float32) * 0.1
    b_lin = jax.random.normal(k4, (D,), jnp.float32) * 0.05
    params = (w_conv, b_conv, w_lin, b_lin)

    # Batched (grid over episodes) kernel call.
    scores = prototypical_forward_batched(params, support_images, support_labels,
                                          query_images, num_classes=K)
    scores = jax.block_until_ready(scores)
    assert scores.shape == (E, NQ, K)

    # Single-episode path (matches the PyTorch module's forward signature).
    scores0 = prototypical_forward(params, support_images[0], support_labels[0],
                                   query_images[0], num_classes=K)
    scores0 = jax.block_until_ready(scores0)
    assert scores0.shape == (NQ, K)

    # Check every episode against the pure-f32 reference.  Tolerance covers the
    # bf16 conv operands (f32 MXU accumulation; f32 pooling/head/distance).
    for ep in range(E):
        ref = _reference_forward(params, support_images[ep], support_labels[ep],
                                 query_images[ep])
        ref = jax.block_until_ready(ref)
        assert jnp.allclose(scores[ep], ref, atol=1e-2, rtol=2e-2), (ep, scores[ep], ref)
    ref0 = _reference_forward(params, support_images[0], support_labels[0],
                              query_images[0])
    assert jnp.allclose(scores0, ref0, atol=1e-2, rtol=2e-2), (scores0, ref0)

    print("KERNEL_OK")
</pallas_src>

<mosaic_0001>
module attributes {stable_mosaic.version = 11 : i64} {
  func.func @_proto_kernel(%arg0: i32, %arg1: memref<1x4x3328xbf16, #tpu.memory_space<vmem>>, %arg2: memref<9x8x4xbf16, #tpu.memory_space<vmem>>, %arg3: memref<8x1xf32, #tpu.memory_space<vmem>>, %arg4: memref<8x32xf32, #tpu.memory_space<vmem>>, %arg5: memref<1x32xf32, #tpu.memory_space<vmem>>, %arg6: memref<10x3240xf32, #tpu.memory_space<vmem>>, %arg7: memref<1x2x6xf32, #tpu.memory_space<vmem>>, %arg8: memref<1x4x2xf32, #tpu.memory_space<vmem>>) attributes {dimension_semantics = [#tpu.dimension_semantics<parallel>], iteration_bounds = array<i64: 2>, scalar_prefetch = 0 : i64, scratch_operands = 0 : i64, tpu.core_type = #tpu.core_type<tc>, window_params = [{transform_indices = @transform_0, window_bounds = array<i64: 1, 4, 3328>}, {pipeline_mode = #tpu.pipeline_mode<synchronous>, transform_indices = @transform_1, window_bounds = array<i64: 9, 8, 4>}, {pipeline_mode = #tpu.pipeline_mode<synchronous>, transform_indices = @transform_2, window_bounds = array<i64: 8, 1>}, {pipeline_mode = #tpu.pipeline_mode<synchronous>, transform_indices = @transform_3, window_bounds = array<i64: 8, 32>}, {pipeline_mode = #tpu.pipeline_mode<synchronous>, transform_indices = @transform_4, window_bounds = array<i64: 1, 32>}, {pipeline_mode = #tpu.pipeline_mode<synchronous>, transform_indices = @transform_5, window_bounds = array<i64: 10, 3240>}, {transform_indices = @transform_6, window_bounds = array<i64: 1, 2, 6>}, {transform_indices = @transform_7, window_bounds = array<i64: 1, 4, 2>}]} {
    %c0 = arith.constant 0 : index
    %c0_0 = arith.constant 0 : index
    %c0_1 = arith.constant 0 : index
    %0 = vector.load %arg2[%c0, %c0_0, %c0_1] : memref<9x8x4xbf16, #tpu.memory_space<vmem>>, vector<1x8x4xbf16>
    %1 = vector.shape_cast %0 : vector<1x8x4xbf16> to vector<8x4xbf16>
    %c0_2 = arith.constant 0 : index
    %c0_3 = arith.constant 0 : index
    %c0_4 = arith.constant 0 : index
    %2 = vector.load %arg1[%c0_2, %c0_3, %c0_4] : memref<1x4x3328xbf16, #tpu.memory_space<vmem>>, vector<1x4x3240xbf16>
    %3 = vector.shape_cast %2 : vector<1x4x3240xbf16> to vector<4x3240xbf16>
    %cst = arith.constant dense<0.000000e+00> : vector<8x3240xf32>
    %4 = tpu.matmul %1, %3, %cst {dimension_numbers = #tpu.dot_dimension_numbers<[1], [0], [0], [1], [0, 0, 1, 1], [], []>} : vector<8x4xbf16>, vector<4x3240xbf16>, vector<8x3240xf32> -> vector<8x3240xf32>
    %c1 = arith.constant 1 : index
    %c0_5 = arith.constant 0 : index
    %c0_6 = arith.constant 0 : index
    %5 = vector.load %arg2[%c1, %c0_5, %c0_6] : memref<9x8x4xbf16, #tpu.memory_space<vmem>>, vector<1x8x4xbf16>
    %6 = vector.shape_cast %5 : vector<1x8x4xbf16> to vector<8x4xbf16>
    %c0_7 = arith.constant 0 : index
    %c0_8 = arith.constant 0 : index
    %c1_9 = arith.constant 1 : index
    %7 = vector.load %arg1[%c0_7, %c0_8, %c1_9] : memref<1x4x3328xbf16, #tpu.memory_space<vmem>>, vector<1x4x3240xbf16>
    %8 = vector.shape_cast %7 : vector<1x4x3240xbf16> to vector<4x3240xbf16>
    %cst_10 = arith.constant dense<0.000000e+00> : vector<8x3240xf32>
    %9 = tpu.matmul %6, %8, %cst_10 {dimension_numbers = #tpu.dot_dimension_numbers<[1], [0], [0], [1], [0, 0, 1, 1], [], []>} : vector<8x4xbf16>, vector<4x3240xbf16>, vector<8x3240xf32> -> vector<8x3240xf32>
    %10 = arith.addf %4, %9 : vector<8x3240xf32>
    %c2 = arith.constant 2 : index
    %c0_11 = arith.constant 0 : index
    %c0_12 = arith.constant 0 : index
    %11 = vector.load %arg2[%c2, %c0_11, %c0_12] : memref<9x8x4xbf16, #tpu.memory_space<vmem>>, vector<1x8x4xbf16>
    %12 = vector.shape_cast %11 : vector<1x8x4xbf16> to vector<8x4xbf16>
    %c0_13 = arith.constant 0 : index
    %c0_14 = arith.constant 0 : index
    %c2_15 = arith.constant 2 : index
    %13 = vector.load %arg1[%c0_13, %c0_14, %c2_15] : memref<1x4x3328xbf16, #tpu.memory_space<vmem>>, vector<1x4x3240xbf16>
    %14 = vector.shape_cast %13 : vector<1x4x3240xbf16> to vector<4x3240xbf16>
    %cst_16 = arith.constant dense<0.000000e+00> : vector<8x3240xf32>
    %15 = tpu.matmul %12, %14, %cst_16 {dimension_numbers = #tpu.dot_dimension_numbers<[1], [0], [0], [1], [0, 0, 1, 1], [], []>} : vector<8x4xbf16>, vector<4x3240xbf16>, vector<8x3240xf32> -> vector<8x3240xf32>
    %16 = arith.addf %10, %15 : vector<8x3240xf32>
    %c3 = arith.constant 3 : index
    %c0_17 = arith.constant 0 : index
    %c0_18 = arith.constant 0 : index
    %17 = vector.load %arg2[%c3, %c0_17, %c0_18] : memref<9x8x4xbf16, #tpu.memory_space<vmem>>, vector<1x8x4xbf16>
    %18 = vector.shape_cast %17 : vector<1x8x4xbf16> to vector<8x4xbf16>
    %c0_19 = arith.constant 0 : index
    %c0_20 = arith.constant 0 : index
    %c18 = arith.constant 18 : index
    %19 = vector.load %arg1[%c0_19, %c0_20, %c18] : memref<1x4x3328xbf16, #tpu.memory_space<vmem>>, vector<1x4x3240xbf16>
    %20 = vector.shape_cast %19 : vector<1x4x3240xbf16> to vector<4x3240xbf16>
    %cst_21 = arith.constant dense<0.000000e+00> : vector<8x3240xf32>
    %21 = tpu.matmul %18, %20, %cst_21 {dimension_numbers = #tpu.dot_dimension_numbers<[1], [0], [0], [1], [0, 0, 1, 1], [], []>} : vector<8x4xbf16>, vector<4x3240xbf16>, vector<8x3240xf32> -> vector<8x3240xf32>
    %22 = arith.addf %16, %21 : vector<8x3240xf32>
    %c4 = arith.constant 4 : index
    %c0_22 = arith.constant 0 : index
    %c0_23 = arith.constant 0 : index
    %23 = vector.load %arg2[%c4, %c0_22, %c0_23] : memref<9x8x4xbf16, #tpu.memory_space<vmem>>, vector<1x8x4xbf16>
    %24 = vector.shape_cast %23 : vector<1x8x4xbf16> to vector<8x4xbf16>
    %c0_24 = arith.constant 0 : index
    %c0_25 = arith.constant 0 : index
    %c19 = arith.constant 19 : index
    %25 = vector.load %arg1[%c0_24, %c0_25, %c19] : memref<1x4x3328xbf16, #tpu.memory_space<vmem>>, vector<1x4x3240xbf16>
    %26 = vector.shape_cast %25 : vector<1x4x3240xbf16> to vector<4x3240xbf16>
    %cst_26 = arith.constant dense<0.000000e+00> : vector<8x3240xf32>
    %27 = tpu.matmul %24, %26, %cst_26 {dimension_numbers = #tpu.dot_dimension_numbers<[1], [0], [0], [1], [0, 0, 1, 1], [], []>} : vector<8x4xbf16>, vector<4x3240xbf16>, vector<8x3240xf32> -> vector<8x3240xf32>
    %28 = arith.addf %22, %27 : vector<8x3240xf32>
    %c5 = arith.constant 5 : index
    %c0_27 = arith.constant 0 : index
    %c0_28 = arith.constant 0 : index
    %29 = vector.load %arg2[%c5, %c0_27, %c0_28] : memref<9x8x4xbf16, #tpu.memory_space<vmem>>, vector<1x8x4xbf16>
    %30 = vector.shape_cast %29 : vector<1x8x4xbf16> to vector<8x4xbf16>
    %c0_29 = arith.constant 0 : index
    %c0_30 = arith.constant 0 : index
    %c20 = arith.constant 20 : index
    %31 = vector.load %arg1[%c0_29, %c0_30, %c20] : memref<1x4x3328xbf16, #tpu.memory_space<vmem>>, vector<1x4x3240xbf16>
    %32 = vector.shape_cast %31 : vector<1x4x3240xbf16> to vector<4x3240xbf16>
    %cst_31 = arith.constant dense<0.000000e+00> : vector<8x3240xf32>
    %33 = tpu.matmul %30, %32, %cst_31 {dimension_numbers = #tpu.dot_dimension_numbers<[1], [0], [0], [1], [0, 0, 1, 1], [], []>} : vector<8x4xbf16>, vector<4x3240xbf16>, vector<8x3240xf32> -> vector<8x3240xf32>
    %34 = arith.addf %28, %33 : vector<8x3240xf32>
    %c6 = arith.constant 6 : index
    %c0_32 = arith.constant 0 : index
    %c0_33 = arith.constant 0 : index
    %35 = vector.load %arg2[%c6, %c0_32, %c0_33] : memref<9x8x4xbf16, #tpu.memory_space<vmem>>, vector<1x8x4xbf16>
    %36 = vector.shape_cast %35 : vector<1x8x4xbf16> to vector<8x4xbf16>
    %c0_34 = arith.constant 0 : index
    %c0_35 = arith.constant 0 : index
    %c36 = arith.constant 36 : index
    %37 = vector.load %arg1[%c0_34, %c0_35, %c36] : memref<1x4x3328xbf16, #tpu.memory_space<vmem>>, vector<1x4x3240xbf16>
    %38 = vector.shape_cast %37 : vector<1x4x3240xbf16> to vector<4x3240xbf16>
    %cst_36 = arith.constant dense<0.000000e+00> : vector<8x3240xf32>
    %39 = tpu.matmul %36, %38, %cst_36 {dimension_numbers = #tpu.dot_dimension_numbers<[1], [0], [0], [1], [0, 0, 1, 1], [], []>} : vector<8x4xbf16>, vector<4x3240xbf16>, vector<8x3240xf32> -> vector<8x3240xf32>
    %40 = arith.addf %34, %39 : vector<8x3240xf32>
    %c7 = arith.constant 7 : index
    %c0_37 = arith.constant 0 : index
    %c0_38 = arith.constant 0 : index
    %41 = vector.load %arg2[%c7, %c0_37, %c0_38] : memref<9x8x4xbf16, #tpu.memory_space<vmem>>, vector<1x8x4xbf16>
    %42 = vector.shape_cast %41 : vector<1x8x4xbf16> to vector<8x4xbf16>
    %c0_39 = arith.constant 0 : index
    %c0_40 = arith.constant 0 : index
    %c37 = arith.constant 37 : index
    %43 = vector.load %arg1[%c0_39, %c0_40, %c37] : memref<1x4x3328xbf16, #tpu.memory_space<vmem>>, vector<1x4x3240xbf16>
    %44 = vector.shape_cast %43 : vector<1x4x3240xbf16> to vector<4x3240xbf16>
    %cst_41 = arith.constant dense<0.000000e+00> : vector<8x3240xf32>
    %45 = tpu.matmul %42, %44, %cst_41 {dimension_numbers = #tpu.dot_dimension_numbers<[1], [0], [0], [1], [0, 0, 1, 1], [], []>} : vector<8x4xbf16>, vector<4x3240xbf16>, vector<8x3240xf32> -> vector<8x3240xf32>
    %46 = arith.addf %40, %45 : vector<8x3240xf32>
    %c8 = arith.constant 8 : index
    %c0_42 = arith.constant 0 : index
    %c0_43 = arith.constant 0 : index
    %47 = vector.load %arg2[%c8, %c0_42, %c0_43] : memref<9x8x4xbf16, #tpu.memory_space<vmem>>, vector<1x8x4xbf16>
    %48 = vector.shape_cast %47 : vector<1x8x4xbf16> to vector<8x4xbf16>
    %c0_44 = arith.constant 0 : index
    %c0_45 = arith.constant 0 : index
    %c38 = arith.constant 38 : index
    %49 = vector.load %arg1[%c0_44, %c0_45, %c38] : memref<1x4x3328xbf16, #tpu.memory_space<vmem>>, vector<1x4x3240xbf16>
    %50 = vector.shape_cast %49 : vector<1x4x3240xbf16> to vector<4x3240xbf16>
    %cst_46 = arith.constant dense<0.000000e+00> : vector<8x3240xf32>
    %51 = tpu.matmul %48, %50, %cst_46 {dimension_numbers = #tpu.dot_dimension_numbers<[1], [0], [0], [1], [0, 0, 1, 1], [], []>} : vector<8x4xbf16>, vector<4x3240xbf16>, vector<8x3240xf32> -> vector<8x3240xf32>
    %52 = arith.addf %46, %51 : vector<8x3240xf32>
    %c0_47 = arith.constant 0 : index
    %c0_48 = arith.constant 0 : index
    %53 = vector.load %arg3[%c0_47, %c0_48] : memref<8x1xf32, #tpu.memory_space<vmem>>, vector<8x1xf32>
    %54 = vector.broadcast %53 : vector<8x1xf32> to vector<8x3240xf32>
    %55 = arith.addf %52, %54 : vector<8x3240xf32>
    %cst_49 = arith.constant 0.000000e+00 : f32
    %56 = vector.broadcast %cst_49 : f32 to vector<8x3240xf32>
    %57 = arith.maximumf %55, %56 : vector<8x3240xf32>
    %c0_50 = arith.constant 0 : index
    %c0_51 = arith.constant 0 : index
    %58 = vector.load %arg6[%c0_50, %c0_51] : memref<10x3240xf32, #tpu.memory_space<vmem>>, vector<10x3240xf32>
    %cst_52 = arith.constant dense<0.000000e+00> : vector<10x8xf32>
    %59 = tpu.matmul %58, %57, %cst_52 {dimension_numbers = #tpu.dot_dimension_numbers<[1], [1], [0], [0], [0, 0, 1, 0], [], []>} : vector<10x3240xf32>, vector<8x3240xf32>, vector<10x8xf32> -> vector<10x8xf32>
    %c0_53 = arith.constant 0 : index
    %c0_54 = arith.constant 0 : index
    %60 = vector.load %arg4[%c0_53, %c0_54] : memref<8x32xf32, #tpu.memory_space<vmem>>, vector<8x32xf32>
    %cst_55 = arith.constant dense<0.000000e+00> : vector<10x32xf32>
    %61 = tpu.matmul %59, %60, %cst_55 {dimension_numbers = #tpu.dot_dimension_numbers<[1], [0], [0], [1], [0, 0, 1, 1], [], []>} : vector<10x8xf32>, vector<8x32xf32>, vector<10x32xf32> -> vector<10x32xf32>
    %c0_56 = arith.constant 0 : index
    %c0_57 = arith.constant 0 : index
    %62 = vector.load %arg5[%c0_56, %c0_57] : memref<1x32xf32, #tpu.memory_space<vmem>>, vector<1x32xf32>
    %63 = vector.broadcast %62 : vector<1x32xf32> to vector<10x32xf32>
    %64 = arith.addf %61, %63 : vector<10x32xf32>
    %65 = vector.extract_strided_slice %64 {offsets = [0, 0], sizes = [6, 32], strides = [1, 1]} : vector<10x32xf32> to vector<6x32xf32>
    %66 = vector.extract_strided_slice %64 {offsets = [6, 0], sizes = [4, 32], strides = [1, 1]} : vector<10x32xf32> to vector<4x32xf32>
    %c0_58 = arith.constant 0 : index
    %c0_59 = arith.constant 0 : index
    %c0_60 = arith.constant 0 : index
    %67 = vector.load %arg7[%c0_58, %c0_59, %c0_60] : memref<1x2x6xf32, #tpu.memory_space<vmem>>, vector<1x2x6xf32>
    %68 = vector.shape_cast %67 : vector<1x2x6xf32> to vector<2x6xf32>
    %cst_61 = arith.constant dense<0.000000e+00> : vector<2x32xf32>
    %69 = tpu.matmul %68, %65, %cst_61 {dimension_numbers = #tpu.dot_dimension_numbers<[1], [0], [0], [1], [0, 0, 1, 1], [], []>} : vector<2x6xf32>, vector<6x32xf32>, vector<2x32xf32> -> vector<2x32xf32>
    %70 = arith.mulf %66, %66 : vector<4x32xf32>
    %cst_62 = arith.constant dense<0.000000e+00> : vector<4xf32>
    %71 = vector.multi_reduction <add>, %70, %cst_62 [1] : vector<4x32xf32> to vector<4xf32>
    %72 = vector.shape_cast %71 : vector<4xf32> to vector<4x1xf32>
    %cst_63 = arith.constant 1.000000e+00 : f32
    %73 = vector.broadcast %cst_63 : f32 to vector<1x32xf32>
    %74 = arith.mulf %69, %69 : vector<2x32xf32>
    %cst_64 = arith.constant dense<0.000000e+00> : vector<1x2xf32>
    %75 = tpu.matmul %73, %74, %cst_64 {dimension_numbers = #tpu.dot_dimension_numbers<[1], [1], [0], [0], [0, 0, 1, 0], [], []>} : vector<1x32xf32>, vector<2x32xf32>, vector<1x2xf32> -> vector<1x2xf32>
    %cst_65 = arith.constant dense<0.000000e+00> : vector<4x2xf32>
    %76 = tpu.matmul %66, %69, %cst_65 {dimension_numbers = #tpu.dot_dimension_numbers<[1], [1], [0], [0], [0, 0, 1, 0], [], []>} : vector<4x32xf32>, vector<2x32xf32>, vector<4x2xf32> -> vector<4x2xf32>
    %77 = vector.broadcast %72 : vector<4x1xf32> to vector<4x2xf32>
    %78 = vector.broadcast %75 : vector<1x2xf32> to vector<4x2xf32>
    %79 = arith.addf %77, %78 : vector<4x2xf32>
    %cst_66 = arith.constant 2.000000e+00 : f32
    %80 = vector.broadcast %cst_66 : f32 to vector<4x2xf32>
    %81 = arith.mulf %80, %76 : vector<4x2xf32>
    %82 = arith.subf %79, %81 : vector<4x2xf32>
    %cst_67 = arith.constant 0.000000e+00 : f32
    %83 = vector.broadcast %cst_67 : f32 to vector<4x2xf32>
    %84 = arith.maximumf %82, %83 : vector<4x2xf32>
    %85 = math.sqrt %84 : vector<4x2xf32>
    %cst_68 = arith.constant 0.000000e+00 : f32
    %86 = vector.broadcast %cst_68 : f32 to vector<4x2xf32>
    %87 = arith.subf %86, %85 : vector<4x2xf32>
    %c0_69 = arith.constant 0 : index
    %c0_70 = arith.constant 0 : index
    %c0_71 = arith.constant 0 : index
    %88 = vector.load %arg8[%c0_69, %c0_70, %c0_71] : memref<1x4x2xf32, #tpu.memory_space<vmem>>, vector<1x4x2xf32>
    %89 = vector.shape_cast %88 : vector<1x4x2xf32> to vector<4x2xf32>
    %90 = vector.shape_cast %87 : vector<4x2xf32> to vector<1x4x2xf32>
    tpu.vector_store %arg8[%c0_69, %c0_70, %c0_71], %90 {strides = array<i32>} : memref<1x4x2xf32, #tpu.memory_space<vmem>>, vector<1x4x2xf32>,
    return
  }
  func.func @transform_0(%arg0: i32) -> (i32, i32, i32) {
    %c0_i32 = arith.constant 0 : i32
    %c0_i32_0 = arith.constant 0 : i32
    %c0_i32_1 = arith.constant 0 : i32
    return %arg0, %c0_i32, %c0_i32_0 : i32, i32, i32
  }
  func.func @transform_1(%arg0: i32) -> (i32, i32, i32) {
    %c0_i32 = arith.constant 0 : i32
    %c0_i32_0 = arith.constant 0 : i32
    %c0_i32_1 = arith.constant 0 : i32
    %c0_i32_2 = arith.constant 0 : i32
    return %c0_i32, %c0_i32_0, %c0_i32_1 : i32, i32, i32
  }
  func.func @transform_2(%arg0: i32) -> (i32, i32) {
    %c0_i32 = arith.constant 0 : i32
    %c0_i32_0 = arith.constant 0 : i32
    %c0_i32_1 = arith.constant 0 : i32
    return %c0_i32, %c0_i32_0 : i32, i32
  }
  func.func @transform_3(%arg0: i32) -> (i32, i32) {
    %c0_i32 = arith.constant 0 : i32
    %c0_i32_0 = arith.constant 0 : i32
    %c0_i32_1 = arith.constant 0 : i32
    return %c0_i32, %c0_i32_0 : i32, i32
  }
  func.func @transform_4(%arg0: i32) -> (i32, i32) {
    %c0_i32 = arith.constant 0 : i32
    %c0_i32_0 = arith.constant 0 : i32
    %c0_i32_1 = arith.constant 0 : i32
    return %c0_i32, %c0_i32_0 : i32, i32
  }
  func.func @transform_5(%arg0: i32) -> (i32, i32) {
    %c0_i32 = arith.constant 0 : i32
    %c0_i32_0 = arith.constant 0 : i32
    %c0_i32_1 = arith.constant 0 : i32
    return %c0_i32, %c0_i32_0 : i32, i32
  }
  func.func @transform_6(%arg0: i32) -> (i32, i32, i32) {
    %c0_i32 = arith.constant 0 : i32
    %c0_i32_0 = arith.constant 0 : i32
    %c0_i32_1 = arith.constant 0 : i32
    return %arg0, %c0_i32, %c0_i32_0 : i32, i32, i32
  }
  func.func @transform_7(%arg0: i32) -> (i32, i32, i32) {
    %c0_i32 = arith.constant 0 : i32
    %c0_i32_0 = arith.constant 0 : i32
    %c0_i32_1 = arith.constant 0 : i32
    return %arg0, %c0_i32, %c0_i32_0 : i32, i32, i32
  }
}

</mosaic_0001>

<llo_original>
// kernel: prototypical_forward_batched.1
$region0: #{prototypical_forward_batched.1}
  #allocation0 [shape = 'u32[]', space=smem, size = 0x4, offset = 0x4, fixed_abs, tag = 'smem constant byte address 0x4 - core index']
  #allocation1 [shape = 'u32[144,128]{1,0:T(1,128)}', space=vmem, size = 0x12000, scoped, tag = 'internal scratch']
  %s0 = inlined_call_operand.vmem [shape: bf16[2,4,3328], index: 0, kind: input, shape index: {}]
  %s1 = inlined_call_operand.vmem [shape: bf16[9,8,4], index: 1, kind: input, shape index: {}]
  %s2 = inlined_call_operand.vmem [shape: f32[8,1], index: 2, kind: input, shape index: {}]
  %s3 = inlined_call_operand.vmem [shape: f32[8,32], index: 3, kind: input, shape index: {}]
  %s4 = inlined_call_operand.vmem [shape: f32[1,32], index: 4, kind: input, shape index: {}]
  %s5 = inlined_call_operand.vmem [shape: f32[10,3240], index: 5, kind: input, shape index: {}]
  %s6 = inlined_call_operand.vmem [shape: f32[2,2,6], index: 6, kind: input, shape index: {}]
  %s7 = inlined_call_operand.vmem [shape: f32[2,4,2], index: 7, kind: output, shape index: {}]
  %s8 = sld [smem:[#allocation0]]
  $region61: #{prototypical_forward_batched.1} parent=0
    _
  %s10 = ssub.s32 1, %s8
  %s11 = scalar_select 0, %s10, %s8
  loop: start=0, step=1, limit=4
  $region2: #{prototypical_forward_batched.1} parent=0 // loop_pre_header
    _
  $region3: #{prototypical_forward_batched.1} parent=0 // loop_header
    %s13 = sphi 0, %s17
    %p14 = scmp.ge.s32.totalorder %s13, 4
    %s23 = sphi 0, %s25
    %s26 = sphi 0, %s23
    %s27 = sphi 0, %s26
    %s43 = sphi 0, %s27
    %s47 = sphi 0, %s47
    %s49 = sphi 0, %s47
    %s50 = sphi 0, %s49
    %s64 = sphi 0, %s50
    %s68 = sphi 0, %s68
    %s70 = sphi 0, %s68
    %s71 = sphi 0, %s70
    %s85 = sphi 0, %s71
    %s89 = sphi 0, %s89
    %s91 = sphi 0, %s89
    %s92 = sphi 0, %s91
    %s106 = sphi 0, %s92
    %s110 = sphi 0, %s110
    %s112 = sphi 0, %s110
    %s113 = sphi 0, %s112
    %s127 = sphi 0, %s113
    %s131 = sphi 0, %s131
    %s133 = sphi 0, %s131
    %s134 = sphi 0, %s133
    %s148 = sphi 0, %s134
    %s154 = sphi 0, %s156
    %s157 = sphi 0, %s154
    %s158 = sphi 0, %s157
    %s174 = sphi 0, %s158
    %s180 = sphi 0, %s182
    %s183 = sphi 0, %s180
    %s184 = sphi 0, %s183
    %s200 = sphi 0, %s184
  $region4: #{prototypical_forward_batched.1} parent=0 // loop_header_branch
    %16 = sbr.rel (%p14) target = $region8
  $region5: #{prototypical_forward_batched.1} parent=0 // loop_body
    %s18 = ssub.s32 %s13, 1
    %s19 = ssub.s32 %s13, 2
    %s20 = sadd.s32 %s13, 1
    %s21 = ssub.s32 %s13, %s20
    %p22 = scmp.eq.s32.totalorder %s21, 0
    %s24 = sadd.s32 %s23, 1
    %s25 = scalar_select %p22, %s23, %s24
    %p28 = pneg %p22
    %p29 = scmp.eq.s32.totalorder %s13, 1
    %p30 = por %p28, %p29
    %p31 = scmp.ne.s32.totalorder %s23, %s26
    %p32 = scmp.eq.s32.totalorder %s13, 0
    %p33 = por %p31, %p32
    %p34 = scmp.ne.s32.totalorder %s23, %s26
    %p35 = scmp.eq.s32.totalorder %s18, 1
    %p36 = por %p34, %p35
    %p37 = scmp.ne.s32.totalorder %s26, %s27
    %p38 = scmp.eq.s32.totalorder %s18, 0
    %p39 = por %p37, %p38
    %p40 = scmp.ne.s32.totalorder %s26, %s27
    %p41 = scmp.eq.s32.totalorder %s19, 1
    %p42 = por %p40, %p41
    %p44 = scmp.ne.s32.totalorder %s27, %s43
    %p45 = scmp.eq.s32.totalorder %s19, 0
    %p46 = por %p44, %p45
    %s48 = sadd.s32 %s47, 1
    %p51 = scmp.eq.s32.totalorder %s13, 1
    %p52 = scmp.ne.s32.totalorder %s47, %s49
    %p53 = scmp.eq.s32.totalorder %s13, 0
    %p54 = por %p52, %p53
    %p55 = scmp.ne.s32.totalorder %s47, %s49
    %p56 = scmp.eq.s32.totalorder %s18, 1
    %p57 = por %p55, %p56
    %p58 = scmp.ne.s32.totalorder %s49, %s50
    %p59 = scmp.eq.s32.totalorder %s18, 0
    %p60 = por %p58, %p59
    %p61 = scmp.ne.s32.totalorder %s49, %s50
    %p62 = scmp.eq.s32.totalorder %s19, 1
    %p63 = por %p61, %p62
    %p65 = scmp.ne.s32.totalorder %s50, %s64
    %p66 = scmp.eq.s32.totalorder %s19, 0
    %p67 = por %p65, %p66
    %s69 = sadd.s32 %s68, 1
    %p72 = scmp.eq.s32.totalorder %s13, 1
    %p73 = scmp.ne.s32.totalorder %s68, %s70
    %p74 = scmp.eq.s32.totalorder %s13, 0
    %p75 = por %p73, %p74
    %p76 = scmp.ne.s32.totalorder %s68, %s70
    %p77 = scmp.eq.s32.totalorder %s18, 1
    %p78 = por %p76, %p77
    %p79 = scmp.ne.s32.totalorder %s70, %s71
    %p80 = scmp.eq.s32.totalorder %s18, 0
    %p81 = por %p79, %p80
    %p82 = scmp.ne.s32.totalorder %s70, %s71
    %p83 = scmp.eq.s32.totalorder %s19, 1
    %p84 = por %p82, %p83
    %p86 = scmp.ne.s32.totalorder %s71, %s85
    %p87 = scmp.eq.s32.totalorder %s19, 0
    %p88 = por %p86, %p87
    %s90 = sadd.s32 %s89, 1
    %p93 = scmp.eq.s32.totalorder %s13, 1
    %p94 = scmp.ne.s32.totalorder %s89, %s91
    %p95 = scmp.eq.s32.totalorder %s13, 0
    %p96 = por %p94, %p95
    %p97 = scmp.ne.s32.totalorder %s89, %s91
    %p98 = scmp.eq.s32.totalorder %s18, 1
    %p99 = por %p97, %p98
    %p100 = scmp.ne.s32.totalorder %s91, %s92
    %p101 = scmp.eq.s32.totalorder %s18, 0
    %p102 = por %p100, %p101
    %p103 = scmp.ne.s32.totalorder %s91, %s92
    %p104 = scmp.eq.s32.totalorder %s19, 1
    %p105 = por %p103, %p104
    %p107 = scmp.ne.s32.totalorder %s92, %s106
    %p108 = scmp.eq.s32.totalorder %s19, 0
    %p109 = por %p107, %p108
    %s111 = sadd.s32 %s110, 1
    %p114 = scmp.eq.s32.totalorder %s13, 1
    %p115 = scmp.ne.s32.totalorder %s110, %s112
    %p116 = scmp.eq.s32.totalorder %s13, 0
    %p117 = por %p115, %p116
    %p118 = scmp.ne.s32.totalorder %s110, %s112
    %p119 = scmp.eq.s32.totalorder %s18, 1
    %p120 = por %p118, %p119
    %p121 = scmp.ne.s32.totalorder %s112, %s113
    %p122 = scmp.eq.s32.totalorder %s18, 0
    %p123 = por %p121, %p122
    %p124 = scmp.ne.s32.totalorder %s112, %s113
    %p125 = scmp.eq.s32.totalorder %s19, 1
    %p126 = por %p124, %p125
    %p128 = scmp.ne.s32.totalorder %s113, %s127
    %p129 = scmp.eq.s32.totalorder %s19, 0
    %p130 = por %p128, %p129
    %s132 = sadd.s32 %s131, 1
    %p135 = scmp.eq.s32.totalorder %s13, 1
    %p136 = scmp.ne.s32.totalorder %s131, %s133
    %p137 = scmp.eq.s32.totalorder %s13, 0
    %p138 = por %p136, %p137
    %p139 = scmp.ne.s32.totalorder %s131, %s133
    %p140 = scmp.eq.s32.totalorder %s18, 1
    %p141 = por %p139, %p140
    %p142 = scmp.ne.s32.totalorder %s133, %s134
    %p143 = scmp.eq.s32.totalorder %s18, 0
    %p144 = por %p142, %p143
    %p145 = scmp.ne.s32.totalorder %s133, %s134
    %p146 = scmp.eq.s32.totalorder %s19, 1
    %p147 = por %p145, %p146
    %p149 = scmp.ne.s32.totalorder %s134, %s148
    %p150 = scmp.eq.s32.totalorder %s19, 0
    %p151 = por %p149, %p150
    %s152 = ssub.s32 %s13, %s20
    %p153 = scmp.eq.s32.totalorder %s152, 0
    %s155 = sadd.s32 %s154, 1
    %s156 = scalar_select %p153, %s154, %s155
    %p159 = pneg %p153
    %p160 = scmp.eq.s32.totalorder %s13, 1
    %p161 = por %p159, %p160
    %p162 = scmp.ne.s32.totalorder %s154, %s157
    %p163 = scmp.eq.s32.totalorder %s13, 0
    %p164 = por %p162, %p163
    %p165 = scmp.ne.s32.totalorder %s154, %s157
    %p166 = scmp.eq.s32.totalorder %s18, 1
    %p167 = por %p165, %p166
    %p168 = scmp.ne.s32.totalorder %s157, %s158
    %p169 = scmp.eq.s32.totalorder %s18, 0
    %p170 = por %p168, %p169
    %p171 = scmp.ne.s32.totalorder %s157, %s158
    %p172 = scmp.eq.s32.totalorder %s19, 1
    %p173 = por %p171, %p172
    %p175 = scmp.ne.s32.totalorder %s158, %s174
    %p176 = scmp.eq.s32.totalorder %s19, 0
    %p177 = por %p175, %p176
    %s178 = ssub.s32 %s13, %s20
    %p179 = scmp.eq.s32.totalorder %s178, 0
    %s181 = sadd.s32 %s180, 1
    %s182 = scalar_select %p179, %s180, %s181
    %p185 = pneg %p179
    %p186 = scmp.eq.s32.totalorder %s13, 1
    %p187 = por %p185, %p186
    %p188 = scmp.ne.s32.totalorder %s180, %s183
    %p189 = scmp.eq.s32.totalorder %s13, 0
    %p190 = por %p188, %p189
    %p191 = scmp.ne.s32.totalorder %s180, %s183
    %p192 = scmp.eq.s32.totalorder %s18, 1
    %p193 = por %p191, %p192
    %p194 = scmp.ne.s32.totalorder %s183, %s184
    %p195 = scmp.eq.s32.totalorder %s18, 0
    %p196 = por %p194, %p195
    %p197 = scmp.ne.s32.totalorder %s183, %s184
    %p198 = scmp.eq.s32.totalorder %s19, 1
    %p199 = por %p197, %p198
    %p201 = scmp.ne.s32.totalorder %s184, %s200
    %p202 = scmp.eq.s32.totalorder %s19, 0
    %p203 = por %p201, %p202
    %p204 = scmp.le.s32.totalorder 1, %s13
    %p205 = scmp.lt.s32.totalorder %s13, 3
    %p206 = pnand %p204, %p205
    %p207 = pneg %p206
    // Predicated region
    $region9: #{prototypical_forward_batched.1} parent=5 // pred_check
      _
    $region10: #{prototypical_forward_batched.1} parent=5 // pred_check_branch
      %209 = sbr.rel (%p206) target = $region12
    $region11: #{prototypical_forward_batched.1} parent=5 // pred_region
      %s210 = ssub.s32 %s13, 1
      // Predicated region
      $region13: #{prototypical_forward_batched.1} parent=11 // pred_check
        %p211 = pneg %p60
      $region14: #{prototypical_forward_batched.1} parent=11 // pred_check_branch
        %213 = sbr.rel (%p211) target = $region16
      $region15: #{prototypical_forward_batched.1} parent=11 // pred_region
        _
      $region16: #{prototypical_forward_batched.1} parent=11 // pred_fallthru
        _
      // Predicated region
      $region17: #{prototypical_forward_batched.1} parent=11 // pred_check
        %p214 = pneg %p81
      $region18: #{prototypical_forward_batched.1} parent=11 // pred_check_branch
        %216 = sbr.rel (%p214) target = $region20
      $region19: #{prototypical_forward_batched.1} parent=11 // pred_region
        _
      $region20: #{prototypical_forward_batched.1} parent=11 // pred_fallthru
        _
      // Predicated region
      $region21: #{prototypical_forward_batched.1} parent=11 // pred_check
        %p217 = pneg %p102
      $region22: #{prototypical_forward_batched.1} parent=11 // pred_check_branch
        %219 = sbr.rel (%p217) target = $region24
      $region23: #{prototypical_forward_batched.1} parent=11 // pred_region
        _
      $region24: #{prototypical_forward_batched.1} parent=11 // pred_fallthru
        _
      // Predicated region
      $region25: #{prototypical_forward_batched.1} parent=11 // pred_check
        %p220 = pneg %p123
      $region26: #{prototypical_forward_batched.1} parent=11 // pred_check_branch
        %222 = sbr.rel (%p220) target = $region28
      $region27: #{prototypical_forward_batched.1} parent=11 // pred_region
        _
      $region28: #{prototypical_forward_batched.1} parent=11 // pred_fallthru
        _
      // Predicated region
      $region29: #{prototypical_forward_batched.1} parent=11 // pred_check
        %p223 = pneg %p144
      $region30: #{prototypical_forward_batched.1} parent=11 // pred_check_branch
        %225 = sbr.rel (%p223) target = $region32
      $region31: #{prototypical_forward_batched.1} parent=11 // pred_region
        _
      $region32: #{prototypical_forward_batched.1} parent=11 // pred_fallthru
        _
    $region12: #{prototypical_forward_batched.1} parent=5 // pred_fallthru
      _
    %p226 = scmp.lt.s32.totalorder %s13, 2
    // Predicated region
    $region33: #{prototypical_forward_batched.1} parent=5 // pred_check
      %p227 = pneg %p226
    $region34: #{prototypical_forward_batched.1} parent=5 // pred_check_branch
      %229 = sbr.rel (%p227) target = $region36
    $region35: #{prototypical_forward_batched.1} parent=5 // pred_region
      // Predicated region
      $region37: #{prototypical_forward_batched.1} parent=35 // pred_check
        %p230 = pneg %p33
      $region38: #{prototypical_forward_batched.1} parent=35 // pred_check_branch
        %232 = sbr.rel (%p230) target = $region40
      $region39: #{prototypical_forward_batched.1} parent=35 // pred_region
        %p233 = scmp.lt.s32.totalorder %s13, 1
        %s234 = scalar_select %p233, %s13, 1
        %s235 = smul.addr %s234, 26
        %s236 = smul.addr %s235, 2
        %s237 = scalar_lea.vmem %s0, %s236
      $region40: #{prototypical_forward_batched.1} parent=35 // pred_fallthru
        _
      // Predicated region
      $region41: #{prototypical_forward_batched.1} parent=35 // pred_check
        %p238 = pneg %p164
      $region42: #{prototypical_forward_batched.1} parent=35 // pred_check_branch
        %240 = sbr.rel (%p238) target = $region44
      $region43: #{prototypical_forward_batched.1} parent=35 // pred_region
        %p241 = scmp.lt.s32.totalorder %s13, 1
        %s242 = scalar_select %p241, %s13, 1
        %s243 = smul.addr %s242, 2
        %s244 = scalar_lea.vmem %s6, %s243
      $region44: #{prototypical_forward_batched.1} parent=35 // pred_fallthru
        _
    $region36: #{prototypical_forward_batched.1} parent=5 // pred_fallthru
      _
    %p245 = scmp.le.s32.totalorder 1, %s13
    %p246 = scmp.lt.s32.totalorder %s13, 3
    %p247 = pnand %p245, %p246
    %p248 = pneg %p247
    // Predicated region
    $region45: #{prototypical_forward_batched.1} parent=5 // pred_check
      _
    $region46: #{prototypical_forward_batched.1} parent=5 // pred_check_branch
      %250 = sbr.rel (%p247) target = $region48
    $region47: #{prototypical_forward_batched.1} parent=5 // pred_region
      %s251 = ssub.s32 %s13, 1
      %p252 = scmp.lt.s32.totalorder %s18, 1
      %s253 = scalar_select %p252, %s18, 1
      %s254 = smul.addr %s253, 26
      %s255 = smul.addr %s254, 2
      %s256 = scalar_lea.vmem %s0, %s255
      %p257 = pneg %p39
      %p258 = pneg %p36
      %p259 = pneg %p60
      %p260 = pneg %p57
      %p261 = pneg %p81
      %p262 = pneg %p78
      %p263 = pneg %p102
      %p264 = pneg %p99
      %p265 = pneg %p123
      %p266 = pneg %p120
      %p267 = pneg %p144
      %p268 = pneg %p141
      %p269 = scmp.lt.s32.totalorder %s18, 1
      %s270 = scalar_select %p269, %s18, 1
      %s271 = smul.addr %s270, 2
      %s272 = scalar_lea.vmem %s6, %s271
      %p273 = pneg %p170
      %p274 = pneg %p167
      %p275 = pneg %p196
      %p276 = pneg %p193
      %p277 = scmp.lt.s32.totalorder %s18, 1
      %s278 = scalar_select %p277, %s18, 1
      %s279 = smul.addr %s278, 4
      %s280 = scalar_lea.vmem %s7, %s279
      %p281 = scmp.lt.s32.totalorder %s18, 1
      %s282 = scalar_select %p281, %s18, 1
      %s283 = smul.addr %s282, 26
      %s284 = smul.addr %s283, 2
      %s285 = scalar_lea.vmem %s0, %s284
      %p286 = scmp.lt.s32.totalorder %s18, 1
      %s287 = scalar_select %p286, %s18, 1
      %s288 = smul.addr %s287, 2
      %s289 = scalar_lea.vmem %s6, %s288
      %p290 = scmp.lt.s32.totalorder %s18, 1
      %s291 = scalar_select %p290, %s18, 1
      %s292 = smul.addr %s291, 4
      %s293 = scalar_lea.vmem %s7, %s292
      %v295 = vld [vmem:[%s1] sm:$0xf]
      %v296 = vld [vmem:[%s285] sm:$0xff]
      %v297 = vld [vmem:[%s285 + $0x8] sm:$0xff]
      %v298 = vld [vmem:[%s285 + $0x10] sm:$0xff]
      %v299 = vld [vmem:[%s285 + $0x18] sm:$0xff]
      %v300 = vld [vmem:[%s285 + $0x20] sm:$0xff]
      %v301 = vld [vmem:[%s285 + $0x28] sm:$0xff]
      %v302 = vld [vmem:[%s285 + $0x30] sm:$0xf]
      %s303 = scalar_lea.vmem %s1, 4
      %v304 = vld [vmem:[%s303] sm:$0xf]
      %v312 = vcombine.high %v296, %v296
      %v314 = vunpack.c.l.s4 1983009808
      %v315 = vunpack.c.0.s8 %v314
      %v316 = vlaneseq
      %v317 = vshrl.u32 %v316, 7
      %v318 = vsub.s32 %v315, %v317
      %v319 = vrot.slane %v296, %v318
      %v321 = vunpack.c.l.s4 1983009808
      %v322 = vunpack.c.0.s8 %v321
      %v323 = vlaneseq
      %v324 = vshrl.u32 %v323, 7
      %v325 = vsub.s32 %v322, %v324
      %v326 = vrot.slane %v312, %v325
      %v327 = vcombine.high %v319, %v319
      %v328 = vcombine.high %v326, %v326
      %v329 = vcombine.high %v297, %v297
      %v331 = vunpack.c.l.s4 1983009808
      %v332 = vunpack.c.0.s8 %v331
      %v333 = vlaneseq
      %v334 = vshrl.u32 %v333, 7
      %v335 = vsub.s32 %v332, %v334
      %v336 = vrot.slane %v297, %v335
      %v338 = vunpack.c.l.s4 1983009808
      %v339 = vunpack.c.0.s8 %v338
      %v340 = vlaneseq
      %v341 = vshrl.u32 %v340, 7
      %v342 = vsub.s32 %v339, %v341
      %v343 = vrot.slane %v329, %v342
      %v344 = vcombine.high %v336, %v336
      %v345 = vcombine.high %v343, %v343
      %v346 = vcombine.high %v298, %v298
      %v348 = vunpack.c.l.s4 1983009808
      %v349 = vunpack.c.0.s8 %v348
      %v350 = vlaneseq
      %v351 = vshrl.u32 %v350, 7
      %v352 = vsub.s32 %v349, %v351
      %v353 = vrot.slane %v298, %v352
      %v355 = vunpack.c.l.s4 1983009808
      %v356 = vunpack.c.0.s8 %v355
      %v357 = vlaneseq
      %v358 = vshrl.u32 %v357, 7
      %v359 = vsub.s32 %v356, %v358
      %v360 = vrot.slane %v346, %v359
      %v361 = vcombine.high %v353, %v353
      %v362 = vcombine.high %v360, %v360
      %v363 = vcombine.high %v299, %v299
      %v365 = vunpack.c.l.s4 1983009808
      %v366 = vunpack.c.0.s8 %v365
      %v367 = vlaneseq
      %v368 = vshrl.u32 %v367, 7
      %v369 = vsub.s32 %v366, %v368
      %v370 = vrot.slane %v299, %v369
      %v372 = vunpack.c.l.s4 1983009808
      %v373 = vunpack.c.0.s8 %v372
      %v374 = vlaneseq
      %v375 = vshrl.u32 %v374, 7
      %v376 = vsub.s32 %v373, %v375
      %v377 = vrot.slane %v363, %v376
      %v378 = vcombine.high %v370, %v370
      %v379 = vcombine.high %v377, %v377
      %v380 = vcombine.high %v300, %v300
      %v382 = vunpack.c.l.s4 1983009808
      %v383 = vunpack.c.0.s8 %v382
      %v384 = vlaneseq
      %v385 = vshrl.u32 %v384, 7
      %v386 = vsub.s32 %v383, %v385
      %v387 = vrot.slane %v300, %v386
      %v389 = vunpack.c.l.s4 1983009808
      %v390 = vunpack.c.0.s8 %v389
      %v391 = vlaneseq
      %v392 = vshrl.u32 %v391, 7
      %v393 = vsub.s32 %v390, %v392
      %v394 = vrot.slane %v380, %v393
      %v395 = vcombine.high %v387, %v387
      %v396 = vcombine.high %v394, %v394
      %v397 = vcombine.high %v301, %v301
      %v399 = vunpack.c.l.s4 1983009808
      %v400 = vunpack.c.0.s8 %v399
      %v401 = vlaneseq
      %v402 = vshrl.u32 %v401, 7
      %v403 = vsub.s32 %v400, %v402
      %v404 = vrot.slane %v301, %v403
      %v406 = vunpack.c.l.s4 1983009808
      %v407 = vunpack.c.0.s8 %v406
      %v408 = vlaneseq
      %v409 = vshrl.u32 %v408, 7
      %v410 = vsub.s32 %v407, %v409
      %v411 = vrot.slane %v397, %v410
      %v412 = vcombine.high %v404, %v404
      %v413 = vcombine.high %v411, %v411
      %v415 = vunpack.c.l.s4 1983009808
      %v416 = vunpack.c.0.s8 %v415
      %v417 = vlaneseq
      %v418 = vshrl.u32 %v417, 7
      %v419 = vsub.s32 %v416, %v418
      %v420 = vrot.slane %v302, %v419
      %v421 = vcombine.high %v420, %v420
      %422 = vrot.lane.b32.xlu0 %v319, 127
      %v423 = vpop.permute.xlu0 %422
      %424 = vrot.lane.b32.xlu0 %v327, 127
      %v425 = vpop.permute.xlu0 %424
      %426 = vrot.lane.b32.xlu0 %v326, 127
      %v427 = vpop.permute.xlu0 %426
      %428 = vrot.lane.b32.xlu0 %v328, 127
      %v429 = vpop.permute.xlu0 %428
      %430 = vrot.lane.b32.xlu0 %v336, 127
      %v431 = vpop.permute.xlu0 %430
      %432 = vrot.lane.b32.xlu0 %v344, 127
      %v433 = vpop.permute.xlu0 %432
      %434 = vrot.lane.b32.xlu0 %v343, 127
      %v435 = vpop.permute.xlu0 %434
      %436 = vrot.lane.b32.xlu0 %v345, 127
      %v437 = vpop.permute.xlu0 %436
      %438 = vrot.lane.b32.xlu0 %v353, 127
      %v439 = vpop.permute.xlu0 %438
      %440 = vrot.lane.b32.xlu0 %v361, 127
      %v441 = vpop.permute.xlu0 %440
      %442 = vrot.lane.b32.xlu0 %v360, 127
      %v443 = vpop.permute.xlu0 %442
      %444 = vrot.lane.b32.xlu0 %v362, 127
      %v445 = vpop.permute.xlu0 %444
      %446 = vrot.lane.b32.xlu0 %v370, 127
      %v447 = vpop.permute.xlu0 %446
      %448 = vrot.lane.b32.xlu0 %v378, 127
      %v449 = vpop.permute.xlu0 %448
      %450 = vrot.lane.b32.xlu0 %v377, 127
      %v451 = vpop.permute.xlu0 %450
      %452 = vrot.lane.b32.xlu0 %v379, 127
      %v453 = vpop.permute.xlu0 %452
      %454 = vrot.lane.b32.xlu0 %v387, 127
      %v455 = vpop.permute.xlu0 %454
      %456 = vrot.lane.b32.xlu0 %v395, 127
      %v457 = vpop.permute.xlu0 %456
      %458 = vrot.lane.b32.xlu0 %v394, 127
      %v459 = vpop.permute.xlu0 %458
      %460 = vrot.lane.b32.xlu0 %v396, 127
      %v461 = vpop.permute.xlu0 %460
      %462 = vrot.lane.b32.xlu0 %v404, 127
      %v463 = vpop.permute.xlu0 %462
      %464 = vrot.lane.b32.xlu0 %v412, 127
      %v465 = vpop.permute.xlu0 %464
      %466 = vrot.lane.b32.xlu0 %v411, 127
      %v467 = vpop.permute.xlu0 %466
      %468 = vrot.lane.b32.xlu0 %v413, 127
      %v469 = vpop.permute.xlu0 %468
      %470 = vrot.lane.b32.xlu0 %v420, 127
      %v471 = vpop.permute.xlu0 %470
      %472 = vrot.lane.b32.xlu0 %v421, 127
      %v473 = vpop.permute.xlu0 %472
      %vm474 = vcmask 1039360
      %v475 = vsel %vm474, %v423, %v425
      %v476 = vsel %vm474, %v425, %v427
      %v477 = vsel %vm474, %v427, %v429
      %v478 = vsel %vm474, %v429, %v431
      %v479 = vsel %vm474, %v431, %v433
      %v480 = vsel %vm474, %v433, %v435
      %v481 = vsel %vm474, %v435, %v437
      %v482 = vsel %vm474, %v437, %v439
      %v483 = vsel %vm474, %v439, %v441
      %v484 = vsel %vm474, %v441, %v443
      %v485 = vsel %vm474, %v443, %v445
      %v486 = vsel %vm474, %v445, %v447
      %v487 = vsel %vm474, %v447, %v449
      %v488 = vsel %vm474, %v449, %v451
      %v489 = vsel %vm474, %v451, %v453
      %v490 = vsel %vm474, %v453, %v455
      %v491 = vsel %vm474, %v455, %v457
      %v492 = vsel %vm474, %v457, %v459
      %v493 = vsel %vm474, %v459, %v461
      %v494 = vsel %vm474, %v461, %v463
      %v495 = vsel %vm474, %v463, %v465
      %v496 = vsel %vm474, %v465, %v467
      %v497 = vsel %vm474, %v467, %v469
      %v498 = vsel %vm474, %v469, %v471
      %v499 = vsel %vm474, %v471, %v473
      %vm500 = vcmask 31744
      %v502 = vsel %vm500, %v304, 0
      %vm504 = vcmask 1041408
      %v506 = vsel %vm504, %v475, 0
      %v509 = vsel %vm504, %v476, 0
      %v512 = vsel %vm504, %v477, 0
      %v515 = vsel %vm504, %v478, 0
      %v518 = vsel %vm504, %v479, 0
      %v521 = vsel %vm504, %v480, 0
      %v524 = vsel %vm504, %v481, 0
      %v527 = vsel %vm504, %v482, 0
      %v530 = vsel %vm504, %v483, 0
      %v533 = vsel %vm504, %v484, 0
      %v536 = vsel %vm504, %v485, 0
      %v539 = vsel %vm504, %v486, 0
      %v542 = vsel %vm504, %v487, 0
      %v545 = vsel %vm504, %v488, 0
      %v548 = vsel %vm504, %v489, 0
      %v551 = vsel %vm504, %v490, 0
      %v554 = vsel %vm504, %v491, 0
      %v557 = vsel %vm504, %v492, 0
      %v560 = vsel %vm504, %v493, 0
      %v563 = vsel %vm504, %v494, 0
      %v566 = vsel %vm504, %v495, 0
      %v569 = vsel %vm504, %v496, 0
      %v572 = vsel %vm504, %v497, 0
      %v575 = vsel %vm504, %v498, 0
      %v578 = vsel %vm504, %v499, 0
      %v581 = vsel %vm504, %v473, 0
      %583 = vmatprep.subr.bf16.mxu0 0
      %584 = vmatpush1.bf16.msra.mxu0 0
      %585 = vmatprep.subr.bf16.mxu0 0
      %586 = vmatpush1.bf16.msra.mxu0 0
      %587 = vmatprep.subr.bf16.mxu0 0
      %588 = vmatpush1.bf16.msra.mxu0 0
      %589 = vmatprep.subr.bf16.mxu0 0
      %590 = vmatpush1.bf16.msra.mxu0 0
      %591 = vmatprep.subr.bf16.mxu0 0
      %592 = vmatpush1.bf16.msra.mxu0 0
      %593 = vmatprep.subr.bf16.mxu0 0
      %594 = vmatpush1.bf16.msra.mxu0 0
      %595 = vmatprep.subr.bf16.mxu0 0
      %596 = vmatpush1.bf16.msra.mxu0 0
      %597 = vmatprep.subr.bf16.mxu0 %v509
      %598 = vmatpush1.bf16.msra.mxu0 %v506
      %599 = vmatprep.subr.bf16.mxu0 0
      %600 = vmatpush2.bf16.msra.mxu0 0
      %601 = vmatprep.subr.bf16.mxu0 0
      %602 = vmatpush2.bf16.msra.mxu0 0
      %603 = vmatprep.subr.bf16.mxu0 0
      %604 = vmatpush2.bf16.msra.mxu0 0
      %605 = vmatprep.subr.bf16.mxu0 0
      %606 = vmatpush2.bf16.msra.mxu0 0
      %607 = vmatprep.subr.bf16.mxu0 0
      %608 = vmatpush2.bf16.msra.mxu0 0
      %609 = vmatprep.subr.bf16.mxu0 0
      %610 = vmatpush2.bf16.msra.mxu0 0
      %611 = vmatprep.subr.bf16.mxu0 0
      %612 = vmatpush2.bf16.msra.mxu0 0
      %613 = vmatprep.subr.bf16.mxu0 0
      %614 = vmatpush2.bf16.msra.mxu0 0
      %615 = vmatprep.mubr.bf16.mxu0 0
      %616 = vmatmul.mubr.bf16.gmra.mxu0 %v502
      %v617 = vpop.f32.mrf.mxu0
      %v618 = vadd.f32 0.0, %v617
      %v619 = vpop.f32.mrf.mxu0
      %v620 = vadd.f32 0.0, %v619
      %v621 = vpop.f32.mrf.mxu0
      %v622 = vpop.f32.mrf.mxu0
      %623 = vdwg.mxu0
      %624 = vmatprep.subr.bf16.mxu0 0
      %625 = vmatpush1.bf16.msra.mxu0 0
      %626 = vmatprep.subr.bf16.mxu0 0
      %627 = vmatpush1.bf16.msra.mxu0 0
      %628 = vmatprep.subr.bf16.mxu0 0
      %629 = vmatpush1.bf16.msra.mxu0 0
      %630 = vmatprep.subr.bf16.mxu0 0
      %631 = vmatpush1.bf16.msra.mxu0 0
      %632 = vmatprep.subr.bf16.mxu0 0
      %633 = vmatpush1.bf16.msra.mxu0 0
      %634 = vmatprep.subr.bf16.mxu0 0
      %635 = vmatpush1.bf16.msra.mxu0 0
      %636 = vmatprep.subr.bf16.mxu0 0
      %637 = vmatpush1.bf16.msra.mxu0 0
      %638 = vmatprep.subr.bf16.mxu0 %v515
      %639 = vmatpush1.bf16.msra.mxu0 %v512
      %640 = vmatprep.subr.bf16.mxu0 0
      %641 = vmatpush2.bf16.msra.mxu0 0
      %642 = vmatprep.subr.bf16.mxu0 0
      %643 = vmatpush2.bf16.msra.mxu0 0
      %644 = vmatprep.subr.bf16.mxu0 0
      %645 = vmatpush2.bf16.msra.mxu0 0
      %646 = vmatprep.subr.bf16.mxu0 0
      %647 = vmatpush2.bf16.msra.mxu0 0
      %648 = vmatprep.subr.bf16.mxu0 0
      %649 = vmatpush2.bf16.msra.mxu0 0
      %650 = vmatprep.subr.bf16.mxu0 0
      %651 = vmatpush2.bf16.msra.mxu0 0
      %652 = vmatprep.subr.bf16.mxu0 0
      %653 = vmatpush2.bf16.msra.mxu0 0
      %654 = vmatprep.subr.bf16.mxu0 0
      %655 = vmatpush2.bf16.msra.mxu0 0
      %656 = vmatprep.mubr.bf16.mxu0 0
      %657 = vmatmul.mubr.bf16.gmra.mxu0 %v502
      %v658 = vpop.f32.mrf.mxu0
      %v659 = vadd.f32 0.0, %v658
      %v660 = vpop.f32.mrf.mxu0
      %v661 = vadd.f32 0.0, %v660
      %v662 = vpop.f32.mrf.mxu0
      %v663 = vpop.f32.mrf.mxu0
      %664 = vdwg.mxu0
      %665 = vmatprep.subr.bf16.mxu0 0
      %666 = vmatpush1.bf16.msra.mxu0 0
      %667 = vmatprep.subr.bf16.mxu0 0
      %668 = vmatpush1.bf16.msra.mxu0 0
      %669 = vmatprep.subr.bf16.mxu0 0
      %670 = vmatpush1.bf16.msra.mxu0 0
      %671 = vmatprep.subr.bf16.mxu0 0
      %672 = vmatpush1.bf16.msra.mxu0 0
      %673 = vmatprep.subr.bf16.mxu0 0
      %674 = vmatpush1.bf16.msra.mxu0 0
      %675 = vmatprep.subr.bf16.mxu0 0
      %676 = vmatpush1.bf16.msra.mxu0 0
      %677 = vmatprep.subr.bf16.mxu0 0
      %678 = vmatpush1.bf16.msra.mxu0 0
      %679 = vmatprep.subr.bf16.mxu0 %v521
      %680 = vmatpush1.bf16.msra.mxu0 %v518
      %681 = vmatprep.subr.bf16.mxu0 0
      %682 = vmatpush2.bf16.msra.mxu0 0
      %683 = vmatprep.subr.bf16.mxu0 0
      %684 = vmatpush2.bf16.msra.mxu0 0
      %685 = vmatprep.subr.bf16.mxu0 0
      %686 = vmatpush2.bf16.msra.mxu0 0
      %687 = vmatprep.subr.bf16.mxu0 0
      %688 = vmatpush2.bf16.msra.mxu0 0
      %689 = vmatprep.subr.bf16.mxu0 0
      %690 = vmatpush2.bf16.msra.mxu0 0
      %691 = vmatprep.subr.bf16.mxu0 0
      %692 = vmatpush2.bf16.msra.mxu0 0
      %693 = vmatprep.subr.bf16.mxu0 0
      %694 = vmatpush2.bf16.msra.mxu0 0
      %695 = vmatprep.subr.bf16.mxu0 0
      %696 = vmatpush2.bf16.msra.mxu0 0
      %697 = vmatprep.mubr.bf16.mxu0 0
      %698 = vmatmul.mubr.bf16.gmra.mxu0 %v502
      %v699 = vpop.f32.mrf.mxu0
      %v700 = vadd.f32 0.0, %v699
      %v701 = vpop.f32.mrf.mxu0
      %v702 = vadd.f32 0.0, %v701
      %v703 = vpop.f32.mrf.mxu0
      %v704 = vpop.f32.mrf.mxu0
      %705 = vdwg.mxu0
      %706 = vmatprep.subr.bf16.mxu0 0
      %707 = vmatpush1.bf16.msra.mxu0 0
      %708 = vmatprep.subr.bf16.mxu0 0
      %709 = vmatpush1.bf16.msra.mxu0 0
      %710 = vmatprep.subr.bf16.mxu0 0
      %711 = vmatpush1.bf16.msra.mxu0 0
      %712 = vmatprep.subr.bf16.mxu0 0
      %713 = vmatpush1.bf16.msra.mxu0 0
      %714 = vmatprep.subr.bf16.mxu0 0
      %715 = vmatpush1.bf16.msra.mxu0 0
      %716 = vmatprep.subr.bf16.mxu0 0
      %717 = vmatpush1.bf16.msra.mxu0 0
      %718 = vmatprep.subr.bf16.mxu0 0
      %719 = vmatpush1.bf16.msra.mxu0 0
      %720 = vmatprep.subr.bf16.mxu0 %v527
      %721 = vmatpush1.bf16.msra.mxu0 %v524
      %722 = vmatprep.subr.bf16.mxu0 0
      %723 = vmatpush2.bf16.msra.mxu0 0
      %724 = vmatprep.subr.bf16.mxu0 0
      %725 = vmatpush2.bf16.msra.mxu0 0
      %726 = vmatprep.subr.bf16.mxu0 0
      %727 = vmatpush2.bf16.msra.mxu0 0
      %728 = vmatprep.subr.bf16.mxu0 0
      %729 = vmatpush2.bf16.msra.mxu0 0
      %730 = vmatprep.subr.bf16.mxu0 0
      %731 = vmatpush2.bf16.msra.mxu0 0
      %732 = vmatprep.subr.bf16.mxu0 0
      %733 = vmatpush2.bf16.msra.mxu0 0
      %734 = vmatprep.subr.bf16.mxu0 0
      %735 = vmatpush2.bf16.msra.mxu0 0
      %736 = vmatprep.subr.bf16.mxu0 0
      %737 = vmatpush2.bf16.msra.mxu0 0
      %738 = vmatprep.mubr.bf16.mxu0 0
      %739 = vmatmul.mubr.bf16.gmra.mxu0 %v502
      %v740 = vpop.f32.mrf.mxu0
      %v741 = vadd.f32 0.0, %v740
      %v742 = vpop.f32.mrf.mxu0
      %v743 = vadd.f32 0.0, %v742
      %v744 = vpop.f32.mrf.mxu0
      %v745 = vpop.f32.mrf.mxu0
      %746 = vdwg.mxu0
      %747 = vmatprep.subr.bf16.mxu0 0
      %748 = vmatpush1.bf16.msra.mxu0 0
      %749 = vmatprep.subr.bf16.mxu0 0
      %750 = vmatpush1.bf16.msra.mxu0 0
      %751 = vmatprep.subr.bf16.mxu0 0
      %752 = vmatpush1.bf16.msra.mxu0 0
      %753 = vmatprep.subr.bf16.mxu0 0
      %754 = vmatpush1.bf16.msra.mxu0 0
      %755 = vmatprep.subr.bf16.mxu0 0
      %756 = vmatpush1.bf16.msra.mxu0 0
      %757 = vmatprep.subr.bf16.mxu0 0
      %758 = vmatpush1.bf16.msra.mxu0 0
      %759 = vmatprep.subr.bf16.mxu0 0
      %760 = vmatpush1.bf16.msra.mxu0 0
      %761 = vmatprep.subr.bf16.mxu0 %v533
      %762 = vmatpush1.bf16.msra.mxu0 %v530
      %763 = vmatprep.subr.bf16.mxu0 0
      %764 = vmatpush2.bf16.msra.mxu0 0
      %765 = vmatprep.subr.bf16.mxu0 0
      %766 = vmatpush2.bf16.msra.mxu0 0
      %767 = vmatprep.subr.bf16.mxu0 0
      %768 = vmatpush2.bf16.msra.mxu0 0
      %769 = vmatprep.subr.bf16.mxu0 0
      %770 = vmatpush2.bf16.msra.mxu0 0
      %771 = vmatprep.subr.bf16.mxu0 0
      %772 = vmatpush2.bf16.msra.mxu0 0
      %773 = vmatprep.subr.bf16.mxu0 0
      %774 = vmatpush2.bf16.msra.mxu0 0
      %775 = vmatprep.subr.bf16.mxu0 0
      %776 = vmatpush2.bf16.msra.mxu0 0
      %777 = vmatprep.subr.bf16.mxu0 0
      %778 = vmatpush2.bf16.msra.mxu0 0
      %779 = vmatprep.mubr.bf16.mxu0 0
      %780 = vmatmul.mubr.bf16.gmra.mxu0 %v502
      %v781 = vpop.f32.mrf.mxu0
      %v782 = vadd.f32 0.0, %v781
      %v783 = vpop.f32.mrf.mxu0
      %v784 = vadd.f32 0.0, %v783
      %v785 = vpop.f32.mrf.mxu0
      %v786 = vpop.f32.mrf.mxu0
      %787 = vdwg.mxu0
      %788 = vmatprep.subr.bf16.mxu0 0
      %789 = vmatpush1.bf16.msra.mxu0 0
      %790 = vmatprep.subr.bf16.mxu0 0
      %791 = vmatpush1.bf16.msra.mxu0 0
      %792 = vmatprep.subr.bf16.mxu0 0
      %793 = vmatpush1.bf16.msra.mxu0 0
      %794 = vmatprep.subr.bf16.mxu0 0
      %795 = vmatpush1.bf16.msra.mxu0 0
      %796 = vmatprep.subr.bf16.mxu0 0
      %797 = vmatpush1.bf16.msra.mxu0 0
      %798 = vmatprep.subr.bf16.mxu0 0
      %799 = vmatpush1.bf16.msra.mxu0 0
      %800 = vmatprep.subr.bf16.mxu0 0
      %801 = vmatpush1.bf16.msra.mxu0 0
      %802 = vmatprep.subr.bf16.mxu0 %v539
      %803 = vmatpush1.bf16.msra.mxu0 %v536
      %804 = vmatprep.subr.bf16.mxu0 0
      %805 = vmatpush2.bf16.msra.mxu0 0
      %806 = vmatprep.subr.bf16.mxu0 0
      %807 = vmatpush2.bf16.msra.mxu0 0
      %808 = vmatprep.subr.bf16.mxu0 0
      %809 = vmatpush2.bf16.msra.mxu0 0
      %810 = vmatprep.subr.bf16.mxu0 0
      %811 = vmatpush2.bf16.msra.mxu0 0
      %812 = vmatprep.subr.bf16.mxu0 0
      %813 = vmatpush2.bf16.msra.mxu0 0
      %814 = vmatprep.subr.bf16.mxu0 0
      %815 = vmatpush2.bf16.msra.mxu0 0
      %816 = vmatprep.subr.bf16.mxu0 0
      %817 = vmatpush2.bf16.msra.mxu0 0
      %818 = vmatprep.subr.bf16.mxu0 0
      %819 = vmatpush2.bf16.msra.mxu0 0
      %820 = vmatprep.mubr.bf16.mxu0 0
      %821 = vmatmul.mubr.bf16.gmra.mxu0 %v502
      %v822 = vpop.f32.mrf.mxu0
      %v823 = vadd.f32 0.0, %v822
      %v824 = vpop.f32.mrf.mxu0
      %v825 = vadd.f32 0.0, %v824
      %v826 = vpop.f32.mrf.mxu0
      %v827 = vpop.f32.mrf.mxu0
      %828 = vdwg.mxu0
      %829 = vmatprep.subr.bf16.mxu0 0
      %830 = vmatpush1.bf16.msra.mxu0 0
      %831 = vmatprep.subr.bf16.mxu0 0
      %832 = vmatpush1.bf16.msra.mxu0 0
      %833 = vmatprep.subr.bf16.mxu0 0
      %834 = vmatpush1.bf16.msra.mxu0 0
      %835 = vmatprep.subr.bf16.mxu0 0
      %836 = vmatpush1.bf16.msra.mxu0 0
      %837 = vmatprep.subr.bf16.mxu0 0
      %838 = vmatpush1.bf16.msra.mxu0 0
      %839 = vmatprep.subr.bf16.mxu0 0
      %840 = vmatpush1.bf16.msra.mxu0 0
      %841 = vmatprep.subr.bf16.mxu0 0
      %842 = vmatpush1.bf16.msra.mxu0 0
      %843 = vmatprep.subr.bf16.mxu0 %v545
      %844 = vmatpush1.bf16.msra.mxu0 %v542
      %845 = vmatprep.subr.bf16.mxu0 0
      %846 = vmatpush2.bf16.msra.mxu0 0
      %847 = vmatprep.subr.bf16.mxu0 0
      %848 = vmatpush2.bf16.msra.mxu0 0
      %849 = vmatprep.subr.bf16.mxu0 0
      %850 = vmatpush2.bf16.msra.mxu0 0
      %851 = vmatprep.subr.bf16.mxu0 0
      %852 = vmatpush2.bf16.msra.mxu0 0
      %853 = vmatprep.subr.bf16.mxu0 0
      %854 = vmatpush2.bf16.msra.mxu0 0
      %855 = vmatprep.subr.bf16.mxu0 0
      %856 = vmatpush2.bf16.msra.mxu0 0
      %857 = vmatprep.subr.bf16.mxu0 0
      %858 = vmatpush2.bf16.msra.mxu0 0
      %859 = vmatprep.subr.bf16.mxu0 0
      %860 = vmatpush2.bf16.msra.mxu0 0
      %861 = vmatprep.mubr.bf16.mxu0 0
      %862 = vmatmul.mubr.bf16.gmra.mxu0 %v502
      %v863 = vpop.f32.mrf.mxu0
      %v864 = vadd.f32 0.0, %v863
      %v865 = vpop.f32.mrf.mxu0
      %v866 = vadd.f32 0.0, %v865
      %v867 = vpop.f32.mrf.mxu0
      %v868 = vpop.f32.mrf.mxu0
      %869 = vdwg.mxu0
      %870 = vmatprep.subr.bf16.mxu0 0
      %871 = vmatpush1.bf16.msra.mxu0 0
      %872 = vmatprep.subr.bf16.mxu0 0
      %873 = vmatpush1.bf16.msra.mxu0 0
      %874 = vmatprep.subr.bf16.mxu0 0
      %875 = vmatpush1.bf16.msra.mxu0 0
      %876 = vmatprep.subr.bf16.mxu0 0
      %877 = vmatpush1.bf16.msra.mxu0 0
      %878 = vmatprep.subr.bf16.mxu0 0
      %879 = vmatpush1.bf16.msra.mxu0 0
      %880 = vmatprep.subr.bf16.mxu0 0
      %881 = vmatpush1.bf16.msra.mxu0 0
      %882 = vmatprep.subr.bf16.mxu0 0
      %883 = vmatpush1.bf16.msra.mxu0 0
      %884 = vmatprep.subr.bf16.mxu0 %v551
      %885 = vmatpush1.bf16.msra.mxu0 %v548
      %886 = vmatprep.subr.bf16.mxu0 0
      %887 = vmatpush2.bf16.msra.mxu0 0
      %888 = vmatprep.subr.bf16.mxu0 0
      %889 = vmatpush2.bf16.msra.mxu0 0
      %890 = vmatprep.subr.bf16.mxu0 0
      %891 = vmatpush2.bf16.msra.mxu0 0
      %892 = vmatprep.subr.bf16.mxu0 0
      %893 = vmatpush2.bf16.msra.mxu0 0
      %894 = vmatprep.subr.bf16.mxu0 0
      %895 = vmatpush2.bf16.msra.mxu0 0
      %896 = vmatprep.subr.bf16.mxu0 0
      %897 = vmatpush2.bf16.msra.mxu0 0
      %898 = vmatprep.subr.bf16.mxu0 0
      %899 = vmatpush2.bf16.msra.mxu0 0
      %900 = vmatprep.subr.bf16.mxu0 0
      %901 = vmatpush2.bf16.msra.mxu0 0
      %902 = vmatprep.mubr.bf16.mxu0 0
      %903 = vmatmul.mubr.bf16.gmra.mxu0 %v502
      %v904 = vpop.f32.mrf.mxu0
      %v905 = vadd.f32 0.0, %v904
      %v906 = vpop.f32.mrf.mxu0
      %v907 = vadd.f32 0.0, %v906
      %v908 = vpop.f32.mrf.mxu0
      %v909 = vpop.f32.mrf.mxu0
      %910 = vdwg.mxu0
      %911 = vmatprep.subr.bf16.mxu0 0
      %912 = vmatpush1.bf16.msra.mxu0 0
      %913 = vmatprep.subr.bf16.mxu0 0
      %914 = vmatpush1.bf16.msra.mxu0 0
      %915 = vmatprep.subr.bf16.mxu0 0
      %916 = vmatpush1.bf16.msra.mxu0 0
      %917 = vmatprep.subr.bf16.mxu0 0
      %918 = vmatpush1.bf16.msra.mxu0 0
      %919 = vmatprep.subr.bf16.mxu0 0
      %920 = vmatpush1.bf16.msra.mxu0 0
      %921 = vmatprep.subr.bf16.mxu0 0
      %922 = vmatpush1.bf16.msra.mxu0 0
      %923 = vmatprep.subr.bf16.mxu0 0
      %924 = vmatpush1.bf16.msra.mxu0 0
      %925 = vmatprep.subr.bf16.mxu0 %v557
      %926 = vmatpush1.bf16.msra.mxu0 %v554
      %927 = vmatprep.subr.bf16.mxu0 0
      %928 = vmatpush2.bf16.msra.mxu0 0
      %929 = vmatprep.subr.bf16.mxu0 0
      %930 = vmatpush2.bf16.msra.mxu0 0
      %931 = vmatprep.subr.bf16.mxu0 0
      %932 = vmatpush2.bf16.msra.mxu0 0
      %933 = vmatprep.subr.bf16.mxu0 0
      %934 = vmatpush2.bf16.msra.mxu0 0
      %935 = vmatprep.subr.bf16.mxu0 0
      %936 = vmatpush2.bf16.msra.mxu0 0
      %937 = vmatprep.subr.bf16.mxu0 0
      %938 = vmatpush2.bf16.msra.mxu0 0
      %939 = vmatprep.subr.bf16.mxu0 0
      %940 = vmatpush2.bf16.msra.mxu0 0
      %941 = vmatprep.subr.bf16.mxu0 0
      %942 = vmatpush2.bf16.msra.mxu0 0
      %943 = vmatprep.mubr.bf16.mxu0 0
      %944 = vmatmul.mubr.bf16.gmra.mxu0 %v502
      %v945 = vpop.f32.mrf.mxu0
      %v946 = vadd.f32 0.0, %v945
      %v947 = vpop.f32.mrf.mxu0
      %v948 = vadd.f32 0.0, %v947
      %v949 = vpop.f32.mrf.mxu0
      %v950 = vpop.f32.mrf.mxu0
      %951 = vdwg.mxu0
      %952 = vmatprep.subr.bf16.mxu0 0
      %953 = vmatpush1.bf16.msra.mxu0 0
      %954 = vmatprep.subr.bf16.mxu0 0
      %955 = vmatpush1.bf16.msra.mxu0 0
      %956 = vmatprep.subr.bf16.mxu0 0
      %957 = vmatpush1.bf16.msra.mxu0 0
      %958 = vmatprep.subr.bf16.mxu0 0
      %959 = vmatpush1.bf16.msra.mxu0 0
      %960 = vmatprep.subr.bf16.mxu0 0
      %961 = vmatpush1.bf16.msra.mxu0 0
      %962 = vmatprep.subr.bf16.mxu0 0
      %963 = vmatpush1.bf16.msra.mxu0 0
      %964 = vmatprep.subr.bf16.mxu0 0
      %965 = vmatpush1.bf16.msra.mxu0 0
      %966 = vmatprep.subr.bf16.mxu0 %v563
      %967 = vmatpush1.bf16.msra.mxu0 %v560
      %968 = vmatprep.subr.bf16.mxu0 0
      %969 = vmatpush2.bf16.msra.mxu0 0
      %970 = vmatprep.subr.bf16.mxu0 0
      %971 = vmatpush2.bf16.msra.mxu0 0
      %972 = vmatprep.subr.bf16.mxu0 0
      %973 = vmatpush2.bf16.msra.mxu0 0
      %974 = vmatprep.subr.bf16.mxu0 0
      %975 = vmatpush2.bf16.msra.mxu0 0
      %976 = vmatprep.subr.bf16.mxu0 0
      %977 = vmatpush2.bf16.msra.mxu0 0
      %978 = vmatprep.subr.bf16.mxu0 0
      %979 = vmatpush2.bf16.msra.mxu0 0
      %980 = vmatprep.subr.bf16.mxu0 0
      %981 = vmatpush2.bf16.msra.mxu0 0
      %982 = vmatprep.subr.bf16.mxu0 0
      %983 = vmatpush2.bf16.msra.mxu0 0
      %984 = vmatprep.mubr.bf16.mxu0 0
      %985 = vmatmul.mubr.bf16.gmra.mxu0 %v502
      %v986 = vpop.f32.mrf.mxu0
      %v987 = vadd.f32 0.0, %v986
      %v988 = vpop.f32.mrf.mxu0
      %v989 = vadd.f32 0.0, %v988
      %v990 = vpop.f32.mrf.mxu0
      %v991 = vpop.f32.mrf.mxu0
      %992 = vdwg.mxu0
      %993 = vmatprep.subr.bf16.mxu0 0
      %994 = vmatpush1.bf16.msra.mxu0 0
      %995 = vmatprep.subr.bf16.mxu0 0
      %996 = vmatpush1.bf16.msra.mxu0 0
      %997 = vmatprep.subr.bf16.mxu0 0
      %998 = vmatpush1.bf16.msra.mxu0 0
      %999 = vmatprep.subr.bf16.mxu0 0
      %1000 = vmatpush1.bf16.msra.mxu0 0
      %1001 = vmatprep.subr.bf16.mxu0 0
      %1002 = vmatpush1.bf16.msra.mxu0 0
      %1003 = vmatprep.subr.bf16.mxu0 0
      %1004 = vmatpush1.bf16.msra.mxu0 0
      %1005 = vmatprep.subr.bf16.mxu0 0
      %1006 = vmatpush1.bf16.msra.mxu0 0
      %1007 = vmatprep.subr.bf16.mxu0 %v569
      %1008 = vmatpush1.bf16.msra.mxu0 %v566
      %1009 = vmatprep.subr.bf16.mxu0 0
      %1010 = vmatpush2.bf16.msra.mxu0 0
      %1011 = vmatprep.subr.bf16.mxu0 0
      %1012 = vmatpush2.bf16.msra.mxu0 0
      %1013 = vmatprep.subr.bf16.mxu0 0
      %1014 = vmatpush2.bf16.msra.mxu0 0
      %1015 = vmatprep.subr.bf16.mxu0 0
      %1016 = vmatpush2.bf16.msra.mxu0 0
      %1017 = vmatprep.subr.bf16.mxu0 0
      %1018 = vmatpush2.bf16.msra.mxu0 0
      %1019 = vmatprep.subr.bf16.mxu0 0
      %1020 = vmatpush2.bf16.msra.mxu0 0
      %1021 = vmatprep.subr.bf16.mxu0 0
      %1022 = vmatpush2.bf16.msra.mxu0 0
      %1023 = vmatprep.subr.bf16.mxu0 0
      %1024 = vmatpush2.bf16.msra.mxu0 0
      %1025 = vmatprep.mubr.bf16.mxu0 0
      %1026 = vmatmul.mubr.bf16.gmra.mxu0 %v502
      %v1027 = vpop.f32.mrf.mxu0
      %v1028 = vadd.f32 0.0, %v1027
      %v1029 = vpop.f32.mrf.mxu0
      %v1030 = vadd.f32 0.0, %v1029
      %v1031 = vpop.f32.mrf.mxu0
      %v1032 = vpop.f32.mrf.mxu0
      %1033 = vdwg.mxu0
      %1034 = vmatprep.subr.bf16.mxu0 0
      %1035 = vmatpush1.bf16.msra.mxu0 0
      %1036 = vmatprep.subr.bf16.mxu0 0
      %1037 = vmatpush1.bf16.msra.mxu0 0
      %1038 = vmatprep.subr.bf16.mxu0 0
      %1039 = vmatpush1.bf16.msra.mxu0 0
      %1040 = vmatprep.subr.bf16.mxu0 0
      %1041 = vmatpush1.bf16.msra.mxu0 0
      %1042 = vmatprep.subr.bf16.mxu0 0
      %1043 = vmatpush1.bf16.msra.mxu0 0
      %1044 = vmatprep.subr.bf16.mxu0 0
      %1045 = vmatpush1.bf16.msra.mxu0 0
      %1046 = vmatprep.subr.bf16.mxu0 0
      %1047 = vmatpush1.bf16.msra.mxu0 0
      %1048 = vmatprep.subr.bf16.mxu0 %v575
      %1049 = vmatpush1.bf16.msra.mxu0 %v572
      %1050 = vmatprep.subr.bf16.mxu0 0
      %1051 = vmatpush2.bf16.msra.mxu0 0
      %1052 = vmatprep.subr.bf16.mxu0 0
      %1053 = vmatpush2.bf16.msra.mxu0 0
      %1054 = vmatprep.subr.bf16.mxu0 0
      %1055 = vmatpush2.bf16.msra.mxu0 0
      %1056 = vmatprep.subr.bf16.mxu0 0
      %1057 = vmatpush2.bf16.msra.mxu0 0
      %1058 = vmatprep.subr.bf16.mxu0 0
      %1059 = vmatpush2.bf16.msra.mxu0 0
      %1060 = vmatprep.subr.bf16.mxu0 0
      %1061 = vmatpush2.bf16.msra.mxu0 0
      %1062 = vmatprep.subr.bf16.mxu0 0
      %1063 = vmatpush2.bf16.msra.mxu0 0
      %1064 = vmatprep.subr.bf16.mxu0 0
      %1065 = vmatpush2.bf16.msra.mxu0 0
      %1066 = vmatprep.mubr.bf16.mxu0 0
      %1067 = vmatmul.mubr.bf16.gmra.mxu0 %v502
      %v1068 = vpop.f32.mrf.mxu0
      %v1069 = vadd.f32 0.0, %v1068
      %v1070 = vpop.f32.mrf.mxu0
      %v1071 = vadd.f32 0.0, %v1070
      %v1072 = vpop.f32.mrf.mxu0
      %v1073 = vpop.f32.mrf.mxu0
      %1074 = vdwg.mxu0
      %1075 = vmatprep.subr.bf16.mxu0 0
      %1076 = vmatpush1.bf16.msra.mxu0 0
      %1077 = vmatprep.subr.bf16.mxu0 0
      %1078 = vmatpush1.bf16.msra.mxu0 0
      %1079 = vmatprep.subr.bf16.mxu0 0
      %1080 = vmatpush1.bf16.msra.mxu0 0
      %1081 = vmatprep.subr.bf16.mxu0 0
      %1082 = vmatpush1.bf16.msra.mxu0 0
      %1083 = vmatprep.subr.bf16.mxu0 0
      %1084 = vmatpush1.bf16.msra.mxu0 0
      %1085 = vmatprep.subr.bf16.mxu0 0
      %1086 = vmatpush1.bf16.msra.mxu0 0
      %1087 = vmatprep.subr.bf16.mxu0 0
      %1088 = vmatpush1.bf16.msra.mxu0 0
      %1089 = vmatprep.subr.bf16.mxu0 %v581
      %1090 = vmatpush1.bf16.msra.mxu0 %v578
      %1091 = vmatprep.subr.bf16.mxu0 0
      %1092 = vmatpush2.bf16.msra.mxu0 0
      %1093 = vmatprep.subr.bf16.mxu0 0
      %1094 = vmatpush2.bf16.msra.mxu0 0
      %1095 = vmatprep.subr.bf16.mxu0 0
      %1096 = vmatpush2.bf16.msra.mxu0 0
      %1097 = vmatprep.subr.bf16.mxu0 0
      %1098 = vmatpush2.bf16.msra.mxu0 0
      %1099 = vmatprep.subr.bf16.mxu0 0
      %1100 = vmatpush2.bf16.msra.mxu0 0
      %1101 = vmatprep.subr.bf16.mxu0 0
      %1102 = vmatpush2.bf16.msra.mxu0 0
      %1103 = vmatprep.subr.bf16.mxu0 0
      %1104 = vmatpush2.bf16.msra.mxu0 0
      %1105 = vmatprep.subr.bf16.mxu0 0
      %1106 = vmatpush2.bf16.msra.mxu0 0
      %1107 = vmatprep.mubr.bf16.mxu0 0
      %1108 = vmatmul.mubr.bf16.gmra.mxu0 %v502
      %v1109 = vpop.f32.mrf.mxu0
      %v1110 = vadd.f32 0.0, %v1109
      %v1111 = vpop.f32.mrf.mxu0
      %v1112 = vadd.f32 0.0, %v1111
      %v1113 = vpop.f32.mrf.mxu0
      %v1114 = vpop.f32.mrf.mxu0
      %1115 = vdwg.mxu0
      %v1117 = vsel %vm500, %v295, 0
      %v1120 = vsel %vm504, %v319, 0
      %v1123 = vsel %vm504, %v327, 0
      %v1126 = vsel %vm504, %v326, 0
      %v1129 = vsel %vm504, %v328, 0
      %v1132 = vsel %vm504, %v336, 0
      %v1135 = vsel %vm504, %v344, 0
      %v1138 = vsel %vm504, %v343, 0
      %v1141 = vsel %vm504, %v345, 0
      %v1144 = vsel %vm504, %v353, 0
      %v1147 = vsel %vm504, %v361, 0
      %v1150 = vsel %vm504, %v360, 0
      %v1153 = vsel %vm504, %v362, 0
      %v1156 = vsel %vm504, %v370, 0
      %v1159 = vsel %vm504, %v378, 0
      %v1162 = vsel %vm504, %v377, 0
      %v1165 = vsel %vm504, %v379, 0
      %v1168 = vsel %vm504, %v387, 0
      %v1171 = vsel %vm504, %v395, 0
      %v1174 = vsel %vm504, %v394, 0
      %v1177 = vsel %vm504, %v396, 0
      %v1180 = vsel %vm504, %v404, 0
      %v1183 = vsel %vm504, %v412, 0
      %v1186 = vsel %vm504, %v411, 0
      %v1189 = vsel %vm504, %v413, 0
      %v1192 = vsel %vm504, %v420, 0
      %v1195 = vsel %vm504, %v421, 0
      %1197 = vmatprep.subr.bf16.mxu0 0
      %1198 = vmatpush1.bf16.msra.mxu0 0
      %1199 = vmatprep.subr.bf16.mxu0 0
      %1200 = vmatpush1.bf16.msra.mxu0 0
      %1201 = vmatprep.subr.bf16.mxu0 0
      %1202 = vmatpush1.bf16.msra.mxu0 0
      %1203 = vmatprep.subr.bf16.mxu0 0
      %1204 = vmatpush1.bf16.msra.mxu0 0
      %1205 = vmatprep.subr.bf16.mxu0 0
      %1206 = vmatpush1.bf16.msra.mxu0 0
      %1207 = vmatprep.subr.bf16.mxu0 0
      %1208 = vmatpush1.bf16.msra.mxu0 0
      %1209 = vmatprep.subr.bf16.mxu0 0
      %1210 = vmatpush1.bf16.msra.mxu0 0
      %1211 = vmatprep.subr.bf16.mxu0 %v1123
      %1212 = vmatpush1.bf16.msra.mxu0 %v1120
      %1213 = vmatprep.subr.bf16.mxu0 0
      %1214 = vmatpush2.bf16.msra.mxu0 0
      %1215 = vmatprep.subr.bf16.mxu0 0
      %1216 = vmatpush2.bf16.msra.mxu0 0
      %1217 = vmatprep.subr.bf16.mxu0 0
      %1218 = vmatpush2.bf16.msra.mxu0 0
      %1219 = vmatprep.subr.bf16.mxu0 0
      %1220 = vmatpush2.bf16.msra.mxu0 0
      %1221 = vmatprep.subr.bf16.mxu0 0
      %1222 = vmatpush2.bf16.msra.mxu0 0
      %1223 = vmatprep.subr.bf16.mxu0 0
      %1224 = vmatpush2.bf16.msra.mxu0 0
      %1225 = vmatprep.subr.bf16.mxu0 0
      %1226 = vmatpush2.bf16.msra.mxu0 0
      %1227 = vmatprep.subr.bf16.mxu0 0
      %1228 = vmatpush2.bf16.msra.mxu0 0
      %1229 = vmatprep.mubr.bf16.mxu0 0
      %1230 = vmatmul.mubr.bf16.gmra.mxu0 %v1117
      %v1231 = vpop.f32.mrf.mxu0
      %v1232 = vadd.f32 %v618, %v1231
      %v1233 = vpop.f32.mrf.mxu0
      %v1234 = vadd.f32 %v620, %v1233
      %v1235 = vpop.f32.mrf.mxu0
      %v1236 = vpop.f32.mrf.mxu0
      %1237 = vdwg.mxu0
      %1238 = vmatprep.subr.bf16.mxu0 0
      %1239 = vmatpush1.bf16.msra.mxu0 0
      %1240 = vmatprep.subr.bf16.mxu0 0
      %1241 = vmatpush1.bf16.msra.mxu0 0
      %1242 = vmatprep.subr.bf16.mxu0 0
      %1243 = vmatpush1.bf16.msra.mxu0 0
      %1244 = vmatprep.subr.bf16.mxu0 0
      %1245 = vmatpush1.bf16.msra.mxu0 0
      %1246 = vmatprep.subr.bf16.mxu0 0
      %1247 = vmatpush1.bf16.msra.mxu0 0
      %1248 = vmatprep.subr.bf16.mxu0 0
      %1249 = vmatpush1.bf16.msra.mxu0 0
      %1250 = vmatprep.subr.bf16.mxu0 0
      %1251 = vmatpush1.bf16.msra.mxu0 0
      %1252 = vmatprep.subr.bf16.mxu0 %v1129
      %1253 = vmatpush1.bf16.msra.mxu0 %v1126
      %1254 = vmatprep.subr.bf16.mxu0 0
      %1255 = vmatpush2.bf16.msra.mxu0 0
      %1256 = vmatprep.subr.bf16.mxu0 0
      %1257 = vmatpush2.bf16.msra.mxu0 0
      %1258 = vmatprep.subr.bf16.mxu0 0
      %1259 = vmatpush2.bf16.msra.mxu0 0
      %1260 = vmatprep.subr.bf16.mxu0 0
      %1261 = vmatpush2.bf16.msra.mxu0 0
      %1262 = vmatprep.subr.bf16.mxu0 0
      %1263 = vmatpush2.bf16.msra.mxu0 0
      %1264 = vmatprep.subr.bf16.mxu0 0
      %1265 = vmatpush2.bf16.msra.mxu0 0
      %1266 = vmatprep.subr.bf16.mxu0 0
      %1267 = vmatpush2.bf16.msra.mxu0 0
      %1268 = vmatprep.subr.bf16.mxu0 0
      %1269 = vmatpush2.bf16.msra.mxu0 0
      %1270 = vmatprep.mubr.bf16.mxu0 0
      %1271 = vmatmul.mubr.bf16.gmra.mxu0 %v1117
      %v1272 = vpop.f32.mrf.mxu0
      %v1273 = vadd.f32 %v659, %v1272
      %v1274 = vpop.f32.mrf.mxu0
      %v1275 = vadd.f32 %v661, %v1274
      %v1276 = vpop.f32.mrf.mxu0
      %v1277 = vpop.f32.mrf.mxu0
      %1278 = vdwg.mxu0
      %1279 = vmatprep.subr.bf16.mxu0 0
      %1280 = vmatpush1.bf16.msra.mxu0 0
      %1281 = vmatprep.subr.bf16.mxu0 0
      %1282 = vmatpush1.bf16.msra.mxu0 0
      %1283 = vmatprep.subr.bf16.mxu0 0
      %1284 = vmatpush1.bf16.msra.mxu0 0
      %1285 = vmatprep.subr.bf16.mxu0 0
      %1286 = vmatpush1.bf16.msra.mxu0 0
      %1287 = vmatprep.subr.bf16.mxu0 0
      %1288 = vmatpush1.bf16.msra.mxu0 0
      %1289 = vmatprep.subr.bf16.mxu0 0
      %1290 = vmatpush1.bf16.msra.mxu0 0
      %1291 = vmatprep.subr.bf16.mxu0 0
      %1292 = vmatpush1.bf16.msra.mxu0 0
      %1293 = vmatprep.subr.bf16.mxu0 %v1135
      %1294 = vmatpush1.bf16.msra.mxu0 %v1132
      %1295 = vmatprep.subr.bf16.mxu0 0
      %1296 = vmatpush2.bf16.msra.mxu0 0
      %1297 = vmatprep.subr.bf16.mxu0 0
      %1298 = vmatpush2.bf16.msra.mxu0 0
      %1299 = vmatprep.subr.bf16.mxu0 0
      %1300 = vmatpush2.bf16.msra.mxu0 0
      %1301 = vmatprep.subr.bf16.mxu0 0
      %1302 = vmatpush2.bf16.msra.mxu0 0
      %1303 = vmatprep.subr.bf16.mxu0 0
      %1304 = vmatpush2.bf16.msra.mxu0 0
      %1305 = vmatprep.subr.bf16.mxu0 0
      %1306 = vmatpush2.bf16.msra.mxu0 0
      %1307 = vmatprep.subr.bf16.mxu0 0
      %1308 = vmatpush2.bf16.msra.mxu0 0
      %1309 = vmatprep.subr.bf16.mxu0 0
      %1310 = vmatpush2.bf16.msra.mxu0 0
      %1311 = vmatprep.mubr.bf16.mxu0 0
      %1312 = vmatmul.mubr.bf16.gmra.mxu0 %v1117
      %v1313 = vpop.f32.mrf.mxu0
      %v1314 = vadd.f32 %v700, %v1313
      %v1315 = vpop.f32.mrf.mxu0
      %v1316 = vadd.f32 %v702, %v1315
      %v1317 = vpop.f32.mrf.mxu0
      %v1318 = vpop.f32.mrf.mxu0
      %1319 = vdwg.mxu0
      %1320 = vmatprep.subr.bf16.mxu0 0
      %1321 = vmatpush1.bf16.msra.mxu0 0
      %1322 = vmatprep.subr.bf16.mxu0 0
      %1323 = vmatpush1.bf16.msra.mxu0 0
      %1324 = vmatprep.subr.bf16.mxu0 0
      %1325 = vmatpush1.bf16.msra.mxu0 0
      %1326 = vmatprep.subr.bf16.mxu0 0
      %1327 = vmatpush1.bf16.msra.mxu0 0
      %1328 = vmatprep.subr.bf16.mxu0 0
      %1329 = vmatpush1.bf16.msra.mxu0 0
      %1330 = vmatprep.subr.bf16.mxu0 0
      %1331 = vmatpush1.bf16.msra.mxu0 0
      %1332 = vmatprep.subr.bf16.mxu0 0
      %1333 = vmatpush1.bf16.msra.mxu0 0
      %1334 = vmatprep.subr.bf16.mxu0 %v1141
      %1335 = vmatpush1.bf16.msra.mxu0 %v1138
      %1336 = vmatprep.subr.bf16.mxu0 0
      %1337 = vmatpush2.bf16.msra.mxu0 0
      %1338 = vmatprep.subr.bf16.mxu0 0
      %1339 = vmatpush2.bf16.msra.mxu0 0
      %1340 = vmatprep.subr.bf16.mxu0 0
      %1341 = vmatpush2.bf16.msra.mxu0 0
      %1342 = vmatprep.subr.bf16.mxu0 0
      %1343 = vmatpush2.bf16.msra.mxu0 0
      %1344 = vmatprep.subr.bf16.mxu0 0
      %1345 = vmatpush2.bf16.msra.mxu0 0
      %1346 = vmatprep.subr.bf16.mxu0 0
      %1347 = vmatpush2.bf16.msra.mxu0 0
      %1348 = vmatprep.subr.bf16.mxu0 0
      %1349 = vmatpush2.bf16.msra.mxu0 0
      %1350 = vmatprep.subr.bf16.mxu0 0
      %1351 = vmatpush2.bf16.msra.mxu0 0
      %1352 = vmatprep.mubr.bf16.mxu0 0
      %1353 = vmatmul.mubr.bf16.gmra.mxu0 %v1117
      %v1354 = vpop.f32.mrf.mxu0
      %v1355 = vadd.f32 %v741, %v1354
      %v1356 = vpop.f32.mrf.mxu0
      %v1357 = vadd.f32 %v743, %v1356
      %v1358 = vpop.f32.mrf.mxu0
      %v1359 = vpop.f32.mrf.mxu0
      %1360 = vdwg.mxu0
      %1361 = vmatprep.subr.bf16.mxu0 0
      %1362 = vmatpush1.bf16.msra.mxu0 0
      %1363 = vmatprep.subr.bf16.mxu0 0
      %1364 = vmatpush1.bf16.msra.mxu0 0
      %1365 = vmatprep.subr.bf16.mxu0 0
      %1366 = vmatpush1.bf16.msra.mxu0 0
      %1367 = vmatprep.subr.bf16.mxu0 0
      %1368 = vmatpush1.bf16.msra.mxu0 0
      %1369 = vmatprep.subr.bf16.mxu0 0
      %1370 = vmatpush1.bf16.msra.mxu0 0
      %1371 = vmatprep.subr.bf16.mxu0 0
      %1372 = vmatpush1.bf16.msra.mxu0 0
      %1373 = vmatprep.subr.bf16.mxu0 0
      %1374 = vmatpush1.bf16.msra.mxu0 0
      %1375 = vmatprep.subr.bf16.mxu0 %v1147
      %1376 = vmatpush1.bf16.msra.mxu0 %v1144
      %1377 = vmatprep.subr.bf16.mxu0 0
      %1378 = vmatpush2.bf16.msra.mxu0 0
      %1379 = vmatprep.subr.bf16.mxu0 0
      %1380 = vmatpush2.bf16.msra.mxu0 0
      %1381 = vmatprep.subr.bf16.mxu0 0
      %1382 = vmatpush2.bf16.msra.mxu0 0
      %1383 = vmatprep.subr.bf16.mxu0 0
      %1384 = vmatpush2.bf16.msra.mxu0 0
      %1385 = vmatprep.subr.bf16.mxu0 0
      %1386 = vmatpush2.bf16.msra.mxu0 0
      %1387 = vmatprep.subr.bf16.mxu0 0
      %1388 = vmatpush2.bf16.msra.mxu0 0
      %1389 = vmatprep.subr.bf16.mxu0 0
      %1390 = vmatpush2.bf16.msra.mxu0 0
      %1391 = vmatprep.subr.bf16.mxu0 0
      %1392 = vmatpush2.bf16.msra.mxu0 0
      %1393 = vmatprep.mubr.bf16.mxu0 0
      %1394 = vmatmul.mubr.bf16.gmra.mxu0 %v1117
      %v1395 = vpop.f32.mrf.mxu0
      %v1396 = vadd.f32 %v782, %v1395
      %v1397 = vpop.f32.mrf.mxu0
      %v1398 = vadd.f32 %v784, %v1397
      %v1399 = vpop.f32.mrf.mxu0
      %v1400 = vpop.f32.mrf.mxu0
      %1401 = vdwg.mxu0
      %1402 = vmatprep.subr.bf16.mxu0 0
      %1403 = vmatpush1.bf16.msra.mxu0 0
      %1404 = vmatprep.subr.bf16.mxu0 0
      %1405 = vmatpush1.bf16.msra.mxu0 0
      %1406 = vmatprep.subr.bf16.mxu0 0
      %1407 = vmatpush1.bf16.msra.mxu0 0
      %1408 = vmatprep.subr.bf16.mxu0 0
      %1409 = vmatpush1.bf16.msra.mxu0 0
      %1410 = vmatprep.subr.bf16.mxu0 0
      %1411 = vmatpush1.bf16.msra.mxu0 0
      %1412 = vmatprep.subr.bf16.mxu0 0
      %1413 = vmatpush1.bf16.msra.mxu0 0
      %1414 = vmatprep.subr.bf16.mxu0 0
      %1415 = vmatpush1.bf16.msra.mxu0 0
      %1416 = vmatprep.subr.bf16.mxu0 %v1153
      %1417 = vmatpush1.bf16.msra.mxu0 %v1150
      %1418 = vmatprep.subr.bf16.mxu0 0
      %1419 = vmatpush2.bf16.msra.mxu0 0
      %1420 = vmatprep.subr.bf16.mxu0 0
      %1421 = vmatpush2.bf16.msra.mxu0 0
      %1422 = vmatprep.subr.bf16.mxu0 0
      %1423 = vmatpush2.bf16.msra.mxu0 0
      %1424 = vmatprep.subr.bf16.mxu0 0
      %1425 = vmatpush2.bf16.msra.mxu0 0
      %1426 = vmatprep.subr.bf16.mxu0 0
      %1427 = vmatpush2.bf16.msra.mxu0 0
      %1428 = vmatprep.subr.bf16.mxu0 0
      %1429 = vmatpush2.bf16.msra.mxu0 0
      %1430 = vmatprep.subr.bf16.mxu0 0
      %1431 = vmatpush2.bf16.msra.mxu0 0
      %1432 = vmatprep.subr.bf16.mxu0 0
      %1433 = vmatpush2.bf16.msra.mxu0 0
      %1434 = vmatprep.mubr.bf16.mxu0 0
      %1435 = vmatmul.mubr.bf16.gmra.mxu0 %v1117
      %v1436 = vpop.f32.mrf.mxu0
      %v1437 = vadd.f32 %v823, %v1436
      %v1438 = vpop.f32.mrf.mxu0
      %v1439 = vadd.f32 %v825, %v1438
      %v1440 = vpop.f32.mrf.mxu0
      %v1441 = vpop.f32.mrf.mxu0
      %1442 = vdwg.mxu0
      %1443 = vmatprep.subr.bf16.mxu0 0
      %1444 = vmatpush1.bf16.msra.mxu0 0
      %1445 = vmatprep.subr.bf16.mxu0 0
      %1446 = vmatpush1.bf16.msra.mxu0 0
      %1447 = vmatprep.subr.bf16.mxu0 0
      %1448 = vmatpush1.bf16.msra.mxu0 0
      %1449 = vmatprep.subr.bf16.mxu0 0
      %1450 = vmatpush1.bf16.msra.mxu0 0
      %1451 = vmatprep.subr.bf16.mxu0 0
      %1452 = vmatpush1.bf16.msra.mxu0 0
      %1453 = vmatprep.subr.bf16.mxu0 0
      %1454 = vmatpush1.bf16.msra.mxu0 0
      %1455 = vmatprep.subr.bf16.mxu0 0
      %1456 = vmatpush1.bf16.msra.mxu0 0
      %1457 = vmatprep.subr.bf16.mxu0 %v1159
      %1458 = vmatpush1.bf16.msra.mxu0 %v1156
      %1459 = vmatprep.subr.bf16.mxu0 0
      %1460 = vmatpush2.bf16.msra.mxu0 0
      %1461 = vmatprep.subr.bf16.mxu0 0
      %1462 = vmatpush2.bf16.msra.mxu0 0
      %1463 = vmatprep.subr.bf16.mxu0 0
      %1464 = vmatpush2.bf16.msra.mxu0 0
      %1465 = vmatprep.subr.bf16.mxu0 0
      %1466 = vmatpush2.bf16.msra.mxu0 0
      %1467 = vmatprep.subr.bf16.mxu0 0
      %1468 = vmatpush2.bf16.msra.mxu0 0
      %1469 = vmatprep.subr.bf16.mxu0 0
      %1470 = vmatpush2.bf16.msra.mxu0 0
      %1471 = vmatprep.subr.bf16.mxu0 0
      %1472 = vmatpush2.bf16.msra.mxu0 0
      %1473 = vmatprep.subr.bf16.mxu0 0
      %1474 = vmatpush2.bf16.msra.mxu0 0
      %1475 = vmatprep.mubr.bf16.mxu0 0
      %1476 = vmatmul.mubr.bf16.gmra.mxu0 %v1117
      %v1477 = vpop.f32.mrf.mxu0
      %v1478 = vadd.f32 %v864, %v1477
      %v1479 = vpop.f32.mrf.mxu0
      %v1480 = vadd.f32 %v866, %v1479
      %v1481 = vpop.f32.mrf.mxu0
      %v1482 = vpop.f32.mrf.mxu0
      %1483 = vdwg.mxu0
      %1484 = vmatprep.subr.bf16.mxu0 0
      %1485 = vmatpush1.bf16.msra.mxu0 0
      %1486 = vmatprep.subr.bf16.mxu0 0
      %1487 = vmatpush1.bf16.msra.mxu0 0
      %1488 = vmatprep.subr.bf16.mxu0 0
      %1489 = vmatpush1.bf16.msra.mxu0 0
      %1490 = vmatprep.subr.bf16.mxu0 0
      %1491 = vmatpush1.bf16.msra.mxu0 0
      %1492 = vmatprep.subr.bf16.mxu0 0
      %1493 = vmatpush1.bf16.msra.mxu0 0
      %1494 = vmatprep.subr.bf16.mxu0 0
      %1495 = vmatpush1.bf16.msra.mxu0 0
      %1496 = vmatprep.subr.bf16.mxu0 0
      %1497 = vmatpush1.bf16.msra.mxu0 0
      %1498 = vmatprep.subr.bf16.mxu0 %v1165
      %1499 = vmatpush1.bf16.msra.mxu0 %v1162
      %1500 = vmatprep.subr.bf16.mxu0 0
      %1501 = vmatpush2.bf16.msra.mxu0 0
      %1502 = vmatprep.subr.bf16.mxu0 0
      %1503 = vmatpush2.bf16.msra.mxu0 0
      %1504 = vmatprep.subr.bf16.mxu0 0
      %1505 = vmatpush2.bf16.msra.mxu0 0
      %1506 = vmatprep.subr.bf16.mxu0 0
      %1507 = vmatpush2.bf16.msra.mxu0 0
      %1508 = vmatprep.subr.bf16.mxu0 0
      %1509 = vmatpush2.bf16.msra.mxu0 0
      %1510 = vmatprep.subr.bf16.mxu0 0
      %1511 = vmatpush2.bf16.msra.mxu0 0
      %1512 = vmatprep.subr.bf16.mxu0 0
      %1513 = vmatpush2.bf16.msra.mxu0 0
      %1514 = vmatprep.subr.bf16.mxu0 0
      %1515 = vmatpush2.bf16.msra.mxu0 0
      %1516 = vmatprep.mubr.bf16.mxu0 0
      %1517 = vmatmul.mubr.bf16.gmra.mxu0 %v1117
      %v1518 = vpop.f32.mrf.mxu0
      %v1519 = vadd.f32 %v905, %v1518
      %v1520 = vpop.f32.mrf.mxu0
      %v1521 = vadd.f32 %v907, %v1520
      %v1522 = vpop.f32.mrf.mxu0
      %v1523 = vpop.f32.mrf.mxu0
      %1524 = vdwg.mxu0
      %1525 = vmatprep.subr.bf16.mxu0 0
      %1526 = vmatpush1.bf16.msra.mxu0 0
      %1527 = vmatprep.subr.bf16.mxu0 0
      %1528 = vmatpush1.bf16.msra.mxu0 0
      %1529 = vmatprep.subr.bf16.mxu0 0
      %1530 = vmatpush1.bf16.msra.mxu0 0
      %1531 = vmatprep.subr.bf16.mxu0 0
      %1532 = vmatpush1.bf16.msra.mxu0 0
      %1533 = vmatprep.subr.bf16.mxu0 0
      %1534 = vmatpush1.bf16.msra.mxu0 0
      %1535 = vmatprep.subr.bf16.mxu0 0
      %1536 = vmatpush1.bf16.msra.mxu0 0
      %1537 = vmatprep.subr.bf16.mxu0 0
      %1538 = vmatpush1.bf16.msra.mxu0 0
      %1539 = vmatprep.subr.bf16.mxu0 %v1171
      %1540 = vmatpush1.bf16.msra.mxu0 %v1168
      %1541 = vmatprep.subr.bf16.mxu0 0
      %1542 = vmatpush2.bf16.msra.mxu0 0
      %1543 = vmatprep.subr.bf16.mxu0 0
      %1544 = vmatpush2.bf16.msra.mxu0 0
      %1545 = vmatprep.subr.bf16.mxu0 0
      %1546 = vmatpush2.bf16.msra.mxu0 0
      %1547 = vmatprep.subr.bf16.mxu0 0
      %1548 = vmatpush2.bf16.msra.mxu0 0
      %1549 = vmatprep.subr.bf16.mxu0 0
      %1550 = vmatpush2.bf16.msra.mxu0 0
      %1551 = vmatprep.subr.bf16.mxu0 0
      %1552 = vmatpush2.bf16.msra.mxu0 0
      %1553 = vmatprep.subr.bf16.mxu0 0
      %1554 = vmatpush2.bf16.msra.mxu0 0
      %1555 = vmatprep.subr.bf16.mxu0 0
      %1556 = vmatpush2.bf16.msra.mxu0 0
      %1557 = vmatprep.mubr.bf16.mxu0 0
      %1558 = vmatmul.mubr.bf16.gmra.mxu0 %v1117
      %v1559 = vpop.f32.mrf.mxu0
      %v1560 = vadd.f32 %v946, %v1559
      %v1561 = vpop.f32.mrf.mxu0
      %v1562 = vadd.f32 %v948, %v1561
      %v1563 = vpop.f32.mrf.mxu0
      %v1564 = vpop.f32.mrf.mxu0
      %1565 = vdwg.mxu0
      %1566 = vmatprep.subr.bf16.mxu0 0
      %1567 = vmatpush1.bf16.msra.mxu0 0
      %1568 = vmatprep.subr.bf16.mxu0 0
      %1569 = vmatpush1.bf16.msra.mxu0 0
      %1570 = vmatprep.subr.bf16.mxu0 0
      %1571 = vmatpush1.bf16.msra.mxu0 0
      %1572 = vmatprep.subr.bf16.mxu0 0
      %1573 = vmatpush1.bf16.msra.mxu0 0
      %1574 = vmatprep.subr.bf16.mxu0 0
      %1575 = vmatpush1.bf16.msra.mxu0 0
      %1576 = vmatprep.subr.bf16.mxu0 0
      %1577 = vmatpush1.bf16.msra.mxu0 0
      %1578 = vmatprep.subr.bf16.mxu0 0
      %1579 = vmatpush1.bf16.msra.mxu0 0
      %1580 = vmatprep.subr.bf16.mxu0 %v1177
      %1581 = vmatpush1.bf16.msra.mxu0 %v1174
      %1582 = vmatprep.subr.bf16.mxu0 0
      %1583 = vmatpush2.bf16.msra.mxu0 0
      %1584 = vmatprep.subr.bf16.mxu0 0
      %1585 = vmatpush2.bf16.msra.mxu0 0
      %1586 = vmatprep.subr.bf16.mxu0 0
      %1587 = vmatpush2.bf16.msra.mxu0 0
      %1588 = vmatprep.subr.bf16.mxu0 0
      %1589 = vmatpush2.bf16.msra.mxu0 0
      %1590 = vmatprep.subr.bf16.mxu0 0
      %1591 = vmatpush2.bf16.msra.mxu0 0
      %1592 = vmatprep.subr.bf16.mxu0 0
      %1593 = vmatpush2.bf16.msra.mxu0 0
      %1594 = vmatprep.subr.bf16.mxu0 0
      %1595 = vmatpush2.bf16.msra.mxu0 0
      %1596 = vmatprep.subr.bf16.mxu0 0
      %1597 = vmatpush2.bf16.msra.mxu0 0
      %1598 = vmatprep.mubr.bf16.mxu0 0
      %1599 = vmatmul.mubr.bf16.gmra.mxu0 %v1117
      %v1600 = vpop.f32.mrf.mxu0
      %v1601 = vadd.f32 %v987, %v1600
      %v1602 = vpop.f32.mrf.mxu0
      %v1603 = vadd.f32 %v989, %v1602
      %v1604 = vpop.f32.mrf.mxu0
      %v1605 = vpop.f32.mrf.mxu0
      %1606 = vdwg.mxu0
      %1607 = vmatprep.subr.bf16.mxu0 0
      %1608 = vmatpush1.bf16.msra.mxu0 0
      %1609 = vmatprep.subr.bf16.mxu0 0
      %1610 = vmatpush1.bf16.msra.mxu0 0
      %1611 = vmatprep.subr.bf16.mxu0 0
      %1612 = vmatpush1.bf16.msra.mxu0 0
      %1613 = vmatprep.subr.bf16.mxu0 0
      %1614 = vmatpush1.bf16.msra.mxu0 0
      %1615 = vmatprep.subr.bf16.mxu0 0
      %1616 = vmatpush1.bf16.msra.mxu0 0
      %1617 = vmatprep.subr.bf16.mxu0 0
      %1618 = vmatpush1.bf16.msra.mxu0 0
      %1619 = vmatprep.subr.bf16.mxu0 0
      %1620 = vmatpush1.bf16.msra.mxu0 0
      %1621 = vmatprep.subr.bf16.mxu0 %v1183
      %1622 = vmatpush1.bf16.msra.mxu0 %v1180
      %1623 = vmatprep.subr.bf16.mxu0 0
      %1624 = vmatpush2.bf16.msra.mxu0 0
      %1625 = vmatprep.subr.bf16.mxu0 0
      %1626 = vmatpush2.bf16.msra.mxu0 0
      %1627 = vmatprep.subr.bf16.mxu0 0
      %1628 = vmatpush2.bf16.msra.mxu0 0
      %1629 = vmatprep.subr.bf16.mxu0 0
      %1630 = vmatpush2.bf16.msra.mxu0 0
      %1631 = vmatprep.subr.bf16.mxu0 0
      %1632 = vmatpush2.bf16.msra.mxu0 0
      %1633 = vmatprep.subr.bf16.mxu0 0
      %1634 = vmatpush2.bf16.msra.mxu0 0
      %1635 = vmatprep.subr.bf16.mxu0 0
      %1636 = vmatpush2.bf16.msra.mxu0 0
      %1637 = vmatprep.subr.bf16.mxu0 0
      %1638 = vmatpush2.bf16.msra.mxu0 0
      %1639 = vmatprep.mubr.bf16.mxu0 0
      %1640 = vmatmul.mubr.bf16.gmra.mxu0 %v1117
      %v1641 = vpop.f32.mrf.mxu0
      %v1642 = vadd.f32 %v1028, %v1641
      %v1643 = vpop.f32.mrf.mxu0
      %v1644 = vadd.f32 %v1030, %v1643
      %v1645 = vpop.f32.mrf.mxu0
      %v1646 = vpop.f32.mrf.mxu0
      %1647 = vdwg.mxu0
      %1648 = vmatprep.subr.bf16.mxu0 0
      %1649 = vmatpush1.bf16.msra.mxu0 0
      %1650 = vmatprep.subr.bf16.mxu0 0
      %1651 = vmatpush1.bf16.msra.mxu0 0
      %1652 = vmatprep.subr.bf16.mxu0 0
      %1653 = vmatpush1.bf16.msra.mxu0 0
      %1654 = vmatprep.subr.bf16.mxu0 0
      %1655 = vmatpush1.bf16.msra.mxu0 0
      %1656 = vmatprep.subr.bf16.mxu0 0
      %1657 = vmatpush1.bf16.msra.mxu0 0
      %1658 = vmatprep.subr.bf16.mxu0 0
      %1659 = vmatpush1.bf16.msra.mxu0 0
      %1660 = vmatprep.subr.bf16.mxu0 0
      %1661 = vmatpush1.bf16.msra.mxu0 0
      %1662 = vmatprep.subr.bf16.mxu0 %v1189
      %1663 = vmatpush1.bf16.msra.mxu0 %v1186
      %1664 = vmatprep.subr.bf16.mxu0 0
      %1665 = vmatpush2.bf16.msra.mxu0 0
      %1666 = vmatprep.subr.bf16.mxu0 0
      %1667 = vmatpush2.bf16.msra.mxu0 0
      %1668 = vmatprep.subr.bf16.mxu0 0
      %1669 = vmatpush2.bf16.msra.mxu0 0
      %1670 = vmatprep.subr.bf16.mxu0 0
      %1671 = vmatpush2.bf16.msra.mxu0 0
      %1672 = vmatprep.subr.bf16.mxu0 0
      %1673 = vmatpush2.bf16.msra.mxu0 0
      %1674 = vmatprep.subr.bf16.mxu0 0
      %1675 = vmatpush2.bf16.msra.mxu0 0
      %1676 = vmatprep.subr.bf16.mxu0 0
      %1677 = vmatpush2.bf16.msra.mxu0 0
      %1678 = vmatprep.subr.bf16.mxu0 0
      %1679 = vmatpush2.bf16.msra.mxu0 0
      %1680 = vmatprep.mubr.bf16.mxu0 0
      %1681 = vmatmul.mubr.bf16.gmra.mxu0 %v1117
      %v1682 = vpop.f32.mrf.mxu0
      %v1683 = vadd.f32 %v1069, %v1682
      %v1684 = vpop.f32.mrf.mxu0
      %v1685 = vadd.f32 %v1071, %v1684
      %v1686 = vpop.f32.mrf.mxu0
      %v1687 = vpop.f32.mrf.mxu0
      %1688 = vdwg.mxu0
      %1689 = vmatprep.subr.bf16.mxu0 0
      %1690 = vmatpush1.bf16.msra.mxu0 0
      %1691 = vmatprep.subr.bf16.mxu0 0
      %1692 = vmatpush1.bf16.msra.mxu0 0
      %1693 = vmatprep.subr.bf16.mxu0 0
      %1694 = vmatpush1.bf16.msra.mxu0 0
      %1695 = vmatprep.subr.bf16.mxu0 0
      %1696 = vmatpush1.bf16.msra.mxu0 0
      %1697 = vmatprep.subr.bf16.mxu0 0
      %1698 = vmatpush1.bf16.msra.mxu0 0
      %1699 = vmatprep.subr.bf16.mxu0 0
      %1700 = vmatpush1.bf16.msra.mxu0 0
      %1701 = vmatprep.subr.bf16.mxu0 0
      %1702 = vmatpush1.bf16.msra.mxu0 0
      %1703 = vmatprep.subr.bf16.mxu0 %v1195
      %1704 = vmatpush1.bf16.msra.mxu0 %v1192
      %1705 = vmatprep.subr.bf16.mxu0 0
      %1706 = vmatpush2.bf16.msra.mxu0 0
      %1707 = vmatprep.subr.bf16.mxu0 0
      %1708 = vmatpush2.bf16.msra.mxu0 0
      %1709 = vmatprep.subr.bf16.mxu0 0
      %1710 = vmatpush2.bf16.msra.mxu0 0
      %1711 = vmatprep.subr.bf16.mxu0 0
      %1712 = vmatpush2.bf16.msra.mxu0 0
      %1713 = vmatprep.subr.bf16.mxu0 0
      %1714 = vmatpush2.bf16.msra.mxu0 0
      %1715 = vmatprep.subr.bf16.mxu0 0
      %1716 = vmatpush2.bf16.msra.mxu0 0
      %1717 = vmatprep.subr.bf16.mxu0 0
      %1718 = vmatpush2.bf16.msra.mxu0 0
      %1719 = vmatprep.subr.bf16.mxu0 0
      %1720 = vmatpush2.bf16.msra.mxu0 0
      %1721 = vmatprep.mubr.bf16.mxu0 0
      %1722 = vmatmul.mubr.bf16.gmra.mxu0 %v1117
      %v1723 = vpop.f32.mrf.mxu0
      %v1724 = vadd.f32 %v1110, %v1723
      %v1725 = vpop.f32.mrf.mxu0
      %v1726 = vadd.f32 %v1112, %v1725
      %v1727 = vpop.f32.mrf.mxu0
      %v1728 = vpop.f32.mrf.mxu0
      %1729 = vdwg.mxu0
      %s1730 = scalar_lea.vmem %s1, 8
      %v1731 = vld [vmem:[%s1730] sm:$0xf]
      %v1732 = vld [vmem:[%s285] sm:$0xff]
      %v1733 = vld [vmem:[%s285 + $0x8] sm:$0xff]
      %v1734 = vld [vmem:[%s285 + $0x10] sm:$0xff]
      %v1735 = vld [vmem:[%s285 + $0x18] sm:$0xff]
      %v1736 = vld [vmem:[%s285 + $0x20] sm:$0xff]
      %v1737 = vld [vmem:[%s285 + $0x28] sm:$0xff]
      %v1738 = vld [vmem:[%s285 + $0x30] sm:$0xf]
      %v1746 = vcombine.high %v1732, %v1732
      %v1748 = vunpack.c.l.s4 1983009808
      %v1749 = vunpack.c.0.s8 %v1748
      %v1750 = vlaneseq
      %v1751 = vshrl.u32 %v1750, 7
      %v1752 = vsub.s32 %v1749, %v1751
      %v1753 = vrot.slane %v1732, %v1752
      %v1755 = vunpack.c.l.s4 1983009808
      %v1756 = vunpack.c.0.s8 %v1755
      %v1757 = vlaneseq
      %v1758 = vshrl.u32 %v1757, 7
      %v1759 = vsub.s32 %v1756, %v1758
      %v1760 = vrot.slane %v1746, %v1759
      %v1761 = vcombine.high %v1753, %v1753
      %v1762 = vcombine.high %v1760, %v1760
      %v1763 = vcombine.high %v1733, %v1733
      %v1765 = vunpack.c.l.s4 1983009808
      %v1766 = vunpack.c.0.s8 %v1765
      %v1767 = vlaneseq
      %v1768 = vshrl.u32 %v1767, 7
      %v1769 = vsub.s32 %v1766, %v1768
      %v1770 = vrot.slane %v1733, %v1769
      %v1772 = vunpack.c.l.s4 1983009808
      %v1773 = vunpack.c.0.s8 %v1772
      %v1774 = vlaneseq
      %v1775 = vshrl.u32 %v1774, 7
      %v1776 = vsub.s32 %v1773, %v1775
      %v1777 = vrot.slane %v1763, %v1776
      %v1778 = vcombine.high %v1770, %v1770
      %v1779 = vcombine.high %v1777, %v1777
      %v1780 = vcombine.high %v1734, %v1734
      %v1782 = vunpack.c.l.s4 1983009808
      %v1783 = vunpack.c.0.s8 %v1782
      %v1784 = vlaneseq
      %v1785 = vshrl.u32 %v1784, 7
      %v1786 = vsub.s32 %v1783, %v1785
      %v1787 = vrot.slane %v1734, %v1786
      %v1789 = vunpack.c.l.s4 1983009808
      %v1790 = vunpack.c.0.s8 %v1789
      %v1791 = vlaneseq
      %v1792 = vshrl.u32 %v1791, 7
      %v1793 = vsub.s32 %v1790, %v1792
      %v1794 = vrot.slane %v1780, %v1793
      %v1795 = vcombine.high %v1787, %v1787
      %v1796 = vcombine.high %v1794, %v1794
      %v1797 = vcombine.high %v1735, %v1735
      %v1799 = vunpack.c.l.s4 1983009808
      %v1800 = vunpack.c.0.s8 %v1799
      %v1801 = vlaneseq
      %v1802 = vshrl.u32 %v1801, 7
      %v1803 = vsub.s32 %v1800, %v1802
      %v1804 = vrot.slane %v1735, %v1803
      %v1806 = vunpack.c.l.s4 1983009808
      %v1807 = vunpack.c.0.s8 %v1806
      %v1808 = vlaneseq
      %v1809 = vshrl.u32 %v1808, 7
      %v1810 = vsub.s32 %v1807, %v1809
      %v1811 = vrot.slane %v1797, %v1810
      %v1812 = vcombine.high %v1804, %v1804
      %v1813 = vcombine.high %v1811, %v1811
      %v1814 = vcombine.high %v1736, %v1736
      %v1816 = vunpack.c.l.s4 1983009808
      %v1817 = vunpack.c.0.s8 %v1816
      %v1818 = vlaneseq
      %v1819 = vshrl.u32 %v1818, 7
      %v1820 = vsub.s32 %v1817, %v1819
      %v1821 = vrot.slane %v1736, %v1820
      %v1823 = vunpack.c.l.s4 1983009808
      %v1824 = vunpack.c.0.s8 %v1823
      %v1825 = vlaneseq
      %v1826 = vshrl.u32 %v1825, 7
      %v1827 = vsub.s32 %v1824, %v1826
      %v1828 = vrot.slane %v1814, %v1827
      %v1829 = vcombine.high %v1821, %v1821
      %v1830 = vcombine.high %v1828, %v1828
      %v1831 = vcombine.high %v1737, %v1737
      %v1833 = vunpack.c.l.s4 1983009808
      %v1834 = vunpack.c.0.s8 %v1833
      %v1835 = vlaneseq
      %v1836 = vshrl.u32 %v1835, 7
      %v1837 = vsub.s32 %v1834, %v1836
      %v1838 = vrot.slane %v1737, %v1837
      %v1840 = vunpack.c.l.s4 1983009808
      %v1841 = vunpack.c.0.s8 %v1840
      %v1842 = vlaneseq
      %v1843 = vshrl.u32 %v1842, 7
      %v1844 = vsub.s32 %v1841, %v1843
      %v1845 = vrot.slane %v1831, %v1844
      %v1846 = vcombine.high %v1838, %v1838
      %v1847 = vcombine.high %v1845, %v1845
      %v1849 = vunpack.c.l.s4 1983009808
      %v1850 = vunpack.c.0.s8 %v1849
      %v1851 = vlaneseq
      %v1852 = vshrl.u32 %v1851, 7
      %v1853 = vsub.s32 %v1850, %v1852
      %v1854 = vrot.slane %v1738, %v1853
      %v1855 = vcombine.high %v1854, %v1854
      %1856 = vrot.lane.b32.xlu0 %v1753, 126
      %v1857 = vpop.permute.xlu0 %1856
      %1858 = vrot.lane.b32.xlu0 %v1761, 126
      %v1859 = vpop.permute.xlu0 %1858
      %1860 = vrot.lane.b32.xlu0 %v1760, 126
      %v1861 = vpop.permute.xlu0 %1860
      %1862 = vrot.lane.b32.xlu0 %v1762, 126
      %v1863 = vpop.permute.xlu0 %1862
      %1864 = vrot.lane.b32.xlu0 %v1770, 126
      %v1865 = vpop.permute.xlu0 %1864
      %1866 = vrot.lane.b32.xlu0 %v1778, 126
      %v1867 = vpop.permute.xlu0 %1866
      %1868 = vrot.lane.b32.xlu0 %v1777, 126
      %v1869 = vpop.permute.xlu0 %1868
      %1870 = vrot.lane.b32.xlu0 %v1779, 126
      %v1871 = vpop.permute.xlu0 %1870
      %1872 = vrot.lane.b32.xlu0 %v1787, 126
      %v1873 = vpop.permute.xlu0 %1872
      %1874 = vrot.lane.b32.xlu0 %v1795, 126
      %v1875 = vpop.permute.xlu0 %1874
      %1876 = vrot.lane.b32.xlu0 %v1794, 126
      %v1877 = vpop.permute.xlu0 %1876
      %1878 = vrot.lane.b32.xlu0 %v1796, 126
      %v1879 = vpop.permute.xlu0 %1878
      %1880 = vrot.lane.b32.xlu0 %v1804, 126
      %v1881 = vpop.permute.xlu0 %1880
      %1882 = vrot.lane.b32.xlu0 %v1812, 126
      %v1883 = vpop.permute.xlu0 %1882
      %1884 = vrot.lane.b32.xlu0 %v1811, 126
      %v1885 = vpop.permute.xlu0 %1884
      %1886 = vrot.lane.b32.xlu0 %v1813, 126
      %v1887 = vpop.permute.xlu0 %1886
      %1888 = vrot.lane.b32.xlu0 %v1821, 126
      %v1889 = vpop.permute.xlu0 %1888
      %1890 = vrot.lane.b32.xlu0 %v1829, 126
      %v1891 = vpop.permute.xlu0 %1890
      %1892 = vrot.lane.b32.xlu0 %v1828, 126
      %v1893 = vpop.permute.xlu0 %1892
      %1894 = vrot.lane.b32.xlu0 %v1830, 126
      %v1895 = vpop.permute.xlu0 %1894
      %1896 = vrot.lane.b32.xlu0 %v1838, 126
      %v1897 = vpop.permute.xlu0 %1896
      %1898 = vrot.lane.b32.xlu0 %v1846, 126
      %v1899 = vpop.permute.xlu0 %1898
      %1900 = vrot.lane.b32.xlu0 %v1845, 126
      %v1901 = vpop.permute.xlu0 %1900
      %1902 = vrot.lane.b32.xlu0 %v1847, 126
      %v1903 = vpop.permute.xlu0 %1902
      %1904 = vrot.lane.b32.xlu0 %v1854, 126
      %v1905 = vpop.permute.xlu0 %1904
      %1906 = vrot.lane.b32.xlu0 %v1855, 126
      %v1907 = vpop.permute.xlu0 %1906
      %vm1908 = vcmask 1031168
      %v1909 = vsel %vm1908, %v1857, %v1859
      %v1910 = vsel %vm1908, %v1859, %v1861
      %v1911 = vsel %vm1908, %v1861, %v1863
      %v1912 = vsel %vm1908, %v1863, %v1865
      %v1913 = vsel %vm1908, %v1865, %v1867
      %v1914 = vsel %vm1908, %v1867, %v1869
      %v1915 = vsel %vm1908, %v1869, %v1871
      %v1916 = vsel %vm1908, %v1871, %v1873
      %v1917 = vsel %vm1908, %v1873, %v1875
      %v1918 = vsel %vm1908, %v1875, %v1877
      %v1919 = vsel %vm1908, %v1877, %v1879
      %v1920 = vsel %vm1908, %v1879, %v1881
      %v1921 = vsel %vm1908, %v1881, %v1883
      %v1922 = vsel %vm1908, %v1883, %v1885
      %v1923 = vsel %vm1908, %v1885, %v1887
      %v1924 = vsel %vm1908, %v1887, %v1889
      %v1925 = vsel %vm1908, %v1889, %v1891
      %v1926 = vsel %vm1908, %v1891, %v1893
      %v1927 = vsel %vm1908, %v1893, %v1895
      %v1928 = vsel %vm1908, %v1895, %v1897
      %v1929 = vsel %vm1908, %v1897, %v1899
      %v1930 = vsel %vm1908, %v1899, %v1901
      %v1931 = vsel %vm1908, %v1901, %v1903
      %v1932 = vsel %vm1908, %v1903, %v1905
      %v1933 = vsel %vm1908, %v1905, %v1907
      %v1935 = vsel %vm500, %v1731, 0
      %v1938 = vsel %vm504, %v1909, 0
      %v1941 = vsel %vm504, %v1910, 0
      %v1944 = vsel %vm504, %v1911, 0
      %v1947 = vsel %vm504, %v1912, 0
      %v1950 = vsel %vm504, %v1913, 0
      %v1953 = vsel %vm504, %v1914, 0
      %v1956 = vsel %vm504, %v1915, 0
      %v1959 = vsel %vm504, %v1916, 0
      %v1962 = vsel %vm504, %v1917, 0
      %v1965 = vsel %vm504, %v1918, 0
      %v1968 = vsel %vm504, %v1919, 0
      %v1971 = vsel %vm504, %v1920, 0
      %v1974 = vsel %vm504, %v1921, 0
      %v1977 = vsel %vm504, %v1922, 0
      %v1980 = vsel %vm504, %v1923, 0
      %v1983 = vsel %vm504, %v1924, 0
      %v1986 = vsel %vm504, %v1925, 0
      %v1989 = vsel %vm504, %v1926, 0
      %v1992 = vsel %vm504, %v1927, 0
      %v1995 = vsel %vm504, %v1928, 0
      %v1998 = vsel %vm504, %v1929, 0
      %v2001 = vsel %vm504, %v1930, 0
      %v2004 = vsel %vm504, %v1931, 0
      %v2007 = vsel %vm504, %v1932, 0
      %v2010 = vsel %vm504, %v1933, 0
      %v2013 = vsel %vm504, %v1907, 0
      %2015 = vmatprep.subr.bf16.mxu0 0
      %2016 = vmatpush1.bf16.msra.mxu0 0
      %2017 = vmatprep.subr.bf16.mxu0 0
      %2018 = vmatpush1.bf16.msra.mxu0 0
      %2019 = vmatprep.subr.bf16.mxu0 0
      %2020 = vmatpush1.bf16.msra.mxu0 0
      %2021 = vmatprep.subr.bf16.mxu0 0
      %2022 = vmatpush1.bf16.msra.mxu0 0
      %2023 = vmatprep.subr.bf16.mxu0 0
      %2024 = vmatpush1.bf16.msra.mxu0 0
      %2025 = vmatprep.subr.bf16.mxu0 0
      %2026 = vmatpush1.bf16.msra.mxu0 0
      %2027 = vmatprep.subr.bf16.mxu0 0
      %2028 = vmatpush1.bf16.msra.mxu0 0
      %2029 = vmatprep.subr.bf16.mxu0 %v1941
      %2030 = vmatpush1.bf16.msra.mxu0 %v1938
      %2031 = vmatprep.subr.bf16.mxu0 0
      %2032 = vmatpush2.bf16.msra.mxu0 0
      %2033 = vmatprep.subr.bf16.mxu0 0
      %2034 = vmatpush2.bf16.msra.mxu0 0
      %2035 = vmatprep.subr.bf16.mxu0 0
      %2036 = vmatpush2.bf16.msra.mxu0 0
      %2037 = vmatprep.subr.bf16.mxu0 0
      %2038 = vmatpush2.bf16.msra.mxu0 0
      %2039 = vmatprep.subr.bf16.mxu0 0
      %2040 = vmatpush2.bf16.msra.mxu0 0
      %2041 = vmatprep.subr.bf16.mxu0 0
      %2042 = vmatpush2.bf16.msra.mxu0 0
      %2043 = vmatprep.subr.bf16.mxu0 0
      %2044 = vmatpush2.bf16.msra.mxu0 0
      %2045 = vmatprep.subr.bf16.mxu0 0
      %2046 = vmatpush2.bf16.msra.mxu0 0
      %2047 = vmatprep.mubr.bf16.mxu0 0
      %2048 = vmatmul.mubr.bf16.gmra.mxu0 %v1935
      %v2049 = vpop.f32.mrf.mxu0
      %v2050 = vadd.f32 0.0, %v2049
      %v2051 = vpop.f32.mrf.mxu0
      %v2052 = vadd.f32 0.0, %v2051
      %v2053 = vpop.f32.mrf.mxu0
      %v2054 = vpop.f32.mrf.mxu0
      %2055 = vdwg.mxu0
      %2056 = vmatprep.subr.bf16.mxu0 0
      %2057 = vmatpush1.bf16.msra.mxu0 0
      %2058 = vmatprep.subr.bf16.mxu0 0
      %2059 = vmatpush1.bf16.msra.mxu0 0
      %2060 = vmatprep.subr.bf16.mxu0 0
      %2061 = vmatpush1.bf16.msra.mxu0 0
      %2062 = vmatprep.subr.bf16.mxu0 0
      %2063 = vmatpush1.bf16.msra.mxu0 0
      %2064 = vmatprep.subr.bf16.mxu0 0
      %2065 = vmatpush1.bf16.msra.mxu0 0
      %2066 = vmatprep.subr.bf16.mxu0 0
      %2067 = vmatpush1.bf16.msra.mxu0 0
      %2068 = vmatprep.subr.bf16.mxu0 0
      %2069 = vmatpush1.bf16.msra.mxu0 0
      %2070 = vmatprep.subr.bf16.mxu0 %v1947
      %2071 = vmatpush1.bf16.msra.mxu0 %v1944
      %2072 = vmatprep.subr.bf16.mxu0 0
      %2073 = vmatpush2.bf16.msra.mxu0 0
      %2074 = vmatprep.subr.bf16.mxu0 0
      %2075 = vmatpush2.bf16.msra.mxu0 0
      %2076 = vmatprep.subr.bf16.mxu0 0
      %2077 = vmatpush2.bf16.msra.mxu0 0
      %2078 = vmatprep.subr.bf16.mxu0 0
      %2079 = vmatpush2.bf16.msra.mxu0 0
      %2080 = vmatprep.subr.bf16.mxu0 0
      %2081 = vmatpush2.bf16.msra.mxu0 0
      %2082 = vmatprep.subr.bf16.mxu0 0
      %2083 = vmatpush2.bf16.msra.mxu0 0
      %2084 = vmatprep.subr.bf16.mxu0 0
      %2085 = vmatpush2.bf16.msra.mxu0 0
      %2086 = vmatprep.subr.bf16.mxu0 0
      %2087 = vmatpush2.bf16.msra.mxu0 0
      %2088 = vmatprep.mubr.bf16.mxu0 0
      %2089 = vmatmul.mubr.bf16.gmra.mxu0 %v1935
      %v2090 = vpop.f32.mrf.mxu0
      %v2091 = vadd.f32 0.0, %v2090
      %v2092 = vpop.f32.mrf.mxu0
      %v2093 = vadd.f32 0.0, %v2092
      %v2094 = vpop.f32.mrf.mxu0
      %v2095 = vpop.f32.mrf.mxu0
      %2096 = vdwg.mxu0
      %2097 = vmatprep.subr.bf16.mxu0 0
      %2098 = vmatpush1.bf16.msra.mxu0 0
      %2099 = vmatprep.subr.bf16.mxu0 0
      %2100 = vmatpush1.bf16.msra.mxu0 0
      %2101 = vmatprep.subr.bf16.mxu0 0
      %2102 = vmatpush1.bf16.msra.mxu0 0
      %2103 = vmatprep.subr.bf16.mxu0 0
      %2104 = vmatpush1.bf16.msra.mxu0 0
      %2105 = vmatprep.subr.bf16.mxu0 0
      %2106 = vmatpush1.bf16.msra.mxu0 0
      %2107 = vmatprep.subr.bf16.mxu0 0
      %2108 = vmatpush1.bf16.msra.mxu0 0
      %2109 = vmatprep.subr.bf16.mxu0 0
      %2110 = vmatpush1.bf16.msra.mxu0 0
      %2111 = vmatprep.subr.bf16.mxu0 %v1953
      %2112 = vmatpush1.bf16.msra.mxu0 %v1950
      %2113 = vmatprep.subr.bf16.mxu0 0
      %2114 = vmatpush2.bf16.msra.mxu0 0
      %2115 = vmatprep.subr.bf16.mxu0 0
      %2116 = vmatpush2.bf16.msra.mxu0 0
      %2117 = vmatprep.subr.bf16.mxu0 0
      %2118 = vmatpush2.bf16.msra.mxu0 0
      %2119 = vmatprep.subr.bf16.mxu0 0
      %2120 = vmatpush2.bf16.msra.mxu0 0
      %2121 = vmatprep.subr.bf16.mxu0 0
      %2122 = vmatpush2.bf16.msra.mxu0 0
      %2123 = vmatprep.subr.bf16.mxu0 0
      %2124 = vmatpush2.bf16.msra.mxu0 0
      %2125 = vmatprep.subr.bf16.mxu0 0
      %2126 = vmatpush2.bf16.msra.mxu0 0
      %2127 = vmatprep.subr.bf16.mxu0 0
      %2128 = vmatpush2.bf16.msra.mxu0 0
      %2129 = vmatprep.mubr.bf16.mxu0 0
      %2130 = vmatmul.mubr.bf16.gmra.mxu0 %v1935
      %v2131 = vpop.f32.mrf.mxu0
      %v2132 = vadd.f32 0.0, %v2131
      %v2133 = vpop.f32.mrf.mxu0
      %v2134 = vadd.f32 0.0, %v2133
      %v2135 = vpop.f32.mrf.mxu0
      %v2136 = vpop.f32.mrf.mxu0
      %2137 = vdwg.mxu0
      %2138 = vmatprep.subr.bf16.mxu0 0
      %2139 = vmatpush1.bf16.msra.mxu0 0
      %2140 = vmatprep.subr.bf16.mxu0 0
      %2141 = vmatpush1.bf16.msra.mxu0 0
      %2142 = vmatprep.subr.bf16.mxu0 0
      %2143 = vmatpush1.bf16.msra.mxu0 0
      %2144 = vmatprep.subr.bf16.mxu0 0
      %2145 = vmatpush1.bf16.msra.mxu0 0
      %2146 = vmatprep.subr.bf16.mxu0 0
      %2147 = vmatpush1.bf16.msra.mxu0 0
      %2148 = vmatprep.subr.bf16.mxu0 0
      %2149 = vmatpush1.bf16.msra.mxu0 0
      %2150 = vmatprep.subr.bf16.mxu0 0
      %2151 = vmatpush1.bf16.msra.mxu0 0
      %2152 = vmatprep.subr.bf16.mxu0 %v1959
      %2153 = vmatpush1.bf16.msra.mxu0 %v1956
      %2154 = vmatprep.subr.bf16.mxu0 0
      %2155 = vmatpush2.bf16.msra.mxu0 0
      %2156 = vmatprep.subr.bf16.mxu0 0
      %2157 = vmatpush2.bf16.msra.mxu0 0
      %2158 = vmatprep.subr.bf16.mxu0 0
      %2159 = vmatpush2.bf16.msra.mxu0 0
      %2160 = vmatprep.subr.bf16.mxu0 0
      %2161 = vmatpush2.bf16.msra.mxu0 0
      %2162 = vmatprep.subr.bf16.mxu0 0
      %2163 = vmatpush2.bf16.msra.mxu0 0
      %2164 = vmatprep.subr.bf16.mxu0 0
      %2165 = vmatpush2.bf16.msra.mxu0 0
      %2166 = vmatprep.subr.bf16.mxu0 0
      %2167 = vmatpush2.bf16.msra.mxu0 0
      %2168 = vmatprep.subr.bf16.mxu0 0
      %2169 = vmatpush2.bf16.msra.mxu0 0
      %2170 = vmatprep.mubr.bf16.mxu0 0
      %2171 = vmatmul.mubr.bf16.gmra.mxu0 %v1935
      %v2172 = vpop.f32.mrf.mxu0
      %v2173 = vadd.f32 0.0, %v2172
      %v2174 = vpop.f32.mrf.mxu0
      %v2175 = vadd.f32 0.0, %v2174
      %v2176 = vpop.f32.mrf.mxu0
      %v2177 = vpop.f32.mrf.mxu0
      %2178 = vdwg.mxu0
      %2179 = vmatprep.subr.bf16.mxu0 0
      %2180 = vmatpush1.bf16.msra.mxu0 0
      %2181 = vmatprep.subr.bf16.mxu0 0
      %2182 = vmatpush1.bf16.msra.mxu0 0
      %2183 = vmatprep.subr.bf16.mxu0 0
      %2184 = vmatpush1.bf16.msra.mxu0 0
      %2185 = vmatprep.subr.bf16.mxu0 0
      %2186 = vmatpush1.bf16.msra.mxu0 0
      %2187 = vmatprep.subr.bf16.mxu0 0
      %2188 = vmatpush1.bf16.msra.mxu0 0
      %2189 = vmatprep.subr.bf16.mxu0 0
      %2190 = vmatpush1.bf16.msra.mxu0 0
      %2191 = vmatprep.subr.bf16.mxu0 0
      %2192 = vmatpush1.bf16.msra.mxu0 0
      %2193 = vmatprep.subr.bf16.mxu0 %v1965
      %2194 = vmatpush1.bf16.msra.mxu0 %v1962
      %2195 = vmatprep.subr.bf16.mxu0 0
      %2196 = vmatpush2.bf16.msra.mxu0 0
      %2197 = vmatprep.subr.bf16.mxu0 0
      %2198 = vmatpush2.bf16.msra.mxu0 0
      %2199 = vmatprep.subr.bf16.mxu0 0
      %2200 = vmatpush2.bf16.msra.mxu0 0
      %2201 = vmatprep.subr.bf16.mxu0 0
      %2202 = vmatpush2.bf16.msra.mxu0 0
      %2203 = vmatprep.subr.bf16.mxu0 0
      %2204 = vmatpush2.bf16.msra.mxu0 0
      %2205 = vmatprep.subr.bf16.mxu0 0
      %2206 = vmatpush2.bf16.msra.mxu0 0
      %2207 = vmatprep.subr.bf16.mxu0 0
      %2208 = vmatpush2.bf16.msra.mxu0 0
      %2209 = vmatprep.subr.bf16.mxu0 0
      %2210 = vmatpush2.bf16.msra.mxu0 0
      %2211 = vmatprep.mubr.bf16.mxu0 0
      %2212 = vmatmul.mubr.bf16.gmra.mxu0 %v1935
      %v2213 = vpop.f32.mrf.mxu0
      %v2214 = vadd.f32 0.0, %v2213
      %v2215 = vpop.f32.mrf.mxu0
      %v2216 = vadd.f32 0.0, %v2215
      %v2217 = vpop.f32.mrf.mxu0
      %v2218 = vpop.f32.mrf.mxu0
      %2219 = vdwg.mxu0
      %2220 = vmatprep.subr.bf16.mxu0 0
      %2221 = vmatpush1.bf16.msra.mxu0 0
      %2222 = vmatprep.subr.bf16.mxu0 0
      %2223 = vmatpush1.bf16.msra.mxu0 0
      %2224 = vmatprep.subr.bf16.mxu0 0
      %2225 = vmatpush1.bf16.msra.mxu0 0
      %2226 = vmatprep.subr.bf16.mxu0 0
      %2227 = vmatpush1.bf16.msra.mxu0 0
      %2228 = vmatprep.subr.bf16.mxu0 0
      %2229 = vmatpush1.bf16.msra.mxu0 0
      %2230 = vmatprep.subr.bf16.mxu0 0
      %2231 = vmatpush1.bf16.msra.mxu0 0
      %2232 = vmatprep.subr.bf16.mxu0 0
      %2233 = vmatpush1.bf16.msra.mxu0 0
      %2234 = vmatprep.subr.bf16.mxu0 %v1971
      %2235 = vmatpush1.bf16.msra.mxu0 %v1968
      %2236 = vmatprep.subr.bf16.mxu0 0
      %2237 = vmatpush2.bf16.msra.mxu0 0
      %2238 = vmatprep.subr.bf16.mxu0 0
      %2239 = vmatpush2.bf16.msra.mxu0 0
      %2240 = vmatprep.subr.bf16.mxu0 0
      %2241 = vmatpush2.bf16.msra.mxu0 0
      %2242 = vmatprep.subr.bf16.mxu0 0
      %2243 = vmatpush2.bf16.msra.mxu0 0
      %2244 = vmatprep.subr.bf16.mxu0 0
      %2245 = vmatpush2.bf16.msra.mxu0 0
      %2246 = vmatprep.subr.bf16.mxu0 0
      %2247 = vmatpush2.bf16.msra.mxu0 0
      %2248 = vmatprep.subr.bf16.mxu0 0
      %2249 = vmatpush2.bf16.msra.mxu0 0
      %2250 = vmatprep.subr.bf16.mxu0 0
      %2251 = vmatpush2.bf16.msra.mxu0 0
      %2252 = vmatprep.mubr.bf16.mxu0 0
      %2253 = vmatmul.mubr.bf16.gmra.mxu0 %v1935
      %v2254 = vpop.f32.mrf.mxu0
      %v2255 = vadd.f32 0.0, %v2254
      %v2256 = vpop.f32.mrf.mxu0
      %v2257 = vadd.f32 0.0, %v2256
      %v2258 = vpop.f32.mrf.mxu0
      %v2259 = vpop.f32.mrf.mxu0
      %2260 = vdwg.mxu0
      %2261 = vmatprep.subr.bf16.mxu0 0
      %2262 = vmatpush1.bf16.msra.mxu0 0
      %2263 = vmatprep.subr.bf16.mxu0 0
      %2264 = vmatpush1.bf16.msra.mxu0 0
      %2265 = vmatprep.subr.bf16.mxu0 0
      %2266 = vmatpush1.bf16.msra.mxu0 0
      %2267 = vmatprep.subr.bf16.mxu0 0
      %2268 = vmatpush1.bf16.msra.mxu0 0
      %2269 = vmatprep.subr.bf16.mxu0 0
      %2270 = vmatpush1.bf16.msra.mxu0 0
      %2271 = vmatprep.subr.bf16.mxu0 0
      %2272 = vmatpush1.bf16.msra.mxu0 0
      %2273 = vmatprep.subr.bf16.mxu0 0
      %2274 = vmatpush1.bf16.msra.mxu0 0
      %2275 = vmatprep.subr.bf16.mxu0 %v1977
      %2276 = vmatpush1.bf16.msra.mxu0 %v1974
      %2277 = vmatprep.subr.bf16.mxu0 0
      %2278 = vmatpush2.bf16.msra.mxu0 0
      %2279 = vmatprep.subr.bf16.mxu0 0
      %2280 = vmatpush2.bf16.msra.mxu0 0
      %2281 = vmatprep.subr.bf16.mxu0 0
      %2282 = vmatpush2.bf16.msra.mxu0 0
      %2283 = vmatprep.subr.bf16.mxu0 0
      %2284 = vmatpush2.bf16.msra.mxu0 0
      %2285 = vmatprep.subr.bf16.mxu0 0
      %2286 = vmatpush2.bf16.msra.mxu0 0
      %2287 = vmatprep.subr.bf16.mxu0 0
      %2288 = vmatpush2.bf16.msra.mxu0 0
      %2289 = vmatprep.subr.bf16.mxu0 0
      %2290 = vmatpush2.bf16.msra.mxu0 0
      %2291 = vmatprep.subr.bf16.mxu0 0
      %2292 = vmatpush2.bf16.msra.mxu0 0
      %2293 = vmatprep.mubr.bf16.mxu0 0
      %2294 = vmatmul.mubr.bf16.gmra.mxu0 %v1935
      %v2295 = vpop.f32.mrf.mxu0
      %v2296 = vadd.f32 0.0, %v2295
      %v2297 = vpop.f32.mrf.mxu0
      %v2298 = vadd.f32 0.0, %v2297
      %v2299 = vpop.f32.mrf.mxu0
      %v2300 = vpop.f32.mrf.mxu0
      %2301 = vdwg.mxu0
      %2302 = vmatprep.subr.bf16.mxu0 0
      %2303 = vmatpush1.bf16.msra.mxu0 0
      %2304 = vmatprep.subr.bf16.mxu0 0
      %2305 = vmatpush1.bf16.msra.mxu0 0
      %2306 = vmatprep.subr.bf16.mxu0 0
      %2307 = vmatpush1.bf16.msra.mxu0 0
      %2308 = vmatprep.subr.bf16.mxu0 0
      %2309 = vmatpush1.bf16.msra.mxu0 0
      %2310 = vmatprep.subr.bf16.mxu0 0
      %2311 = vmatpush1.bf16.msra.mxu0 0
      %2312 = vmatprep.subr.bf16.mxu0 0
      %2313 = vmatpush1.bf16.msra.mxu0 0
      %2314 = vmatprep.subr.bf16.mxu0 0
      %2315 = vmatpush1.bf16.msra.mxu0 0
      %2316 = vmatprep.subr.bf16.mxu0 %v1983
      %2317 = vmatpush1.bf16.msra.mxu0 %v1980
      %2318 = vmatprep.subr.bf16.mxu0 0
      %2319 = vmatpush2.bf16.msra.mxu0 0
      %2320 = vmatprep.subr.bf16.mxu0 0
      %2321 = vmatpush2.bf16.msra.mxu0 0
      %2322 = vmatprep.subr.bf16.mxu0 0
      %2323 = vmatpush2.bf16.msra.mxu0 0
      %2324 = vmatprep.subr.bf16.mxu0 0
      %2325 = vmatpush2.bf16.msra.mxu0 0
      %2326 = vmatprep.subr.bf16.mxu0 0
      %2327 = vmatpush2.bf16.msra.mxu0 0
      %2328 = vmatprep.subr.bf16.mxu0 0
      %2329 = vmatpush2.bf16.msra.mxu0 0
      %2330 = vmatprep.subr.bf16.mxu0 0
      %2331 = vmatpush2.bf16.msra.mxu0 0
      %2332 = vmatprep.subr.bf16.mxu0 0
      %2333 = vmatpush2.bf16.msra.mxu0 0
      %2334 = vmatprep.mubr.bf16.mxu0 0
      %2335 = vmatmul.mubr.bf16.gmra.mxu0 %v1935
      %v2336 = vpop.f32.mrf.mxu0
      %v2337 = vadd.f32 0.0, %v2336
      %v2338 = vpop.f32.mrf.mxu0
      %v2339 = vadd.f32 0.0, %v2338
      %v2340 = vpop.f32.mrf.mxu0
      %v2341 = vpop.f32.mrf.mxu0
      %2342 = vdwg.mxu0
      %2343 = vmatprep.subr.bf16.mxu0 0
      %2344 = vmatpush1.bf16.msra.mxu0 0
      %2345 = vmatprep.subr.bf16.mxu0 0
      %2346 = vmatpush1.bf16.msra.mxu0 0
      %2347 = vmatprep.subr.bf16.mxu0 0
      %2348 = vmatpush1.bf16.msra.mxu0 0
      %2349 = vmatprep.subr.bf16.mxu0 0
      %2350 = vmatpush1.bf16.msra.mxu0 0
      %2351 = vmatprep.subr.bf16.mxu0 0
      %2352 = vmatpush1.bf16.msra.mxu0 0
      %2353 = vmatprep.subr.bf16.mxu0 0
      %2354 = vmatpush1.bf16.msra.mxu0 0
      %2355 = vmatprep.subr.bf16.mxu0 0
      %2356 = vmatpush1.bf16.msra.mxu0 0
      %2357 = vmatprep.subr.bf16.mxu0 %v1989
      %2358 = vmatpush1.bf16.msra.mxu0 %v1986
      %2359 = vmatprep.subr.bf16.mxu0 0
      %2360 = vmatpush2.bf16.msra.mxu0 0
      %2361 = vmatprep.subr.bf16.mxu0 0
      %2362 = vmatpush2.bf16.msra.mxu0 0
      %2363 = vmatprep.subr.bf16.mxu0 0
      %2364 = vmatpush2.bf16.msra.mxu0 0
      %2365 = vmatprep.subr.bf16.mxu0 0
      %2366 = vmatpush2.bf16.msra.mxu0 0
      %2367 = vmatprep.subr.bf16.mxu0 0
      %2368 = vmatpush2.bf16.msra.mxu0 0
      %2369 = vmatprep.subr.bf16.mxu0 0
      %2370 = vmatpush2.bf16.msra.mxu0 0
      %2371 = vmatprep.subr.bf16.mxu0 0
      %2372 = vmatpush2.bf16.msra.mxu0 0
      %2373 = vmatprep.subr.bf16.mxu0 0
      %2374 = vmatpush2.bf16.msra.mxu0 0
      %2375 = vmatprep.mubr.bf16.mxu0 0
      %2376 = vmatmul.mubr.bf16.gmra.mxu0 %v1935
      %v2377 = vpop.f32.mrf.mxu0
      %v2378 = vadd.f32 0.0, %v2377
      %v2379 = vpop.f32.mrf.mxu0
      %v2380 = vadd.f32 0.0, %v2379
      %v2381 = vpop.f32.mrf.mxu0
      %v2382 = vpop.f32.mrf.mxu0
      %2383 = vdwg.mxu0
      %2384 = vmatprep.subr.bf16.mxu0 0
      %2385 = vmatpush1.bf16.msra.mxu0 0
      %2386 = vmatprep.subr.bf16.mxu0 0
      %2387 = vmatpush1.bf16.msra.mxu0 0
      %2388 = vmatprep.subr.bf16.mxu0 0
      %2389 = vmatpush1.bf16.msra.mxu0 0
      %2390 = vmatprep.subr.bf16.mxu0 0
      %2391 = vmatpush1.bf16.msra.mxu0 0
      %2392 = vmatprep.subr.bf16.mxu0 0
      %2393 = vmatpush1.bf16.msra.mxu0 0
      %2394 = vmatprep.subr.bf16.mxu0 0
      %2395 = vmatpush1.bf16.msra.mxu0 0
      %2396 = vmatprep.subr.bf16.mxu0 0
      %2397 = vmatpush1.bf16.msra.mxu0 0
      %2398 = vmatprep.subr.bf16.mxu0 %v1995
      %2399 = vmatpush1.bf16.msra.mxu0 %v1992
      %2400 = vmatprep.subr.bf16.mxu0 0
      %2401 = vmatpush2.bf16.msra.mxu0 0
      %2402 = vmatprep.subr.bf16.mxu0 0
      %2403 = vmatpush2.bf16.msra.mxu0 0
      %2404 = vmatprep.subr.bf16.mxu0 0
      %2405 = vmatpush2.bf16.msra.mxu0 0
      %2406 = vmatprep.subr.bf16.mxu0 0
      %2407 = vmatpush2.bf16.msra.mxu0 0
      %2408 = vmatprep.subr.bf16.mxu0 0
      %2409 = vmatpush2.bf16.msra.mxu0 0
      %2410 = vmatprep.subr.bf16.mxu0 0
      %2411 = vmatpush2.bf16.msra.mxu0 0
      %2412 = vmatprep.subr.bf16.mxu0 0
      %2413 = vmatpush2.bf16.msra.mxu0 0
      %2414 = vmatprep.subr.bf16.mxu0 0
      %2415 = vmatpush2.bf16.msra.mxu0 0
      %2416 = vmatprep.mubr.bf16.mxu0 0
      %2417 = vmatmul.mubr.bf16.gmra.mxu0 %v1935
      %v2418 = vpop.f32.mrf.mxu0
      %v2419 = vadd.f32 0.0, %v2418
      %v2420 = vpop.f32.mrf.mxu0
      %v2421 = vadd.f32 0.0, %v2420
      %v2422 = vpop.f32.mrf.mxu0
      %v2423 = vpop.f32.mrf.mxu0
      %2424 = vdwg.mxu0
      %2425 = vmatprep.subr.bf16.mxu0 0
      %2426 = vmatpush1.bf16.msra.mxu0 0
      %2427 = vmatprep.subr.bf16.mxu0 0
      %2428 = vmatpush1.bf16.msra.mxu0 0
      %2429 = vmatprep.subr.bf16.mxu0 0
      %2430 = vmatpush1.bf16.msra.mxu0 0
      %2431 = vmatprep.subr.bf16.mxu0 0
      %2432 = vmatpush1.bf16.msra.mxu0 0
      %2433 = vmatprep.subr.bf16.mxu0 0
      %2434 = vmatpush1.bf16.msra.mxu0 0
      %2435 = vmatprep.subr.bf16.mxu0 0
      %2436 = vmatpush1.bf16.msra.mxu0 0
      %2437 = vmatprep.subr.bf16.mxu0 0
      %2438 = vmatpush1.bf16.msra.mxu0 0
      %2439 = vmatprep.subr.bf16.mxu0 %v2001
      %2440 = vmatpush1.bf16.msra.mxu0 %v1998
      %2441 = vmatprep.subr.bf16.mxu0 0
      %2442 = vmatpush2.bf16.msra.mxu0 0
      %2443 = vmatprep.subr.bf16.mxu0 0
      %2444 = vmatpush2.bf16.msra.mxu0 0
      %2445 = vmatprep.subr.bf16.mxu0 0
      %2446 = vmatpush2.bf16.msra.mxu0 0
      %2447 = vmatprep.subr.bf16.mxu0 0
      %2448 = vmatpush2.bf16.msra.mxu0 0
      %2449 = vmatprep.subr.bf16.mxu0 0
      %2450 = vmatpush2.bf16.msra.mxu0 0
      %2451 = vmatprep.subr.bf16.mxu0 0
      %2452 = vmatpush2.bf16.msra.mxu0 0
      %2453 = vmatprep.subr.bf16.mxu0 0
      %2454 = vmatpush2.bf16.msra.mxu0 0
      %2455 = vmatprep.subr.bf16.mxu0 0
      %2456 = vmatpush2.bf16.msra.mxu0 0
      %2457 = vmatprep.mubr.bf16.mxu0 0
      %2458 = vmatmul.mubr.bf16.gmra.mxu0 %v1935
      %v2459 = vpop.f32.mrf.mxu0
      %v2460 = vadd.f32 0.0, %v2459
      %v2461 = vpop.f32.mrf.mxu0
      %v2462 = vadd.f32 0.0, %v2461
      %v2463 = vpop.f32.mrf.mxu0
      %v2464 = vpop.f32.mrf.mxu0
      %2465 = vdwg.mxu0
      %2466 = vmatprep.subr.bf16.mxu0 0
      %2467 = vmatpush1.bf16.msra.mxu0 0
      %2468 = vmatprep.subr.bf16.mxu0 0
      %2469 = vmatpush1.bf16.msra.mxu0 0
      %2470 = vmatprep.subr.bf16.mxu0 0
      %2471 = vmatpush1.bf16.msra.mxu0 0
      %2472 = vmatprep.subr.bf16.mxu0 0
      %2473 = vmatpush1.bf16.msra.mxu0 0
      %2474 = vmatprep.subr.bf16.mxu0 0
      %2475 = vmatpush1.bf16.msra.mxu0 0
      %2476 = vmatprep.subr.bf16.mxu0 0
      %2477 = vmatpush1.bf16.msra.mxu0 0
      %2478 = vmatprep.subr.bf16.mxu0 0
      %2479 = vmatpush1.bf16.msra.mxu0 0
      %2480 = vmatprep.subr.bf16.mxu0 %v2007
      %2481 = vmatpush1.bf16.msra.mxu0 %v2004
      %2482 = vmatprep.subr.bf16.mxu0 0
      %2483 = vmatpush2.bf16.msra.mxu0 0
      %2484 = vmatprep.subr.bf16.mxu0 0
      %2485 = vmatpush2.bf16.msra.mxu0 0
      %2486 = vmatprep.subr.bf16.mxu0 0
      %2487 = vmatpush2.bf16.msra.mxu0 0
      %2488 = vmatprep.subr.bf16.mxu0 0
      %2489 = vmatpush2.bf16.msra.mxu0 0
      %2490 = vmatprep.subr.bf16.mxu0 0
      %2491 = vmatpush2.bf16.msra.mxu0 0
      %2492 = vmatprep.subr.bf16.mxu0 0
      %2493 = vmatpush2.bf16.msra.mxu0 0
      %2494 = vmatprep.subr.bf16.mxu0 0
      %2495 = vmatpush2.bf16.msra.mxu0 0
      %2496 = vmatprep.subr.bf16.mxu0 0
      %2497 = vmatpush2.bf16.msra.mxu0 0
      %2498 = vmatprep.mubr.bf16.mxu0 0
      %2499 = vmatmul.mubr.bf16.gmra.mxu0 %v1935
      %v2500 = vpop.f32.mrf.mxu0
      %v2501 = vadd.f32 0.0, %v2500
      %v2502 = vpop.f32.mrf.mxu0
      %v2503 = vadd.f32 0.0, %v2502
      %v2504 = vpop.f32.mrf.mxu0
      %v2505 = vpop.f32.mrf.mxu0
      %2506 = vdwg.mxu0
      %2507 = vmatprep.subr.bf16.mxu0 0
      %2508 = vmatpush1.bf16.msra.mxu0 0
      %2509 = vmatprep.subr.bf16.mxu0 0
      %2510 = vmatpush1.bf16.msra.mxu0 0
      %2511 = vmatprep.subr.bf16.mxu0 0
      %2512 = vmatpush1.bf16.msra.mxu0 0
      %2513 = vmatprep.subr.bf16.mxu0 0
      %2514 = vmatpush1.bf16.msra.mxu0 0
      %2515 = vmatprep.subr.bf16.mxu0 0
      %2516 = vmatpush1.bf16.msra.mxu0 0
      %2517 = vmatprep.subr.bf16.mxu0 0
      %2518 = vmatpush1.bf16.msra.mxu0 0
      %2519 = vmatprep.subr.bf16.mxu0 0
      %2520 = vmatpush1.bf16.msra.mxu0 0
      %2521 = vmatprep.subr.bf16.mxu0 %v2013
      %2522 = vmatpush1.bf16.msra.mxu0 %v2010
      %2523 = vmatprep.subr.bf16.mxu0 0
      %2524 = vmatpush2.bf16.msra.mxu0 0
      %2525 = vmatprep.subr.bf16.mxu0 0
      %2526 = vmatpush2.bf16.msra.mxu0 0
      %2527 = vmatprep.subr.bf16.mxu0 0
      %2528 = vmatpush2.bf16.msra.mxu0 0
      %2529 = vmatprep.subr.bf16.mxu0 0
      %2530 = vmatpush2.bf16.msra.mxu0 0
      %2531 = vmatprep.subr.bf16.mxu0 0
      %2532 = vmatpush2.bf16.msra.mxu0 0
      %2533 = vmatprep.subr.bf16.mxu0 0
      %2534 = vmatpush2.bf16.msra.mxu0 0
      %2535 = vmatprep.subr.bf16.mxu0 0
      %2536 = vmatpush2.bf16.msra.mxu0 0
      %2537 = vmatprep.subr.bf16.mxu0 0
      %2538 = vmatpush2.bf16.msra.mxu0 0
      %2539 = vmatprep.mubr.bf16.mxu0 0
      %2540 = vmatmul.mubr.bf16.gmra.mxu0 %v1935
      %v2541 = vpop.f32.mrf.mxu0
      %v2542 = vadd.f32 0.0, %v2541
      %v2543 = vpop.f32.mrf.mxu0
      %v2544 = vadd.f32 0.0, %v2543
      %v2545 = vpop.f32.mrf.mxu0
      %v2546 = vpop.f32.mrf.mxu0
      %2547 = vdwg.mxu0
      %v2548 = vadd.f32 %v1232, %v2050
      %v2549 = vadd.f32 %v1234, %v2052
      %v2550 = vadd.f32 %v1273, %v2091
      %v2551 = vadd.f32 %v1275, %v2093
      %v2552 = vadd.f32 %v1314, %v2132
      %v2553 = vadd.f32 %v1316, %v2134
      %v2554 = vadd.f32 %v1355, %v2173
      %v2555 = vadd.f32 %v1357, %v2175
      %v2556 = vadd.f32 %v1396, %v2214
      %v2557 = vadd.f32 %v1398, %v2216
      %v2558 = vadd.f32 %v1437, %v2255
      %v2559 = vadd.f32 %v1439, %v2257
      %v2560 = vadd.f32 %v1478, %v2296
      %v2561 = vadd.f32 %v1480, %v2298
      %v2562 = vadd.f32 %v1519, %v2337
      %v2563 = vadd.f32 %v1521, %v2339
      %v2564 = vadd.f32 %v1560, %v2378
      %v2565 = vadd.f32 %v1562, %v2380
      %v2566 = vadd.f32 %v1601, %v2419
      %v2567 = vadd.f32 %v1603, %v2421
      %v2568 = vadd.f32 %v1642, %v2460
      %v2569 = vadd.f32 %v1644, %v2462
      %v2570 = vadd.f32 %v1683, %v2501
      %v2571 = vadd.f32 %v1685, %v2503
      %v2572 = vadd.f32 %v1724, %v2542
      %v2573 = vadd.f32 %v1726, %v2544
      %s2574 = scalar_lea.vmem %s1, 12
      %v2575 = vld [vmem:[%s2574] sm:$0xf]
      %v2576 = vld [vmem:[%s285] sm:$0xff]
      %v2577 = vld [vmem:[%s285 + $0x8] sm:$0xff]
      %v2578 = vld [vmem:[%s285 + $0x10] sm:$0xff]
      %v2579 = vld [vmem:[%s285 + $0x18] sm:$0xff]
      %v2580 = vld [vmem:[%s285 + $0x20] sm:$0xff]
      %v2581 = vld [vmem:[%s285 + $0x28] sm:$0xff]
      %v2582 = vld [vmem:[%s285 + $0x30] sm:$0xf]
      %v2590 = vcombine.high %v2576, %v2576
      %v2592 = vunpack.c.l.s4 1983009808
      %v2593 = vunpack.c.0.s8 %v2592
      %v2594 = vlaneseq
      %v2595 = vshrl.u32 %v2594, 7
      %v2596 = vsub.s32 %v2593, %v2595
      %v2597 = vrot.slane %v2576, %v2596
      %v2599 = vunpack.c.l.s4 1983009808
      %v2600 = vunpack.c.0.s8 %v2599
      %v2601 = vlaneseq
      %v2602 = vshrl.u32 %v2601, 7
      %v2603 = vsub.s32 %v2600, %v2602
      %v2604 = vrot.slane %v2590, %v2603
      %v2605 = vcombine.high %v2597, %v2597
      %v2606 = vcombine.high %v2604, %v2604
      %v2607 = vcombine.high %v2577, %v2577
      %v2609 = vunpack.c.l.s4 1983009808
      %v2610 = vunpack.c.0.s8 %v2609
      %v2611 = vlaneseq
      %v2612 = vshrl.u32 %v2611, 7
      %v2613 = vsub.s32 %v2610, %v2612
      %v2614 = vrot.slane %v2577, %v2613
      %v2616 = vunpack.c.l.s4 1983009808
      %v2617 = vunpack.c.0.s8 %v2616
      %v2618 = vlaneseq
      %v2619 = vshrl.u32 %v2618, 7
      %v2620 = vsub.s32 %v2617, %v2619
      %v2621 = vrot.slane %v2607, %v2620
      %v2622 = vcombine.high %v2614, %v2614
      %v2623 = vcombine.high %v2621, %v2621
      %v2624 = vcombine.high %v2578, %v2578
      %v2626 = vunpack.c.l.s4 1983009808
      %v2627 = vunpack.c.0.s8 %v2626
      %v2628 = vlaneseq
      %v2629 = vshrl.u32 %v2628, 7
      %v2630 = vsub.s32 %v2627, %v2629
      %v2631 = vrot.slane %v2578, %v2630
      %v2633 = vunpack.c.l.s4 1983009808
      %v2634 = vunpack.c.0.s8 %v2633
      %v2635 = vlaneseq
      %v2636 = vshrl.u32 %v2635, 7
      %v2637 = vsub.s32 %v2634, %v2636
      %v2638 = vrot.slane %v2624, %v2637
      %v2639 = vcombine.high %v2631, %v2631
      %v2640 = vcombine.high %v2638, %v2638
      %v2641 = vcombine.high %v2579, %v2579
      %v2643 = vunpack.c.l.s4 1983009808
      %v2644 = vunpack.c.0.s8 %v2643
      %v2645 = vlaneseq
      %v2646 = vshrl.u32 %v2645, 7
      %v2647 = vsub.s32 %v2644, %v2646
      %v2648 = vrot.slane %v2579, %v2647
      %v2650 = vunpack.c.l.s4 1983009808
      %v2651 = vunpack.c.0.s8 %v2650
      %v2652 = vlaneseq
      %v2653 = vshrl.u32 %v2652, 7
      %v2654 = vsub.s32 %v2651, %v2653
      %v2655 = vrot.slane %v2641, %v2654
      %v2656 = vcombine.high %v2648, %v2648
      %v2657 = vcombine.high %v2655, %v2655
      %v2658 = vcombine.high %v2580, %v2580
      %v2660 = vunpack.c.l.s4 1983009808
      %v2661 = vunpack.c.0.s8 %v2660
      %v2662 = vlaneseq
      %v2663 = vshrl.u32 %v2662, 7
      %v2664 = vsub.s32 %v2661, %v2663
      %v2665 = vrot.slane %v2580, %v2664
      %v2667 = vunpack.c.l.s4 1983009808
      %v2668 = vunpack.c.0.s8 %v2667
      %v2669 = vlaneseq
      %v2670 = vshrl.u32 %v2669, 7
      %v2671 = vsub.s32 %v2668, %v2670
      %v2672 = vrot.slane %v2658, %v2671
      %v2673 = vcombine.high %v2665, %v2665
      %v2674 = vcombine.high %v2672, %v2672
      %v2675 = vcombine.high %v2581, %v2581
      %v2677 = vunpack.c.l.s4 1983009808
      %v2678 = vunpack.c.0.s8 %v2677
      %v2679 = vlaneseq
      %v2680 = vshrl.u32 %v2679, 7
      %v2681 = vsub.s32 %v2678, %v2680
      %v2682 = vrot.slane %v2581, %v2681
      %v2684 = vunpack.c.l.s4 1983009808
      %v2685 = vunpack.c.0.s8 %v2684
      %v2686 = vlaneseq
      %v2687 = vshrl.u32 %v2686, 7
      %v2688 = vsub.s32 %v2685, %v2687
      %v2689 = vrot.slane %v2675, %v2688
      %v2690 = vcombine.high %v2682, %v2682
      %v2691 = vcombine.high %v2689, %v2689
      %v2693 = vunpack.c.l.s4 1983009808
      %v2694 = vunpack.c.0.s8 %v2693
      %v2695 = vlaneseq
      %v2696 = vshrl.u32 %v2695, 7
      %v2697 = vsub.s32 %v2694, %v2696
      %v2698 = vrot.slane %v2582, %v2697
      %v2699 = vcombine.high %v2698, %v2698
      %2700 = vrot.lane.b32.xlu0 %v2597, 110
      %v2701 = vpop.permute.xlu0 %2700
      %2702 = vrot.lane.b32.xlu0 %v2605, 110
      %v2703 = vpop.permute.xlu0 %2702
      %2704 = vrot.lane.b32.xlu0 %v2604, 110
      %v2705 = vpop.permute.xlu0 %2704
      %2706 = vrot.lane.b32.xlu0 %v2606, 110
      %v2707 = vpop.permute.xlu0 %2706
      %2708 = vrot.lane.b32.xlu0 %v2614, 110
      %v2709 = vpop.permute.xlu0 %2708
      %2710 = vrot.lane.b32.xlu0 %v2622, 110
      %v2711 = vpop.permute.xlu0 %2710
      %2712 = vrot.lane.b32.xlu0 %v2621, 110
      %v2713 = vpop.permute.xlu0 %2712
      %2714 = vrot.lane.b32.xlu0 %v2623, 110
      %v2715 = vpop.permute.xlu0 %2714
      %2716 = vrot.lane.b32.xlu0 %v2631, 110
      %v2717 = vpop.permute.xlu0 %2716
      %2718 = vrot.lane.b32.xlu0 %v2639, 110
      %v2719 = vpop.permute.xlu0 %2718
      %2720 = vrot.lane.b32.xlu0 %v2638, 110
      %v2721 = vpop.permute.xlu0 %2720
      %2722 = vrot.lane.b32.xlu0 %v2640, 110
      %v2723 = vpop.permute.xlu0 %2722
      %2724 = vrot.lane.b32.xlu0 %v2648, 110
      %v2725 = vpop.permute.xlu0 %2724
      %2726 = vrot.lane.b32.xlu0 %v2656, 110
      %v2727 = vpop.permute.xlu0 %2726
      %2728 = vrot.lane.b32.xlu0 %v2655, 110
      %v2729 = vpop.permute.xlu0 %2728
      %2730 = vrot.lane.b32.xlu0 %v2657, 110
      %v2731 = vpop.permute.xlu0 %2730
      %2732 = vrot.lane.b32.xlu0 %v2665, 110
      %v2733 = vpop.permute.xlu0 %2732
      %2734 = vrot.lane.b32.xlu0 %v2673, 110
      %v2735 = vpop.permute.xlu0 %2734
      %2736 = vrot.lane.b32.xlu0 %v2672, 110
      %v2737 = vpop.permute.xlu0 %2736
      %2738 = vrot.lane.b32.xlu0 %v2674, 110
      %v2739 = vpop.permute.xlu0 %2738
      %2740 = vrot.lane.b32.xlu0 %v2682, 110
      %v2741 = vpop.permute.xlu0 %2740
      %2742 = vrot.lane.b32.xlu0 %v2690, 110
      %v2743 = vpop.permute.xlu0 %2742
      %2744 = vrot.lane.b32.xlu0 %v2689, 110
      %v2745 = vpop.permute.xlu0 %2744
      %2746 = vrot.lane.b32.xlu0 %v2691, 110
      %v2747 = vpop.permute.xlu0 %2746
      %2748 = vrot.lane.b32.xlu0 %v2698, 110
      %v2749 = vpop.permute.xlu0 %2748
      %2750 = vrot.lane.b32.xlu0 %v2699, 110
      %v2751 = vpop.permute.xlu0 %2750
      %vm2752 = vcmask 900096
      %v2753 = vsel %vm2752, %v2701, %v2703
      %v2754 = vsel %vm2752, %v2703, %v2705
      %v2755 = vsel %vm2752, %v2705, %v2707
      %v2756 = vsel %vm2752, %v2707, %v2709
      %v2757 = vsel %vm2752, %v2709, %v2711
      %v2758 = vsel %vm2752, %v2711, %v2713
      %v2759 = vsel %vm2752, %v2713, %v2715
      %v2760 = vsel %vm2752, %v2715, %v2717
      %v2761 = vsel %vm2752, %v2717, %v2719
      %v2762 = vsel %vm2752, %v2719, %v2721
      %v2763 = vsel %vm2752, %v2721, %v2723
      %v2764 = vsel %vm2752, %v2723, %v2725
      %v2765 = vsel %vm2752, %v2725, %v2727
      %v2766 = vsel %vm2752, %v2727, %v2729
      %v2767 = vsel %vm2752, %v2729, %v2731
      %v2768 = vsel %vm2752, %v2731, %v2733
      %v2769 = vsel %vm2752, %v2733, %v2735
      %v2770 = vsel %vm2752, %v2735, %v2737
      %v2771 = vsel %vm2752, %v2737, %v2739
      %v2772 = vsel %vm2752, %v2739, %v2741
      %v2773 = vsel %vm2752, %v2741, %v2743
      %v2774 = vsel %vm2752, %v2743, %v2745
      %v2775 = vsel %vm2752, %v2745, %v2747
      %v2776 = vsel %vm2752, %v2747, %v2749
      %v2777 = vsel %vm2752, %v2749, %v2751
      %v2779 = vsel %vm500, %v2575, 0
      %v2782 = vsel %vm504, %v2753, 0
      %v2785 = vsel %vm504, %v2754, 0
      %v2788 = vsel %vm504, %v2755, 0
      %v2791 = vsel %vm504, %v2756, 0
      %v2794 = vsel %vm504, %v2757, 0
      %v2797 = vsel %vm504, %v2758, 0
      %v2800 = vsel %vm504, %v2759, 0
      %v2803 = vsel %vm504, %v2760, 0
      %v2806 = vsel %vm504, %v2761, 0
      %v2809 = vsel %vm504, %v2762, 0
      %v2812 = vsel %vm504, %v2763, 0
      %v2815 = vsel %vm504, %v2764, 0
      %v2818 = vsel %vm504, %v2765, 0
      %v2821 = vsel %vm504, %v2766, 0
      %v2824 = vsel %vm504, %v2767, 0
      %v2827 = vsel %vm504, %v2768, 0
      %v2830 = vsel %vm504, %v2769, 0
      %v2833 = vsel %vm504, %v2770, 0
      %v2836 = vsel %vm504, %v2771, 0
      %v2839 = vsel %vm504, %v2772, 0
      %v2842 = vsel %vm504, %v2773, 0
      %v2845 = vsel %vm504, %v2774, 0
      %v2848 = vsel %vm504, %v2775, 0
      %v2851 = vsel %vm504, %v2776, 0
      %v2854 = vsel %vm504, %v2777, 0
      %v2857 = vsel %vm504, %v2751, 0
      %2859 = vmatprep.subr.bf16.mxu0 0
      %2860 = vmatpush1.bf16.msra.mxu0 0
      %2861 = vmatprep.subr.bf16.mxu0 0
      %2862 = vmatpush1.bf16.msra.mxu0 0
      %2863 = vmatprep.subr.bf16.mxu0 0
      %2864 = vmatpush1.bf16.msra.mxu0 0
      %2865 = vmatprep.subr.bf16.mxu0 0
      %2866 = vmatpush1.bf16.msra.mxu0 0
      %2867 = vmatprep.subr.bf16.mxu0 0
      %2868 = vmatpush1.bf16.msra.mxu0 0
      %2869 = vmatprep.subr.bf16.mxu0 0
      %2870 = vmatpush1.bf16.msra.mxu0 0
      %2871 = vmatprep.subr.bf16.mxu0 0
      %2872 = vmatpush1.bf16.msra.mxu0 0
      %2873 = vmatprep.subr.bf16.mxu0 %v2785
      %2874 = vmatpush1.bf16.msra.mxu0 %v2782
      %2875 = vmatprep.subr.bf16.mxu0 0
      %2876 = vmatpush2.bf16.msra.mxu0 0
      %2877 = vmatprep.subr.bf16.mxu0 0
      %2878 = vmatpush2.bf16.msra.mxu0 0
      %2879 = vmatprep.subr.bf16.mxu0 0
      %2880 = vmatpush2.bf16.msra.mxu0 0
      %2881 = vmatprep.subr.bf16.mxu0 0
      %2882 = vmatpush2.bf16.msra.mxu0 0
      %2883 = vmatprep.subr.bf16.mxu0 0
      %2884 = vmatpush2.bf16.msra.mxu0 0
      %2885 = vmatprep.subr.bf16.mxu0 0
      %2886 = vmatpush2.bf16.msra.mxu0 0
      %2887 = vmatprep.subr.bf16.mxu0 0
      %2888 = vmatpush2.bf16.msra.mxu0 0
      %2889 = vmatprep.subr.bf16.mxu0 0
      %2890 = vmatpush2.bf16.msra.mxu0 0
      %2891 = vmatprep.mubr.bf16.mxu0 0
      %2892 = vmatmul.mubr.bf16.gmra.mxu0 %v2779
      %v2893 = vpop.f32.mrf.mxu0
      %v2894 = vadd.f32 0.0, %v2893
      %v2895 = vpop.f32.mrf.mxu0
      %v2896 = vadd.f32 0.0, %v2895
      %v2897 = vpop.f32.mrf.mxu0
      %v2898 = vpop.f32.mrf.mxu0
      %2899 = vdwg.mxu0
      %2900 = vmatprep.subr.bf16.mxu0 0
      %2901 = vmatpush1.bf16.msra.mxu0 0
      %2902 = vmatprep.subr.bf16.mxu0 0
      %2903 = vmatpush1.bf16.msra.mxu0 0
      %2904 = vmatprep.subr.bf16.mxu0 0
      %2905 = vmatpush1.bf16.msra.mxu0 0
      %2906 = vmatprep.subr.bf16.mxu0 0
      %2907 = vmatpush1.bf16.msra.mxu0 0
      %2908 = vmatprep.subr.bf16.mxu0 0
      %2909 = vmatpush1.bf16.msra.mxu0 0
      %2910 = vmatprep.subr.bf16.mxu0 0
      %2911 = vmatpush1.bf16.msra.mxu0 0
      %2912 = vmatprep.subr.bf16.mxu0 0
      %2913 = vmatpush1.bf16.msra.mxu0 0
      %2914 = vmatprep.subr.bf16.mxu0 %v2791
      %2915 = vmatpush1.bf16.msra.mxu0 %v2788
      %2916 = vmatprep.subr.bf16.mxu0 0
      %2917 = vmatpush2.bf16.msra.mxu0 0
      %2918 = vmatprep.subr.bf16.mxu0 0
      %2919 = vmatpush2.bf16.msra.mxu0 0
      %2920 = vmatprep.subr.bf16.mxu0 0
      %2921 = vmatpush2.bf16.msra.mxu0 0
      %2922 = vmatprep.subr.bf16.mxu0 0
      %2923 = vmatpush2.bf16.msra.mxu0 0
      %2924 = vmatprep.subr.bf16.mxu0 0
      %2925 = vmatpush2.bf16.msra.mxu0 0
      %2926 = vmatprep.subr.bf16.mxu0 0
      %2927 = vmatpush2.bf16.msra.mxu0 0
      %2928 = vmatprep.subr.bf16.mxu0 0
      %2929 = vmatpush2.bf16.msra.mxu0 0
      %2930 = vmatprep.subr.bf16.mxu0 0
      %2931 = vmatpush2.bf16.msra.mxu0 0
      %2932 = vmatprep.mubr.bf16.mxu0 0
      %2933 = vmatmul.mubr.bf16.gmra.mxu0 %v2779
      %v2934 = vpop.f32.mrf.mxu0
      %v2935 = vadd.f32 0.0, %v2934
      %v2936 = vpop.f32.mrf.mxu0
      %v2937 = vadd.f32 0.0, %v2936
      %v2938 = vpop.f32.mrf.mxu0
      %v2939 = vpop.f32.mrf.mxu0
      %2940 = vdwg.mxu0
      %2941 = vmatprep.subr.bf16.mxu0 0
      %2942 = vmatpush1.bf16.msra.mxu0 0
      %2943 = vmatprep.subr.bf16.mxu0 0
      %2944 = vmatpush1.bf16.msra.mxu0 0
      %2945 = vmatprep.subr.bf16.mxu0 0
      %2946 = vmatpush1.bf16.msra.mxu0 0
      %2947 = vmatprep.subr.bf16.mxu0 0
      %2948 = vmatpush1.bf16.msra.mxu0 0
      %2949 = vmatprep.subr.bf16.mxu0 0
      %2950 = vmatpush1.bf16.msra.mxu0 0
      %2951 = vmatprep.subr.bf16.mxu0 0
      %2952 = vmatpush1.bf16.msra.mxu0 0
      %2953 = vmatprep.subr.bf16.mxu0 0
      %2954 = vmatpush1.bf16.msra.mxu0 0
      %2955 = vmatprep.subr.bf16.mxu0 %v2797
      %2956 = vmatpush1.bf16.msra.mxu0 %v2794
      %2957 = vmatprep.subr.bf16.mxu0 0
      %2958 = vmatpush2.bf16.msra.mxu0 0
      %2959 = vmatprep.subr.bf16.mxu0 0
      %2960 = vmatpush2.bf16.msra.mxu0 0
      %2961 = vmatprep.subr.bf16.mxu0 0
      %2962 = vmatpush2.bf16.msra.mxu0 0
      %2963 = vmatprep.subr.bf16.mxu0 0
      %2964 = vmatpush2.bf16.msra.mxu0 0
      %2965 = vmatprep.subr.bf16.mxu0 0
      %2966 = vmatpush2.bf16.msra.mxu0 0
      %2967 = vmatprep.subr.bf16.mxu0 0
      %2968 = vmatpush2.bf16.msra.mxu0 0
      %2969 = vmatprep.subr.bf16.mxu0 0
      %2970 = vmatpush2.bf16.msra.mxu0 0
      %2971 = vmatprep.subr.bf16.mxu0 0
      %2972 = vmatpush2.bf16.msra.mxu0 0
      %2973 = vmatprep.mubr.bf16.mxu0 0
      %2974 = vmatmul.mubr.bf16.gmra.mxu0 %v2779
      %v2975 = vpop.f32.mrf.mxu0
      %v2976 = vadd.f32 0.0, %v2975
      %v2977 = vpop.f32.mrf.mxu0
      %v2978 = vadd.f32 0.0, %v2977
      %v2979 = vpop.f32.mrf.mxu0
      %v2980 = vpop.f32.mrf.mxu0
      %2981 = vdwg.mxu0
      %2982 = vmatprep.subr.bf16.mxu0 0
      %2983 = vmatpush1.bf16.msra.mxu0 0
      %2984 = vmatprep.subr.bf16.mxu0 0
      %2985 = vmatpush1.bf16.msra.mxu0 0
      %2986 = vmatprep.subr.bf16.mxu0 0
      %2987 = vmatpush1.bf16.msra.mxu0 0
      %2988 = vmatprep.subr.bf16.mxu0 0
      %2989 = vmatpush1.bf16.msra.mxu0 0
      %2990 = vmatprep.subr.bf16.mxu0 0
      %2991 = vmatpush1.bf16.msra.mxu0 0
      %2992 = vmatprep.subr.bf16.mxu0 0
      %2993 = vmatpush1.bf16.msra.mxu0 0
      %2994 = vmatprep.subr.bf16.mxu0 0
      %2995 = vmatpush1.bf16.msra.mxu0 0
      %2996 = vmatprep.subr.bf16.mxu0 %v2803
      %2997 = vmatpush1.bf16.msra.mxu0 %v2800
      %2998 = vmatprep.subr.bf16.mxu0 0
      %2999 = vmatpush2.bf16.msra.mxu0 0
      %3000 = vmatprep.subr.bf16.mxu0 0
      %3001 = vmatpush2.bf16.msra.mxu0 0
      %3002 = vmatprep.subr.bf16.mxu0 0
      %3003 = vmatpush2.bf16.msra.mxu0 0
      %3004 = vmatprep.subr.bf16.mxu0 0
      %3005 = vmatpush2.bf16.msra.mxu0 0
      %3006 = vmatprep.subr.bf16.mxu0 0
      %3007 = vmatpush2.bf16.msra.mxu0 0
      %3008 = vmatprep.subr.bf16.mxu0 0
      %3009 = vmatpush2.bf16.msra.mxu0 0
      %3010 = vmatprep.subr.bf16.mxu0 0
      %3011 = vmatpush2.bf16.msra.mxu0 0
      %3012 = vmatprep.subr.bf16.mxu0 0
      %3013 = vmatpush2.bf16.msra.mxu0 0
      %3014 = vmatprep.mubr.bf16.mxu0 0
      %3015 = vmatmul.mubr.bf16.gmra.mxu0 %v2779
      %v3016 = vpop.f32.mrf.mxu0
      %v3017 = vadd.f32 0.0, %v3016
      %v3018 = vpop.f32.mrf.mxu0
      %v3019 = vadd.f32 0.0, %v3018
      %v3020 = vpop.f32.mrf.mxu0
      %v3021 = vpop.f32.mrf.mxu0
      %3022 = vdwg.mxu0
      %3023 = vmatprep.subr.bf16.mxu0 0
      %3024 = vmatpush1.bf16.msra.mxu0 0
      %3025 = vmatprep.subr.bf16.mxu0 0
      %3026 = vmatpush1.bf16.msra.mxu0 0
      %3027 = vmatprep.subr.bf16.mxu0 0
      %3028 = vmatpush1.bf16.msra.mxu0 0
      %3029 = vmatprep.subr.bf16.mxu0 0
      %3030 = vmatpush1.bf16.msra.mxu0 0
      %3031 = vmatprep.subr.bf16.mxu0 0
      %3032 = vmatpush1.bf16.msra.mxu0 0
      %3033 = vmatprep.subr.bf16.mxu0 0
      %3034 = vmatpush1.bf16.msra.mxu0 0
      %3035 = vmatprep.subr.bf16.mxu0 0
      %3036 = vmatpush1.bf16.msra.mxu0 0
      %3037 = vmatprep.subr.bf16.mxu0 %v2809
      %3038 = vmatpush1.bf16.msra.mxu0 %v2806
      %3039 = vmatprep.subr.bf16.mxu0 0
      %3040 = vmatpush2.bf16.msra.mxu0 0
      %3041 = vmatprep.subr.bf16.mxu0 0
      %3042 = vmatpush2.bf16.msra.mxu0 0
      %3043 = vmatprep.subr.bf16.mxu0 0
      %3044 = vmatpush2.bf16.msra.mxu0 0
      %3045 = vmatprep.subr.bf16.mxu0 0
      %3046 = vmatpush2.bf16.msra.mxu0 0
      %3047 = vmatprep.subr.bf16.mxu0 0
      %3048 = vmatpush2.bf16.msra.mxu0 0
      %3049 = vmatprep.subr.bf16.mxu0 0
      %3050 = vmatpush2.bf16.msra.mxu0 0
      %3051 = vmatprep.subr.bf16.mxu0 0
      %3052 = vmatpush2.bf16.msra.mxu0 0
      %3053 = vmatprep.subr.bf16.mxu0 0
      %3054 = vmatpush2.bf16.msra.mxu0 0
      %3055 = vmatprep.mubr.bf16.mxu0 0
      %3056 = vmatmul.mubr.bf16.gmra.mxu0 %v2779
      %v3057 = vpop.f32.mrf.mxu0
      %v3058 = vadd.f32 0.0, %v3057
      %v3059 = vpop.f32.mrf.mxu0
      %v3060 = vadd.f32 0.0, %v3059
      %v3061 = vpop.f32.mrf.mxu0
      %v3062 = vpop.f32.mrf.mxu0
      %3063 = vdwg.mxu0
      %3064 = vmatprep.subr.bf16.mxu0 0
      %3065 = vmatpush1.bf16.msra.mxu0 0
      %3066 = vmatprep.subr.bf16.mxu0 0
      %3067 = vmatpush1.bf16.msra.mxu0 0
      %3068 = vmatprep.subr.bf16.mxu0 0
      %3069 = vmatpush1.bf16.msra.mxu0 0
      %3070 = vmatprep.subr.bf16.mxu0 0
      %3071 = vmatpush1.bf16.msra.mxu0 0
      %3072 = vmatprep.subr.bf16.mxu0 0
      %3073 = vmatpush1.bf16.msra.mxu0 0
      %3074 = vmatprep.subr.bf16.mxu0 0
      %3075 = vmatpush1.bf16.msra.mxu0 0
      %3076 = vmatprep.subr.bf16.mxu0 0
      %3077 = vmatpush1.bf16.msra.mxu0 0
      %3078 = vmatprep.subr.bf16.mxu0 %v2815
      %3079 = vmatpush1.bf16.msra.mxu0 %v2812
      %3080 = vmatprep.subr.bf16.mxu0 0
      %3081 = vmatpush2.bf16.msra.mxu0 0
      %3082 = vmatprep.subr.bf16.mxu0 0
      %3083 = vmatpush2.bf16.msra.mxu0 0
      %3084 = vmatprep.subr.bf16.mxu0 0
      %3085 = vmatpush2.bf16.msra.mxu0 0
      %3086 = vmatprep.subr.bf16.mxu0 0
      %3087 = vmatpush2.bf16.msra.mxu0 0
      %3088 = vmatprep.subr.bf16.mxu0 0
      %3089 = vmatpush2.bf16.msra.mxu0 0
      %3090 = vmatprep.subr.bf16.mxu0 0
      %3091 = vmatpush2.bf16.msra.mxu0 0
      %3092 = vmatprep.subr.bf16.mxu0 0
      %3093 = vmatpush2.bf16.msra.mxu0 0
      %3094 = vmatprep.subr.bf16.mxu0 0
      %3095 = vmatpush2.bf16.msra.mxu0 0
      %3096 = vmatprep.mubr.bf16.mxu0 0
      %3097 = vmatmul.mubr.bf16.gmra.mxu0 %v2779
      %v3098 = vpop.f32.mrf.mxu0
      %v3099 = vadd.f32 0.0, %v3098
      %v3100 = vpop.f32.mrf.mxu0
      %v3101 = vadd.f32 0.0, %v3100
      %v3102 = vpop.f32.mrf.mxu0
      %v3103 = vpop.f32.mrf.mxu0
      %3104 = vdwg.mxu0
      %3105 = vmatprep.subr.bf16.mxu0 0
      %3106 = vmatpush1.bf16.msra.mxu0 0
      %3107 = vmatprep.subr.bf16.mxu0 0
      %3108 = vmatpush1.bf16.msra.mxu0 0
      %3109 = vmatprep.subr.bf16.mxu0 0
      %3110 = vmatpush1.bf16.msra.mxu0 0
      %3111 = vmatprep.subr.bf16.mxu0 0
      %3112 = vmatpush1.bf16.msra.mxu0 0
      %3113 = vmatprep.subr.bf16.mxu0 0
      %3114 = vmatpush1.bf16.msra.mxu0 0
      %3115 = vmatprep.subr.bf16.mxu0 0
      %3116 = vmatpush1.bf16.msra.mxu0 0
      %3117 = vmatprep.subr.bf16.mxu0 0
      %3118 = vmatpush1.bf16.msra.mxu0 0
      %3119 = vmatprep.subr.bf16.mxu0 %v2821
      %3120 = vmatpush1.bf16.msra.mxu0 %v2818
      %3121 = vmatprep.subr.bf16.mxu0 0
      %3122 = vmatpush2.bf16.msra.mxu0 0
      %3123 = vmatprep.subr.bf16.mxu0 0
      %3124 = vmatpush2.bf16.msra.mxu0 0
      %3125 = vmatprep.subr.bf16.mxu0 0
      %3126 = vmatpush2.bf16.msra.mxu0 0
      %3127 = vmatprep.subr.bf16.mxu0 0
      %3128 = vmatpush2.bf16.msra.mxu0 0
      %3129 = vmatprep.subr.bf16.mxu0 0
      %3130 = vmatpush2.bf16.msra.mxu0 0
      %3131 = vmatprep.subr.bf16.mxu0 0
      %3132 = vmatpush2.bf16.msra.mxu0 0
      %3133 = vmatprep.subr.bf16.mxu0 0
      %3134 = vmatpush2.bf16.msra.mxu0 0
      %3135 = vmatprep.subr.bf16.mxu0 0
      %3136 = vmatpush2.bf16.msra.mxu0 0
      %3137 = vmatprep.mubr.bf16.mxu0 0
      %3138 = vmatmul.mubr.bf16.gmra.mxu0 %v2779
      %v3139 = vpop.f32.mrf.mxu0
      %v3140 = vadd.f32 0.0, %v3139
      %v3141 = vpop.f32.mrf.mxu0
      %v3142 = vadd.f32 0.0, %v3141
      %v3143 = vpop.f32.mrf.mxu0
      %v3144 = vpop.f32.mrf.mxu0
      %3145 = vdwg.mxu0
      %3146 = vmatprep.subr.bf16.mxu0 0
      %3147 = vmatpush1.bf16.msra.mxu0 0
      %3148 = vmatprep.subr.bf16.mxu0 0
      %3149 = vmatpush1.bf16.msra.mxu0 0
      %3150 = vmatprep.subr.bf16.mxu0 0
      %3151 = vmatpush1.bf16.msra.mxu0 0
      %3152 = vmatprep.subr.bf16.mxu0 0
      %3153 = vmatpush1.bf16.msra.mxu0 0
      %3154 = vmatprep.subr.bf16.mxu0 0
      %3155 = vmatpush1.bf16.msra.mxu0 0
      %3156 = vmatprep.subr.bf16.mxu0 0
      %3157 = vmatpush1.bf16.msra.mxu0 0
      %3158 = vmatprep.subr.bf16.mxu0 0
      %3159 = vmatpush1.bf16.msra.mxu0 0
      %3160 = vmatprep.subr.bf16.mxu0 %v2827
      %3161 = vmatpush1.bf16.msra.mxu0 %v2824
      %3162 = vmatprep.subr.bf16.mxu0 0
      %3163 = vmatpush2.bf16.msra.mxu0 0
      %3164 = vmatprep.subr.bf16.mxu0 0
      %3165 = vmatpush2.bf16.msra.mxu0 0
      %3166 = vmatprep.subr.bf16.mxu0 0
      %3167 = vmatpush2.bf16.msra.mxu0 0
      %3168 = vmatprep.subr.bf16.mxu0 0
      %3169 = vmatpush2.bf16.msra.mxu0 0
      %3170 = vmatprep.subr.bf16.mxu0 0
      %3171 = vmatpush2.bf16.msra.mxu0 0
      %3172 = vmatprep.subr.bf16.mxu0 0
      %3173 = vmatpush2.bf16.msra.mxu0 0
      %3174 = vmatprep.subr.bf16.mxu0 0
      %3175 = vmatpush2.bf16.msra.mxu0 0
      %3176 = vmatprep.subr.bf16.mxu0 0
      %3177 = vmatpush2.bf16.msra.mxu0 0
      %3178 = vmatprep.mubr.bf16.mxu0 0
      %3179 = vmatmul.mubr.bf16.gmra.mxu0 %v2779
      %v3180 = vpop.f32.mrf.mxu0
      %v3181 = vadd.f32 0.0, %v3180
      %v3182 = vpop.f32.mrf.mxu0
      %v3183 = vadd.f32 0.0, %v3182
      %v3184 = vpop.f32.mrf.mxu0
      %v3185 = vpop.f32.mrf.mxu0
      %3186 = vdwg.mxu0
      %3187 = vmatprep.subr.bf16.mxu0 0
      %3188 = vmatpush1.bf16.msra.mxu0 0
      %3189 = vmatprep.subr.bf16.mxu0 0
      %3190 = vmatpush1.bf16.msra.mxu0 0
      %3191 = vmatprep.subr.bf16.mxu0 0
      %3192 = vmatpush1.bf16.msra.mxu0 0
      %3193 = vmatprep.subr.bf16.mxu0 0
      %3194 = vmatpush1.bf16.msra.mxu0 0
      %3195 = vmatprep.subr.bf16.mxu0 0
      %3196 = vmatpush1.bf16.msra.mxu0 0
      %3197 = vmatprep.subr.bf16.mxu0 0
      %3198 = vmatpush1.bf16.msra.mxu0 0
      %3199 = vmatprep.subr.bf16.mxu0 0
      %3200 = vmatpush1.bf16.msra.mxu0 0
      %3201 = vmatprep.subr.bf16.mxu0 %v2833
      %3202 = vmatpush1.bf16.msra.mxu0 %v2830
      %3203 = vmatprep.subr.bf16.mxu0 0
      %3204 = vmatpush2.bf16.msra.mxu0 0
      %3205 = vmatprep.subr.bf16.mxu0 0
      %3206 = vmatpush2.bf16.msra.mxu0 0
      %3207 = vmatprep.subr.bf16.mxu0 0
      %3208 = vmatpush2.bf16.msra.mxu0 0
      %3209 = vmatprep.subr.bf16.mxu0 0
      %3210 = vmatpush2.bf16.msra.mxu0 0
      %3211 = vmatprep.subr.bf16.mxu0 0
      %3212 = vmatpush2.bf16.msra.mxu0 0
      %3213 = vmatprep.subr.bf16.mxu0 0
      %3214 = vmatpush2.bf16.msra.mxu0 0
      %3215 = vmatprep.subr.bf16.mxu0 0
      %3216 = vmatpush2.bf16.msra.mxu0 0
      %3217 = vmatprep.subr.bf16.mxu0 0
      %3218 = vmatpush2.bf16.msra.mxu0 0
      %3219 = vmatprep.mubr.bf16.mxu0 0
      %3220 = vmatmul.mubr.bf16.gmra.mxu0 %v2779
      %v3221 = vpop.f32.mrf.mxu0
      %v3222 = vadd.f32 0.0, %v3221
      %v3223 = vpop.f32.mrf.mxu0
      %v3224 = vadd.f32 0.0, %v3223
      %v3225 = vpop.f32.mrf.mxu0
      %v3226 = vpop.f32.mrf.mxu0
      %3227 = vdwg.mxu0
      %3228 = vmatprep.subr.bf16.mxu0 0
      %3229 = vmatpush1.bf16.msra.mxu0 0
      %3230 = vmatprep.subr.bf16.mxu0 0
      %3231 = vmatpush1.bf16.msra.mxu0 0
      %3232 = vmatprep.subr.bf16.mxu0 0
      %3233 = vmatpush1.bf16.msra.mxu0 0
      %3234 = vmatprep.subr.bf16.mxu0 0
      %3235 = vmatpush1.bf16.msra.mxu0 0
      %3236 = vmatprep.subr.bf16.mxu0 0
      %3237 = vmatpush1.bf16.msra.mxu0 0
      %3238 = vmatprep.subr.bf16.mxu0 0
      %3239 = vmatpush1.bf16.msra.mxu0 0
      %3240 = vmatprep.subr.bf16.mxu0 0
      %3241 = vmatpush1.bf16.msra.mxu0 0
      %3242 = vmatprep.subr.bf16.mxu0 %v2839
      %3243 = vmatpush1.bf16.msra.mxu0 %v2836
      %3244 = vmatprep.subr.bf16.mxu0 0
      %3245 = vmatpush2.bf16.msra.mxu0 0
      %3246 = vmatprep.subr.bf16.mxu0 0
      %3247 = vmatpush2.bf16.msra.mxu0 0
      %3248 = vmatprep.subr.bf16.mxu0 0
      %3249 = vmatpush2.bf16.msra.mxu0 0
      %3250 = vmatprep.subr.bf16.mxu0 0
      %3251 = vmatpush2.bf16.msra.mxu0 0
      %3252 = vmatprep.subr.bf16.mxu0 0
      %3253 = vmatpush2.bf16.msra.mxu0 0
      %3254 = vmatprep.subr.bf16.mxu0 0
      %3255 = vmatpush2.bf16.msra.mxu0 0
      %3256 = vmatprep.subr.bf16.mxu0 0
      %3257 = vmatpush2.bf16.msra.mxu0 0
      %3258 = vmatprep.subr.bf16.mxu0 0
      %3259 = vmatpush2.bf16.msra.mxu0 0
      %3260 = vmatprep.mubr.bf16.mxu0 0
      %3261 = vmatmul.mubr.bf16.gmra.mxu0 %v2779
      %v3262 = vpop.f32.mrf.mxu0
      %v3263 = vadd.f32 0.0, %v3262
      %v3264 = vpop.f32.mrf.mxu0
      %v3265 = vadd.f32 0.0, %v3264
      %v3266 = vpop.f32.mrf.mxu0
      %v3267 = vpop.f32.mrf.mxu0
      %3268 = vdwg.mxu0
      %3269 = vmatprep.subr.bf16.mxu0 0
      %3270 = vmatpush1.bf16.msra.mxu0 0
      %3271 = vmatprep.subr.bf16.mxu0 0
      %3272 = vmatpush1.bf16.msra.mxu0 0
      %3273 = vmatprep.subr.bf16.mxu0 0
      %3274 = vmatpush1.bf16.msra.mxu0 0
      %3275 = vmatprep.subr.bf16.mxu0 0
      %3276 = vmatpush1.bf16.msra.mxu0 0
      %3277 = vmatprep.subr.bf16.mxu0 0
      %3278 = vmatpush1.bf16.msra.mxu0 0
      %3279 = vmatprep.subr.bf16.mxu0 0
      %3280 = vmatpush1.bf16.msra.mxu0 0
      %3281 = vmatprep.subr.bf16.mxu0 0
      %3282 = vmatpush1.bf16.msra.mxu0 0
      %3283 = vmatprep.subr.bf16.mxu0 %v2845
      %3284 = vmatpush1.bf16.msra.mxu0 %v2842
      %3285 = vmatprep.subr.bf16.mxu0 0
      %3286 = vmatpush2.bf16.msra.mxu0 0
      %3287 = vmatprep.subr.bf16.mxu0 0
      %3288 = vmatpush2.bf16.msra.mxu0 0
      %3289 = vmatprep.subr.bf16.mxu0 0
      %3290 = vmatpush2.bf16.msra.mxu0 0
      %3291 = vmatprep.subr.bf16.mxu0 0
      %3292 = vmatpush2.bf16.msra.mxu0 0
      %3293 = vmatprep.subr.bf16.mxu0 0
      %3294 = vmatpush2.bf16.msra.mxu0 0
      %3295 = vmatprep.subr.bf16.mxu0 0
      %3296 = vmatpush2.bf16.msra.mxu0 0
      %3297 = vmatprep.subr.bf16.mxu0 0
      %3298 = vmatpush2.bf16.msra.mxu0 0
      %3299 = vmatprep.subr.bf16.mxu0 0
      %3300 = vmatpush2.bf16.msra.mxu0 0
      %3301 = vmatprep.mubr.bf16.mxu0 0
      %3302 = vmatmul.mubr.bf16.gmra.mxu0 %v2779
      %v3303 = vpop.f32.mrf.mxu0
      %v3304 = vadd.f32 0.0, %v3303
      %v3305 = vpop.f32.mrf.mxu0
      %v3306 = vadd.f32 0.0, %v3305
      %v3307 = vpop.f32.mrf.mxu0
      %v3308 = vpop.f32.mrf.mxu0
      %3309 = vdwg.mxu0
      %3310 = vmatprep.subr.bf16.mxu0 0
      %3311 = vmatpush1.bf16.msra.mxu0 0
      %3312 = vmatprep.subr.bf16.mxu0 0
      %3313 = vmatpush1.bf16.msra.mxu0 0
      %3314 = vmatprep.subr.bf16.mxu0 0
      %3315 = vmatpush1.bf16.msra.mxu0 0
      %3316 = vmatprep.subr.bf16.mxu0 0
      %3317 = vmatpush1.bf16.msra.mxu0 0
      %3318 = vmatprep.subr.bf16.mxu0 0
      %3319 = vmatpush1.bf16.msra.mxu0 0
      %3320 = vmatprep.subr.bf16.mxu0 0
      %3321 = vmatpush1.bf16.msra.mxu0 0
      %3322 = vmatprep.subr.bf16.mxu0 0
      %3323 = vmatpush1.bf16.msra.mxu0 0
      %3324 = vmatprep.subr.bf16.mxu0 %v2851
      %3325 = vmatpush1.bf16.msra.mxu0 %v2848
      %3326 = vmatprep.subr.bf16.mxu0 0
      %3327 = vmatpush2.bf16.msra.mxu0 0
      %3328 = vmatprep.subr.bf16.mxu0 0
      %3329 = vmatpush2.bf16.msra.mxu0 0
      %3330 = vmatprep.subr.bf16.mxu0 0
      %3331 = vmatpush2.bf16.msra.mxu0 0
      %3332 = vmatprep.subr.bf16.mxu0 0
      %3333 = vmatpush2.bf16.msra.mxu0 0
      %3334 = vmatprep.subr.bf16.mxu0 0
      %3335 = vmatpush2.bf16.msra.mxu0 0
      %3336 = vmatprep.subr.bf16.mxu0 0
      %3337 = vmatpush2.bf16.msra.mxu0 0
      %3338 = vmatprep.subr.bf16.mxu0 0
      %3339 = vmatpush2.bf16.msra.mxu0 0
      %3340 = vmatprep.subr.bf16.mxu0 0
      %3341 = vmatpush2.bf16.msra.mxu0 0
      %3342 = vmatprep.mubr.bf16.mxu0 0
      %3343 = vmatmul.mubr.bf16.gmra.mxu0 %v2779
      %v3344 = vpop.f32.mrf.mxu0
      %v3345 = vadd.f32 0.0, %v3344
      %v3346 = vpop.f32.mrf.mxu0
      %v3347 = vadd.f32 0.0, %v3346
      %v3348 = vpop.f32.mrf.mxu0
      %v3349 = vpop.f32.mrf.mxu0
      %3350 = vdwg.mxu0
      %3351 = vmatprep.subr.bf16.mxu0 0
      %3352 = vmatpush1.bf16.msra.mxu0 0
      %3353 = vmatprep.subr.bf16.mxu0 0
      %3354 = vmatpush1.bf16.msra.mxu0 0
      %3355 = vmatprep.subr.bf16.mxu0 0
      %3356 = vmatpush1.bf16.msra.mxu0 0
      %3357 = vmatprep.subr.bf16.mxu0 0
      %3358 = vmatpush1.bf16.msra.mxu0 0
      %3359 = vmatprep.subr.bf16.mxu0 0
      %3360 = vmatpush1.bf16.msra.mxu0 0
      %3361 = vmatprep.subr.bf16.mxu0 0
      %3362 = vmatpush1.bf16.msra.mxu0 0
      %3363 = vmatprep.subr.bf16.mxu0 0
      %3364 = vmatpush1.bf16.msra.mxu0 0
      %3365 = vmatprep.subr.bf16.mxu0 %v2857
      %3366 = vmatpush1.bf16.msra.mxu0 %v2854
      %3367 = vmatprep.subr.bf16.mxu0 0
      %3368 = vmatpush2.bf16.msra.mxu0 0
      %3369 = vmatprep.subr.bf16.mxu0 0
      %3370 = vmatpush2.bf16.msra.mxu0 0
      %3371 = vmatprep.subr.bf16.mxu0 0
      %3372 = vmatpush2.bf16.msra.mxu0 0
      %3373 = vmatprep.subr.bf16.mxu0 0
      %3374 = vmatpush2.bf16.msra.mxu0 0
      %3375 = vmatprep.subr.bf16.mxu0 0
      %3376 = vmatpush2.bf16.msra.mxu0 0
      %3377 = vmatprep.subr.bf16.mxu0 0
      %3378 = vmatpush2.bf16.msra.mxu0 0
      %3379 = vmatprep.subr.bf16.mxu0 0
      %3380 = vmatpush2.bf16.msra.mxu0 0
      %3381 = vmatprep.subr.bf16.mxu0 0
      %3382 = vmatpush2.bf16.msra.mxu0 0
      %3383 = vmatprep.mubr.bf16.mxu0 0
      %3384 = vmatmul.mubr.bf16.gmra.mxu0 %v2779
      %v3385 = vpop.f32.mrf.mxu0
      %v3386 = vadd.f32 0.0, %v3385
      %v3387 = vpop.f32.mrf.mxu0
      %v3388 = vadd.f32 0.0, %v3387
      %v3389 = vpop.f32.mrf.mxu0
      %v3390 = vpop.f32.mrf.mxu0
      %3391 = vdwg.mxu0
      %v3392 = vadd.f32 %v2548, %v2894
      %v3393 = vadd.f32 %v2549, %v2896
      %v3394 = vadd.f32 %v2550, %v2935
      %v3395 = vadd.f32 %v2551, %v2937
      %v3396 = vadd.f32 %v2552, %v2976
      %v3397 = vadd.f32 %v2553, %v2978
      %v3398 = vadd.f32 %v2554, %v3017
      %v3399 = vadd.f32 %v2555, %v3019
      %v3400 = vadd.f32 %v2556, %v3058
      %v3401 = vadd.f32 %v2557, %v3060
      %v3402 = vadd.f32 %v2558, %v3099
      %v3403 = vadd.f32 %v2559, %v3101
      %v3404 = vadd.f32 %v2560, %v3140
      %v3405 = vadd.f32 %v2561, %v3142
      %v3406 = vadd.f32 %v2562, %v3181
      %v3407 = vadd.f32 %v2563, %v3183
      %v3408 = vadd.f32 %v2564, %v3222
      %v3409 = vadd.f32 %v2565, %v3224
      %v3410 = vadd.f32 %v2566, %v3263
      %v3411 = vadd.f32 %v2567, %v3265
      %v3412 = vadd.f32 %v2568, %v3304
      %v3413 = vadd.f32 %v2569, %v3306
      %v3414 = vadd.f32 %v2570, %v3345
      %v3415 = vadd.f32 %v2571, %v3347
      %v3416 = vadd.f32 %v2572, %v3386
      %v3417 = vadd.f32 %v2573, %v3388
      %s3418 = scalar_lea.vmem %s1, 16
      %v3419 = vld [vmem:[%s3418] sm:$0xf]
      %v3420 = vld [vmem:[%s285] sm:$0xff]
      %v3421 = vld [vmem:[%s285 + $0x8] sm:$0xff]
      %v3422 = vld [vmem:[%s285 + $0x10] sm:$0xff]
      %v3423 = vld [vmem:[%s285 + $0x18] sm:$0xff]
      %v3424 = vld [vmem:[%s285 + $0x20] sm:$0xff]
      %v3425 = vld [vmem:[%s285 + $0x28] sm:$0xff]
      %v3426 = vld [vmem:[%s285 + $0x30] sm:$0xf]
      %v3434 = vcombine.high %v3420, %v3420
      %v3436 = vunpack.c.l.s4 1983009808
      %v3437 = vunpack.c.0.s8 %v3436
      %v3438 = vlaneseq
      %v3439 = vshrl.u32 %v3438, 7
      %v3440 = vsub.s32 %v3437, %v3439
      %v3441 = vrot.slane %v3420, %v3440
      %v3443 = vunpack.c.l.s4 1983009808
      %v3444 = vunpack.c.0.s8 %v3443
      %v3445 = vlaneseq
      %v3446 = vshrl.u32 %v3445, 7
      %v3447 = vsub.s32 %v3444, %v3446
      %v3448 = vrot.slane %v3434, %v3447
      %v3449 = vcombine.high %v3441, %v3441
      %v3450 = vcombine.high %v3448, %v3448
      %v3451 = vcombine.high %v3421, %v3421
      %v3453 = vunpack.c.l.s4 1983009808
      %v3454 = vunpack.c.0.s8 %v3453
      %v3455 = vlaneseq
      %v3456 = vshrl.u32 %v3455, 7
      %v3457 = vsub.s32 %v3454, %v3456
      %v3458 = vrot.slane %v3421, %v3457
      %v3460 = vunpack.c.l.s4 1983009808
      %v3461 = vunpack.c.0.s8 %v3460
      %v3462 = vlaneseq
      %v3463 = vshrl.u32 %v3462, 7
      %v3464 = vsub.s32 %v3461, %v3463
      %v3465 = vrot.slane %v3451, %v3464
      %v3466 = vcombine.high %v3458, %v3458
      %v3467 = vcombine.high %v3465, %v3465
      %v3468 = vcombine.high %v3422, %v3422
      %v3470 = vunpack.c.l.s4 1983009808
      %v3471 = vunpack.c.0.s8 %v3470
      %v3472 = vlaneseq
      %v3473 = vshrl.u32 %v3472, 7
      %v3474 = vsub.s32 %v3471, %v3473
      %v3475 = vrot.slane %v3422, %v3474
      %v3477 = vunpack.c.l.s4 1983009808
      %v3478 = vunpack.c.0.s8 %v3477
      %v3479 = vlaneseq
      %v3480 = vshrl.u32 %v3479, 7
      %v3481 = vsub.s32 %v3478, %v3480
      %v3482 = vrot.slane %v3468, %v3481
      %v3483 = vcombine.high %v3475, %v3475
      %v3484 = vcombine.high %v3482, %v3482
      %v3485 = vcombine.high %v3423, %v3423
      %v3487 = vunpack.c.l.s4 1983009808
      %v3488 = vunpack.c.0.s8 %v3487
      %v3489 = vlaneseq
      %v3490 = vshrl.u32 %v3489, 7
      %v3491 = vsub.s32 %v3488, %v3490
      %v3492 = vrot.slane %v3423, %v3491
      %v3494 = vunpack.c.l.s4 1983009808
      %v3495 = vunpack.c.0.s8 %v3494
      %v3496 = vlaneseq
      %v3497 = vshrl.u32 %v3496, 7
      %v3498 = vsub.s32 %v3495, %v3497
      %v3499 = vrot.slane %v3485, %v3498
      %v3500 = vcombine.high %v3492, %v3492
      %v3501 = vcombine.high %v3499, %v3499
      %v3502 = vcombine.high %v3424, %v3424
      %v3504 = vunpack.c.l.s4 1983009808
      %v3505 = vunpack.c.0.s8 %v3504
      %v3506 = vlaneseq
      %v3507 = vshrl.u32 %v3506, 7
      %v3508 = vsub.s32 %v3505, %v3507
      %v3509 = vrot.slane %v3424, %v3508
      %v3511 = vunpack.c.l.s4 1983009808
      %v3512 = vunpack.c.0.s8 %v3511
      %v3513 = vlaneseq
      %v3514 = vshrl.u32 %v3513, 7
      %v3515 = vsub.s32 %v3512, %v3514
      %v3516 = vrot.slane %v3502, %v3515
      %v3517 = vcombine.high %v3509, %v3509
      %v3518 = vcombine.high %v3516, %v3516
      %v3519 = vcombine.high %v3425, %v3425
      %v3521 = vunpack.c.l.s4 1983009808
      %v3522 = vunpack.c.0.s8 %v3521
      %v3523 = vlaneseq
      %v3524 = vshrl.u32 %v3523, 7
      %v3525 = vsub.s32 %v3522, %v3524
      %v3526 = vrot.slane %v3425, %v3525
      %v3528 = vunpack.c.l.s4 1983009808
      %v3529 = vunpack.c.0.s8 %v3528
      %v3530 = vlaneseq
      %v3531 = vshrl.u32 %v3530, 7
      %v3532 = vsub.s32 %v3529, %v3531
      %v3533 = vrot.slane %v3519, %v3532
      %v3534 = vcombine.high %v3526, %v3526
      %v3535 = vcombine.high %v3533, %v3533
      %v3537 = vunpack.c.l.s4 1983009808
      %v3538 = vunpack.c.0.s8 %v3537
      %v3539 = vlaneseq
      %v3540 = vshrl.u32 %v3539, 7
      %v3541 = vsub.s32 %v3538, %v3540
      %v3542 = vrot.slane %v3426, %v3541
      %v3543 = vcombine.high %v3542, %v3542
      %3544 = vrot.lane.b32.xlu0 %v3441, 109
      %v3545 = vpop.permute.xlu0 %3544
      %3546 = vrot.lane.b32.xlu0 %v3449, 109
      %v3547 = vpop.permute.xlu0 %3546
      %3548 = vrot.lane.b32.xlu0 %v3448, 109
      %v3549 = vpop.permute.xlu0 %3548
      %3550 = vrot.lane.b32.xlu0 %v3450, 109
      %v3551 = vpop.permute.xlu0 %3550
      %3552 = vrot.lane.b32.xlu0 %v3458, 109
      %v3553 = vpop.permute.xlu0 %3552
      %3554 = vrot.lane.b32.xlu0 %v3466, 109
      %v3555 = vpop.permute.xlu0 %3554
      %3556 = vrot.lane.b32.xlu0 %v3465, 109
      %v3557 = vpop.permute.xlu0 %3556
      %3558 = vrot.lane.b32.xlu0 %v3467, 109
      %v3559 = vpop.permute.xlu0 %3558
      %3560 = vrot.lane.b32.xlu0 %v3475, 109
      %v3561 = vpop.permute.xlu0 %3560
      %3562 = vrot.lane.b32.xlu0 %v3483, 109
      %v3563 = vpop.permute.xlu0 %3562
      %3564 = vrot.lane.b32.xlu0 %v3482, 109
      %v3565 = vpop.permute.xlu0 %3564
      %3566 = vrot.lane.b32.xlu0 %v3484, 109
      %v3567 = vpop.permute.xlu0 %3566
      %3568 = vrot.lane.b32.xlu0 %v3492, 109
      %v3569 = vpop.permute.xlu0 %3568
      %3570 = vrot.lane.b32.xlu0 %v3500, 109
      %v3571 = vpop.permute.xlu0 %3570
      %3572 = vrot.lane.b32.xlu0 %v3499, 109
      %v3573 = vpop.permute.xlu0 %3572
      %3574 = vrot.lane.b32.xlu0 %v3501, 109
      %v3575 = vpop.permute.xlu0 %3574
      %3576 = vrot.lane.b32.xlu0 %v3509, 109
      %v3577 = vpop.permute.xlu0 %3576
      %3578 = vrot.lane.b32.xlu0 %v3517, 109
      %v3579 = vpop.permute.xlu0 %3578
      %3580 = vrot.lane.b32.xlu0 %v3516, 109
      %v3581 = vpop.permute.xlu0 %3580
      %3582 = vrot.lane.b32.xlu0 %v3518, 109
      %v3583 = vpop.permute.xlu0 %3582
      %3584 = vrot.lane.b32.xlu0 %v3526, 109
      %v3585 = vpop.permute.xlu0 %3584
      %3586 = vrot.lane.b32.xlu0 %v3534, 109
      %v3587 = vpop.permute.xlu0 %3586
      %3588 = vrot.lane.b32.xlu0 %v3533, 109
      %v3589 = vpop.permute.xlu0 %3588
      %3590 = vrot.lane.b32.xlu0 %v3535, 109
      %v3591 = vpop.permute.xlu0 %3590
      %3592 = vrot.lane.b32.xlu0 %v3542, 109
      %v3593 = vpop.permute.xlu0 %3592
      %3594 = vrot.lane.b32.xlu0 %v3543, 109
      %v3595 = vpop.permute.xlu0 %3594
      %vm3596 = vcmask 891904
      %v3597 = vsel %vm3596, %v3545, %v3547
      %v3598 = vsel %vm3596, %v3547, %v3549
      %v3599 = vsel %vm3596, %v3549, %v3551
      %v3600 = vsel %vm3596, %v3551, %v3553
      %v3601 = vsel %vm3596, %v3553, %v3555
      %v3602 = vsel %vm3596, %v3555, %v3557
      %v3603 = vsel %vm3596, %v3557, %v3559
      %v3604 = vsel %vm3596, %v3559, %v3561
      %v3605 = vsel %vm3596, %v3561, %v3563
      %v3606 = vsel %vm3596, %v3563, %v3565
      %v3607 = vsel %vm3596, %v3565, %v3567
      %v3608 = vsel %vm3596, %v3567, %v3569
      %v3609 = vsel %vm3596, %v3569, %v3571
      %v3610 = vsel %vm3596, %v3571, %v3573
      %v3611 = vsel %vm3596, %v3573, %v3575
      %v3612 = vsel %vm3596, %v3575, %v3577
      %v3613 = vsel %vm3596, %v3577, %v3579
      %v3614 = vsel %vm3596, %v3579, %v3581
      %v3615 = vsel %vm3596, %v3581, %v3583
      %v3616 = vsel %vm3596, %v3583, %v3585
      %v3617 = vsel %vm3596, %v3585, %v3587
      %v3618 = vsel %vm3596, %v3587, %v3589
      %v3619 = vsel %vm3596, %v3589, %v3591
      %v3620 = vsel %vm3596, %v3591, %v3593
      %v3621 = vsel %vm3596, %v3593, %v3595
      %v3623 = vsel %vm500, %v3419, 0
      %v3626 = vsel %vm504, %v3597, 0
      %v3629 = vsel %vm504, %v3598, 0
      %v3632 = vsel %vm504, %v3599, 0
      %v3635 = vsel %vm504, %v3600, 0
      %v3638 = vsel %vm504, %v3601, 0
      %v3641 = vsel %vm504, %v3602, 0
      %v3644 = vsel %vm504, %v3603, 0
      %v3647 = vsel %vm504, %v3604, 0
      %v3650 = vsel %vm504, %v3605, 0
      %v3653 = vsel %vm504, %v3606, 0
      %v3656 = vsel %vm504, %v3607, 0
      %v3659 = vsel %vm504, %v3608, 0
      %v3662 = vsel %vm504, %v3609, 0
      %v3665 = vsel %vm504, %v3610, 0
      %v3668 = vsel %vm504, %v3611, 0
      %v3671 = vsel %vm504, %v3612, 0
      %v3674 = vsel %vm504, %v3613, 0
      %v3677 = vsel %vm504, %v3614, 0
      %v3680 = vsel %vm504, %v3615, 0
      %v3683 = vsel %vm504, %v3616, 0
      %v3686 = vsel %vm504, %v3617, 0
      %v3689 = vsel %vm504, %v3618, 0
      %v3692 = vsel %vm504, %v3619, 0
      %v3695 = vsel %vm504, %v3620, 0
      %v3698 = vsel %vm504, %v3621, 0
      %v3701 = vsel %vm504, %v3595, 0
      %3703 = vmatprep.subr.bf16.mxu0 0
      %3704 = vmatpush1.bf16.msra.mxu0 0
      %3705 = vmatprep.subr.bf16.mxu0 0
      %3706 = vmatpush1.bf16.msra.mxu0 0
      %3707 = vmatprep.subr.bf16.mxu0 0
      %3708 = vmatpush1.bf16.msra.mxu0 0
      %3709 = vmatprep.subr.bf16.mxu0 0
      %3710 = vmatpush1.bf16.msra.mxu0 0
      %3711 = vmatprep.subr.bf16.mxu0 0
      %3712 = vmatpush1.bf16.msra.mxu0 0
      %3713 = vmatprep.subr.bf16.mxu0 0
      %3714 = vmatpush1.bf16.msra.mxu0 0
      %3715 = vmatprep.subr.bf16.mxu0 0
      %3716 = vmatpush1.bf16.msra.mxu0 0
      %3717 = vmatprep.subr.bf16.mxu0 %v3629
      %3718 = vmatpush1.bf16.msra.mxu0 %v3626
      %3719 = vmatprep.subr.bf16.mxu0 0
      %3720 = vmatpush2.bf16.msra.mxu0 0
      %3721 = vmatprep.subr.bf16.mxu0 0
      %3722 = vmatpush2.bf16.msra.mxu0 0
      %3723 = vmatprep.subr.bf16.mxu0 0
      %3724 = vmatpush2.bf16.msra.mxu0 0
      %3725 = vmatprep.subr.bf16.mxu0 0
      %3726 = vmatpush2.bf16.msra.mxu0 0
      %3727 = vmatprep.subr.bf16.mxu0 0
      %3728 = vmatpush2.bf16.msra.mxu0 0
      %3729 = vmatprep.subr.bf16.mxu0 0
      %3730 = vmatpush2.bf16.msra.mxu0 0
      %3731 = vmatprep.subr.bf16.mxu0 0
      %3732 = vmatpush2.bf16.msra.mxu0 0
      %3733 = vmatprep.subr.bf16.mxu0 0
      %3734 = vmatpush2.bf16.msra.mxu0 0
      %3735 = vmatprep.mubr.bf16.mxu0 0
      %3736 = vmatmul.mubr.bf16.gmra.mxu0 %v3623
      %v3737 = vpop.f32.mrf.mxu0
      %v3738 = vadd.f32 0.0, %v3737
      %v3739 = vpop.f32.mrf.mxu0
      %v3740 = vadd.f32 0.0, %v3739
      %v3741 = vpop.f32.mrf.mxu0
      %v3742 = vpop.f32.mrf.mxu0
      %3743 = vdwg.mxu0
      %3744 = vmatprep.subr.bf16.mxu0 0
      %3745 = vmatpush1.bf16.msra.mxu0 0
      %3746 = vmatprep.subr.bf16.mxu0 0
      %3747 = vmatpush1.bf16.msra.mxu0 0
      %3748 = vmatprep.subr.bf16.mxu0 0
      %3749 = vmatpush1.bf16.msra.mxu0 0
      %3750 = vmatprep.subr.bf16.mxu0 0
      %3751 = vmatpush1.bf16.msra.mxu0 0
      %3752 = vmatprep.subr.bf16.mxu0 0
      %3753 = vmatpush1.bf16.msra.mxu0 0
      %3754 = vmatprep.subr.bf16.mxu0 0
      %3755 = vmatpush1.bf16.msra.mxu0 0
      %3756 = vmatprep.subr.bf16.mxu0 0
      %3757 = vmatpush1.bf16.msra.mxu0 0
      %3758 = vmatprep.subr.bf16.mxu0 %v3635
      %3759 = vmatpush1.bf16.msra.mxu0 %v3632
      %3760 = vmatprep.subr.bf16.mxu0 0
      %3761 = vmatpush2.bf16.msra.mxu0 0
      %3762 = vmatprep.subr.bf16.mxu0 0
      %3763 = vmatpush2.bf16.msra.mxu0 0
      %3764 = vmatprep.subr.bf16.mxu0 0
      %3765 = vmatpush2.bf16.msra.mxu0 0
      %3766 = vmatprep.subr.bf16.mxu0 0
      %3767 = vmatpush2.bf16.msra.mxu0 0
      %3768 = vmatprep.subr.bf16.mxu0 0
      %3769 = vmatpush2.bf16.msra.mxu0 0
      %3770 = vmatprep.subr.bf16.mxu0 0
      %3771 = vmatpush2.bf16.msra.mxu0 0
      %3772 = vmatprep.subr.bf16.mxu0 0
      %3773 = vmatpush2.bf16.msra.mxu0 0
      %3774 = vmatprep.subr.bf16.mxu0 0
      %3775 = vmatpush2.bf16.msra.mxu0 0
      %3776 = vmatprep.mubr.bf16.mxu0 0
      %3777 = vmatmul.mubr.bf16.gmra.mxu0 %v3623
      %v3778 = vpop.f32.mrf.mxu0
      %v3779 = vadd.f32 0.0, %v3778
      %v3780 = vpop.f32.mrf.mxu0
      %v3781 = vadd.f32 0.0, %v3780
      %v3782 = vpop.f32.mrf.mxu0
      %v3783 = vpop.f32.mrf.mxu0
      %3784 = vdwg.mxu0
      %3785 = vmatprep.subr.bf16.mxu0 0
      %3786 = vmatpush1.bf16.msra.mxu0 0
      %3787 = vmatprep.subr.bf16.mxu0 0
      %3788 = vmatpush1.bf16.msra.mxu0 0
      %3789 = vmatprep.subr.bf16.mxu0 0
      %3790 = vmatpush1.bf16.msra.mxu0 0
      %3791 = vmatprep.subr.bf16.mxu0 0
      %3792 = vmatpush1.bf16.msra.mxu0 0
      %3793 = vmatprep.subr.bf16.mxu0 0
      %3794 = vmatpush1.bf16.msra.mxu0 0
      %3795 = vmatprep.subr.bf16.mxu0 0
      %3796 = vmatpush1.bf16.msra.mxu0 0
      %3797 = vmatprep.subr.bf16.mxu0 0
      %3798 = vmatpush1.bf16.msra.mxu0 0
      %3799 = vmatprep.subr.bf16.mxu0 %v3641
      %3800 = vmatpush1.bf16.msra.mxu0 %v3638
      %3801 = vmatprep.subr.bf16.mxu0 0
      %3802 = vmatpush2.bf16.msra.mxu0 0
      %3803 = vmatprep.subr.bf16.mxu0 0
      %3804 = vmatpush2.bf16.msra.mxu0 0
      %3805 = vmatprep.subr.bf16.mxu0 0
      %3806 = vmatpush2.bf16.msra.mxu0 0
      %3807 = vmatprep.subr.bf16.mxu0 0
      %3808 = vmatpush2.bf16.msra.mxu0 0
      %3809 = vmatprep.subr.bf16.mxu0 0
      %3810 = vmatpush2.bf16.msra.mxu0 0
      %3811 = vmatprep.subr.bf16.mxu0 0
      %3812 = vmatpush2.bf16.msra.mxu0 0
      %3813 = vmatprep.subr.bf16.mxu0 0
      %3814 = vmatpush2.bf16.msra.mxu0 0
      %3815 = vmatprep.subr.bf16.mxu0 0
      %3816 = vmatpush2.bf16.msra.mxu0 0
      %3817 = vmatprep.mubr.bf16.mxu0 0
      %3818 = vmatmul.mubr.bf16.gmra.mxu0 %v3623
      %v3819 = vpop.f32.mrf.mxu0
      %v3820 = vadd.f32 0.0, %v3819
      %v3821 = vpop.f32.mrf.mxu0
      %v3822 = vadd.f32 0.0, %v3821
      %v3823 = vpop.f32.mrf.mxu0
      %v3824 = vpop.f32.mrf.mxu0
      %3825 = vdwg.mxu0
      %3826 = vmatprep.subr.bf16.mxu0 0
      %3827 = vmatpush1.bf16.msra.mxu0 0
      %3828 = vmatprep.subr.bf16.mxu0 0
      %3829 = vmatpush1.bf16.msra.mxu0 0
      %3830 = vmatprep.subr.bf16.mxu0 0
      %3831 = vmatpush1.bf16.msra.mxu0 0
      %3832 = vmatprep.subr.bf16.mxu0 0
      %3833 = vmatpush1.bf16.msra.mxu0 0
      %3834 = vmatprep.subr.bf16.mxu0 0
      %3835 = vmatpush1.bf16.msra.mxu0 0
      %3836 = vmatprep.subr.bf16.mxu0 0
      %3837 = vmatpush1.bf16.msra.mxu0 0
      %3838 = vmatprep.subr.bf16.mxu0 0
      %3839 = vmatpush1.bf16.msra.mxu0 0
      %3840 = vmatprep.subr.bf16.mxu0 %v3647
      %3841 = vmatpush1.bf16.msra.mxu0 %v3644
      %3842 = vmatprep.subr.bf16.mxu0 0
      %3843 = vmatpush2.bf16.msra.mxu0 0
      %3844 = vmatprep.subr.bf16.mxu0 0
      %3845 = vmatpush2.bf16.msra.mxu0 0
      %3846 = vmatprep.subr.bf16.mxu0 0
      %3847 = vmatpush2.bf16.msra.mxu0 0
      %3848 = vmatprep.subr.bf16.mxu0 0
      %3849 = vmatpush2.bf16.msra.mxu0 0
      %3850 = vmatprep.subr.bf16.mxu0 0
      %3851 = vmatpush2.bf16.msra.mxu0 0
      %3852 = vmatprep.subr.bf16.mxu0 0
      %3853 = vmatpush2.bf16.msra.mxu0 0
      %3854 = vmatprep.subr.bf16.mxu0 0
      %3855 = vmatpush2.bf16.msra.mxu0 0
      %3856 = vmatprep.subr.bf16.mxu0 0
      %3857 = vmatpush2.bf16.msra.mxu0 0
      %3858 = vmatprep.mubr.bf16.mxu0 0
      %3859 = vmatmul.mubr.bf16.gmra.mxu0 %v3623
      %v3860 = vpop.f32.mrf.mxu0
      %v3861 = vadd.f32 0.0, %v3860
      %v3862 = vpop.f32.mrf.mxu0
      %v3863 = vadd.f32 0.0, %v3862
      %v3864 = vpop.f32.mrf.mxu0
      %v3865 = vpop.f32.mrf.mxu0
      %3866 = vdwg.mxu0
      %3867 = vmatprep.subr.bf16.mxu0 0
      %3868 = vmatpush1.bf16.msra.mxu0 0
      %3869 = vmatprep.subr.bf16.mxu0 0
      %3870 = vmatpush1.bf16.msra.mxu0 0
      %3871 = vmatprep.subr.bf16.mxu0 0
      %3872 = vmatpush1.bf16.msra.mxu0 0
      %3873 = vmatprep.subr.bf16.mxu0 0
      %3874 = vmatpush1.bf16.msra.mxu0 0
      %3875 = vmatprep.subr.bf16.mxu0 0
      %3876 = vmatpush1.bf16.msra.mxu0 0
      %3877 = vmatprep.subr.bf16.mxu0 0
      %3878 = vmatpush1.bf16.msra.mxu0 0
      %3879 = vmatprep.subr.bf16.mxu0 0
      %3880 = vmatpush1.bf16.msra.mxu0 0
      %3881 = vmatprep.subr.bf16.mxu0 %v3653
      %3882 = vmatpush1.bf16.msra.mxu0 %v3650
      %3883 = vmatprep.subr.bf16.mxu0 0
      %3884 = vmatpush2.bf16.msra.mxu0 0
      %3885 = vmatprep.subr.bf16.mxu0 0
      %3886 = vmatpush2.bf16.msra.mxu0 0
      %3887 = vmatprep.subr.bf16.mxu0 0
      %3888 = vmatpush2.bf16.msra.mxu0 0
      %3889 = vmatprep.subr.bf16.mxu0 0
      %3890 = vmatpush2.bf16.msra.mxu0 0
      %3891 = vmatprep.subr.bf16.mxu0 0
      %3892 = vmatpush2.bf16.msra.mxu0 0
      %3893 = vmatprep.subr.bf16.mxu0 0
      %3894 = vmatpush2.bf16.msra.mxu0 0
      %3895 = vmatprep.subr.bf16.mxu0 0
      %3896 = vmatpush2.bf16.msra.mxu0 0
      %3897 = vmatprep.subr.bf16.mxu0 0
      %3898 = vmatpush2.bf16.msra.mxu0 0
      %3899 = vmatprep.mubr.bf16.mxu0 0
      %3900 = vmatmul.mubr.bf16.gmra.mxu0 %v3623
      %v3901 = vpop.f32.mrf.mxu0
      %v3902 = vadd.f32 0.0, %v3901
      %v3903 = vpop.f32.mrf.mxu0
      %v3904 = vadd.f32 0.0, %v3903
      %v3905 = vpop.f32.mrf.mxu0
      %v3906 = vpop.f32.mrf.mxu0
      %3907 = vdwg.mxu0
      %3908 = vmatprep.subr.bf16.mxu0 0
      %3909 = vmatpush1.bf16.msra.mxu0 0
      %3910 = vmatprep.subr.bf16.mxu0 0
      %3911 = vmatpush1.bf16.msra.mxu0 0
      %3912 = vmatprep.subr.bf16.mxu0 0
      %3913 = vmatpush1.bf16.msra.mxu0 0
      %3914 = vmatprep.subr.bf16.mxu0 0
      %3915 = vmatpush1.bf16.msra.mxu0 0
      %3916 = vmatprep.subr.bf16.mxu0 0
      %3917 = vmatpush1.bf16.msra.mxu0 0
      %3918 = vmatprep.subr.bf16.mxu0 0
      %3919 = vmatpush1.bf16.msra.mxu0 0
      %3920 = vmatprep.subr.bf16.mxu0 0
      %3921 = vmatpush1.bf16.msra.mxu0 0
      %3922 = vmatprep.subr.bf16.mxu0 %v3659
      %3923 = vmatpush1.bf16.msra.mxu0 %v3656
      %3924 = vmatprep.subr.bf16.mxu0 0
      %3925 = vmatpush2.bf16.msra.mxu0 0
      %3926 = vmatprep.subr.bf16.mxu0 0
      %3927 = vmatpush2.bf16.msra.mxu0 0
      %3928 = vmatprep.subr.bf16.mxu0 0
      %3929 = vmatpush2.bf16.msra.mxu0 0
      %3930 = vmatprep.subr.bf16.mxu0 0
      %3931 = vmatpush2.bf16.msra.mxu0 0
      %3932 = vmatprep.subr.bf16.mxu0 0
      %3933 = vmatpush2.bf16.msra.mxu0 0
      %3934 = vmatprep.subr.bf16.mxu0 0
      %3935 = vmatpush2.bf16.msra.mxu0 0
      %3936 = vmatprep.subr.bf16.mxu0 0
      %3937 = vmatpush2.bf16.msra.mxu0 0
      %3938 = vmatprep.subr.bf16.mxu0 0
      %3939 = vmatpush2.bf16.msra.mxu0 0
      %3940 = vmatprep.mubr.bf16.mxu0 0
      %3941 = vmatmul.mubr.bf16.gmra.mxu0 %v3623
      %v3942 = vpop.f32.mrf.mxu0
      %v3943 = vadd.f32 0.0, %v3942
      %v3944 = vpop.f32.mrf.mxu0
      %v3945 = vadd.f32 0.0, %v3944
      %v3946 = vpop.f32.mrf.mxu0
      %v3947 = vpop.f32.mrf.mxu0
      %3948 = vdwg.mxu0
      %3949 = vmatprep.subr.bf16.mxu0 0
      %3950 = vmatpush1.bf16.msra.mxu0 0
      %3951 = vmatprep.subr.bf16.mxu0 0
      %3952 = vmatpush1.bf16.msra.mxu0 0
      %3953 = vmatprep.subr.bf16.mxu0 0
      %3954 = vmatpush1.bf16.msra.mxu0 0
      %3955 = vmatprep.subr.bf16.mxu0 0
      %3956 = vmatpush1.bf16.msra.mxu0 0
      %3957 = vmatprep.subr.bf16.mxu0 0
      %3958 = vmatpush1.bf16.msra.mxu0 0
      %3959 = vmatprep.subr.bf16.mxu0 0
      %3960 = vmatpush1.bf16.msra.mxu0 0
      %3961 = vmatprep.subr.bf16.mxu0 0
      %3962 = vmatpush1.bf16.msra.mxu0 0
      %3963 = vmatprep.subr.bf16.mxu0 %v3665
      %3964 = vmatpush1.bf16.msra.mxu0 %v3662
      %3965 = vmatprep.subr.bf16.mxu0 0
      %3966 = vmatpush2.bf16.msra.mxu0 0
      %3967 = vmatprep.subr.bf16.mxu0 0
      %3968 = vmatpush2.bf16.msra.mxu0 0
      %3969 = vmatprep.subr.bf16.mxu0 0
      %3970 = vmatpush2.bf16.msra.mxu0 0
      %3971 = vmatprep.subr.bf16.mxu0 0
      %3972 = vmatpush2.bf16.msra.mxu0 0
      %3973 = vmatprep.subr.bf16.mxu0 0
      %3974 = vmatpush2.bf16.msra.mxu0 0
      %3975 = vmatprep.subr.bf16.mxu0 0
      %3976 = vmatpush2.bf16.msra.mxu0 0
      %3977 = vmatprep.subr.bf16.mxu0 0
      %3978 = vmatpush2.bf16.msra.mxu0 0
      %3979 = vmatprep.subr.bf16.mxu0 0
      %3980 = vmatpush2.bf16.msra.mxu0 0
      %3981 = vmatprep.mubr.bf16.mxu0 0
      %3982 = vmatmul.mubr.bf16.gmra.mxu0 %v3623
      %v3983 = vpop.f32.mrf.mxu0
      %v3984 = vadd.f32 0.0, %v3983
      %v3985 = vpop.f32.mrf.mxu0
      %v3986 = vadd.f32 0.0, %v3985
      %v3987 = vpop.f32.mrf.mxu0
      %v3988 = vpop.f32.mrf.mxu0
      %3989 = vdwg.mxu0
      %3990 = vmatprep.subr.bf16.mxu0 0
      %3991 = vmatpush1.bf16.msra.mxu0 0
      %3992 = vmatprep.subr.bf16.mxu0 0
      %3993 = vmatpush1.bf16.msra.mxu0 0
      %3994 = vmatprep.subr.bf16.mxu0 0
      %3995 = vmatpush1.bf16.msra.mxu0 0
      %3996 = vmatprep.subr.bf16.mxu0 0
      %3997 = vmatpush1.bf16.msra.mxu0 0
      %3998 = vmatprep.subr.bf16.mxu0 0
      %3999 = vmatpush1.bf16.msra.mxu0 0
      %4000 = vmatprep.subr.bf16.mxu0 0
      %4001 = vmatpush1.bf16.msra.mxu0 0
      %4002 = vmatprep.subr.bf16.mxu0 0
      %4003 = vmatpush1.bf16.msra.mxu0 0
      %4004 = vmatprep.subr.bf16.mxu0 %v3671
      %4005 = vmatpush1.bf16.msra.mxu0 %v3668
      %4006 = vmatprep.subr.bf16.mxu0 0
      %4007 = vmatpush2.bf16.msra.mxu0 0
      %4008 = vmatprep.subr.bf16.mxu0 0
      %4009 = vmatpush2.bf16.msra.mxu0 0
      %4010 = vmatprep.subr.bf16.mxu0 0
      %4011 = vmatpush2.bf16.msra.mxu0 0
      %4012 = vmatprep.subr.bf16.mxu0 0
      %4013 = vmatpush2.bf16.msra.mxu0 0
      %4014 = vmatprep.subr.bf16.mxu0 0
      %4015 = vmatpush2.bf16.msra.mxu0 0
      %4016 = vmatprep.subr.bf16.mxu0 0
      %4017 = vmatpush2.bf16.msra.mxu0 0
      %4018 = vmatprep.subr.bf16.mxu0 0
      %4019 = vmatpush2.bf16.msra.mxu0 0
      %4020 = vmatprep.subr.bf16.mxu0 0
      %4021 = vmatpush2.bf16.msra.mxu0 0
      %4022 = vmatprep.mubr.bf16.mxu0 0
      %4023 = vmatmul.mubr.bf16.gmra.mxu0 %v3623
      %v4024 = vpop.f32.mrf.mxu0
      %v4025 = vadd.f32 0.0, %v4024
      %v4026 = vpop.f32.mrf.mxu0
      %v4027 = vadd.f32 0.0, %v4026
      %v4028 = vpop.f32.mrf.mxu0
      %v4029 = vpop.f32.mrf.mxu0
      %4030 = vdwg.mxu0
      %4031 = vmatprep.subr.bf16.mxu0 0
      %4032 = vmatpush1.bf16.msra.mxu0 0
      %4033 = vmatprep.subr.bf16.mxu0 0
      %4034 = vmatpush1.bf16.msra.mxu0 0
      %4035 = vmatprep.subr.bf16.mxu0 0
      %4036 = vmatpush1.bf16.msra.mxu0 0
      %4037 = vmatprep.subr.bf16.mxu0 0
      %4038 = vmatpush1.bf16.msra.mxu0 0
      %4039 = vmatprep.subr.bf16.mxu0 0
      %4040 = vmatpush1.bf16.msra.mxu0 0
      %4041 = vmatprep.subr.bf16.mxu0 0
      %4042 = vmatpush1.bf16.msra.mxu0 0
      %4043 = vmatprep.subr.bf16.mxu0 0
      %4044 = vmatpush1.bf16.msra.mxu0 0
      %4045 = vmatprep.subr.bf16.mxu0 %v3677
      %4046 = vmatpush1.bf16.msra.mxu0 %v3674
      %4047 = vmatprep.subr.bf16.mxu0 0
      %4048 = vmatpush2.bf16.msra.mxu0 0
      %4049 = vmatprep.subr.bf16.mxu0 0
      %4050 = vmatpush2.bf16.msra.mxu0 0
      %4051 = vmatprep.subr.bf16.mxu0 0
      %4052 = vmatpush2.bf16.msra.mxu0 0
      %4053 = vmatprep.subr.bf16.mxu0 0
      %4054 = vmatpush2.bf16.msra.mxu0 0
      %4055 = vmatprep.subr.bf16.mxu0 0
      %4056 = vmatpush2.bf16.msra.mxu0 0
      %4057 = vmatprep.subr.bf16.mxu0 0
      %4058 = vmatpush2.bf16.msra.mxu0 0
      %4059 = vmatprep.subr.bf16.mxu0 0
      %4060 = vmatpush2.bf16.msra.mxu0 0
      %4061 = vmatprep.subr.bf16.mxu0 0
      %4062 = vmatpush2.bf16.msra.mxu0 0
      %4063 = vmatprep.mubr.bf16.mxu0 0
      %4064 = vmatmul.mubr.bf16.gmra.mxu0 %v3623
      %v4065 = vpop.f32.mrf.mxu0
      %v4066 = vadd.f32 0.0, %v4065
      %v4067 = vpop.f32.mrf.mxu0
      %v4068 = vadd.f32 0.0, %v4067
      %v4069 = vpop.f32.mrf.mxu0
      %v4070 = vpop.f32.mrf.mxu0
      %4071 = vdwg.mxu0
      %4072 = vmatprep.subr.bf16.mxu0 0
      %4073 = vmatpush1.bf16.msra.mxu0 0
      %4074 = vmatprep.subr.bf16.mxu0 0
      %4075 = vmatpush1.bf16.msra.mxu0 0
      %4076 = vmatprep.subr.bf16.mxu0 0
      %4077 = vmatpush1.bf16.msra.mxu0 0
      %4078 = vmatprep.subr.bf16.mxu0 0
      %4079 = vmatpush1.bf16.msra.mxu0 0
      %4080 = vmatprep.subr.bf16.mxu0 0
      %4081 = vmatpush1.bf16.msra.mxu0 0
      %4082 = vmatprep.subr.bf16.mxu0 0
      %4083 = vmatpush1.bf16.msra.mxu0 0
      %4084 = vmatprep.subr.bf16.mxu0 0
      %4085 = vmatpush1.bf16.msra.mxu0 0
      %4086 = vmatprep.subr.bf16.mxu0 %v3683
      %4087 = vmatpush1.bf16.msra.mxu0 %v3680
      %4088 = vmatprep.subr.bf16.mxu0 0
      %4089 = vmatpush2.bf16.msra.mxu0 0
      %4090 = vmatprep.subr.bf16.mxu0 0
      %4091 = vmatpush2.bf16.msra.mxu0 0
      %4092 = vmatprep.subr.bf16.mxu0 0
      %4093 = vmatpush2.bf16.msra.mxu0 0
      %4094 = vmatprep.subr.bf16.mxu0 0
      %4095 = vmatpush2.bf16.msra.mxu0 0
      %4096 = vmatprep.subr.bf16.mxu0 0
      %4097 = vmatpush2.bf16.msra.mxu0 0
      %4098 = vmatprep.subr.bf16.mxu0 0
      %4099 = vmatpush2.bf16.msra.mxu0 0
      %4100 = vmatprep.subr.bf16.mxu0 0
      %4101 = vmatpush2.bf16.msra.mxu0 0
      %4102 = vmatprep.subr.bf16.mxu0 0
      %4103 = vmatpush2.bf16.msra.mxu0 0
      %4104 = vmatprep.mubr.bf16.mxu0 0
      %4105 = vmatmul.mubr.bf16.gmra.mxu0 %v3623
      %v4106 = vpop.f32.mrf.mxu0
      %v4107 = vadd.f32 0.0, %v4106
      %v4108 = vpop.f32.mrf.mxu0
      %v4109 = vadd.f32 0.0, %v4108
      %v4110 = vpop.f32.mrf.mxu0
      %v4111 = vpop.f32.mrf.mxu0
      %4112 = vdwg.mxu0
      %4113 = vmatprep.subr.bf16.mxu0 0
      %4114 = vmatpush1.bf16.msra.mxu0 0
      %4115 = vmatprep.subr.bf16.mxu0 0
      %4116 = vmatpush1.bf16.msra.mxu0 0
      %4117 = vmatprep.subr.bf16.mxu0 0
      %4118 = vmatpush1.bf16.msra.mxu0 0
      %4119 = vmatprep.subr.bf16.mxu0 0
      %4120 = vmatpush1.bf16.msra.mxu0 0
      %4121 = vmatprep.subr.bf16.mxu0 0
      %4122 = vmatpush1.bf16.msra.mxu0 0
      %4123 = vmatprep.subr.bf16.mxu0 0
      %4124 = vmatpush1.bf16.msra.mxu0 0
      %4125 = vmatprep.subr.bf16.mxu0 0
      %4126 = vmatpush1.bf16.msra.mxu0 0
      %4127 = vmatprep.subr.bf16.mxu0 %v3689
      %4128 = vmatpush1.bf16.msra.mxu0 %v3686
      %4129 = vmatprep.subr.bf16.mxu0 0
      %4130 = vmatpush2.bf16.msra.mxu0 0
      %4131 = vmatprep.subr.bf16.mxu0 0
      %4132 = vmatpush2.bf16.msra.mxu0 0
      %4133 = vmatprep.subr.bf16.mxu0 0
      %4134 = vmatpush2.bf16.msra.mxu0 0
      %4135 = vmatprep.subr.bf16.mxu0 0
      %4136 = vmatpush2.bf16.msra.mxu0 0
      %4137 = vmatprep.subr.bf16.mxu0 0
      %4138 = vmatpush2.bf16.msra.mxu0 0
      %4139 = vmatprep.subr.bf16.mxu0 0
      %4140 = vmatpush2.bf16.msra.mxu0 0
      %4141 = vmatprep.subr.bf16.mxu0 0
      %4142 = vmatpush2.bf16.msra.mxu0 0
      %4143 = vmatprep.subr.bf16.mxu0 0
      %4144 = vmatpush2.bf16.msra.mxu0 0
      %4145 = vmatprep.mubr.bf16.mxu0 0
      %4146 = vmatmul.mubr.bf16.gmra.mxu0 %v3623
      %v4147 = vpop.f32.mrf.mxu0
      %v4148 = vadd.f32 0.0, %v4147
      %v4149 = vpop.f32.mrf.mxu0
      %v4150 = vadd.f32 0.0, %v4149
      %v4151 = vpop.f32.mrf.mxu0
      %v4152 = vpop.f32.mrf.mxu0
      %4153 = vdwg.mxu0
      %4154 = vmatprep.subr.bf16.mxu0 0
      %4155 = vmatpush1.bf16.msra.mxu0 0
      %4156 = vmatprep.subr.bf16.mxu0 0
      %4157 = vmatpush1.bf16.msra.mxu0 0
      %4158 = vmatprep.subr.bf16.mxu0 0
      %4159 = vmatpush1.bf16.msra.mxu0 0
      %4160 = vmatprep.subr.bf16.mxu0 0
      %4161 = vmatpush1.bf16.msra.mxu0 0
      %4162 = vmatprep.subr.bf16.mxu0 0
      %4163 = vmatpush1.bf16.msra.mxu0 0
      %4164 = vmatprep.subr.bf16.mxu0 0
      %4165 = vmatpush1.bf16.msra.mxu0 0
      %4166 = vmatprep.subr.bf16.mxu0 0
      %4167 = vmatpush1.bf16.msra.mxu0 0
      %4168 = vmatprep.subr.bf16.mxu0 %v3695
      %4169 = vmatpush1.bf16.msra.mxu0 %v3692
      %4170 = vmatprep.subr.bf16.mxu0 0
      %4171 = vmatpush2.bf16.msra.mxu0 0
      %4172 = vmatprep.subr.bf16.mxu0 0
      %4173 = vmatpush2.bf16.msra.mxu0 0
      %4174 = vmatprep.subr.bf16.mxu0 0
      %4175 = vmatpush2.bf16.msra.mxu0 0
      %4176 = vmatprep.subr.bf16.mxu0 0
      %4177 = vmatpush2.bf16.msra.mxu0 0
      %4178 = vmatprep.subr.bf16.mxu0 0
      %4179 = vmatpush2.bf16.msra.mxu0 0
      %4180 = vmatprep.subr.bf16.mxu0 0
      %4181 = vmatpush2.bf16.msra.mxu0 0
      %4182 = vmatprep.subr.bf16.mxu0 0
      %4183 = vmatpush2.bf16.msra.mxu0 0
      %4184 = vmatprep.subr.bf16.mxu0 0
      %4185 = vmatpush2.bf16.msra.mxu0 0
      %4186 = vmatprep.mubr.bf16.mxu0 0
      %4187 = vmatmul.mubr.bf16.gmra.mxu0 %v3623
      %v4188 = vpop.f32.mrf.mxu0
      %v4189 = vadd.f32 0.0, %v4188
      %v4190 = vpop.f32.mrf.mxu0
      %v4191 = vadd.f32 0.0, %v4190
      %v4192 = vpop.f32.mrf.mxu0
      %v4193 = vpop.f32.mrf.mxu0
      %4194 = vdwg.mxu0
      %4195 = vmatprep.subr.bf16.mxu0 0
      %4196 = vmatpush1.bf16.msra.mxu0 0
      %4197 = vmatprep.subr.bf16.mxu0 0
      %4198 = vmatpush1.bf16.msra.mxu0 0
      %4199 = vmatprep.subr.bf16.mxu0 0
      %4200 = vmatpush1.bf16.msra.mxu0 0
      %4201 = vmatprep.subr.bf16.mxu0 0
      %4202 = vmatpush1.bf16.msra.mxu0 0
      %4203 = vmatprep.subr.bf16.mxu0 0
      %4204 = vmatpush1.bf16.msra.mxu0 0
      %4205 = vmatprep.subr.bf16.mxu0 0
      %4206 = vmatpush1.bf16.msra.mxu0 0
      %4207 = vmatprep.subr.bf16.mxu0 0
      %4208 = vmatpush1.bf16.msra.mxu0 0
      %4209 = vmatprep.subr.bf16.mxu0 %v3701
      %4210 = vmatpush1.bf16.msra.mxu0 %v3698
      %4211 = vmatprep.subr.bf16.mxu0 0
      %4212 = vmatpush2.bf16.msra.mxu0 0
      %4213 = vmatprep.subr.bf16.mxu0 0
      %4214 = vmatpush2.bf16.msra.mxu0 0
      %4215 = vmatprep.subr.bf16.mxu0 0
      %4216 = vmatpush2.bf16.msra.mxu0 0
      %4217 = vmatprep.subr.bf16.mxu0 0
      %4218 = vmatpush2.bf16.msra.mxu0 0
      %4219 = vmatprep.subr.bf16.mxu0 0
      %4220 = vmatpush2.bf16.msra.mxu0 0
      %4221 = vmatprep.subr.bf16.mxu0 0
      %4222 = vmatpush2.bf16.msra.mxu0 0
      %4223 = vmatprep.subr.bf16.mxu0 0
      %4224 = vmatpush2.bf16.msra.mxu0 0
      %4225 = vmatprep.subr.bf16.mxu0 0
      %4226 = vmatpush2.bf16.msra.mxu0 0
      %4227 = vmatprep.mubr.bf16.mxu0 0
      %4228 = vmatmul.mubr.bf16.gmra.mxu0 %v3623
      %v4229 = vpop.f32.mrf.mxu0
      %v4230 = vadd.f32 0.0, %v4229
      %v4231 = vpop.f32.mrf.mxu0
      %v4232 = vadd.f32 0.0, %v4231
      %v4233 = vpop.f32.mrf.mxu0
      %v4234 = vpop.f32.mrf.mxu0
      %4235 = vdwg.mxu0
      %v4236 = vadd.f32 %v3392, %v3738
      %v4237 = vadd.f32 %v3393, %v3740
      %v4238 = vadd.f32 %v3394, %v3779
      %v4239 = vadd.f32 %v3395, %v3781
      %v4240 = vadd.f32 %v3396, %v3820
      %v4241 = vadd.f32 %v3397, %v3822
      %v4242 = vadd.f32 %v3398, %v3861
      %v4243 = vadd.f32 %v3399, %v3863
      %v4244 = vadd.f32 %v3400, %v3902
      %v4245 = vadd.f32 %v3401, %v3904
      %v4246 = vadd.f32 %v3402, %v3943
      %v4247 = vadd.f32 %v3403, %v3945
      %v4248 = vadd.f32 %v3404, %v3984
      %v4249 = vadd.f32 %v3405, %v3986
      %v4250 = vadd.f32 %v3406, %v4025
      %v4251 = vadd.f32 %v3407, %v4027
      %v4252 = vadd.f32 %v3408, %v4066
      %v4253 = vadd.f32 %v3409, %v4068
      %v4254 = vadd.f32 %v3410, %v4107
      %v4255 = vadd.f32 %v3411, %v4109
      %v4256 = vadd.f32 %v3412, %v4148
      %v4257 = vadd.f32 %v3413, %v4150
      %v4258 = vadd.f32 %v3414, %v4189
      %v4259 = vadd.f32 %v3415, %v4191
      %v4260 = vadd.f32 %v3416, %v4230
      %v4261 = vadd.f32 %v3417, %v4232
      %s4262 = scalar_lea.vmem %s1, 20
      %v4263 = vld [vmem:[%s4262] sm:$0xf]
      %v4264 = vld [vmem:[%s285] sm:$0xff]
      %v4265 = vld [vmem:[%s285 + $0x8] sm:$0xff]
      %v4266 = vld [vmem:[%s285 + $0x10] sm:$0xff]
      %v4267 = vld [vmem:[%s285 + $0x18] sm:$0xff]
      %v4268 = vld [vmem:[%s285 + $0x20] sm:$0xff]
      %v4269 = vld [vmem:[%s285 + $0x28] sm:$0xff]
      %v4270 = vld [vmem:[%s285 + $0x30] sm:$0xf]
      %v4278 = vcombine.high %v4264, %v4264
      %v4280 = vunpack.c.l.s4 1983009808
      %v4281 = vunpack.c.0.s8 %v4280
      %v4282 = vlaneseq
      %v4283 = vshrl.u32 %v4282, 7
      %v4284 = vsub.s32 %v4281, %v4283
      %v4285 = vrot.slane %v4264, %v4284
      %v4287 = vunpack.c.l.s4 1983009808
      %v4288 = vunpack.c.0.s8 %v4287
      %v4289 = vlaneseq
      %v4290 = vshrl.u32 %v4289, 7
      %v4291 = vsub.s32 %v4288, %v4290
      %v4292 = vrot.slane %v4278, %v4291
      %v4293 = vcombine.high %v4285, %v4285
      %v4294 = vcombine.high %v4292, %v4292
      %v4295 = vcombine.high %v4265, %v4265
      %v4297 = vunpack.c.l.s4 1983009808
      %v4298 = vunpack.c.0.s8 %v4297
      %v4299 = vlaneseq
      %v4300 = vshrl.u32 %v4299, 7
      %v4301 = vsub.s32 %v4298, %v4300
      %v4302 = vrot.slane %v4265, %v4301
      %v4304 = vunpack.c.l.s4 1983009808
      %v4305 = vunpack.c.0.s8 %v4304
      %v4306 = vlaneseq
      %v4307 = vshrl.u32 %v4306, 7
      %v4308 = vsub.s32 %v4305, %v4307
      %v4309 = vrot.slane %v4295, %v4308
      %v4310 = vcombine.high %v4302, %v4302
      %v4311 = vcombine.high %v4309, %v4309
      %v4312 = vcombine.high %v4266, %v4266
      %v4314 = vunpack.c.l.s4 1983009808
      %v4315 = vunpack.c.0.s8 %v4314
      %v4316 = vlaneseq
      %v4317 = vshrl.u32 %v4316, 7
      %v4318 = vsub.s32 %v4315, %v4317
      %v4319 = vrot.slane %v4266, %v4318
      %v4321 = vunpack.c.l.s4 1983009808
      %v4322 = vunpack.c.0.s8 %v4321
      %v4323 = vlaneseq
      %v4324 = vshrl.u32 %v4323, 7
      %v4325 = vsub.s32 %v4322, %v4324
      %v4326 = vrot.slane %v4312, %v4325
      %v4327 = vcombine.high %v4319, %v4319
      %v4328 = vcombine.high %v4326, %v4326
      %v4329 = vcombine.high %v4267, %v4267
      %v4331 = vunpack.c.l.s4 1983009808
      %v4332 = vunpack.c.0.s8 %v4331
      %v4333 = vlaneseq
      %v4334 = vshrl.u32 %v4333, 7
      %v4335 = vsub.s32 %v4332, %v4334
      %v4336 = vrot.slane %v4267, %v4335
      %v4338 = vunpack.c.l.s4 1983009808
      %v4339 = vunpack.c.0.s8 %v4338
      %v4340 = vlaneseq
      %v4341 = vshrl.u32 %v4340, 7
      %v4342 = vsub.s32 %v4339, %v4341
      %v4343 = vrot.slane %v4329, %v4342
      %v4344 = vcombine.high %v4336, %v4336
      %v4345 = vcombine.high %v4343, %v4343
      %v4346 = vcombine.high %v4268, %v4268
      %v4348 = vunpack.c.l.s4 1983009808
      %v4349 = vunpack.c.0.s8 %v4348
      %v4350 = vlaneseq
      %v4351 = vshrl.u32 %v4350, 7
      %v4352 = vsub.s32 %v4349, %v4351
      %v4353 = vrot.slane %v4268, %v4352
      %v4355 = vunpack.c.l.s4 1983009808
      %v4356 = vunpack.c.0.s8 %v4355
      %v4357 = vlaneseq
      %v4358 = vshrl.u32 %v4357, 7
      %v4359 = vsub.s32 %v4356, %v4358
      %v4360 = vrot.slane %v4346, %v4359
      %v4361 = vcombine.high %v4353, %v4353
      %v4362 = vcombine.high %v4360, %v4360
      %v4363 = vcombine.high %v4269, %v4269
      %v4365 = vunpack.c.l.s4 1983009808
      %v4366 = vunpack.c.0.s8 %v4365
      %v4367 = vlaneseq
      %v4368 = vshrl.u32 %v4367, 7
      %v4369 = vsub.s32 %v4366, %v4368
      %v4370 = vrot.slane %v4269, %v4369
      %v4372 = vunpack.c.l.s4 1983009808
      %v4373 = vunpack.c.0.s8 %v4372
      %v4374 = vlaneseq
      %v4375 = vshrl.u32 %v4374, 7
      %v4376 = vsub.s32 %v4373, %v4375
      %v4377 = vrot.slane %v4363, %v4376
      %v4378 = vcombine.high %v4370, %v4370
      %v4379 = vcombine.high %v4377, %v4377
      %v4381 = vunpack.c.l.s4 1983009808
      %v4382 = vunpack.c.0.s8 %v4381
      %v4383 = vlaneseq
      %v4384 = vshrl.u32 %v4383, 7
      %v4385 = vsub.s32 %v4382, %v4384
      %v4386 = vrot.slane %v4270, %v4385
      %v4387 = vcombine.high %v4386, %v4386
      %4388 = vrot.lane.b32.xlu0 %v4285, 108
      %v4389 = vpop.permute.xlu0 %4388
      %4390 = vrot.lane.b32.xlu0 %v4293, 108
      %v4391 = vpop.permute.xlu0 %4390
      %4392 = vrot.lane.b32.xlu0 %v4292, 108
      %v4393 = vpop.permute.xlu0 %4392
      %4394 = vrot.lane.b32.xlu0 %v4294, 108
      %v4395 = vpop.permute.xlu0 %4394
      %4396 = vrot.lane.b32.xlu0 %v4302, 108
      %v4397 = vpop.permute.xlu0 %4396
      %4398 = vrot.lane.b32.xlu0 %v4310, 108
      %v4399 = vpop.permute.xlu0 %4398
      %4400 = vrot.lane.b32.xlu0 %v4309, 108
      %v4401 = vpop.permute.xlu0 %4400
      %4402 = vrot.lane.b32.xlu0 %v4311, 108
      %v4403 = vpop.permute.xlu0 %4402
      %4404 = vrot.lane.b32.xlu0 %v4319, 108
      %v4405 = vpop.permute.xlu0 %4404
      %4406 = vrot.lane.b32.xlu0 %v4327, 108
      %v4407 = vpop.permute.xlu0 %4406
      %4408 = vrot.lane.b32.xlu0 %v4326, 108
      %v4409 = vpop.permute.xlu0 %4408
      %4410 = vrot.lane.b32.xlu0 %v4328, 108
      %v4411 = vpop.permute.xlu0 %4410
      %4412 = vrot.lane.b32.xlu0 %v4336, 108
      %v4413 = vpop.permute.xlu0 %4412
      %4414 = vrot.lane.b32.xlu0 %v4344, 108
      %v4415 = vpop.permute.xlu0 %4414
      %4416 = vrot.lane.b32.xlu0 %v4343, 108
      %v4417 = vpop.permute.xlu0 %4416
      %4418 = vrot.lane.b32.xlu0 %v4345, 108
      %v4419 = vpop.permute.xlu0 %4418
      %4420 = vrot.lane.b32.xlu0 %v4353, 108
      %v4421 = vpop.permute.xlu0 %4420
      %4422 = vrot.lane.b32.xlu0 %v4361, 108
      %v4423 = vpop.permute.xlu0 %4422
      %4424 = vrot.lane.b32.xlu0 %v4360, 108
      %v4425 = vpop.permute.xlu0 %4424
      %4426 = vrot.lane.b32.xlu0 %v4362, 108
      %v4427 = vpop.permute.xlu0 %4426
      %4428 = vrot.lane.b32.xlu0 %v4370, 108
      %v4429 = vpop.permute.xlu0 %4428
      %4430 = vrot.lane.b32.xlu0 %v4378, 108
      %v4431 = vpop.permute.xlu0 %4430
      %4432 = vrot.lane.b32.xlu0 %v4377, 108
      %v4433 = vpop.permute.xlu0 %4432
      %4434 = vrot.lane.b32.xlu0 %v4379, 108
      %v4435 = vpop.permute.xlu0 %4434
      %4436 = vrot.lane.b32.xlu0 %v4386, 108
      %v4437 = vpop.permute.xlu0 %4436
      %4438 = vrot.lane.b32.xlu0 %v4387, 108
      %v4439 = vpop.permute.xlu0 %4438
      %vm4440 = vcmask 883712
      %v4441 = vsel %vm4440, %v4389, %v4391
      %v4442 = vsel %vm4440, %v4391, %v4393
      %v4443 = vsel %vm4440, %v4393, %v4395
      %v4444 = vsel %vm4440, %v4395, %v4397
      %v4445 = vsel %vm4440, %v4397, %v4399
      %v4446 = vsel %vm4440, %v4399, %v4401
      %v4447 = vsel %vm4440, %v4401, %v4403
      %v4448 = vsel %vm4440, %v4403, %v4405
      %v4449 = vsel %vm4440, %v4405, %v4407
      %v4450 = vsel %vm4440, %v4407, %v4409
      %v4451 = vsel %vm4440, %v4409, %v4411
      %v4452 = vsel %vm4440, %v4411, %v4413
      %v4453 = vsel %vm4440, %v4413, %v4415
      %v4454 = vsel %vm4440, %v4415, %v4417
      %v4455 = vsel %vm4440, %v4417, %v4419
      %v4456 = vsel %vm4440, %v4419, %v4421
      %v4457 = vsel %vm4440, %v4421, %v4423
      %v4458 = vsel %vm4440, %v4423, %v4425
      %v4459 = vsel %vm4440, %v4425, %v4427
      %v4460 = vsel %vm4440, %v4427, %v4429
      %v4461 = vsel %vm4440, %v4429, %v4431
      %v4462 = vsel %vm4440, %v4431, %v4433
      %v4463 = vsel %vm4440, %v4433, %v4435
      %v4464 = vsel %vm4440, %v4435, %v4437
      %v4465 = vsel %vm4440, %v4437, %v4439
      %v4467 = vsel %vm500, %v4263, 0
      %v4470 = vsel %vm504, %v4441, 0
      %v4473 = vsel %vm504, %v4442, 0
      %v4476 = vsel %vm504, %v4443, 0
      %v4479 = vsel %vm504, %v4444, 0
      %v4482 = vsel %vm504, %v4445, 0
      %v4485 = vsel %vm504, %v4446, 0
      %v4488 = vsel %vm504, %v4447, 0
      %v4491 = vsel %vm504, %v4448, 0
      %v4494 = vsel %vm504, %v4449, 0
      %v4497 = vsel %vm504, %v4450, 0
      %v4500 = vsel %vm504, %v4451, 0
      %v4503 = vsel %vm504, %v4452, 0
      %v4506 = vsel %vm504, %v4453, 0
      %v4509 = vsel %vm504, %v4454, 0
      %v4512 = vsel %vm504, %v4455, 0
      %v4515 = vsel %vm504, %v4456, 0
      %v4518 = vsel %vm504, %v4457, 0
      %v4521 = vsel %vm504, %v4458, 0
      %v4524 = vsel %vm504, %v4459, 0
      %v4527 = vsel %vm504, %v4460, 0
      %v4530 = vsel %vm504, %v4461, 0
      %v4533 = vsel %vm504, %v4462, 0
      %v4536 = vsel %vm504, %v4463, 0
      %v4539 = vsel %vm504, %v4464, 0
      %v4542 = vsel %vm504, %v4465, 0
      %v4545 = vsel %vm504, %v4439, 0
      %4547 = vmatprep.subr.bf16.mxu0 0
      %4548 = vmatpush1.bf16.msra.mxu0 0
      %4549 = vmatprep.subr.bf16.mxu0 0
      %4550 = vmatpush1.bf16.msra.mxu0 0
      %4551 = vmatprep.subr.bf16.mxu0 0
      %4552 = vmatpush1.bf16.msra.mxu0 0
      %4553 = vmatprep.subr.bf16.mxu0 0
      %4554 = vmatpush1.bf16.msra.mxu0 0
      %4555 = vmatprep.subr.bf16.mxu0 0
      %4556 = vmatpush1.bf16.msra.mxu0 0
      %4557 = vmatprep.subr.bf16.mxu0 0
      %4558 = vmatpush1.bf16.msra.mxu0 0
      %4559 = vmatprep.subr.bf16.mxu0 0
      %4560 = vmatpush1.bf16.msra.mxu0 0
      %4561 = vmatprep.subr.bf16.mxu0 %v4473
      %4562 = vmatpush1.bf16.msra.mxu0 %v4470
      %4563 = vmatprep.subr.bf16.mxu0 0
      %4564 = vmatpush2.bf16.msra.mxu0 0
      %4565 = vmatprep.subr.bf16.mxu0 0
      %4566 = vmatpush2.bf16.msra.mxu0 0
      %4567 = vmatprep.subr.bf16.mxu0 0
      %4568 = vmatpush2.bf16.msra.mxu0 0
      %4569 = vmatprep.subr.bf16.mxu0 0
      %4570 = vmatpush2.bf16.msra.mxu0 0
      %4571 = vmatprep.subr.bf16.mxu0 0
      %4572 = vmatpush2.bf16.msra.mxu0 0
      %4573 = vmatprep.subr.bf16.mxu0 0
      %4574 = vmatpush2.bf16.msra.mxu0 0
      %4575 = vmatprep.subr.bf16.mxu0 0
      %4576 = vmatpush2.bf16.msra.mxu0 0
      %4577 = vmatprep.subr.bf16.mxu0 0
      %4578 = vmatpush2.bf16.msra.mxu0 0
      %4579 = vmatprep.mubr.bf16.mxu0 0
      %4580 = vmatmul.mubr.bf16.gmra.mxu0 %v4467
      %v4581 = vpop.f32.mrf.mxu0
      %v4582 = vadd.f32 0.0, %v4581
      %v4583 = vpop.f32.mrf.mxu0
      %v4584 = vadd.f32 0.0, %v4583
      %v4585 = vpop.f32.mrf.mxu0
      %v4586 = vpop.f32.mrf.mxu0
      %4587 = vdwg.mxu0
      %4588 = vmatprep.subr.bf16.mxu0 0
      %4589 = vmatpush1.bf16.msra.mxu0 0
      %4590 = vmatprep.subr.bf16.mxu0 0
      %4591 = vmatpush1.bf16.msra.mxu0 0
      %4592 = vmatprep.subr.bf16.mxu0 0
      %4593 = vmatpush1.bf16.msra.mxu0 0
      %4594 = vmatprep.subr.bf16.mxu0 0
      %4595 = vmatpush1.bf16.msra.mxu0 0
      %4596 = vmatprep.subr.bf16.mxu0 0
      %4597 = vmatpush1.bf16.msra.mxu0 0
      %4598 = vmatprep.subr.bf16.mxu0 0
      %4599 = vmatpush1.bf16.msra.mxu0 0
      %4600 = vmatprep.subr.bf16.mxu0 0
      %4601 = vmatpush1.bf16.msra.mxu0 0
      %4602 = vmatprep.subr.bf16.mxu0 %v4479
      %4603 = vmatpush1.bf16.msra.mxu0 %v4476
      %4604 = vmatprep.subr.bf16.mxu0 0
      %4605 = vmatpush2.bf16.msra.mxu0 0
      %4606 = vmatprep.subr.bf16.mxu0 0
      %4607 = vmatpush2.bf16.msra.mxu0 0
      %4608 = vmatprep.subr.bf16.mxu0 0
      %4609 = vmatpush2.bf16.msra.mxu0 0
      %4610 = vmatprep.subr.bf16.mxu0 0
      %4611 = vmatpush2.bf16.msra.mxu0 0
      %4612 = vmatprep.subr.bf16.mxu0 0
      %4613 = vmatpush2.bf16.msra.mxu0 0
      %4614 = vmatprep.subr.bf16.mxu0 0
      %4615 = vmatpush2.bf16.msra.mxu0 0
      %4616 = vmatprep.subr.bf16.mxu0 0
      %4617 = vmatpush2.bf16.msra.mxu0 0
      %4618 = vmatprep.subr.bf16.mxu0 0
      %4619 = vmatpush2.bf16.msra.mxu0 0
      %4620 = vmatprep.mubr.bf16.mxu0 0
      %4621 = vmatmul.mubr.bf16.gmra.mxu0 %v4467
      %v4622 = vpop.f32.mrf.mxu0
      %v4623 = vadd.f32 0.0, %v4622
      %v4624 = vpop.f32.mrf.mxu0
      %v4625 = vadd.f32 0.0, %v4624
      %v4626 = vpop.f32.mrf.mxu0
      %v4627 = vpop.f32.mrf.mxu0
      %4628 = vdwg.mxu0
      %4629 = vmatprep.subr.bf16.mxu0 0
      %4630 = vmatpush1.bf16.msra.mxu0 0
      %4631 = vmatprep.subr.bf16.mxu0 0
      %4632 = vmatpush1.bf16.msra.mxu0 0
      %4633 = vmatprep.subr.bf16.mxu0 0
      %4634 = vmatpush1.bf16.msra.mxu0 0
      %4635 = vmatprep.subr.bf16.mxu0 0
      %4636 = vmatpush1.bf16.msra.mxu0 0
      %4637 = vmatprep.subr.bf16.mxu0 0
      %4638 = vmatpush1.bf16.msra.mxu0 0
      %4639 = vmatprep.subr.bf16.mxu0 0
      %4640 = vmatpush1.bf16.msra.mxu0 0
      %4641 = vmatprep.subr.bf16.mxu0 0
      %4642 = vmatpush1.bf16.msra.mxu0 0
      %4643 = vmatprep.subr.bf16.mxu0 %v4485
      %4644 = vmatpush1.bf16.msra.mxu0 %v4482
      %4645 = vmatprep.subr.bf16.mxu0 0
      %4646 = vmatpush2.bf16.msra.mxu0 0
      %4647 = vmatprep.subr.bf16.mxu0 0
      %4648 = vmatpush2.bf16.msra.mxu0 0
      %4649 = vmatprep.subr.bf16.mxu0 0
      %4650 = vmatpush2.bf16.msra.mxu0 0
      %4651 = vmatprep.subr.bf16.mxu0 0
      %4652 = vmatpush2.bf16.msra.mxu0 0
      %4653 = vmatprep.subr.bf16.mxu0 0
      %4654 = vmatpush2.bf16.msra.mxu0 0
      %4655 = vmatprep.subr.bf16.mxu0 0
      %4656 = vmatpush2.bf16.msra.mxu0 0
      %4657 = vmatprep.subr.bf16.mxu0 0
      %4658 = vmatpush2.bf16.msra.mxu0 0
      %4659 = vmatprep.subr.bf16.mxu0 0
      %4660 = vmatpush2.bf16.msra.mxu0 0
      %4661 = vmatprep.mubr.bf16.mxu0 0
      %4662 = vmatmul.mubr.bf16.gmra.mxu0 %v4467
      %v4663 = vpop.f32.mrf.mxu0
      %v4664 = vadd.f32 0.0, %v4663
      %v4665 = vpop.f32.mrf.mxu0
      %v4666 = vadd.f32 0.0, %v4665
      %v4667 = vpop.f32.mrf.mxu0
      %v4668 = vpop.f32.mrf.mxu0
      %4669 = vdwg.mxu0
      %4670 = vmatprep.subr.bf16.mxu0 0
      %4671 = vmatpush1.bf16.msra.mxu0 0
      %4672 = vmatprep.subr.bf16.mxu0 0
      %4673 = vmatpush1.bf16.msra.mxu0 0
      %4674 = vmatprep.subr.bf16.mxu0 0
      %4675 = vmatpush1.bf16.msra.mxu0 0
      %4676 = vmatprep.subr.bf16.mxu0 0
      %4677 = vmatpush1.bf16.msra.mxu0 0
      %4678 = vmatprep.subr.bf16.mxu0 0
      %4679 = vmatpush1.bf16.msra.mxu0 0
      %4680 = vmatprep.subr.bf16.mxu0 0
      %4681 = vmatpush1.bf16.msra.mxu0 0
      %4682 = vmatprep.subr.bf16.mxu0 0
      %4683 = vmatpush1.bf16.msra.mxu0 0
      %4684 = vmatprep.subr.bf16.mxu0 %v4491
      %4685 = vmatpush1.bf16.msra.mxu0 %v4488
      %4686 = vmatprep.subr.bf16.mxu0 0
      %4687 = vmatpush2.bf16.msra.mxu0 0
      %4688 = vmatprep.subr.bf16.mxu0 0
      %4689 = vmatpush2.bf16.msra.mxu0 0
      %4690 = vmatprep.subr.bf16.mxu0 0
      %4691 = vmatpush2.bf16.msra.mxu0 0
      %4692 = vmatprep.subr.bf16.mxu0 0
      %4693 = vmatpush2.bf16.msra.mxu0 0
      %4694 = vmatprep.subr.bf16.mxu0 0
      %4695 = vmatpush2.bf16.msra.mxu0 0
      %4696 = vmatprep.subr.bf16.mxu0 0
      %4697 = vmatpush2.bf16.msra.mxu0 0
      %4698 = vmatprep.subr.bf16.mxu0 0
      %4699 = vmatpush2.bf16.msra.mxu0 0
      %4700 = vmatprep.subr.bf16.mxu0 0
      %4701 = vmatpush2.bf16.msra.mxu0 0
      %4702 = vmatprep.mubr.bf16.mxu0 0
      %4703 = vmatmul.mubr.bf16.gmra.mxu0 %v4467
      %v4704 = vpop.f32.mrf.mxu0
      %v4705 = vadd.f32 0.0, %v4704
      %v4706 = vpop.f32.mrf.mxu0
      %v4707 = vadd.f32 0.0, %v4706
      %v4708 = vpop.f32.mrf.mxu0
      %v4709 = vpop.f32.mrf.mxu0
      %4710 = vdwg.mxu0
      %4711 = vmatprep.subr.bf16.mxu0 0
      %4712 = vmatpush1.bf16.msra.mxu0 0
      %4713 = vmatprep.subr.bf16.mxu0 0
      %4714 = vmatpush1.bf16.msra.mxu0 0
      %4715 = vmatprep.subr.bf16.mxu0 0
      %4716 = vmatpush1.bf16.msra.mxu0 0
      %4717 = vmatprep.subr.bf16.mxu0 0
      %4718 = vmatpush1.bf16.msra.mxu0 0
      %4719 = vmatprep.subr.bf16.mxu0 0
      %4720 = vmatpush1.bf16.msra.mxu0 0
      %4721 = vmatprep.subr.bf16.mxu0 0
      %4722 = vmatpush1.bf16.msra.mxu0 0
      %4723 = vmatprep.subr.bf16.mxu0 0
      %4724 = vmatpush1.bf16.msra.mxu0 0
      %4725 = vmatprep.subr.bf16.mxu0 %v4497
      %4726 = vmatpush1.bf16.msra.mxu0 %v4494
      %4727 = vmatprep.subr.bf16.mxu0 0
      %4728 = vmatpush2.bf16.msra.mxu0 0
      %4729 = vmatprep.subr.bf16.mxu0 0
      %4730 = vmatpush2.bf16.msra.mxu0 0
      %4731 = vmatprep.subr.bf16.mxu0 0
      %4732 = vmatpush2.bf16.msra.mxu0 0
      %4733 = vmatprep.subr.bf16.mxu0 0
      %4734 = vmatpush2.bf16.msra.mxu0 0
      %4735 = vmatprep.subr.bf16.mxu0 0
      %4736 = vmatpush2.bf16.msra.mxu0 0
      %4737 = vmatprep.subr.bf16.mxu0 0
      %4738 = vmatpush2.bf16.msra.mxu0 0
      %4739 = vmatprep.subr.bf16.mxu0 0
      %4740 = vmatpush2.bf16.msra.mxu0 0
      %4741 = vmatprep.subr.bf16.mxu0 0
      %4742 = vmatpush2.bf16.msra.mxu0 0
      %4743 = vmatprep.mubr.bf16.mxu0 0
      %4744 = vmatmul.mubr.bf16.gmra.mxu0 %v4467
      %v4745 = vpop.f32.mrf.mxu0
      %v4746 = vadd.f32 0.0, %v4745
      %v4747 = vpop.f32.mrf.mxu0
      %v4748 = vadd.f32 0.0, %v4747
      %v4749 = vpop.f32.mrf.mxu0
      %v4750 = vpop.f32.mrf.mxu0
      %4751 = vdwg.mxu0
      %4752 = vmatprep.subr.bf16.mxu0 0
      %4753 = vmatpush1.bf16.msra.mxu0 0
      %4754 = vmatprep.subr.bf16.mxu0 0
      %4755 = vmatpush1.bf16.msra.mxu0 0
      %4756 = vmatprep.subr.bf16.mxu0 0
      %4757 = vmatpush1.bf16.msra.mxu0 0
      %4758 = vmatprep.subr.bf16.mxu0 0
      %4759 = vmatpush1.bf16.msra.mxu0 0
      %4760 = vmatprep.subr.bf16.mxu0 0
      %4761 = vmatpush1.bf16.msra.mxu0 0
      %4762 = vmatprep.subr.bf16.mxu0 0
      %4763 = vmatpush1.bf16.msra.mxu0 0
      %4764 = vmatprep.subr.bf16.mxu0 0
      %4765 = vmatpush1.bf16.msra.mxu0 0
      %4766 = vmatprep.subr.bf16.mxu0 %v4503
      %4767 = vmatpush1.bf16.msra.mxu0 %v4500
      %4768 = vmatprep.subr.bf16.mxu0 0
      %4769 = vmatpush2.bf16.msra.mxu0 0
      %4770 = vmatprep.subr.bf16.mxu0 0
      %4771 = vmatpush2.bf16.msra.mxu0 0
      %4772 = vmatprep.subr.bf16.mxu0 0
      %4773 = vmatpush2.bf16.msra.mxu0 0
      %4774 = vmatprep.subr.bf16.mxu0 0
      %4775 = vmatpush2.bf16.msra.mxu0 0
      %4776 = vmatprep.subr.bf16.mxu0 0
      %4777 = vmatpush2.bf16.msra.mxu0 0
      %4778 = vmatprep.subr.bf16.mxu0 0
      %4779 = vmatpush2.bf16.msra.mxu0 0
      %4780 = vmatprep.subr.bf16.mxu0 0
      %4781 = vmatpush2.bf16.msra.mxu0 0
      %4782 = vmatprep.subr.bf16.mxu0 0
      %4783 = vmatpush2.bf16.msra.mxu0 0
      %4784 = vmatprep.mubr.bf16.mxu0 0
      %4785 = vmatmul.mubr.bf16.gmra.mxu0 %v4467
      %v4786 = vpop.f32.mrf.mxu0
      %v4787 = vadd.f32 0.0, %v4786
      %v4788 = vpop.f32.mrf.mxu0
      %v4789 = vadd.f32 0.0, %v4788
      %v4790 = vpop.f32.mrf.mxu0
      %v4791 = vpop.f32.mrf.mxu0
      %4792 = vdwg.mxu0
      %4793 = vmatprep.subr.bf16.mxu0 0
      %4794 = vmatpush1.bf16.msra.mxu0 0
      %4795 = vmatprep.subr.bf16.mxu0 0
      %4796 = vmatpush1.bf16.msra.mxu0 0
      %4797 = vmatprep.subr.bf16.mxu0 0
      %4798 = vmatpush1.bf16.msra.mxu0 0
      %4799 = vmatprep.subr.bf16.mxu0 0
      %4800 = vmatpush1.bf16.msra.mxu0 0
      %4801 = vmatprep.subr.bf16.mxu0 0
      %4802 = vmatpush1.bf16.msra.mxu0 0
      %4803 = vmatprep.subr.bf16.mxu0 0
      %4804 = vmatpush1.bf16.msra.mxu0 0
      %4805 = vmatprep.subr.bf16.mxu0 0
      %4806 = vmatpush1.bf16.msra.mxu0 0
      %4807 = vmatprep.subr.bf16.mxu0 %v4509
      %4808 = vmatpush1.bf16.msra.mxu0 %v4506
      %4809 = vmatprep.subr.bf16.mxu0 0
      %4810 = vmatpush2.bf16.msra.mxu0 0
      %4811 = vmatprep.subr.bf16.mxu0 0
      %4812 = vmatpush2.bf16.msra.mxu0 0
      %4813 = vmatprep.subr.bf16.mxu0 0
      %4814 = vmatpush2.bf16.msra.mxu0 0
      %4815 = vmatprep.subr.bf16.mxu0 0
      %4816 = vmatpush2.bf16.msra.mxu0 0
      %4817 = vmatprep.subr.bf16.mxu0 0
      %4818 = vmatpush2.bf16.msra.mxu0 0
      %4819 = vmatprep.subr.bf16.mxu0 0
      %4820 = vmatpush2.bf16.msra.mxu0 0
      %4821 = vmatprep.subr.bf16.mxu0 0
      %4822 = vmatpush2.bf16.msra.mxu0 0
      %4823 = vmatprep.subr.bf16.mxu0 0
      %4824 = vmatpush2.bf16.msra.mxu0 0
      %4825 = vmatprep.mubr.bf16.mxu0 0
      %4826 = vmatmul.mubr.bf16.gmra.mxu0 %v4467
      %v4827 = vpop.f32.mrf.mxu0
      %v4828 = vadd.f32 0.0, %v4827
      %v4829 = vpop.f32.mrf.mxu0
      %v4830 = vadd.f32 0.0, %v4829
      %v4831 = vpop.f32.mrf.mxu0
      %v4832 = vpop.f32.mrf.mxu0
      %4833 = vdwg.mxu0
      %4834 = vmatprep.subr.bf16.mxu0 0
      %4835 = vmatpush1.bf16.msra.mxu0 0
      %4836 = vmatprep.subr.bf16.mxu0 0
      %4837 = vmatpush1.bf16.msra.mxu0 0
      %4838 = vmatprep.subr.bf16.mxu0 0
      %4839 = vmatpush1.bf16.msra.mxu0 0
      %4840 = vmatprep.subr.bf16.mxu0 0
      %4841 = vmatpush1.bf16.msra.mxu0 0
      %4842 = vmatprep.subr.bf16.mxu0 0
      %4843 = vmatpush1.bf16.msra.mxu0 0
      %4844 = vmatprep.subr.bf16.mxu0 0
      %4845 = vmatpush1.bf16.msra.mxu0 0
      %4846 = vmatprep.subr.bf16.mxu0 0
      %4847 = vmatpush1.bf16.msra.mxu0 0
      %4848 = vmatprep.subr.bf16.mxu0 %v4515
      %4849 = vmatpush1.bf16.msra.mxu0 %v4512
      %4850 = vmatprep.subr.bf16.mxu0 0
      %4851 = vmatpush2.bf16.msra.mxu0 0
      %4852 = vmatprep.subr.bf16.mxu0 0
      %4853 = vmatpush2.bf16.msra.mxu0 0
      %4854 = vmatprep.subr.bf16.mxu0 0
      %4855 = vmatpush2.bf16.msra.mxu0 0
      %4856 = vmatprep.subr.bf16.mxu0 0
      %4857 = vmatpush2.bf16.msra.mxu0 0
      %4858 = vmatprep.subr.bf16.mxu0 0
      %4859 = vmatpush2.bf16.msra.mxu0 0
      %4860 = vmatprep.subr.bf16.mxu0 0
      %4861 = vmatpush2.bf16.msra.mxu0 0
      %4862 = vmatprep.subr.bf16.mxu0 0
      %4863 = vmatpush2.bf16.msra.mxu0 0
      %4864 = vmatprep.subr.bf16.mxu0 0
      %4865 = vmatpush2.bf16.msra.mxu0 0
      %4866 = vmatprep.mubr.bf16.mxu0 0
      %4867 = vmatmul.mubr.bf16.gmra.mxu0 %v4467
      %v4868 = vpop.f32.mrf.mxu0
      %v4869 = vadd.f32 0.0, %v4868
      %v4870 = vpop.f32.mrf.mxu0
      %v4871 = vadd.f32 0.0, %v4870
      %v4872 = vpop.f32.mrf.mxu0
      %v4873 = vpop.f32.mrf.mxu0
      %4874 = vdwg.mxu0
      %4875 = vmatprep.subr.bf16.mxu0 0
      %4876 = vmatpush1.bf16.msra.mxu0 0
      %4877 = vmatprep.subr.bf16.mxu0 0
      %4878 = vmatpush1.bf16.msra.mxu0 0
      %4879 = vmatprep.subr.bf16.mxu0 0
      %4880 = vmatpush1.bf16.msra.mxu0 0
      %4881 = vmatprep.subr.bf16.mxu0 0
      %4882 = vmatpush1.bf16.msra.mxu0 0
      %4883 = vmatprep.subr.bf16.mxu0 0
      %4884 = vmatpush1.bf16.msra.mxu0 0
      %4885 = vmatprep.subr.bf16.mxu0 0
      %4886 = vmatpush1.bf16.msra.mxu0 0
      %4887 = vmatprep.subr.bf16.mxu0 0
      %4888 = vmatpush1.bf16.msra.mxu0 0
      %4889 = vmatprep.subr.bf16.mxu0 %v4521
      %4890 = vmatpush1.bf16.msra.mxu0 %v4518
      %4891 = vmatprep.subr.bf16.mxu0 0
      %4892 = vmatpush2.bf16.msra.mxu0 0
      %4893 = vmatprep.subr.bf16.mxu0 0
      %4894 = vmatpush2.bf16.msra.mxu0 0
      %4895 = vmatprep.subr.bf16.mxu0 0
      %4896 = vmatpush2.bf16.msra.mxu0 0
      %4897 = vmatprep.subr.bf16.mxu0 0
      %4898 = vmatpush2.bf16.msra.mxu0 0
      %4899 = vmatprep.subr.bf16.mxu0 0
      %4900 = vmatpush2.bf16.msra.mxu0 0
      %4901 = vmatprep.subr.bf16.mxu0 0
      %4902 = vmatpush2.bf16.msra.mxu0 0
      %4903 = vmatprep.subr.bf16.mxu0 0
      %4904 = vmatpush2.bf16.msra.mxu0 0
      %4905 = vmatprep.subr.bf16.mxu0 0
      %4906 = vmatpush2.bf16.msra.mxu0 0
      %4907 = vmatprep.mubr.bf16.mxu0 0
      %4908 = vmatmul.mubr.bf16.gmra.mxu0 %v4467
      %v4909 = vpop.f32.mrf.mxu0
      %v4910 = vadd.f32 0.0, %v4909
      %v4911 = vpop.f32.mrf.mxu0
      %v4912 = vadd.f32 0.0, %v4911
      %v4913 = vpop.f32.mrf.mxu0
      %v4914 = vpop.f32.mrf.mxu0
      %4915 = vdwg.mxu0
      %4916 = vmatprep.subr.bf16.mxu0 0
      %4917 = vmatpush1.bf16.msra.mxu0 0
      %4918 = vmatprep.subr.bf16.mxu0 0
      %4919 = vmatpush1.bf16.msra.mxu0 0
      %4920 = vmatprep.subr.bf16.mxu0 0
      %4921 = vmatpush1.bf16.msra.mxu0 0
      %4922 = vmatprep.subr.bf16.mxu0 0
      %4923 = vmatpush1.bf16.msra.mxu0 0
      %4924 = vmatprep.subr.bf16.mxu0 0
      %4925 = vmatpush1.bf16.msra.mxu0 0
      %4926 = vmatprep.subr.bf16.mxu0 0
      %4927 = vmatpush1.bf16.msra.mxu0 0
      %4928 = vmatprep.subr.bf16.mxu0 0
      %4929 = vmatpush1.bf16.msra.mxu0 0
      %4930 = vmatprep.subr.bf16.mxu0 %v4527
      %4931 = vmatpush1.bf16.msra.mxu0 %v4524
      %4932 = vmatprep.subr.bf16.mxu0 0
      %4933 = vmatpush2.bf16.msra.mxu0 0
      %4934 = vmatprep.subr.bf16.mxu0 0
      %4935 = vmatpush2.bf16.msra.mxu0 0
      %4936 = vmatprep.subr.bf16.mxu0 0
      %4937 = vmatpush2.bf16.msra.mxu0 0
      %4938 = vmatprep.subr.bf16.mxu0 0
      %4939 = vmatpush2.bf16.msra.mxu0 0
      %4940 = vmatprep.subr.bf16.mxu0 0
      %4941 = vmatpush2.bf16.msra.mxu0 0
      %4942 = vmatprep.subr.bf16.mxu0 0
      %4943 = vmatpush2.bf16.msra.mxu0 0
      %4944 = vmatprep.subr.bf16.mxu0 0
      %4945 = vmatpush2.bf16.msra.mxu0 0
      %4946 = vmatprep.subr.bf16.mxu0 0
      %4947 = vmatpush2.bf16.msra.mxu0 0
      %4948 = vmatprep.mubr.bf16.mxu0 0
      %4949 = vmatmul.mubr.bf16.gmra.mxu0 %v4467
      %v4950 = vpop.f32.mrf.mxu0
      %v4951 = vadd.f32 0.0, %v4950
      %v4952 = vpop.f32.mrf.mxu0
      %v4953 = vadd.f32 0.0, %v4952
      %v4954 = vpop.f32.mrf.mxu0
      %v4955 = vpop.f32.mrf.mxu0
      %4956 = vdwg.mxu0
      %4957 = vmatprep.subr.bf16.mxu0 0
      %4958 = vmatpush1.bf16.msra.mxu0 0
      %4959 = vmatprep.subr.bf16.mxu0 0
      %4960 = vmatpush1.bf16.msra.mxu0 0
      %4961 = vmatprep.subr.bf16.mxu0 0
      %4962 = vmatpush1.bf16.msra.mxu0 0
      %4963 = vmatprep.subr.bf16.mxu0 0
      %4964 = vmatpush1.bf16.msra.mxu0 0
      %4965 = vmatprep.subr.bf16.mxu0 0
      %4966 = vmatpush1.bf16.msra.mxu0 0
      %4967 = vmatprep.subr.bf16.mxu0 0
      %4968 = vmatpush1.bf16.msra.mxu0 0
      %4969 = vmatprep.subr.bf16.mxu0 0
      %4970 = vmatpush1.bf16.msra.mxu0 0
      %4971 = vmatprep.subr.bf16.mxu0 %v4533
      %4972 = vmatpush1.bf16.msra.mxu0 %v4530
      %4973 = vmatprep.subr.bf16.mxu0 0
      %4974 = vmatpush2.bf16.msra.mxu0 0
      %4975 = vmatprep.subr.bf16.mxu0 0
      %4976 = vmatpush2.bf16.msra.mxu0 0
      %4977 = vmatprep.subr.bf16.mxu0 0
      %4978 = vmatpush2.bf16.msra.mxu0 0
      %4979 = vmatprep.subr.bf16.mxu0 0
      %4980 = vmatpush2.bf16.msra.mxu0 0
      %4981 = vmatprep.subr.bf16.mxu0 0
      %4982 = vmatpush2.bf16.msra.mxu0 0
      %4983 = vmatprep.subr.bf16.mxu0 0
      %4984 = vmatpush2.bf16.msra.mxu0 0
      %4985 = vmatprep.subr.bf16.mxu0 0
      %4986 = vmatpush2.bf16.msra.mxu0 0
      %4987 = vmatprep.subr.bf16.mxu0 0
      %4988 = vmatpush2.bf16.msra.mxu0 0
      %4989 = vmatprep.mubr.bf16.mxu0 0
      %4990 = vmatmul.mubr.bf16.gmra.mxu0 %v4467
      %v4991 = vpop.f32.mrf.mxu0
      %v4992 = vadd.f32 0.0, %v4991
      %v4993 = vpop.f32.mrf.mxu0
      %v4994 = vadd.f32 0.0, %v4993
      %v4995 = vpop.f32.mrf.mxu0
      %v4996 = vpop.f32.mrf.mxu0
      %4997 = vdwg.mxu0
      %4998 = vmatprep.subr.bf16.mxu0 0
      %4999 = vmatpush1.bf16.msra.mxu0 0
      %5000 = vmatprep.subr.bf16.mxu0 0
      %5001 = vmatpush1.bf16.msra.mxu0 0
      %5002 = vmatprep.subr.bf16.mxu0 0
      %5003 = vmatpush1.bf16.msra.mxu0 0
      %5004 = vmatprep.subr.bf16.mxu0 0
      %5005 = vmatpush1.bf16.msra.mxu0 0
      %5006 = vmatprep.subr.bf16.mxu0 0
      %5007 = vmatpush1.bf16.msra.mxu0 0
      %5008 = vmatprep.subr.bf16.mxu0 0
      %5009 = vmatpush1.bf16.msra.mxu0 0
      %5010 = vmatprep.subr.bf16.mxu0 0
      %5011 = vmatpush1.bf16.msra.mxu0 0
      %5012 = vmatprep.subr.bf16.mxu0 %v4539
      %5013 = vmatpush1.bf16.msra.mxu0 %v4536
      %5014 = vmatprep.subr.bf16.mxu0 0
      %5015 = vmatpush2.bf16.msra.mxu0 0
      %5016 = vmatprep.subr.bf16.mxu0 0
      %5017 = vmatpush2.bf16.msra.mxu0 0
      %5018 = vmatprep.subr.bf16.mxu0 0
      %5019 = vmatpush2.bf16.msra.mxu0 0
      %5020 = vmatprep.subr.bf16.mxu0 0
      %5021 = vmatpush2.bf16.msra.mxu0 0
      %5022 = vmatprep.subr.bf16.mxu0 0
      %5023 = vmatpush2.bf16.msra.mxu0 0
      %5024 = vmatprep.subr.bf16.mxu0 0
      %5025 = vmatpush2.bf16.msra.mxu0 0
      %5026 = vmatprep.subr.bf16.mxu0 0
      %5027 = vmatpush2.bf16.msra.mxu0 0
      %5028 = vmatprep.subr.bf16.mxu0 0
      %5029 = vmatpush2.bf16.msra.mxu0 0
      %5030 = vmatprep.mubr.bf16.mxu0 0
      %5031 = vmatmul.mubr.bf16.gmra.mxu0 %v4467
      %v5032 = vpop.f32.mrf.mxu0
      %v5033 = vadd.f32 0.0, %v5032
      %v5034 = vpop.f32.mrf.mxu0
      %v5035 = vadd.f32 0.0, %v5034
      %v5036 = vpop.f32.mrf.mxu0
      %v5037 = vpop.f32.mrf.mxu0
      %5038 = vdwg.mxu0
      %5039 = vmatprep.subr.bf16.mxu0 0
      %5040 = vmatpush1.bf16.msra.mxu0 0
      %5041 = vmatprep.subr.bf16.mxu0 0
      %5042 = vmatpush1.bf16.msra.mxu0 0
      %5043 = vmatprep.subr.bf16.mxu0 0
      %5044 = vmatpush1.bf16.msra.mxu0 0
      %5045 = vmatprep.subr.bf16.mxu0 0
      %5046 = vmatpush1.bf16.msra.mxu0 0
      %5047 = vmatprep.subr.bf16.mxu0 0
      %5048 = vmatpush1.bf16.msra.mxu0 0
      %5049 = vmatprep.subr.bf16.mxu0 0
      %5050 = vmatpush1.bf16.msra.mxu0 0
      %5051 = vmatprep.subr.bf16.mxu0 0
      %5052 = vmatpush1.bf16.msra.mxu0 0
      %5053 = vmatprep.subr.bf16.mxu0 %v4545
      %5054 = vmatpush1.bf16.msra.mxu0 %v4542
      %5055 = vmatprep.subr.bf16.mxu0 0
      %5056 = vmatpush2.bf16.msra.mxu0 0
      %5057 = vmatprep.subr.bf16.mxu0 0
      %5058 = vmatpush2.bf16.msra.mxu0 0
      %5059 = vmatprep.subr.bf16.mxu0 0
      %5060 = vmatpush2.bf16.msra.mxu0 0
      %5061 = vmatprep.subr.bf16.mxu0 0
      %5062 = vmatpush2.bf16.msra.mxu0 0
      %5063 = vmatprep.subr.bf16.mxu0 0
      %5064 = vmatpush2.bf16.msra.mxu0 0
      %5065 = vmatprep.subr.bf16.mxu0 0
      %5066 = vmatpush2.bf16.msra.mxu0 0
      %5067 = vmatprep.subr.bf16.mxu0 0
      %5068 = vmatpush2.bf16.msra.mxu0 0
      %5069 = vmatprep.subr.bf16.mxu0 0
      %5070 = vmatpush2.bf16.msra.mxu0 0
      %5071 = vmatprep.mubr.bf16.mxu0 0
      %5072 = vmatmul.mubr.bf16.gmra.mxu0 %v4467
      %v5073 = vpop.f32.mrf.mxu0
      %v5074 = vadd.f32 0.0, %v5073
      %v5075 = vpop.f32.mrf.mxu0
      %v5076 = vadd.f32 0.0, %v5075
      %v5077 = vpop.f32.mrf.mxu0
      %v5078 = vpop.f32.mrf.mxu0
      %5079 = vdwg.mxu0
      %v5080 = vadd.f32 %v4236, %v4582
      %v5081 = vadd.f32 %v4237, %v4584
      %v5082 = vadd.f32 %v4238, %v4623
      %v5083 = vadd.f32 %v4239, %v4625
      %v5084 = vadd.f32 %v4240, %v4664
      %v5085 = vadd.f32 %v4241, %v4666
      %v5086 = vadd.f32 %v4242, %v4705
      %v5087 = vadd.f32 %v4243, %v4707
      %v5088 = vadd.f32 %v4244, %v4746
      %v5089 = vadd.f32 %v4245, %v4748
      %v5090 = vadd.f32 %v4246, %v4787
      %v5091 = vadd.f32 %v4247, %v4789
      %v5092 = vadd.f32 %v4248, %v4828
      %v5093 = vadd.f32 %v4249, %v4830
      %v5094 = vadd.f32 %v4250, %v4869
      %v5095 = vadd.f32 %v4251, %v4871
      %v5096 = vadd.f32 %v4252, %v4910
      %v5097 = vadd.f32 %v4253, %v4912
      %v5098 = vadd.f32 %v4254, %v4951
      %v5099 = vadd.f32 %v4255, %v4953
      %v5100 = vadd.f32 %v4256, %v4992
      %v5101 = vadd.f32 %v4257, %v4994
      %v5102 = vadd.f32 %v4258, %v5033
      %v5103 = vadd.f32 %v4259, %v5035
      %v5104 = vadd.f32 %v4260, %v5074
      %v5105 = vadd.f32 %v4261, %v5076
      %s5106 = scalar_lea.vmem %s1, 24
      %v5107 = vld [vmem:[%s5106] sm:$0xf]
      %v5108 = vld [vmem:[%s285] sm:$0xff]
      %v5109 = vld [vmem:[%s285 + $0x8] sm:$0xff]
      %v5110 = vld [vmem:[%s285 + $0x10] sm:$0xff]
      %v5111 = vld [vmem:[%s285 + $0x18] sm:$0xff]
      %v5112 = vld [vmem:[%s285 + $0x20] sm:$0xff]
      %v5113 = vld [vmem:[%s285 + $0x28] sm:$0xff]
      %v5114 = vld [vmem:[%s285 + $0x30] sm:$0xf]
      %v5122 = vcombine.high %v5108, %v5108
      %v5124 = vunpack.c.l.s4 1983009808
      %v5125 = vunpack.c.0.s8 %v5124
      %v5126 = vlaneseq
      %v5127 = vshrl.u32 %v5126, 7
      %v5128 = vsub.s32 %v5125, %v5127
      %v5129 = vrot.slane %v5108, %v5128
      %v5131 = vunpack.c.l.s4 1983009808
      %v5132 = vunpack.c.0.s8 %v5131
      %v5133 = vlaneseq
      %v5134 = vshrl.u32 %v5133, 7
      %v5135 = vsub.s32 %v5132, %v5134
      %v5136 = vrot.slane %v5122, %v5135
      %v5137 = vcombine.high %v5129, %v5129
      %v5138 = vcombine.high %v5136, %v5136
      %v5139 = vcombine.high %v5109, %v5109
      %v5141 = vunpack.c.l.s4 1983009808
      %v5142 = vunpack.c.0.s8 %v5141
      %v5143 = vlaneseq
      %v5144 = vshrl.u32 %v5143, 7
      %v5145 = vsub.s32 %v5142, %v5144
      %v5146 = vrot.slane %v5109, %v5145
      %v5148 = vunpack.c.l.s4 1983009808
      %v5149 = vunpack.c.0.s8 %v5148
      %v5150 = vlaneseq
      %v5151 = vshrl.u32 %v5150, 7
      %v5152 = vsub.s32 %v5149, %v5151
      %v5153 = vrot.slane %v5139, %v5152
      %v5154 = vcombine.high %v5146, %v5146
      %v5155 = vcombine.high %v5153, %v5153
      %v5156 = vcombine.high %v5110, %v5110
      %v5158 = vunpack.c.l.s4 1983009808
      %v5159 = vunpack.c.0.s8 %v5158
      %v5160 = vlaneseq
      %v5161 = vshrl.u32 %v5160, 7
      %v5162 = vsub.s32 %v5159, %v5161
      %v5163 = vrot.slane %v5110, %v5162
      %v5165 = vunpack.c.l.s4 1983009808
      %v5166 = vunpack.c.0.s8 %v5165
      %v5167 = vlaneseq
      %v5168 = vshrl.u32 %v5167, 7
      %v5169 = vsub.s32 %v5166, %v5168
      %v5170 = vrot.slane %v5156, %v5169
      %v5171 = vcombine.high %v5163, %v5163
      %v5172 = vcombine.high %v5170, %v5170
      %v5173 = vcombine.high %v5111, %v5111
      %v5175 = vunpack.c.l.s4 1983009808
      %v5176 = vunpack.c.0.s8 %v5175
      %v5177 = vlaneseq
      %v5178 = vshrl.u32 %v5177, 7
      %v5179 = vsub.s32 %v5176, %v5178
      %v5180 = vrot.slane %v5111, %v5179
      %v5182 = vunpack.c.l.s4 1983009808
      %v5183 = vunpack.c.0.s8 %v5182
      %v5184 = vlaneseq
      %v5185 = vshrl.u32 %v5184, 7
      %v5186 = vsub.s32 %v5183, %v5185
      %v5187 = vrot.slane %v5173, %v5186
      %v5188 = vcombine.high %v5180, %v5180
      %v5189 = vcombine.high %v5187, %v5187
      %v5190 = vcombine.high %v5112, %v5112
      %v5192 = vunpack.c.l.s4 1983009808
      %v5193 = vunpack.c.0.s8 %v5192
      %v5194 = vlaneseq
      %v5195 = vshrl.u32 %v5194, 7
      %v5196 = vsub.s32 %v5193, %v5195
      %v5197 = vrot.slane %v5112, %v5196
      %v5199 = vunpack.c.l.s4 1983009808
      %v5200 = vunpack.c.0.s8 %v5199
      %v5201 = vlaneseq
      %v5202 = vshrl.u32 %v5201, 7
      %v5203 = vsub.s32 %v5200, %v5202
      %v5204 = vrot.slane %v5190, %v5203
      %v5205 = vcombine.high %v5197, %v5197
      %v5206 = vcombine.high %v5204, %v5204
      %v5207 = vcombine.high %v5113, %v5113
      %v5209 = vunpack.c.l.s4 1983009808
      %v5210 = vunpack.c.0.s8 %v5209
      %v5211 = vlaneseq
      %v5212 = vshrl.u32 %v5211, 7
      %v5213 = vsub.s32 %v5210, %v5212
      %v5214 = vrot.slane %v5113, %v5213
      %v5216 = vunpack.c.l.s4 1983009808
      %v5217 = vunpack.c.0.s8 %v5216
      %v5218 = vlaneseq
      %v5219 = vshrl.u32 %v5218, 7
      %v5220 = vsub.s32 %v5217, %v5219
      %v5221 = vrot.slane %v5207, %v5220
      %v5222 = vcombine.high %v5214, %v5214
      %v5223 = vcombine.high %v5221, %v5221
      %v5225 = vunpack.c.l.s4 1983009808
      %v5226 = vunpack.c.0.s8 %v5225
      %v5227 = vlaneseq
      %v5228 = vshrl.u32 %v5227, 7
      %v5229 = vsub.s32 %v5226, %v5228
      %v5230 = vrot.slane %v5114, %v5229
      %v5231 = vcombine.high %v5230, %v5230
      %5232 = vrot.lane.b32.xlu0 %v5129, 92
      %v5233 = vpop.permute.xlu0 %5232
      %5234 = vrot.lane.b32.xlu0 %v5137, 92
      %v5235 = vpop.permute.xlu0 %5234
      %5236 = vrot.lane.b32.xlu0 %v5136, 92
      %v5237 = vpop.permute.xlu0 %5236
      %5238 = vrot.lane.b32.xlu0 %v5138, 92
      %v5239 = vpop.permute.xlu0 %5238
      %5240 = vrot.lane.b32.xlu0 %v5146, 92
      %v5241 = vpop.permute.xlu0 %5240
      %5242 = vrot.lane.b32.xlu0 %v5154, 92
      %v5243 = vpop.permute.xlu0 %5242
      %5244 = vrot.lane.b32.xlu0 %v5153, 92
      %v5245 = vpop.permute.xlu0 %5244
      %5246 = vrot.lane.b32.xlu0 %v5155, 92
      %v5247 = vpop.permute.xlu0 %5246
      %5248 = vrot.lane.b32.xlu0 %v5163, 92
      %v5249 = vpop.permute.xlu0 %5248
      %5250 = vrot.lane.b32.xlu0 %v5171, 92
      %v5251 = vpop.permute.xlu0 %5250
      %5252 = vrot.lane.b32.xlu0 %v5170, 92
      %v5253 = vpop.permute.xlu0 %5252
      %5254 = vrot.lane.b32.xlu0 %v5172, 92
      %v5255 = vpop.permute.xlu0 %5254
      %5256 = vrot.lane.b32.xlu0 %v5180, 92
      %v5257 = vpop.permute.xlu0 %5256
      %5258 = vrot.lane.b32.xlu0 %v5188, 92
      %v5259 = vpop.permute.xlu0 %5258
      %5260 = vrot.lane.b32.xlu0 %v5187, 92
      %v5261 = vpop.permute.xlu0 %5260
      %5262 = vrot.lane.b32.xlu0 %v5189, 92
      %v5263 = vpop.permute.xlu0 %5262
      %5264 = vrot.lane.b32.xlu0 %v5197, 92
      %v5265 = vpop.permute.xlu0 %5264
      %5266 = vrot.lane.b32.xlu0 %v5205, 92
      %v5267 = vpop.permute.xlu0 %5266
      %5268 = vrot.lane.b32.xlu0 %v5204, 92
      %v5269 = vpop.permute.xlu0 %5268
      %5270 = vrot.lane.b32.xlu0 %v5206, 92
      %v5271 = vpop.permute.xlu0 %5270
      %5272 = vrot.lane.b32.xlu0 %v5214, 92
      %v5273 = vpop.permute.xlu0 %5272
      %5274 = vrot.lane.b32.xlu0 %v5222, 92
      %v5275 = vpop.permute.xlu0 %5274
      %5276 = vrot.lane.b32.xlu0 %v5221, 92
      %v5277 = vpop.permute.xlu0 %5276
      %5278 = vrot.lane.b32.xlu0 %v5223, 92
      %v5279 = vpop.permute.xlu0 %5278
      %5280 = vrot.lane.b32.xlu0 %v5230, 92
      %v5281 = vpop.permute.xlu0 %5280
      %5282 = vrot.lane.b32.xlu0 %v5231, 92
      %v5283 = vpop.permute.xlu0 %5282
      %vm5284 = vcmask 752640
      %v5285 = vsel %vm5284, %v5233, %v5235
      %v5286 = vsel %vm5284, %v5235, %v5237
      %v5287 = vsel %vm5284, %v5237, %v5239
      %v5288 = vsel %vm5284, %v5239, %v5241
      %v5289 = vsel %vm5284, %v5241, %v5243
      %v5290 = vsel %vm5284, %v5243, %v5245
      %v5291 = vsel %vm5284, %v5245, %v5247
      %v5292 = vsel %vm5284, %v5247, %v5249
      %v5293 = vsel %vm5284, %v5249, %v5251
      %v5294 = vsel %vm5284, %v5251, %v5253
      %v5295 = vsel %vm5284, %v5253, %v5255
      %v5296 = vsel %vm5284, %v5255, %v5257
      %v5297 = vsel %vm5284, %v5257, %v5259
      %v5298 = vsel %vm5284, %v5259, %v5261
      %v5299 = vsel %vm5284, %v5261, %v5263
      %v5300 = vsel %vm5284, %v5263, %v5265
      %v5301 = vsel %vm5284, %v5265, %v5267
      %v5302 = vsel %vm5284, %v5267, %v5269
      %v5303 = vsel %vm5284, %v5269, %v5271
      %v5304 = vsel %vm5284, %v5271, %v5273
      %v5305 = vsel %vm5284, %v5273, %v5275
      %v5306 = vsel %vm5284, %v5275, %v5277
      %v5307 = vsel %vm5284, %v5277, %v5279
      %v5308 = vsel %vm5284, %v5279, %v5281
      %v5309 = vsel %vm5284, %v5281, %v5283
      %v5311 = vsel %vm500, %v5107, 0
      %v5314 = vsel %vm504, %v5285, 0
      %v5317 = vsel %vm504, %v5286, 0
      %v5320 = vsel %vm504, %v5287, 0
      %v5323 = vsel %vm504, %v5288, 0
      %v5326 = vsel %vm504, %v5289, 0
      %v5329 = vsel %vm504, %v5290, 0
      %v5332 = vsel %vm504, %v5291, 0
      %v5335 = vsel %vm504, %v5292, 0
      %v5338 = vsel %vm504, %v5293, 0
      %v5341 = vsel %vm504, %v5294, 0
      %v5344 = vsel %vm504, %v5295, 0
      %v5347 = vsel %vm504, %v5296, 0
      %v5350 = vsel %vm504, %v5297, 0
      %v5353 = vsel %vm504, %v5298, 0
      %v5356 = vsel %vm504, %v5299, 0
      %v5359 = vsel %vm504, %v5300, 0
      %v5362 = vsel %vm504, %v5301, 0
      %v5365 = vsel %vm504, %v5302, 0
      %v5368 = vsel %vm504, %v5303, 0
      %v5371 = vsel %vm504, %v5304, 0
      %v5374 = vsel %vm504, %v5305, 0
      %v5377 = vsel %vm504, %v5306, 0
      %v5380 = vsel %vm504, %v5307, 0
      %v5383 = vsel %vm504, %v5308, 0
      %v5386 = vsel %vm504, %v5309, 0
      %v5389 = vsel %vm504, %v5283, 0
      %5391 = vmatprep.subr.bf16.mxu0 0
      %5392 = vmatpush1.bf16.msra.mxu0 0
      %5393 = vmatprep.subr.bf16.mxu0 0
      %5394 = vmatpush1.bf16.msra.mxu0 0
      %5395 = vmatprep.subr.bf16.mxu0 0
      %5396 = vmatpush1.bf16.msra.mxu0 0
      %5397 = vmatprep.subr.bf16.mxu0 0
      %5398 = vmatpush1.bf16.msra.mxu0 0
      %5399 = vmatprep.subr.bf16.mxu0 0
      %5400 = vmatpush1.bf16.msra.mxu0 0
      %5401 = vmatprep.subr.bf16.mxu0 0
      %5402 = vmatpush1.bf16.msra.mxu0 0
      %5403 = vmatprep.subr.bf16.mxu0 0
      %5404 = vmatpush1.bf16.msra.mxu0 0
      %5405 = vmatprep.subr.bf16.mxu0 %v5317
      %5406 = vmatpush1.bf16.msra.mxu0 %v5314
      %5407 = vmatprep.subr.bf16.mxu0 0
      %5408 = vmatpush2.bf16.msra.mxu0 0
      %5409 = vmatprep.subr.bf16.mxu0 0
      %5410 = vmatpush2.bf16.msra.mxu0 0
      %5411 = vmatprep.subr.bf16.mxu0 0
      %5412 = vmatpush2.bf16.msra.mxu0 0
      %5413 = vmatprep.subr.bf16.mxu0 0
      %5414 = vmatpush2.bf16.msra.mxu0 0
      %5415 = vmatprep.subr.bf16.mxu0 0
      %5416 = vmatpush2.bf16.msra.mxu0 0
      %5417 = vmatprep.subr.bf16.mxu0 0
      %5418 = vmatpush2.bf16.msra.mxu0 0
      %5419 = vmatprep.subr.bf16.mxu0 0
      %5420 = vmatpush2.bf16.msra.mxu0 0
      %5421 = vmatprep.subr.bf16.mxu0 0
      %5422 = vmatpush2.bf16.msra.mxu0 0
      %5423 = vmatprep.mubr.bf16.mxu0 0
      %5424 = vmatmul.mubr.bf16.gmra.mxu0 %v5311
      %v5425 = vpop.f32.mrf.mxu0
      %v5426 = vadd.f32 0.0, %v5425
      %v5427 = vpop.f32.mrf.mxu0
      %v5428 = vadd.f32 0.0, %v5427
      %v5429 = vpop.f32.mrf.mxu0
      %v5430 = vpop.f32.mrf.mxu0
      %5431 = vdwg.mxu0
      %5432 = vmatprep.subr.bf16.mxu0 0
      %5433 = vmatpush1.bf16.msra.mxu0 0
      %5434 = vmatprep.subr.bf16.mxu0 0
      %5435 = vmatpush1.bf16.msra.mxu0 0
      %5436 = vmatprep.subr.bf16.mxu0 0
      %5437 = vmatpush1.bf16.msra.mxu0 0
      %5438 = vmatprep.subr.bf16.mxu0 0
      %5439 = vmatpush1.bf16.msra.mxu0 0
      %5440 = vmatprep.subr.bf16.mxu0 0
      %5441 = vmatpush1.bf16.msra.mxu0 0
      %5442 = vmatprep.subr.bf16.mxu0 0
      %5443 = vmatpush1.bf16.msra.mxu0 0
      %5444 = vmatprep.subr.bf16.mxu0 0
      %5445 = vmatpush1.bf16.msra.mxu0 0
      %5446 = vmatprep.subr.bf16.mxu0 %v5323
      %5447 = vmatpush1.bf16.msra.mxu0 %v5320
      %5448 = vmatprep.subr.bf16.mxu0 0
      %5449 = vmatpush2.bf16.msra.mxu0 0
      %5450 = vmatprep.subr.bf16.mxu0 0
      %5451 = vmatpush2.bf16.msra.mxu0 0
      %5452 = vmatprep.subr.bf16.mxu0 0
      %5453 = vmatpush2.bf16.msra.mxu0 0
      %5454 = vmatprep.subr.bf16.mxu0 0
      %5455 = vmatpush2.bf16.msra.mxu0 0
      %5456 = vmatprep.subr.bf16.mxu0 0
      %5457 = vmatpush2.bf16.msra.mxu0 0
      %5458 = vmatprep.subr.bf16.mxu0 0
      %5459 = vmatpush2.bf16.msra.mxu0 0
      %5460 = vmatprep.subr.bf16.mxu0 0
      %5461 = vmatpush2.bf16.msra.mxu0 0
      %5462 = vmatprep.subr.bf16.mxu0 0
      %5463 = vmatpush2.bf16.msra.mxu0 0
      %5464 = vmatprep.mubr.bf16.mxu0 0
      %5465 = vmatmul.mubr.bf16.gmra.mxu0 %v5311
      %v5466 = vpop.f32.mrf.mxu0
      %v5467 = vadd.f32 0.0, %v5466
      %v5468 = vpop.f32.mrf.mxu0
      %v5469 = vadd.f32 0.0, %v5468
      %v5470 = vpop.f32.mrf.mxu0
      %v5471 = vpop.f32.mrf.mxu0
      %5472 = vdwg.mxu0
      %5473 = vmatprep.subr.bf16.mxu0 0
      %5474 = vmatpush1.bf16.msra.mxu0 0
      %5475 = vmatprep.subr.bf16.mxu0 0
      %5476 = vmatpush1.bf16.msra.mxu0 0
      %5477 = vmatprep.subr.bf16.mxu0 0
      %5478 = vmatpush1.bf16.msra.mxu0 0
      %5479 = vmatprep.subr.bf16.mxu0 0
      %5480 = vmatpush1.bf16.msra.mxu0 0
      %5481 = vmatprep.subr.bf16.mxu0 0
      %5482 = vmatpush1.bf16.msra.mxu0 0
      %5483 = vmatprep.subr.bf16.mxu0 0
      %5484 = vmatpush1.bf16.msra.mxu0 0
      %5485 = vmatprep.subr.bf16.mxu0 0
      %5486 = vmatpush1.bf16.msra.mxu0 0
      %5487 = vmatprep.subr.bf16.mxu0 %v5329
      %5488 = vmatpush1.bf16.msra.mxu0 %v5326
      %5489 = vmatprep.subr.bf16.mxu0 0
      %5490 = vmatpush2.bf16.msra.mxu0 0
      %5491 = vmatprep.subr.bf16.mxu0 0
      %5492 = vmatpush2.bf16.msra.mxu0 0
      %5493 = vmatprep.subr.bf16.mxu0 0
      %5494 = vmatpush2.bf16.msra.mxu0 0
      %5495 = vmatprep.subr.bf16.mxu0 0
      %5496 = vmatpush2.bf16.msra.mxu0 0
      %5497 = vmatprep.subr.bf16.mxu0 0
      %5498 = vmatpush2.bf16.msra.mxu0 0
      %5499 = vmatprep.subr.bf16.mxu0 0
      %5500 = vmatpush2.bf16.msra.mxu0 0
      %5501 = vmatprep.subr.bf16.mxu0 0
      %5502 = vmatpush2.bf16.msra.mxu0 0
      %5503 = vmatprep.subr.bf16.mxu0 0
      %5504 = vmatpush2.bf16.msra.mxu0 0
      %5505 = vmatprep.mubr.bf16.mxu0 0
      %5506 = vmatmul.mubr.bf16.gmra.mxu0 %v5311
      %v5507 = vpop.f32.mrf.mxu0
      %v5508 = vadd.f32 0.0, %v5507
      %v5509 = vpop.f32.mrf.mxu0
      %v5510 = vadd.f32 0.0, %v5509
      %v5511 = vpop.f32.mrf.mxu0
      %v5512 = vpop.f32.mrf.mxu0
      %5513 = vdwg.mxu0
      %5514 = vmatprep.subr.bf16.mxu0 0
      %5515 = vmatpush1.bf16.msra.mxu0 0
      %5516 = vmatprep.subr.bf16.mxu0 0
      %5517 = vmatpush1.bf16.msra.mxu0 0
      %5518 = vmatprep.subr.bf16.mxu0 0
      %5519 = vmatpush1.bf16.msra.mxu0 0
      %5520 = vmatprep.subr.bf16.mxu0 0
      %5521 = vmatpush1.bf16.msra.mxu0 0
      %5522 = vmatprep.subr.bf16.mxu0 0
      %5523 = vmatpush1.bf16.msra.mxu0 0
      %5524 = vmatprep.subr.bf16.mxu0 0
      %5525 = vmatpush1.bf16.msra.mxu0 0
      %5526 = vmatprep.subr.bf16.mxu0 0
      %5527 = vmatpush1.bf16.msra.mxu0 0
      %5528 = vmatprep.subr.bf16.mxu0 %v5335
      %5529 = vmatpush1.bf16.msra.mxu0 %v5332
      %5530 = vmatprep.subr.bf16.mxu0 0
      %5531 = vmatpush2.bf16.msra.mxu0 0
      %5532 = vmatprep.subr.bf16.mxu0 0
      %5533 = vmatpush2.bf16.msra.mxu0 0
      %5534 = vmatprep.subr.bf16.mxu0 0
      %5535 = vmatpush2.bf16.msra.mxu0 0
      %5536 = vmatprep.subr.bf16.mxu0 0
      %5537 = vmatpush2.bf16.msra.mxu0 0
      %5538 = vmatprep.subr.bf16.mxu0 0
      %5539 = vmatpush2.bf16.msra.mxu0 0
      %5540 = vmatprep.subr.bf16.mxu0 0
      %5541 = vmatpush2.bf16.msra.mxu0 0
      %5542 = vmatprep.subr.bf16.mxu0 0
      %5543 = vmatpush2.bf16.msra.mxu0 0
      %5544 = vmatprep.subr.bf16.mxu0 0
      %5545 = vmatpush2.bf16.msra.mxu0 0
      %5546 = vmatprep.mubr.bf16.mxu0 0
      %5547 = vmatmul.mubr.bf16.gmra.mxu0 %v5311
      %v5548 = vpop.f32.mrf.mxu0
      %v5549 = vadd.f32 0.0, %v5548
      %v5550 = vpop.f32.mrf.mxu0
      %v5551 = vadd.f32 0.0, %v5550
      %v5552 = vpop.f32.mrf.mxu0
      %v5553 = vpop.f32.mrf.mxu0
      %5554 = vdwg.mxu0
      %5555 = vmatprep.subr.bf16.mxu0 0
      %5556 = vmatpush1.bf16.msra.mxu0 0
      %5557 = vmatprep.subr.bf16.mxu0 0
      %5558 = vmatpush1.bf16.msra.mxu0 0
      %5559 = vmatprep.subr.bf16.mxu0 0
      %5560 = vmatpush1.bf16.msra.mxu0 0
      %5561 = vmatprep.subr.bf16.mxu0 0
      %5562 = vmatpush1.bf16.msra.mxu0 0
      %5563 = vmatprep.subr.bf16.mxu0 0
      %5564 = vmatpush1.bf16.msra.mxu0 0
      %5565 = vmatprep.subr.bf16.mxu0 0
      %5566 = vmatpush1.bf16.msra.mxu0 0
      %5567 = vmatprep.subr.bf16.mxu0 0
      %5568 = vmatpush1.bf16.msra.mxu0 0
      %5569 = vmatprep.subr.bf16.mxu0 %v5341
      %5570 = vmatpush1.bf16.msra.mxu0 %v5338
      %5571 = vmatprep.subr.bf16.mxu0 0
      %5572 = vmatpush2.bf16.msra.mxu0 0
      %5573 = vmatprep.subr.bf16.mxu0 0
      %5574 = vmatpush2.bf16.msra.mxu0 0
      %5575 = vmatprep.subr.bf16.mxu0 0
      %5576 = vmatpush2.bf16.msra.mxu0 0
      %5577 = vmatprep.subr.bf16.mxu0 0
      %5578 = vmatpush2.bf16.msra.mxu0 0
      %5579 = vmatprep.subr.bf16.mxu0 0
      %5580 = vmatpush2.bf16.msra.mxu0 0
      %5581 = vmatprep.subr.bf16.mxu0 0
      %5582 = vmatpush2.bf16.msra.mxu0 0
      %5583 = vmatprep.subr.bf16.mxu0 0
      %5584 = vmatpush2.bf16.msra.mxu0 0
      %5585 = vmatprep.subr.bf16.mxu0 0
      %5586 = vmatpush2.bf16.msra.mxu0 0
      %5587 = vmatprep.mubr.bf16.mxu0 0
      %5588 = vmatmul.mubr.bf16.gmra.mxu0 %v5311
      %v5589 = vpop.f32.mrf.mxu0
      %v5590 = vadd.f32 0.0, %v5589
      %v5591 = vpop.f32.mrf.mxu0
      %v5592 = vadd.f32 0.0, %v5591
      %v5593 = vpop.f32.mrf.mxu0
      %v5594 = vpop.f32.mrf.mxu0
      %5595 = vdwg.mxu0
      %5596 = vmatprep.subr.bf16.mxu0 0
      %5597 = vmatpush1.bf16.msra.mxu0 0
      %5598 = vmatprep.subr.bf16.mxu0 0
      %5599 = vmatpush1.bf16.msra.mxu0 0
      %5600 = vmatprep.subr.bf16.mxu0 0
      %5601 = vmatpush1.bf16.msra.mxu0 0
      %5602 = vmatprep.subr.bf16.mxu0 0
      %5603 = vmatpush1.bf16.msra.mxu0 0
      %5604 = vmatprep.subr.bf16.mxu0 0
      %5605 = vmatpush1.bf16.msra.mxu0 0
      %5606 = vmatprep.subr.bf16.mxu0 0
      %5607 = vmatpush1.bf16.msra.mxu0 0
      %5608 = vmatprep.subr.bf16.mxu0 0
      %5609 = vmatpush1.bf16.msra.mxu0 0
      %5610 = vmatprep.subr.bf16.mxu0 %v5347
      %5611 = vmatpush1.bf16.msra.mxu0 %v5344
      %5612 = vmatprep.subr.bf16.mxu0 0
      %5613 = vmatpush2.bf16.msra.mxu0 0
      %5614 = vmatprep.subr.bf16.mxu0 0
      %5615 = vmatpush2.bf16.msra.mxu0 0
      %5616 = vmatprep.subr.bf16.mxu0 0
      %5617 = vmatpush2.bf16.msra.mxu0 0
      %5618 = vmatprep.subr.bf16.mxu0 0
      %5619 = vmatpush2.bf16.msra.mxu0 0
      %5620 = vmatprep.subr.bf16.mxu0 0
      %5621 = vmatpush2.bf16.msra.mxu0 0
      %5622 = vmatprep.subr.bf16.mxu0 0
      %5623 = vmatpush2.bf16.msra.mxu0 0
      %5624 = vmatprep.subr.bf16.mxu0 0
      %5625 = vmatpush2.bf16.msra.mxu0 0
      %5626 = vmatprep.subr.bf16.mxu0 0
      %5627 = vmatpush2.bf16.msra.mxu0 0
      %5628 = vmatprep.mubr.bf16.mxu0 0
      %5629 = vmatmul.mubr.bf16.gmra.mxu0 %v5311
      %v5630 = vpop.f32.mrf.mxu0
      %v5631 = vadd.f32 0.0, %v5630
      %v5632 = vpop.f32.mrf.mxu0
      %v5633 = vadd.f32 0.0, %v5632
      %v5634 = vpop.f32.mrf.mxu0
      %v5635 = vpop.f32.mrf.mxu0
      %5636 = vdwg.mxu0
      %5637 = vmatprep.subr.bf16.mxu0 0
      %5638 = vmatpush1.bf16.msra.mxu0 0
      %5639 = vmatprep.subr.bf16.mxu0 0
      %5640 = vmatpush1.bf16.msra.mxu0 0
      %5641 = vmatprep.subr.bf16.mxu0 0
      %5642 = vmatpush1.bf16.msra.mxu0 0
      %5643 = vmatprep.subr.bf16.mxu0 0
      %5644 = vmatpush1.bf16.msra.mxu0 0
      %5645 = vmatprep.subr.bf16.mxu0 0
      %5646 = vmatpush1.bf16.msra.mxu0 0
      %5647 = vmatprep.subr.bf16.mxu0 0
      %5648 = vmatpush1.bf16.msra.mxu0 0
      %5649 = vmatprep.subr.bf16.mxu0 0
      %5650 = vmatpush1.bf16.msra.mxu0 0
      %5651 = vmatprep.subr.bf16.mxu0 %v5353
      %5652 = vmatpush1.bf16.msra.mxu0 %v5350
      %5653 = vmatprep.subr.bf16.mxu0 0
      %5654 = vmatpush2.bf16.msra.mxu0 0
      %5655 = vmatprep.subr.bf16.mxu0 0
      %5656 = vmatpush2.bf16.msra.mxu0 0
      %5657 = vmatprep.subr.bf16.mxu0 0
      %5658 = vmatpush2.bf16.msra.mxu0 0
      %5659 = vmatprep.subr.bf16.mxu0 0
      %5660 = vmatpush2.bf16.msra.mxu0 0
      %5661 = vmatprep.subr.bf16.mxu0 0
      %5662 = vmatpush2.bf16.msra.mxu0 0
      %5663 = vmatprep.subr.bf16.mxu0 0
      %5664 = vmatpush2.bf16.msra.mxu0 0
      %5665 = vmatprep.subr.bf16.mxu0 0
      %5666 = vmatpush2.bf16.msra.mxu0 0
      %5667 = vmatprep.subr.bf16.mxu0 0
      %5668 = vmatpush2.bf16.msra.mxu0 0
      %5669 = vmatprep.mubr.bf16.mxu0 0
      %5670 = vmatmul.mubr.bf16.gmra.mxu0 %v5311
      %v5671 = vpop.f32.mrf.mxu0
      %v5672 = vadd.f32 0.0, %v5671
      %v5673 = vpop.f32.mrf.mxu0
      %v5674 = vadd.f32 0.0, %v5673
      %v5675 = vpop.f32.mrf.mxu0
      %v5676 = vpop.f32.mrf.mxu0
      %5677 = vdwg.mxu0
      %5678 = vmatprep.subr.bf16.mxu0 0
      %5679 = vmatpush1.bf16.msra.mxu0 0
      %5680 = vmatprep.subr.bf16.mxu0 0
      %5681 = vmatpush1.bf16.msra.mxu0 0
      %5682 = vmatprep.subr.bf16.mxu0 0
      %5683 = vmatpush1.bf16.msra.mxu0 0
      %5684 = vmatprep.subr.bf16.mxu0 0
      %5685 = vmatpush1.bf16.msra.mxu0 0
      %5686 = vmatprep.subr.bf16.mxu0 0
      %5687 = vmatpush1.bf16.msra.mxu0 0
      %5688 = vmatprep.subr.bf16.mxu0 0
      %5689 = vmatpush1.bf16.msra.mxu0 0
      %5690 = vmatprep.subr.bf16.mxu0 0
      %5691 = vmatpush1.bf16.msra.mxu0 0
      %5692 = vmatprep.subr.bf16.mxu0 %v5359
      %5693 = vmatpush1.bf16.msra.mxu0 %v5356
      %5694 = vmatprep.subr.bf16.mxu0 0
      %5695 = vmatpush2.bf16.msra.mxu0 0
      %5696 = vmatprep.subr.bf16.mxu0 0
      %5697 = vmatpush2.bf16.msra.mxu0 0
      %5698 = vmatprep.subr.bf16.mxu0 0
      %5699 = vmatpush2.bf16.msra.mxu0 0
      %5700 = vmatprep.subr.bf16.mxu0 0
      %5701 = vmatpush2.bf16.msra.mxu0 0
      %5702 = vmatprep.subr.bf16.mxu0 0
      %5703 = vmatpush2.bf16.msra.mxu0 0
      %5704 = vmatprep.subr.bf16.mxu0 0
      %5705 = vmatpush2.bf16.msra.mxu0 0
      %5706 = vmatprep.subr.bf16.mxu0 0
      %5707 = vmatpush2.bf16.msra.mxu0 0
      %5708 = vmatprep.subr.bf16.mxu0 0
      %5709 = vmatpush2.bf16.msra.mxu0 0
      %5710 = vmatprep.mubr.bf16.mxu0 0
      %5711 = vmatmul.mubr.bf16.gmra.mxu0 %v5311
      %v5712 = vpop.f32.mrf.mxu0
      %v5713 = vadd.f32 0.0, %v5712
      %v5714 = vpop.f32.mrf.mxu0
      %v5715 = vadd.f32 0.0, %v5714
      %v5716 = vpop.f32.mrf.mxu0
      %v5717 = vpop.f32.mrf.mxu0
      %5718 = vdwg.mxu0
      %5719 = vmatprep.subr.bf16.mxu0 0
      %5720 = vmatpush1.bf16.msra.mxu0 0
      %5721 = vmatprep.subr.bf16.mxu0 0
      %5722 = vmatpush1.bf16.msra.mxu0 0
      %5723 = vmatprep.subr.bf16.mxu0 0
      %5724 = vmatpush1.bf16.msra.mxu0 0
      %5725 = vmatprep.subr.bf16.mxu0 0
      %5726 = vmatpush1.bf16.msra.mxu0 0
      %5727 = vmatprep.subr.bf16.mxu0 0
      %5728 = vmatpush1.bf16.msra.mxu0 0
      %5729 = vmatprep.subr.bf16.mxu0 0
      %5730 = vmatpush1.bf16.msra.mxu0 0
      %5731 = vmatprep.subr.bf16.mxu0 0
      %5732 = vmatpush1.bf16.msra.mxu0 0
      %5733 = vmatprep.subr.bf16.mxu0 %v5365
      %5734 = vmatpush1.bf16.msra.mxu0 %v5362
      %5735 = vmatprep.subr.bf16.mxu0 0
      %5736 = vmatpush2.bf16.msra.mxu0 0
      %5737 = vmatprep.subr.bf16.mxu0 0
      %5738 = vmatpush2.bf16.msra.mxu0 0
      %5739 = vmatprep.subr.bf16.mxu0 0
      %5740 = vmatpush2.bf16.msra.mxu0 0
      %5741 = vmatprep.subr.bf16.mxu0 0
      %5742 = vmatpush2.bf16.msra.mxu0 0
      %5743 = vmatprep.subr.bf16.mxu0 0
      %5744 = vmatpush2.bf16.msra.mxu0 0
      %5745 = vmatprep.subr.bf16.mxu0 0
      %5746 = vmatpush2.bf16.msra.mxu0 0
      %5747 = vmatprep.subr.bf16.mxu0 0
      %5748 = vmatpush2.bf16.msra.mxu0 0
      %5749 = vmatprep.subr.bf16.mxu0 0
      %5750 = vmatpush2.bf16.msra.mxu0 0
      %5751 = vmatprep.mubr.bf16.mxu0 0
      %5752 = vmatmul.mubr.bf16.gmra.mxu0 %v5311
      %v5753 = vpop.f32.mrf.mxu0
      %v5754 = vadd.f32 0.0, %v5753
      %v5755 = vpop.f32.mrf.mxu0
      %v5756 = vadd.f32 0.0, %v5755
      %v5757 = vpop.f32.mrf.mxu0
      %v5758 = vpop.f32.mrf.mxu0
      %5759 = vdwg.mxu0
      %5760 = vmatprep.subr.bf16.mxu0 0
      %5761 = vmatpush1.bf16.msra.mxu0 0
      %5762 = vmatprep.subr.bf16.mxu0 0
      %5763 = vmatpush1.bf16.msra.mxu0 0
      %5764 = vmatprep.subr.bf16.mxu0 0
      %5765 = vmatpush1.bf16.msra.mxu0 0
      %5766 = vmatprep.subr.bf16.mxu0 0
      %5767 = vmatpush1.bf16.msra.mxu0 0
      %5768 = vmatprep.subr.bf16.mxu0 0
      %5769 = vmatpush1.bf16.msra.mxu0 0
      %5770 = vmatprep.subr.bf16.mxu0 0
      %5771 = vmatpush1.bf16.msra.mxu0 0
      %5772 = vmatprep.subr.bf16.mxu0 0
      %5773 = vmatpush1.bf16.msra.mxu0 0
      %5774 = vmatprep.subr.bf16.mxu0 %v5371
      %5775 = vmatpush1.bf16.msra.mxu0 %v5368
      %5776 = vmatprep.subr.bf16.mxu0 0
      %5777 = vmatpush2.bf16.msra.mxu0 0
      %5778 = vmatprep.subr.bf16.mxu0 0
      %5779 = vmatpush2.bf16.msra.mxu0 0
      %5780 = vmatprep.subr.bf16.mxu0 0
      %5781 = vmatpush2.bf16.msra.mxu0 0
      %5782 = vmatprep.subr.bf16.mxu0 0
      %5783 = vmatpush2.bf16.msra.mxu0 0
      %5784 = vmatprep.subr.bf16.mxu0 0
      %5785 = vmatpush2.bf16.msra.mxu0 0
      %5786 = vmatprep.subr.bf16.mxu0 0
      %5787 = vmatpush2.bf16.msra.mxu0 0
      %5788 = vmatprep.subr.bf16.mxu0 0
      %5789 = vmatpush2.bf16.msra.mxu0 0
      %5790 = vmatprep.subr.bf16.mxu0 0
      %5791 = vmatpush2.bf16.msra.mxu0 0
      %5792 = vmatprep.mubr.bf16.mxu0 0
      %5793 = vmatmul.mubr.bf16.gmra.mxu0 %v5311
      %v5794 = vpop.f32.mrf.mxu0
      %v5795 = vadd.f32 0.0, %v5794
      %v5796 = vpop.f32.mrf.mxu0
      %v5797 = vadd.f32 0.0, %v5796
      %v5798 = vpop.f32.mrf.mxu0
      %v5799 = vpop.f32.mrf.mxu0
      %5800 = vdwg.mxu0
      %5801 = vmatprep.subr.bf16.mxu0 0
      %5802 = vmatpush1.bf16.msra.mxu0 0
      %5803 = vmatprep.subr.bf16.mxu0 0
      %5804 = vmatpush1.bf16.msra.mxu0 0
      %5805 = vmatprep.subr.bf16.mxu0 0
      %5806 = vmatpush1.bf16.msra.mxu0 0
      %5807 = vmatprep.subr.bf16.mxu0 0
      %5808 = vmatpush1.bf16.msra.mxu0 0
      %5809 = vmatprep.subr.bf16.mxu0 0
      %5810 = vmatpush1.bf16.msra.mxu0 0
      %5811 = vmatprep.subr.bf16.mxu0 0
      %5812 = vmatpush1.bf16.msra.mxu0 0
      %5813 = vmatprep.subr.bf16.mxu0 0
      %5814 = vmatpush1.bf16.msra.mxu0 0
      %5815 = vmatprep.subr.bf16.mxu0 %v5377
      %5816 = vmatpush1.bf16.msra.mxu0 %v5374
      %5817 = vmatprep.subr.bf16.mxu0 0
      %5818 = vmatpush2.bf16.msra.mxu0 0
      %5819 = vmatprep.subr.bf16.mxu0 0
      %5820 = vmatpush2.bf16.msra.mxu0 0
      %5821 = vmatprep.subr.bf16.mxu0 0
      %5822 = vmatpush2.bf16.msra.mxu0 0
      %5823 = vmatprep.subr.bf16.mxu0 0
      %5824 = vmatpush2.bf16.msra.mxu0 0
      %5825 = vmatprep.subr.bf16.mxu0 0
      %5826 = vmatpush2.bf16.msra.mxu0 0
      %5827 = vmatprep.subr.bf16.mxu0 0
      %5828 = vmatpush2.bf16.msra.mxu0 0
      %5829 = vmatprep.subr.bf16.mxu0 0
      %5830 = vmatpush2.bf16.msra.mxu0 0
      %5831 = vmatprep.subr.bf16.mxu0 0
      %5832 = vmatpush2.bf16.msra.mxu0 0
      %5833 = vmatprep.mubr.bf16.mxu0 0
      %5834 = vmatmul.mubr.bf16.gmra.mxu0 %v5311
      %v5835 = vpop.f32.mrf.mxu0
      %v5836 = vadd.f32 0.0, %v5835
      %v5837 = vpop.f32.mrf.mxu0
      %v5838 = vadd.f32 0.0, %v5837
      %v5839 = vpop.f32.mrf.mxu0
      %v5840 = vpop.f32.mrf.mxu0
      %5841 = vdwg.mxu0
      %5842 = vmatprep.subr.bf16.mxu0 0
      %5843 = vmatpush1.bf16.msra.mxu0 0
      %5844 = vmatprep.subr.bf16.mxu0 0
      %5845 = vmatpush1.bf16.msra.mxu0 0
      %5846 = vmatprep.subr.bf16.mxu0 0
      %5847 = vmatpush1.bf16.msra.mxu0 0
      %5848 = vmatprep.subr.bf16.mxu0 0
      %5849 = vmatpush1.bf16.msra.mxu0 0
      %5850 = vmatprep.subr.bf16.mxu0 0
      %5851 = vmatpush1.bf16.msra.mxu0 0
      %5852 = vmatprep.subr.bf16.mxu0 0
      %5853 = vmatpush1.bf16.msra.mxu0 0
      %5854 = vmatprep.subr.bf16.mxu0 0
      %5855 = vmatpush1.bf16.msra.mxu0 0
      %5856 = vmatprep.subr.bf16.mxu0 %v5383
      %5857 = vmatpush1.bf16.msra.mxu0 %v5380
      %5858 = vmatprep.subr.bf16.mxu0 0
      %5859 = vmatpush2.bf16.msra.mxu0 0
      %5860 = vmatprep.subr.bf16.mxu0 0
      %5861 = vmatpush2.bf16.msra.mxu0 0
      %5862 = vmatprep.subr.bf16.mxu0 0
      %5863 = vmatpush2.bf16.msra.mxu0 0
      %5864 = vmatprep.subr.bf16.mxu0 0
      %5865 = vmatpush2.bf16.msra.mxu0 0
      %5866 = vmatprep.subr.bf16.mxu0 0
      %5867 = vmatpush2.bf16.msra.mxu0 0
      %5868 = vmatprep.subr.bf16.mxu0 0
      %5869 = vmatpush2.bf16.msra.mxu0 0
      %5870 = vmatprep.subr.bf16.mxu0 0
      %5871 = vmatpush2.bf16.msra.mxu0 0
      %5872 = vmatprep.subr.bf16.mxu0 0
      %5873 = vmatpush2.bf16.msra.mxu0 0
      %5874 = vmatprep.mubr.bf16.mxu0 0
      %5875 = vmatmul.mubr.bf16.gmra.mxu0 %v5311
      %v5876 = vpop.f32.mrf.mxu0
      %v5877 = vadd.f32 0.0, %v5876
      %v5878 = vpop.f32.mrf.mxu0
      %v5879 = vadd.f32 0.0, %v5878
      %v5880 = vpop.f32.mrf.mxu0
      %v5881 = vpop.f32.mrf.mxu0
      %5882 = vdwg.mxu0
      %5883 = vmatprep.subr.bf16.mxu0 0
      %5884 = vmatpush1.bf16.msra.mxu0 0
      %5885 = vmatprep.subr.bf16.mxu0 0
      %5886 = vmatpush1.bf16.msra.mxu0 0
      %5887 = vmatprep.subr.bf16.mxu0 0
      %5888 = vmatpush1.bf16.msra.mxu0 0
      %5889 = vmatprep.subr.bf16.mxu0 0
      %5890 = vmatpush1.bf16.msra.mxu0 0
      %5891 = vmatprep.subr.bf16.mxu0 0
      %5892 = vmatpush1.bf16.msra.mxu0 0
      %5893 = vmatprep.subr.bf16.mxu0 0
      %5894 = vmatpush1.bf16.msra.mxu0 0
      %5895 = vmatprep.subr.bf16.mxu0 0
      %5896 = vmatpush1.bf16.msra.mxu0 0
      %5897 = vmatprep.subr.bf16.mxu0 %v5389
      %5898 = vmatpush1.bf16.msra.mxu0 %v5386
      %5899 = vmatprep.subr.bf16.mxu0 0
      %5900 = vmatpush2.bf16.msra.mxu0 0
      %5901 = vmatprep.subr.bf16.mxu0 0
      %5902 = vmatpush2.bf16.msra.mxu0 0
      %5903 = vmatprep.subr.bf16.mxu0 0
      %5904 = vmatpush2.bf16.msra.mxu0 0
      %5905 = vmatprep.subr.bf16.mxu0 0
      %5906 = vmatpush2.bf16.msra.mxu0 0
      %5907 = vmatprep.subr.bf16.mxu0 0
      %5908 = vmatpush2.bf16.msra.mxu0 0
      %5909 = vmatprep.subr.bf16.mxu0 0
      %5910 = vmatpush2.bf16.msra.mxu0 0
      %5911 = vmatprep.subr.bf16.mxu0 0
      %5912 = vmatpush2.bf16.msra.mxu0 0
      %5913 = vmatprep.subr.bf16.mxu0 0
      %5914 = vmatpush2.bf16.msra.mxu0 0
      %5915 = vmatprep.mubr.bf16.mxu0 0
      %5916 = vmatmul.mubr.bf16.gmra.mxu0 %v5311
      %v5917 = vpop.f32.mrf.mxu0
      %v5918 = vadd.f32 0.0, %v5917
      %v5919 = vpop.f32.mrf.mxu0
      %v5920 = vadd.f32 0.0, %v5919
      %v5921 = vpop.f32.mrf.mxu0
      %v5922 = vpop.f32.mrf.mxu0
      %5923 = vdwg.mxu0
      %v5924 = vadd.f32 %v5080, %v5426
      %v5925 = vadd.f32 %v5081, %v5428
      %v5926 = vadd.f32 %v5082, %v5467
      %v5927 = vadd.f32 %v5083, %v5469
      %v5928 = vadd.f32 %v5084, %v5508
      %v5929 = vadd.f32 %v5085, %v5510
      %v5930 = vadd.f32 %v5086, %v5549
      %v5931 = vadd.f32 %v5087, %v5551
      %v5932 = vadd.f32 %v5088, %v5590
      %v5933 = vadd.f32 %v5089, %v5592
      %v5934 = vadd.f32 %v5090, %v5631
      %v5935 = vadd.f32 %v5091, %v5633
      %v5936 = vadd.f32 %v5092, %v5672
      %v5937 = vadd.f32 %v5093, %v5674
      %v5938 = vadd.f32 %v5094, %v5713
      %v5939 = vadd.f32 %v5095, %v5715
      %v5940 = vadd.f32 %v5096, %v5754
      %v5941 = vadd.f32 %v5097, %v5756
      %v5942 = vadd.f32 %v5098, %v5795
      %v5943 = vadd.f32 %v5099, %v5797
      %v5944 = vadd.f32 %v5100, %v5836
      %v5945 = vadd.f32 %v5101, %v5838
      %v5946 = vadd.f32 %v5102, %v5877
      %v5947 = vadd.f32 %v5103, %v5879
      %v5948 = vadd.f32 %v5104, %v5918
      %v5949 = vadd.f32 %v5105, %v5920
      %s5950 = scalar_lea.vmem %s1, 28
      %v5951 = vld [vmem:[%s5950] sm:$0xf]
      %v5952 = vld [vmem:[%s285] sm:$0xff]
      %v5953 = vld [vmem:[%s285 + $0x8] sm:$0xff]
      %v5954 = vld [vmem:[%s285 + $0x10] sm:$0xff]
      %v5955 = vld [vmem:[%s285 + $0x18] sm:$0xff]
      %v5956 = vld [vmem:[%s285 + $0x20] sm:$0xff]
      %v5957 = vld [vmem:[%s285 + $0x28] sm:$0xff]
      %v5958 = vld [vmem:[%s285 + $0x30] sm:$0xf]
      %v5966 = vcombine.high %v5952, %v5952
      %v5968 = vunpack.c.l.s4 1983009808
      %v5969 = vunpack.c.0.s8 %v5968
      %v5970 = vlaneseq
      %v5971 = vshrl.u32 %v5970, 7
      %v5972 = vsub.s32 %v5969, %v5971
      %v5973 = vrot.slane %v5952, %v5972
      %v5975 = vunpack.c.l.s4 1983009808
      %v5976 = vunpack.c.0.s8 %v5975
      %v5977 = vlaneseq
      %v5978 = vshrl.u32 %v5977, 7
      %v5979 = vsub.s32 %v5976, %v5978
      %v5980 = vrot.slane %v5966, %v5979
      %v5981 = vcombine.high %v5973, %v5973
      %v5982 = vcombine.high %v5980, %v5980
      %v5983 = vcombine.high %v5953, %v5953
      %v5985 = vunpack.c.l.s4 1983009808
      %v5986 = vunpack.c.0.s8 %v5985
      %v5987 = vlaneseq
      %v5988 = vshrl.u32 %v5987, 7
      %v5989 = vsub.s32 %v5986, %v5988
      %v5990 = vrot.slane %v5953, %v5989
      %v5992 = vunpack.c.l.s4 1983009808
      %v5993 = vunpack.c.0.s8 %v5992
      %v5994 = vlaneseq
      %v5995 = vshrl.u32 %v5994, 7
      %v5996 = vsub.s32 %v5993, %v5995
      %v5997 = vrot.slane %v5983, %v5996
      %v5998 = vcombine.high %v5990, %v5990
      %v5999 = vcombine.high %v5997, %v5997
      %v6000 = vcombine.high %v5954, %v5954
      %v6002 = vunpack.c.l.s4 1983009808
      %v6003 = vunpack.c.0.s8 %v6002
      %v6004 = vlaneseq
      %v6005 = vshrl.u32 %v6004, 7
      %v6006 = vsub.s32 %v6003, %v6005
      %v6007 = vrot.slane %v5954, %v6006
      %v6009 = vunpack.c.l.s4 1983009808
      %v6010 = vunpack.c.0.s8 %v6009
      %v6011 = vlaneseq
      %v6012 = vshrl.u32 %v6011, 7
      %v6013 = vsub.s32 %v6010, %v6012
      %v6014 = vrot.slane %v6000, %v6013
      %v6015 = vcombine.high %v6007, %v6007
      %v6016 = vcombine.high %v6014, %v6014
      %v6017 = vcombine.high %v5955, %v5955
      %v6019 = vunpack.c.l.s4 1983009808
      %v6020 = vunpack.c.0.s8 %v6019
      %v6021 = vlaneseq
      %v6022 = vshrl.u32 %v6021, 7
      %v6023 = vsub.s32 %v6020, %v6022
      %v6024 = vrot.slane %v5955, %v6023
      %v6026 = vunpack.c.l.s4 1983009808
      %v6027 = vunpack.c.0.s8 %v6026
      %v6028 = vlaneseq
      %v6029 = vshrl.u32 %v6028, 7
      %v6030 = vsub.s32 %v6027, %v6029
      %v6031 = vrot.slane %v6017, %v6030
      %v6032 = vcombine.high %v6024, %v6024
      %v6033 = vcombine.high %v6031, %v6031
      %v6034 = vcombine.high %v5956, %v5956
      %v6036 = vunpack.c.l.s4 1983009808
      %v6037 = vunpack.c.0.s8 %v6036
      %v6038 = vlaneseq
      %v6039 = vshrl.u32 %v6038, 7
      %v6040 = vsub.s32 %v6037, %v6039
      %v6041 = vrot.slane %v5956, %v6040
      %v6043 = vunpack.c.l.s4 1983009808
      %v6044 = vunpack.c.0.s8 %v6043
      %v6045 = vlaneseq
      %v6046 = vshrl.u32 %v6045, 7
      %v6047 = vsub.s32 %v6044, %v6046
      %v6048 = vrot.slane %v6034, %v6047
      %v6049 = vcombine.high %v6041, %v6041
      %v6050 = vcombine.high %v6048, %v6048
      %v6051 = vcombine.high %v5957, %v5957
      %v6053 = vunpack.c.l.s4 1983009808
      %v6054 = vunpack.c.0.s8 %v6053
      %v6055 = vlaneseq
      %v6056 = vshrl.u32 %v6055, 7
      %v6057 = vsub.s32 %v6054, %v6056
      %v6058 = vrot.slane %v5957, %v6057
      %v6060 = vunpack.c.l.s4 1983009808
      %v6061 = vunpack.c.0.s8 %v6060
      %v6062 = vlaneseq
      %v6063 = vshrl.u32 %v6062, 7
      %v6064 = vsub.s32 %v6061, %v6063
      %v6065 = vrot.slane %v6051, %v6064
      %v6066 = vcombine.high %v6058, %v6058
      %v6067 = vcombine.high %v6065, %v6065
      %v6069 = vunpack.c.l.s4 1983009808
      %v6070 = vunpack.c.0.s8 %v6069
      %v6071 = vlaneseq
      %v6072 = vshrl.u32 %v6071, 7
      %v6073 = vsub.s32 %v6070, %v6072
      %v6074 = vrot.slane %v5958, %v6073
      %v6075 = vcombine.high %v6074, %v6074
      %6076 = vrot.lane.b32.xlu0 %v5973, 91
      %v6077 = vpop.permute.xlu0 %6076
      %6078 = vrot.lane.b32.xlu0 %v5981, 91
      %v6079 = vpop.permute.xlu0 %6078
      %6080 = vrot.lane.b32.xlu0 %v5980, 91
      %v6081 = vpop.permute.xlu0 %6080
      %6082 = vrot.lane.b32.xlu0 %v5982, 91
      %v6083 = vpop.permute.xlu0 %6082
      %6084 = vrot.lane.b32.xlu0 %v5990, 91
      %v6085 = vpop.permute.xlu0 %6084
      %6086 = vrot.lane.b32.xlu0 %v5998, 91
      %v6087 = vpop.permute.xlu0 %6086
      %6088 = vrot.lane.b32.xlu0 %v5997, 91
      %v6089 = vpop.permute.xlu0 %6088
      %6090 = vrot.lane.b32.xlu0 %v5999, 91
      %v6091 = vpop.permute.xlu0 %6090
      %6092 = vrot.lane.b32.xlu0 %v6007, 91
      %v6093 = vpop.permute.xlu0 %6092
      %6094 = vrot.lane.b32.xlu0 %v6015, 91
      %v6095 = vpop.permute.xlu0 %6094
      %6096 = vrot.lane.b32.xlu0 %v6014, 91
      %v6097 = vpop.permute.xlu0 %6096
      %6098 = vrot.lane.b32.xlu0 %v6016, 91
      %v6099 = vpop.permute.xlu0 %6098
      %6100 = vrot.lane.b32.xlu0 %v6024, 91
      %v6101 = vpop.permute.xlu0 %6100
      %6102 = vrot.lane.b32.xlu0 %v6032, 91
      %v6103 = vpop.permute.xlu0 %6102
      %6104 = vrot.lane.b32.xlu0 %v6031, 91
      %v6105 = vpop.permute.xlu0 %6104
      %6106 = vrot.lane.b32.xlu0 %v6033, 91
      %v6107 = vpop.permute.xlu0 %6106
      %6108 = vrot.lane.b32.xlu0 %v6041, 91
      %v6109 = vpop.permute.xlu0 %6108
      %6110 = vrot.lane.b32.xlu0 %v6049, 91
      %v6111 = vpop.permute.xlu0 %6110
      %6112 = vrot.lane.b32.xlu0 %v6048, 91
      %v6113 = vpop.permute.xlu0 %6112
      %6114 = vrot.lane.b32.xlu0 %v6050, 91
      %v6115 = vpop.permute.xlu0 %6114
      %6116 = vrot.lane.b32.xlu0 %v6058, 91
      %v6117 = vpop.permute.xlu0 %6116
      %6118 = vrot.lane.b32.xlu0 %v6066, 91
      %v6119 = vpop.permute.xlu0 %6118
      %6120 = vrot.lane.b32.xlu0 %v6065, 91
      %v6121 = vpop.permute.xlu0 %6120
      %6122 = vrot.lane.b32.xlu0 %v6067, 91
      %v6123 = vpop.permute.xlu0 %6122
      %6124 = vrot.lane.b32.xlu0 %v6074, 91
      %v6125 = vpop.permute.xlu0 %6124
      %6126 = vrot.lane.b32.xlu0 %v6075, 91
      %v6127 = vpop.permute.xlu0 %6126
      %vm6128 = vcmask 744448
      %v6129 = vsel %vm6128, %v6077, %v6079
      %v6130 = vsel %vm6128, %v6079, %v6081
      %v6131 = vsel %vm6128, %v6081, %v6083
      %v6132 = vsel %vm6128, %v6083, %v6085
      %v6133 = vsel %vm6128, %v6085, %v6087
      %v6134 = vsel %vm6128, %v6087, %v6089
      %v6135 = vsel %vm6128, %v6089, %v6091
      %v6136 = vsel %vm6128, %v6091, %v6093
      %v6137 = vsel %vm6128, %v6093, %v6095
      %v6138 = vsel %vm6128, %v6095, %v6097
      %v6139 = vsel %vm6128, %v6097, %v6099
      %v6140 = vsel %vm6128, %v6099, %v6101
      %v6141 = vsel %vm6128, %v6101, %v6103
      %v6142 = vsel %vm6128, %v6103, %v6105
      %v6143 = vsel %vm6128, %v6105, %v6107
      %v6144 = vsel %vm6128, %v6107, %v6109
      %v6145 = vsel %vm6128, %v6109, %v6111
      %v6146 = vsel %vm6128, %v6111, %v6113
      %v6147 = vsel %vm6128, %v6113, %v6115
      %v6148 = vsel %vm6128, %v6115, %v6117
      %v6149 = vsel %vm6128, %v6117, %v6119
      %v6150 = vsel %vm6128, %v6119, %v6121
      %v6151 = vsel %vm6128, %v6121, %v6123
      %v6152 = vsel %vm6128, %v6123, %v6125
      %v6153 = vsel %vm6128, %v6125, %v6127
      %v6155 = vsel %vm500, %v5951, 0
      %v6158 = vsel %vm504, %v6129, 0
      %v6161 = vsel %vm504, %v6130, 0
      %v6164 = vsel %vm504, %v6131, 0
      %v6167 = vsel %vm504, %v6132, 0
      %v6170 = vsel %vm504, %v6133, 0
      %v6173 = vsel %vm504, %v6134, 0
      %v6176 = vsel %vm504, %v6135, 0
      %v6179 = vsel %vm504, %v6136, 0
      %v6182 = vsel %vm504, %v6137, 0
      %v6185 = vsel %vm504, %v6138, 0
      %v6188 = vsel %vm504, %v6139, 0
      %v6191 = vsel %vm504, %v6140, 0
      %v6194 = vsel %vm504, %v6141, 0
      %v6197 = vsel %vm504, %v6142, 0
      %v6200 = vsel %vm504, %v6143, 0
      %v6203 = vsel %vm504, %v6144, 0
      %v6206 = vsel %vm504, %v6145, 0
      %v6209 = vsel %vm504, %v6146, 0
      %v6212 = vsel %vm504, %v6147, 0
      %v6215 = vsel %vm504, %v6148, 0
      %v6218 = vsel %vm504, %v6149, 0
      %v6221 = vsel %vm504, %v6150, 0
      %v6224 = vsel %vm504, %v6151, 0
      %v6227 = vsel %vm504, %v6152, 0
      %v6230 = vsel %vm504, %v6153, 0
      %v6233 = vsel %vm504, %v6127, 0
      %6235 = vmatprep.subr.bf16.mxu0 0
      %6236 = vmatpush1.bf16.msra.mxu0 0
      %6237 = vmatprep.subr.bf16.mxu0 0
      %6238 = vmatpush1.bf16.msra.mxu0 0
      %6239 = vmatprep.subr.bf16.mxu0 0
      %6240 = vmatpush1.bf16.msra.mxu0 0
      %6241 = vmatprep.subr.bf16.mxu0 0
      %6242 = vmatpush1.bf16.msra.mxu0 0
      %6243 = vmatprep.subr.bf16.mxu0 0
      %6244 = vmatpush1.bf16.msra.mxu0 0
      %6245 = vmatprep.subr.bf16.mxu0 0
      %6246 = vmatpush1.bf16.msra.mxu0 0
      %6247 = vmatprep.subr.bf16.mxu0 0
      %6248 = vmatpush1.bf16.msra.mxu0 0
      %6249 = vmatprep.subr.bf16.mxu0 %v6161
      %6250 = vmatpush1.bf16.msra.mxu0 %v6158
      %6251 = vmatprep.subr.bf16.mxu0 0
      %6252 = vmatpush2.bf16.msra.mxu0 0
      %6253 = vmatprep.subr.bf16.mxu0 0
      %6254 = vmatpush2.bf16.msra.mxu0 0
      %6255 = vmatprep.subr.bf16.mxu0 0
      %6256 = vmatpush2.bf16.msra.mxu0 0
      %6257 = vmatprep.subr.bf16.mxu0 0
      %6258 = vmatpush2.bf16.msra.mxu0 0
      %6259 = vmatprep.subr.bf16.mxu0 0
      %6260 = vmatpush2.bf16.msra.mxu0 0
      %6261 = vmatprep.subr.bf16.mxu0 0
      %6262 = vmatpush2.bf16.msra.mxu0 0
      %6263 = vmatprep.subr.bf16.mxu0 0
      %6264 = vmatpush2.bf16.msra.mxu0 0
      %6265 = vmatprep.subr.bf16.mxu0 0
      %6266 = vmatpush2.bf16.msra.mxu0 0
      %6267 = vmatprep.mubr.bf16.mxu0 0
      %6268 = vmatmul.mubr.bf16.gmra.mxu0 %v6155
      %v6269 = vpop.f32.mrf.mxu0
      %v6270 = vadd.f32 0.0, %v6269
      %v6271 = vpop.f32.mrf.mxu0
      %v6272 = vadd.f32 0.0, %v6271
      %v6273 = vpop.f32.mrf.mxu0
      %v6274 = vpop.f32.mrf.mxu0
      %6275 = vdwg.mxu0
      %6276 = vmatprep.subr.bf16.mxu0 0
      %6277 = vmatpush1.bf16.msra.mxu0 0
      %6278 = vmatprep.subr.bf16.mxu0 0
      %6279 = vmatpush1.bf16.msra.mxu0 0
      %6280 = vmatprep.subr.bf16.mxu0 0
      %6281 = vmatpush1.bf16.msra.mxu0 0
      %6282 = vmatprep.subr.bf16.mxu0 0
      %6283 = vmatpush1.bf16.msra.mxu0 0
      %6284 = vmatprep.subr.bf16.mxu0 0
      %6285 = vmatpush1.bf16.msra.mxu0 0
      %6286 = vmatprep.subr.bf16.mxu0 0
      %6287 = vmatpush1.bf16.msra.mxu0 0
      %6288 = vmatprep.subr.bf16.mxu0 0
      %6289 = vmatpush1.bf16.msra.mxu0 0
      %6290 = vmatprep.subr.bf16.mxu0 %v6167
      %6291 = vmatpush1.bf16.msra.mxu0 %v6164
      %6292 = vmatprep.subr.bf16.mxu0 0
      %6293 = vmatpush2.bf16.msra.mxu0 0
      %6294 = vmatprep.subr.bf16.mxu0 0
      %6295 = vmatpush2.bf16.msra.mxu0 0
      %6296 = vmatprep.subr.bf16.mxu0 0
      %6297 = vmatpush2.bf16.msra.mxu0 0
      %6298 = vmatprep.subr.bf16.mxu0 0
      %6299 = vmatpush2.bf16.msra.mxu0 0
      %6300 = vmatprep.subr.bf16.mxu0 0
      %6301 = vmatpush2.bf16.msra.mxu0 0
      %6302 = vmatprep.subr.bf16.mxu0 0
      %6303 = vmatpush2.bf16.msra.mxu0 0
      %6304 = vmatprep.subr.bf16.mxu0 0
      %6305 = vmatpush2.bf16.msra.mxu0 0
      %6306 = vmatprep.subr.bf16.mxu0 0
      %6307 = vmatpush2.bf16.msra.mxu0 0
      %6308 = vmatprep.mubr.bf16.mxu0 0
      %6309 = vmatmul.mubr.bf16.gmra.mxu0 %v6155
      %v6310 = vpop.f32.mrf.mxu0
      %v6311 = vadd.f32 0.0, %v6310
      %v6312 = vpop.f32.mrf.mxu0
      %v6313 = vadd.f32 0.0, %v6312
      %v6314 = vpop.f32.mrf.mxu0
      %v6315 = vpop.f32.mrf.mxu0
      %6316 = vdwg.mxu0
      %6317 = vmatprep.subr.bf16.mxu0 0
      %6318 = vmatpush1.bf16.msra.mxu0 0
      %6319 = vmatprep.subr.bf16.mxu0 0
      %6320 = vmatpush1.bf16.msra.mxu0 0
      %6321 = vmatprep.subr.bf16.mxu0 0
      %6322 = vmatpush1.bf16.msra.mxu0 0
      %6323 = vmatprep.subr.bf16.mxu0 0
      %6324 = vmatpush1.bf16.msra.mxu0 0
      %6325 = vmatprep.subr.bf16.mxu0 0
      %6326 = vmatpush1.bf16.msra.mxu0 0
      %6327 = vmatprep.subr.bf16.mxu0 0
      %6328 = vmatpush1.bf16.msra.mxu0 0
      %6329 = vmatprep.subr.bf16.mxu0 0
      %6330 = vmatpush1.bf16.msra.mxu0 0
      %6331 = vmatprep.subr.bf16.mxu0 %v6173
      %6332 = vmatpush1.bf16.msra.mxu0 %v6170
      %6333 = vmatprep.subr.bf16.mxu0 0
      %6334 = vmatpush2.bf16.msra.mxu0 0
      %6335 = vmatprep.subr.bf16.mxu0 0
      %6336 = vmatpush2.bf16.msra.mxu0 0
      %6337 = vmatprep.subr.bf16.mxu0 0
      %6338 = vmatpush2.bf16.msra.mxu0 0
      %6339 = vmatprep.subr.bf16.mxu0 0
      %6340 = vmatpush2.bf16.msra.mxu0 0
      %6341 = vmatprep.subr.bf16.mxu0 0
      %6342 = vmatpush2.bf16.msra.mxu0 0
      %6343 = vmatprep.subr.bf16.mxu0 0
      %6344 = vmatpush2.bf16.msra.mxu0 0
      %6345 = vmatprep.subr.bf16.mxu0 0
      %6346 = vmatpush2.bf16.msra.mxu0 0
      %6347 = vmatprep.subr.bf16.mxu0 0
      %6348 = vmatpush2.bf16.msra.mxu0 0
      %6349 = vmatprep.mubr.bf16.mxu0 0
      %6350 = vmatmul.mubr.bf16.gmra.mxu0 %v6155
      %v6351 = vpop.f32.mrf.mxu0
      %v6352 = vadd.f32 0.0, %v6351
      %v6353 = vpop.f32.mrf.mxu0
      %v6354 = vadd.f32 0.0, %v6353
      %v6355 = vpop.f32.mrf.mxu0
      %v6356 = vpop.f32.mrf.mxu0
      %6357 = vdwg.mxu0
      %6358 = vmatprep.subr.bf16.mxu0 0
      %6359 = vmatpush1.bf16.msra.mxu0 0
      %6360 = vmatprep.subr.bf16.mxu0 0
      %6361 = vmatpush1.bf16.msra.mxu0 0
      %6362 = vmatprep.subr.bf16.mxu0 0
      %6363 = vmatpush1.bf16.msra.mxu0 0
      %6364 = vmatprep.subr.bf16.mxu0 0
      %6365 = vmatpush1.bf16.msra.mxu0 0
      %6366 = vmatprep.subr.bf16.mxu0 0
      %6367 = vmatpush1.bf16.msra.mxu0 0
      %6368 = vmatprep.subr.bf16.mxu0 0
      %6369 = vmatpush1.bf16.msra.mxu0 0
      %6370 = vmatprep.subr.bf16.mxu0 0
      %6371 = vmatpush1.bf16.msra.mxu0 0
      %6372 = vmatprep.subr.bf16.mxu0 %v6179
      %6373 = vmatpush1.bf16.msra.mxu0 %v6176
      %6374 = vmatprep.subr.bf16.mxu0 0
      %6375 = vmatpush2.bf16.msra.mxu0 0
      %6376 = vmatprep.subr.bf16.mxu0 0
      %6377 = vmatpush2.bf16.msra.mxu0 0
      %6378 = vmatprep.subr.bf16.mxu0 0
      %6379 = vmatpush2.bf16.msra.mxu0 0
      %6380 = vmatprep.subr.bf16.mxu0 0
      %6381 = vmatpush2.bf16.msra.mxu0 0
      %6382 = vmatprep.subr.bf16.mxu0 0
      %6383 = vmatpush2.bf16.msra.mxu0 0
      %6384 = vmatprep.subr.bf16.mxu0 0
      %6385 = vmatpush2.bf16.msra.mxu0 0
      %6386 = vmatprep.subr.bf16.mxu0 0
      %6387 = vmatpush2.bf16.msra.mxu0 0
      %6388 = vmatprep.subr.bf16.mxu0 0
      %6389 = vmatpush2.bf16.msra.mxu0 0
      %6390 = vmatprep.mubr.bf16.mxu0 0
      %6391 = vmatmul.mubr.bf16.gmra.mxu0 %v6155
      %v6392 = vpop.f32.mrf.mxu0
      %v6393 = vadd.f32 0.0, %v6392
      %v6394 = vpop.f32.mrf.mxu0
      %v6395 = vadd.f32 0.0, %v6394
      %v6396 = vpop.f32.mrf.mxu0
      %v6397 = vpop.f32.mrf.mxu0
      %6398 = vdwg.mxu0
      %6399 = vmatprep.subr.bf16.mxu0 0
      %6400 = vmatpush1.bf16.msra.mxu0 0
      %6401 = vmatprep.subr.bf16.mxu0 0
      %6402 = vmatpush1.bf16.msra.mxu0 0
      %6403 = vmatprep.subr.bf16.mxu0 0
      %6404 = vmatpush1.bf16.msra.mxu0 0
      %6405 = vmatprep.subr.bf16.mxu0 0
      %6406 = vmatpush1.bf16.msra.mxu0 0
      %6407 = vmatprep.subr.bf16.mxu0 0
      %6408 = vmatpush1.bf16.msra.mxu0 0
      %6409 = vmatprep.subr.bf16.mxu0 0
      %6410 = vmatpush1.bf16.msra.mxu0 0
      %6411 = vmatprep.subr.bf16.mxu0 0
      %6412 = vmatpush1.bf16.msra.mxu0 0
      %6413 = vmatprep.subr.bf16.mxu0 %v6185
      %6414 = vmatpush1.bf16.msra.mxu0 %v6182
      %6415 = vmatprep.subr.bf16.mxu0 0
      %6416 = vmatpush2.bf16.msra.mxu0 0
      %6417 = vmatprep.subr.bf16.mxu0 0
      %6418 = vmatpush2.bf16.msra.mxu0 0
      %6419 = vmatprep.subr.bf16.mxu0 0
      %6420 = vmatpush2.bf16.msra.mxu0 0
      %6421 = vmatprep.subr.bf16.mxu0 0
      %6422 = vmatpush2.bf16.msra.mxu0 0
      %6423 = vmatprep.subr.bf16.mxu0 0
      %6424 = vmatpush2.bf16.msra.mxu0 0
      %6425 = vmatprep.subr.bf16.mxu0 0
      %6426 = vmatpush2.bf16.msra.mxu0 0
      %6427 = vmatprep.subr.bf16.mxu0 0
      %6428 = vmatpush2.bf16.msra.mxu0 0
      %6429 = vmatprep.subr.bf16.mxu0 0
      %6430 = vmatpush2.bf16.msra.mxu0 0
      %6431 = vmatprep.mubr.bf16.mxu0 0
      %6432 = vmatmul.mubr.bf16.gmra.mxu0 %v6155
      %v6433 = vpop.f32.mrf.mxu0
      %v6434 = vadd.f32 0.0, %v6433
      %v6435 = vpop.f32.mrf.mxu0
      %v6436 = vadd.f32 0.0, %v6435
      %v6437 = vpop.f32.mrf.mxu0
      %v6438 = vpop.f32.mrf.mxu0
      %6439 = vdwg.mxu0
      %6440 = vmatprep.subr.bf16.mxu0 0
      %6441 = vmatpush1.bf16.msra.mxu0 0
      %6442 = vmatprep.subr.bf16.mxu0 0
      %6443 = vmatpush1.bf16.msra.mxu0 0
      %6444 = vmatprep.subr.bf16.mxu0 0
      %6445 = vmatpush1.bf16.msra.mxu0 0
      %6446 = vmatprep.subr.bf16.mxu0 0
      %6447 = vmatpush1.bf16.msra.mxu0 0
      %6448 = vmatprep.subr.bf16.mxu0 0
      %6449 = vmatpush1.bf16.msra.mxu0 0
      %6450 = vmatprep.subr.bf16.mxu0 0
      %6451 = vmatpush1.bf16.msra.mxu0 0
      %6452 = vmatprep.subr.bf16.mxu0 0
      %6453 = vmatpush1.bf16.msra.mxu0 0
      %6454 = vmatprep.subr.bf16.mxu0 %v6191
      %6455 = vmatpush1.bf16.msra.mxu0 %v6188
      %6456 = vmatprep.subr.bf16.mxu0 0
      %6457 = vmatpush2.bf16.msra.mxu0 0
      %6458 = vmatprep.subr.bf16.mxu0 0
      %6459 = vmatpush2.bf16.msra.mxu0 0
      %6460 = vmatprep.subr.bf16.mxu0 0
      %6461 = vmatpush2.bf16.msra.mxu0 0
      %6462 = vmatprep.subr.bf16.mxu0 0
      %6463 = vmatpush2.bf16.msra.mxu0 0
      %6464 = vmatprep.subr.bf16.mxu0 0
      %6465 = vmatpush2.bf16.msra.mxu0 0
      %6466 = vmatprep.subr.bf16.mxu0 0
      %6467 = vmatpush2.bf16.msra.mxu0 0
      %6468 = vmatprep.subr.bf16.mxu0 0
      %6469 = vmatpush2.bf16.msra.mxu0 0
      %6470 = vmatprep.subr.bf16.mxu0 0
      %6471 = vmatpush2.bf16.msra.mxu0 0
      %6472 = vmatprep.mubr.bf16.mxu0 0
      %6473 = vmatmul.mubr.bf16.gmra.mxu0 %v6155
      %v6474 = vpop.f32.mrf.mxu0
      %v6475 = vadd.f32 0.0, %v6474
      %v6476 = vpop.f32.mrf.mxu0
      %v6477 = vadd.f32 0.0, %v6476
      %v6478 = vpop.f32.mrf.mxu0
      %v6479 = vpop.f32.mrf.mxu0
      %6480 = vdwg.mxu0
      %6481 = vmatprep.subr.bf16.mxu0 0
      %6482 = vmatpush1.bf16.msra.mxu0 0
      %6483 = vmatprep.subr.bf16.mxu0 0
      %6484 = vmatpush1.bf16.msra.mxu0 0
      %6485 = vmatprep.subr.bf16.mxu0 0
      %6486 = vmatpush1.bf16.msra.mxu0 0
      %6487 = vmatprep.subr.bf16.mxu0 0
      %6488 = vmatpush1.bf16.msra.mxu0 0
      %6489 = vmatprep.subr.bf16.mxu0 0
      %6490 = vmatpush1.bf16.msra.mxu0 0
      %6491 = vmatprep.subr.bf16.mxu0 0
      %6492 = vmatpush1.bf16.msra.mxu0 0
      %6493 = vmatprep.subr.bf16.mxu0 0
      %6494 = vmatpush1.bf16.msra.mxu0 0
      %6495 = vmatprep.subr.bf16.mxu0 %v6197
      %6496 = vmatpush1.bf16.msra.mxu0 %v6194
      %6497 = vmatprep.subr.bf16.mxu0 0
      %6498 = vmatpush2.bf16.msra.mxu0 0
      %6499 = vmatprep.subr.bf16.mxu0 0
      %6500 = vmatpush2.bf16.msra.mxu0 0
      %6501 = vmatprep.subr.bf16.mxu0 0
      %6502 = vmatpush2.bf16.msra.mxu0 0
      %6503 = vmatprep.subr.bf16.mxu0 0
      %6504 = vmatpush2.bf16.msra.mxu0 0
      %6505 = vmatprep.subr.bf16.mxu0 0
      %6506 = vmatpush2.bf16.msra.mxu0 0
      %6507 = vmatprep.subr.bf16.mxu0 0
      %6508 = vmatpush2.bf16.msra.mxu0 0
      %6509 = vmatprep.subr.bf16.mxu0 0
      %6510 = vmatpush2.bf16.msra.mxu0 0
      %6511 = vmatprep.subr.bf16.mxu0 0
      %6512 = vmatpush2.bf16.msra.mxu0 0
      %6513 = vmatprep.mubr.bf16.mxu0 0
      %6514 = vmatmul.mubr.bf16.gmra.mxu0 %v6155
      %v6515 = vpop.f32.mrf.mxu0
      %v6516 = vadd.f32 0.0, %v6515
      %v6517 = vpop.f32.mrf.mxu0
      %v6518 = vadd.f32 0.0, %v6517
      %v6519 = vpop.f32.mrf.mxu0
      %v6520 = vpop.f32.mrf.mxu0
      %6521 = vdwg.mxu0
      %6522 = vmatprep.subr.bf16.mxu0 0
      %6523 = vmatpush1.bf16.msra.mxu0 0
      %6524 = vmatprep.subr.bf16.mxu0 0
      %6525 = vmatpush1.bf16.msra.mxu0 0
      %6526 = vmatprep.subr.bf16.mxu0 0
      %6527 = vmatpush1.bf16.msra.mxu0 0
      %6528 = vmatprep.subr.bf16.mxu0 0
      %6529 = vmatpush1.bf16.msra.mxu0 0
      %6530 = vmatprep.subr.bf16.mxu0 0
      %6531 = vmatpush1.bf16.msra.mxu0 0
      %6532 = vmatprep.subr.bf16.mxu0 0
      %6533 = vmatpush1.bf16.msra.mxu0 0
      %6534 = vmatprep.subr.bf16.mxu0 0
      %6535 = vmatpush1.bf16.msra.mxu0 0
      %6536 = vmatprep.subr.bf16.mxu0 %v6203
      %6537 = vmatpush1.bf16.msra.mxu0 %v6200
      %6538 = vmatprep.subr.bf16.mxu0 0
      %6539 = vmatpush2.bf16.msra.mxu0 0
      %6540 = vmatprep.subr.bf16.mxu0 0
      %6541 = vmatpush2.bf16.msra.mxu0 0
      %6542 = vmatprep.subr.bf16.mxu0 0
      %6543 = vmatpush2.bf16.msra.mxu0 0
      %6544 = vmatprep.subr.bf16.mxu0 0
      %6545 = vmatpush2.bf16.msra.mxu0 0
      %6546 = vmatprep.subr.bf16.mxu0 0
      %6547 = vmatpush2.bf16.msra.mxu0 0
      %6548 = vmatprep.subr.bf16.mxu0 0
      %6549 = vmatpush2.bf16.msra.mxu0 0
      %6550 = vmatprep.subr.bf16.mxu0 0
      %6551 = vmatpush2.bf16.msra.mxu0 0
      %6552 = vmatprep.subr.bf16.mxu0 0
      %6553 = vmatpush2.bf16.msra.mxu0 0
      %6554 = vmatprep.mubr.bf16.mxu0 0
      %6555 = vmatmul.mubr.bf16.gmra.mxu0 %v6155
      %v6556 = vpop.f32.mrf.mxu0
      %v6557 = vadd.f32 0.0, %v6556
      %v6558 = vpop.f32.mrf.mxu0
      %v6559 = vadd.f32 0.0, %v6558
      %v6560 = vpop.f32.mrf.mxu0
      %v6561 = vpop.f32.mrf.mxu0
      %6562 = vdwg.mxu0
      %6563 = vmatprep.subr.bf16.mxu0 0
      %6564 = vmatpush1.bf16.msra.mxu0 0
      %6565 = vmatprep.subr.bf16.mxu0 0
      %6566 = vmatpush1.bf16.msra.mxu0 0
      %6567 = vmatprep.subr.bf16.mxu0 0
      %6568 = vmatpush1.bf16.msra.mxu0 0
      %6569 = vmatprep.subr.bf16.mxu0 0
      %6570 = vmatpush1.bf16.msra.mxu0 0
      %6571 = vmatprep.subr.bf16.mxu0 0
      %6572 = vmatpush1.bf16.msra.mxu0 0
      %6573 = vmatprep.subr.bf16.mxu0 0
      %6574 = vmatpush1.bf16.msra.mxu0 0
      %6575 = vmatprep.subr.bf16.mxu0 0
      %6576 = vmatpush1.bf16.msra.mxu0 0
      %6577 = vmatprep.subr.bf16.mxu0 %v6209
      %6578 = vmatpush1.bf16.msra.mxu0 %v6206
      %6579 = vmatprep.subr.bf16.mxu0 0
      %6580 = vmatpush2.bf16.msra.mxu0 0
      %6581 = vmatprep.subr.bf16.mxu0 0
      %6582 = vmatpush2.bf16.msra.mxu0 0
      %6583 = vmatprep.subr.bf16.mxu0 0
      %6584 = vmatpush2.bf16.msra.mxu0 0
      %6585 = vmatprep.subr.bf16.mxu0 0
      %6586 = vmatpush2.bf16.msra.mxu0 0
      %6587 = vmatprep.subr.bf16.mxu0 0
      %6588 = vmatpush2.bf16.msra.mxu0 0
      %6589 = vmatprep.subr.bf16.mxu0 0
      %6590 = vmatpush2.bf16.msra.mxu0 0
      %6591 = vmatprep.subr.bf16.mxu0 0
      %6592 = vmatpush2.bf16.msra.mxu0 0
      %6593 = vmatprep.subr.bf16.mxu0 0
      %6594 = vmatpush2.bf16.msra.mxu0 0
      %6595 = vmatprep.mubr.bf16.mxu0 0
      %6596 = vmatmul.mubr.bf16.gmra.mxu0 %v6155
      %v6597 = vpop.f32.mrf.mxu0
      %v6598 = vadd.f32 0.0, %v6597
      %v6599 = vpop.f32.mrf.mxu0
      %v6600 = vadd.f32 0.0, %v6599
      %v6601 = vpop.f32.mrf.mxu0
      %v6602 = vpop.f32.mrf.mxu0
      %6603 = vdwg.mxu0
      %6604 = vmatprep.subr.bf16.mxu0 0
      %6605 = vmatpush1.bf16.msra.mxu0 0
      %6606 = vmatprep.subr.bf16.mxu0 0
      %6607 = vmatpush1.bf16.msra.mxu0 0
      %6608 = vmatprep.subr.bf16.mxu0 0
      %6609 = vmatpush1.bf16.msra.mxu0 0
      %6610 = vmatprep.subr.bf16.mxu0 0
      %6611 = vmatpush1.bf16.msra.mxu0 0
      %6612 = vmatprep.subr.bf16.mxu0 0
      %6613 = vmatpush1.bf16.msra.mxu0 0
      %6614 = vmatprep.subr.bf16.mxu0 0
      %6615 = vmatpush1.bf16.msra.mxu0 0
      %6616 = vmatprep.subr.bf16.mxu0 0
      %6617 = vmatpush1.bf16.msra.mxu0 0
      %6618 = vmatprep.subr.bf16.mxu0 %v6215
      %6619 = vmatpush1.bf16.msra.mxu0 %v6212
      %6620 = vmatprep.subr.bf16.mxu0 0
      %6621 = vmatpush2.bf16.msra.mxu0 0
      %6622 = vmatprep.subr.bf16.mxu0 0
      %6623 = vmatpush2.bf16.msra.mxu0 0
      %6624 = vmatprep.subr.bf16.mxu0 0
      %6625 = vmatpush2.bf16.msra.mxu0 0
      %6626 = vmatprep.subr.bf16.mxu0 0
      %6627 = vmatpush2.bf16.msra.mxu0 0
      %6628 = vmatprep.subr.bf16.mxu0 0
      %6629 = vmatpush2.bf16.msra.mxu0 0
      %6630 = vmatprep.subr.bf16.mxu0 0
      %6631 = vmatpush2.bf16.msra.mxu0 0
      %6632 = vmatprep.subr.bf16.mxu0 0
      %6633 = vmatpush2.bf16.msra.mxu0 0
      %6634 = vmatprep.subr.bf16.mxu0 0
      %6635 = vmatpush2.bf16.msra.mxu0 0
      %6636 = vmatprep.mubr.bf16.mxu0 0
      %6637 = vmatmul.mubr.bf16.gmra.mxu0 %v6155
      %v6638 = vpop.f32.mrf.mxu0
      %v6639 = vadd.f32 0.0, %v6638
      %v6640 = vpop.f32.mrf.mxu0
      %v6641 = vadd.f32 0.0, %v6640
      %v6642 = vpop.f32.mrf.mxu0
      %v6643 = vpop.f32.mrf.mxu0
      %6644 = vdwg.mxu0
      %6645 = vmatprep.subr.bf16.mxu0 0
      %6646 = vmatpush1.bf16.msra.mxu0 0
      %6647 = vmatprep.subr.bf16.mxu0 0
      %6648 = vmatpush1.bf16.msra.mxu0 0
      %6649 = vmatprep.subr.bf16.mxu0 0
      %6650 = vmatpush1.bf16.msra.mxu0 0
      %6651 = vmatprep.subr.bf16.mxu0 0
      %6652 = vmatpush1.bf16.msra.mxu0 0
      %6653 = vmatprep.subr.bf16.mxu0 0
      %6654 = vmatpush1.bf16.msra.mxu0 0
      %6655 = vmatprep.subr.bf16.mxu0 0
      %6656 = vmatpush1.bf16.msra.mxu0 0
      %6657 = vmatprep.subr.bf16.mxu0 0
      %6658 = vmatpush1.bf16.msra.mxu0 0
      %6659 = vmatprep.subr.bf16.mxu0 %v6221
      %6660 = vmatpush1.bf16.msra.mxu0 %v6218
      %6661 = vmatprep.subr.bf16.mxu0 0
      %6662 = vmatpush2.bf16.msra.mxu0 0
      %6663 = vmatprep.subr.bf16.mxu0 0
      %6664 = vmatpush2.bf16.msra.mxu0 0
      %6665 = vmatprep.subr.bf16.mxu0 0
      %6666 = vmatpush2.bf16.msra.mxu0 0
      %6667 = vmatprep.subr.bf16.mxu0 0
      %6668 = vmatpush2.bf16.msra.mxu0 0
      %6669 = vmatprep.subr.bf16.mxu0 0
      %6670 = vmatpush2.bf16.msra.mxu0 0
      %6671 = vmatprep.subr.bf16.mxu0 0
      %6672 = vmatpush2.bf16.msra.mxu0 0
      %6673 = vmatprep.subr.bf16.mxu0 0
      %6674 = vmatpush2.bf16.msra.mxu0 0
      %6675 = vmatprep.subr.bf16.mxu0 0
      %6676 = vmatpush2.bf16.msra.mxu0 0
      %6677 = vmatprep.mubr.bf16.mxu0 0
      %6678 = vmatmul.mubr.bf16.gmra.mxu0 %v6155
      %v6679 = vpop.f32.mrf.mxu0
      %v6680 = vadd.f32 0.0, %v6679
      %v6681 = vpop.f32.mrf.mxu0
      %v6682 = vadd.f32 0.0, %v6681
      %v6683 = vpop.f32.mrf.mxu0
      %v6684 = vpop.f32.mrf.mxu0
      %6685 = vdwg.mxu0
      %6686 = vmatprep.subr.bf16.mxu0 0
      %6687 = vmatpush1.bf16.msra.mxu0 0
      %6688 = vmatprep.subr.bf16.mxu0 0
      %6689 = vmatpush1.bf16.msra.mxu0 0
      %6690 = vmatprep.subr.bf16.mxu0 0
      %6691 = vmatpush1.bf16.msra.mxu0 0
      %6692 = vmatprep.subr.bf16.mxu0 0
      %6693 = vmatpush1.bf16.msra.mxu0 0
      %6694 = vmatprep.subr.bf16.mxu0 0
      %6695 = vmatpush1.bf16.msra.mxu0 0
      %6696 = vmatprep.subr.bf16.mxu0 0
      %6697 = vmatpush1.bf16.msra.mxu0 0
      %6698 = vmatprep.subr.bf16.mxu0 0
      %6699 = vmatpush1.bf16.msra.mxu0 0
      %6700 = vmatprep.subr.bf16.mxu0 %v6227
      %6701 = vmatpush1.bf16.msra.mxu0 %v6224
      %6702 = vmatprep.subr.bf16.mxu0 0
      %6703 = vmatpush2.bf16.msra.mxu0 0
      %6704 = vmatprep.subr.bf16.mxu0 0
      %6705 = vmatpush2.bf16.msra.mxu0 0
      %6706 = vmatprep.subr.bf16.mxu0 0
      %6707 = vmatpush2.bf16.msra.mxu0 0
      %6708 = vmatprep.subr.bf16.mxu0 0
      %6709 = vmatpush2.bf16.msra.mxu0 0
      %6710 = vmatprep.subr.bf16.mxu0 0
      %6711 = vmatpush2.bf16.msra.mxu0 0
      %6712 = vmatprep.subr.bf16.mxu0 0
      %6713 = vmatpush2.bf16.msra.mxu0 0
      %6714 = vmatprep.subr.bf16.mxu0 0
      %6715 = vmatpush2.bf16.msra.mxu0 0
      %6716 = vmatprep.subr.bf16.mxu0 0
      %6717 = vmatpush2.bf16.msra.mxu0 0
      %6718 = vmatprep.mubr.bf16.mxu0 0
      %6719 = vmatmul.mubr.bf16.gmra.mxu0 %v6155
      %v6720 = vpop.f32.mrf.mxu0
      %v6721 = vadd.f32 0.0, %v6720
      %v6722 = vpop.f32.mrf.mxu0
      %v6723 = vadd.f32 0.0, %v6722
      %v6724 = vpop.f32.mrf.mxu0
      %v6725 = vpop.f32.mrf.mxu0
      %6726 = vdwg.mxu0
      %6727 = vmatprep.subr.bf16.mxu0 0
      %6728 = vmatpush1.bf16.msra.mxu0 0
      %6729 = vmatprep.subr.bf16.mxu0 0
      %6730 = vmatpush1.bf16.msra.mxu0 0
      %6731 = vmatprep.subr.bf16.mxu0 0
      %6732 = vmatpush1.bf16.msra.mxu0 0
      %6733 = vmatprep.subr.bf16.mxu0 0
      %6734 = vmatpush1.bf16.msra.mxu0 0
      %6735 = vmatprep.subr.bf16.mxu0 0
      %6736 = vmatpush1.bf16.msra.mxu0 0
      %6737 = vmatprep.subr.bf16.mxu0 0
      %6738 = vmatpush1.bf16.msra.mxu0 0
      %6739 = vmatprep.subr.bf16.mxu0 0
      %6740 = vmatpush1.bf16.msra.mxu0 0
      %6741 = vmatprep.subr.bf16.mxu0 %v6233
      %6742 = vmatpush1.bf16.msra.mxu0 %v6230
      %6743 = vmatprep.subr.bf16.mxu0 0
      %6744 = vmatpush2.bf16.msra.mxu0 0
      %6745 = vmatprep.subr.bf16.mxu0 0
      %6746 = vmatpush2.bf16.msra.mxu0 0
      %6747 = vmatprep.subr.bf16.mxu0 0
      %6748 = vmatpush2.bf16.msra.mxu0 0
      %6749 = vmatprep.subr.bf16.mxu0 0
      %6750 = vmatpush2.bf16.msra.mxu0 0
      %6751 = vmatprep.subr.bf16.mxu0 0
      %6752 = vmatpush2.bf16.msra.mxu0 0
      %6753 = vmatprep.subr.bf16.mxu0 0
      %6754 = vmatpush2.bf16.msra.mxu0 0
      %6755 = vmatprep.subr.bf16.mxu0 0
      %6756 = vmatpush2.bf16.msra.mxu0 0
      %6757 = vmatprep.subr.bf16.mxu0 0
      %6758 = vmatpush2.bf16.msra.mxu0 0
      %6759 = vmatprep.mubr.bf16.mxu0 0
      %6760 = vmatmul.mubr.bf16.gmra.mxu0 %v6155
      %v6761 = vpop.f32.mrf.mxu0
      %v6762 = vadd.f32 0.0, %v6761
      %v6763 = vpop.f32.mrf.mxu0
      %v6764 = vadd.f32 0.0, %v6763
      %v6765 = vpop.f32.mrf.mxu0
      %v6766 = vpop.f32.mrf.mxu0
      %6767 = vdwg.mxu0
      %v6768 = vadd.f32 %v5924, %v6270
      %v6769 = vadd.f32 %v5925, %v6272
      %v6770 = vadd.f32 %v5926, %v6311
      %v6771 = vadd.f32 %v5927, %v6313
      %v6772 = vadd.f32 %v5928, %v6352
      %v6773 = vadd.f32 %v5929, %v6354
      %v6774 = vadd.f32 %v5930, %v6393
      %v6775 = vadd.f32 %v5931, %v6395
      %v6776 = vadd.f32 %v5932, %v6434
      %v6777 = vadd.f32 %v5933, %v6436
      %v6778 = vadd.f32 %v5934, %v6475
      %v6779 = vadd.f32 %v5935, %v6477
      %v6780 = vadd.f32 %v5936, %v6516
      %v6781 = vadd.f32 %v5937, %v6518
      %v6782 = vadd.f32 %v5938, %v6557
      %v6783 = vadd.f32 %v5939, %v6559
      %v6784 = vadd.f32 %v5940, %v6598
      %v6785 = vadd.f32 %v5941, %v6600
      %v6786 = vadd.f32 %v5942, %v6639
      %v6787 = vadd.f32 %v5943, %v6641
      %v6788 = vadd.f32 %v5944, %v6680
      %v6789 = vadd.f32 %v5945, %v6682
      %v6790 = vadd.f32 %v5946, %v6721
      %v6791 = vadd.f32 %v5947, %v6723
      %v6792 = vadd.f32 %v5948, %v6762
      %v6793 = vadd.f32 %v5949, %v6764
      %s6794 = scalar_lea.vmem %s1, 32
      %v6795 = vld [vmem:[%s6794] sm:$0xf]
      %v6796 = vld [vmem:[%s285] sm:$0xff]
      %v6797 = vld [vmem:[%s285 + $0x8] sm:$0xff]
      %v6798 = vld [vmem:[%s285 + $0x10] sm:$0xff]
      %v6799 = vld [vmem:[%s285 + $0x18] sm:$0xff]
      %v6800 = vld [vmem:[%s285 + $0x20] sm:$0xff]
      %v6801 = vld [vmem:[%s285 + $0x28] sm:$0xff]
      %v6802 = vld [vmem:[%s285 + $0x30] sm:$0xf]
      %v6810 = vcombine.high %v6796, %v6796
      %v6812 = vunpack.c.l.s4 1983009808
      %v6813 = vunpack.c.0.s8 %v6812
      %v6814 = vlaneseq
      %v6815 = vshrl.u32 %v6814, 7
      %v6816 = vsub.s32 %v6813, %v6815
      %v6817 = vrot.slane %v6796, %v6816
      %v6819 = vunpack.c.l.s4 1983009808
      %v6820 = vunpack.c.0.s8 %v6819
      %v6821 = vlaneseq
      %v6822 = vshrl.u32 %v6821, 7
      %v6823 = vsub.s32 %v6820, %v6822
      %v6824 = vrot.slane %v6810, %v6823
      %v6825 = vcombine.high %v6817, %v6817
      %v6826 = vcombine.high %v6824, %v6824
      %v6827 = vcombine.high %v6797, %v6797
      %v6829 = vunpack.c.l.s4 1983009808
      %v6830 = vunpack.c.0.s8 %v6829
      %v6831 = vlaneseq
      %v6832 = vshrl.u32 %v6831, 7
      %v6833 = vsub.s32 %v6830, %v6832
      %v6834 = vrot.slane %v6797, %v6833
      %v6836 = vunpack.c.l.s4 1983009808
      %v6837 = vunpack.c.0.s8 %v6836
      %v6838 = vlaneseq
      %v6839 = vshrl.u32 %v6838, 7
      %v6840 = vsub.s32 %v6837, %v6839
      %v6841 = vrot.slane %v6827, %v6840
      %v6842 = vcombine.high %v6834, %v6834
      %v6843 = vcombine.high %v6841, %v6841
      %v6844 = vcombine.high %v6798, %v6798
      %v6846 = vunpack.c.l.s4 1983009808
      %v6847 = vunpack.c.0.s8 %v6846
      %v6848 = vlaneseq
      %v6849 = vshrl.u32 %v6848, 7
      %v6850 = vsub.s32 %v6847, %v6849
      %v6851 = vrot.slane %v6798, %v6850
      %v6853 = vunpack.c.l.s4 1983009808
      %v6854 = vunpack.c.0.s8 %v6853
      %v6855 = vlaneseq
      %v6856 = vshrl.u32 %v6855, 7
      %v6857 = vsub.s32 %v6854, %v6856
      %v6858 = vrot.slane %v6844, %v6857
      %v6859 = vcombine.high %v6851, %v6851
      %v6860 = vcombine.high %v6858, %v6858
      %v6861 = vcombine.high %v6799, %v6799
      %v6863 = vunpack.c.l.s4 1983009808
      %v6864 = vunpack.c.0.s8 %v6863
      %v6865 = vlaneseq
      %v6866 = vshrl.u32 %v6865, 7
      %v6867 = vsub.s32 %v6864, %v6866
      %v6868 = vrot.slane %v6799, %v6867
      %v6870 = vunpack.c.l.s4 1983009808
      %v6871 = vunpack.c.0.s8 %v6870
      %v6872 = vlaneseq
      %v6873 = vshrl.u32 %v6872, 7
      %v6874 = vsub.s32 %v6871, %v6873
      %v6875 = vrot.slane %v6861, %v6874
      %v6876 = vcombine.high %v6868, %v6868
      %v6877 = vcombine.high %v6875, %v6875
      %v6878 = vcombine.high %v6800, %v6800
      %v6880 = vunpack.c.l.s4 1983009808
      %v6881 = vunpack.c.0.s8 %v6880
      %v6882 = vlaneseq
      %v6883 = vshrl.u32 %v6882, 7
      %v6884 = vsub.s32 %v6881, %v6883
      %v6885 = vrot.slane %v6800, %v6884
      %v6887 = vunpack.c.l.s4 1983009808
      %v6888 = vunpack.c.0.s8 %v6887
      %v6889 = vlaneseq
      %v6890 = vshrl.u32 %v6889, 7
      %v6891 = vsub.s32 %v6888, %v6890
      %v6892 = vrot.slane %v6878, %v6891
      %v6893 = vcombine.high %v6885, %v6885
      %v6894 = vcombine.high %v6892, %v6892
      %v6895 = vcombine.high %v6801, %v6801
      %v6897 = vunpack.c.l.s4 1983009808
      %v6898 = vunpack.c.0.s8 %v6897
      %v6899 = vlaneseq
      %v6900 = vshrl.u32 %v6899, 7
      %v6901 = vsub.s32 %v6898, %v6900
      %v6902 = vrot.slane %v6801, %v6901
      %v6904 = vunpack.c.l.s4 1983009808
      %v6905 = vunpack.c.0.s8 %v6904
      %v6906 = vlaneseq
      %v6907 = vshrl.u32 %v6906, 7
      %v6908 = vsub.s32 %v6905, %v6907
      %v6909 = vrot.slane %v6895, %v6908
      %v6910 = vcombine.high %v6902, %v6902
      %v6911 = vcombine.high %v6909, %v6909
      %v6913 = vunpack.c.l.s4 1983009808
      %v6914 = vunpack.c.0.s8 %v6913
      %v6915 = vlaneseq
      %v6916 = vshrl.u32 %v6915, 7
      %v6917 = vsub.s32 %v6914, %v6916
      %v6918 = vrot.slane %v6802, %v6917
      %v6919 = vcombine.high %v6918, %v6918
      %6920 = vrot.lane.b32.xlu0 %v6817, 90
      %v6921 = vpop.permute.xlu0 %6920
      %6922 = vrot.lane.b32.xlu0 %v6825, 90
      %v6923 = vpop.permute.xlu0 %6922
      %6924 = vrot.lane.b32.xlu0 %v6824, 90
      %v6925 = vpop.permute.xlu0 %6924
      %6926 = vrot.lane.b32.xlu0 %v6826, 90
      %v6927 = vpop.permute.xlu0 %6926
      %6928 = vrot.lane.b32.xlu0 %v6834, 90
      %v6929 = vpop.permute.xlu0 %6928
      %6930 = vrot.lane.b32.xlu0 %v6842, 90
      %v6931 = vpop.permute.xlu0 %6930
      %6932 = vrot.lane.b32.xlu0 %v6841, 90
      %v6933 = vpop.permute.xlu0 %6932
      %6934 = vrot.lane.b32.xlu0 %v6843, 90
      %v6935 = vpop.permute.xlu0 %6934
      %6936 = vrot.lane.b32.xlu0 %v6851, 90
      %v6937 = vpop.permute.xlu0 %6936
      %6938 = vrot.lane.b32.xlu0 %v6859, 90
      %v6939 = vpop.permute.xlu0 %6938
      %6940 = vrot.lane.b32.xlu0 %v6858, 90
      %v6941 = vpop.permute.xlu0 %6940
      %6942 = vrot.lane.b32.xlu0 %v6860, 90
      %v6943 = vpop.permute.xlu0 %6942
      %6944 = vrot.lane.b32.xlu0 %v6868, 90
      %v6945 = vpop.permute.xlu0 %6944
      %6946 = vrot.lane.b32.xlu0 %v6876, 90
      %v6947 = vpop.permute.xlu0 %6946
      %6948 = vrot.lane.b32.xlu0 %v6875, 90
      %v6949 = vpop.permute.xlu0 %6948
      %6950 = vrot.lane.b32.xlu0 %v6877, 90
      %v6951 = vpop.permute.xlu0 %6950
      %6952 = vrot.lane.b32.xlu0 %v6885, 90
      %v6953 = vpop.permute.xlu0 %6952
      %6954 = vrot.lane.b32.xlu0 %v6893, 90
      %v6955 = vpop.permute.xlu0 %6954
      %6956 = vrot.lane.b32.xlu0 %v6892, 90
      %v6957 = vpop.permute.xlu0 %6956
      %6958 = vrot.lane.b32.xlu0 %v6894, 90
      %v6959 = vpop.permute.xlu0 %6958
      %6960 = vrot.lane.b32.xlu0 %v6902, 90
      %v6961 = vpop.permute.xlu0 %6960
      %6962 = vrot.lane.b32.xlu0 %v6910, 90
      %v6963 = vpop.permute.xlu0 %6962
      %6964 = vrot.lane.b32.xlu0 %v6909, 90
      %v6965 = vpop.permute.xlu0 %6964
      %6966 = vrot.lane.b32.xlu0 %v6911, 90
      %v6967 = vpop.permute.xlu0 %6966
      %6968 = vrot.lane.b32.xlu0 %v6918, 90
      %v6969 = vpop.permute.xlu0 %6968
      %6970 = vrot.lane.b32.xlu0 %v6919, 90
      %v6971 = vpop.permute.xlu0 %6970
      %vm6972 = vcmask 736256
      %v6973 = vsel %vm6972, %v6921, %v6923
      %v6974 = vsel %vm6972, %v6923, %v6925
      %v6975 = vsel %vm6972, %v6925, %v6927
      %v6976 = vsel %vm6972, %v6927, %v6929
      %v6977 = vsel %vm6972, %v6929, %v6931
      %v6978 = vsel %vm6972, %v6931, %v6933
      %v6979 = vsel %vm6972, %v6933, %v6935
      %v6980 = vsel %vm6972, %v6935, %v6937
      %v6981 = vsel %vm6972, %v6937, %v6939
      %v6982 = vsel %vm6972, %v6939, %v6941
      %v6983 = vsel %vm6972, %v6941, %v6943
      %v6984 = vsel %vm6972, %v6943, %v6945
      %v6985 = vsel %vm6972, %v6945, %v6947
      %v6986 = vsel %vm6972, %v6947, %v6949
      %v6987 = vsel %vm6972, %v6949, %v6951
      %v6988 = vsel %vm6972, %v6951, %v6953
      %v6989 = vsel %vm6972, %v6953, %v6955
      %v6990 = vsel %vm6972, %v6955, %v6957
      %v6991 = vsel %vm6972, %v6957, %v6959
      %v6992 = vsel %vm6972, %v6959, %v6961
      %v6993 = vsel %vm6972, %v6961, %v6963
      %v6994 = vsel %vm6972, %v6963, %v6965
      %v6995 = vsel %vm6972, %v6965, %v6967
      %v6996 = vsel %vm6972, %v6967, %v6969
      %v6997 = vsel %vm6972, %v6969, %v6971
      %v6999 = vsel %vm500, %v6795, 0
      %v7002 = vsel %vm504, %v6973, 0
      %v7005 = vsel %vm504, %v6974, 0
      %v7008 = vsel %vm504, %v6975, 0
      %v7011 = vsel %vm504, %v6976, 0
      %v7014 = vsel %vm504, %v6977, 0
      %v7017 = vsel %vm504, %v6978, 0
      %v7020 = vsel %vm504, %v6979, 0
      %v7023 = vsel %vm504, %v6980, 0
      %v7026 = vsel %vm504, %v6981, 0
      %v7029 = vsel %vm504, %v6982, 0
      %v7032 = vsel %vm504, %v6983, 0
      %v7035 = vsel %vm504, %v6984, 0
      %v7038 = vsel %vm504, %v6985, 0
      %v7041 = vsel %vm504, %v6986, 0
      %v7044 = vsel %vm504, %v6987, 0
      %v7047 = vsel %vm504, %v6988, 0
      %v7050 = vsel %vm504, %v6989, 0
      %v7053 = vsel %vm504, %v6990, 0
      %v7056 = vsel %vm504, %v6991, 0
      %v7059 = vsel %vm504, %v6992, 0
      %v7062 = vsel %vm504, %v6993, 0
      %v7065 = vsel %vm504, %v6994, 0
      %v7068 = vsel %vm504, %v6995, 0
      %v7071 = vsel %vm504, %v6996, 0
      %v7074 = vsel %vm504, %v6997, 0
      %v7077 = vsel %vm504, %v6971, 0
      %7079 = vmatprep.subr.bf16.mxu0 0
      %7080 = vmatpush1.bf16.msra.mxu0 0
      %7081 = vmatprep.subr.bf16.mxu0 0
      %7082 = vmatpush1.bf16.msra.mxu0 0
      %7083 = vmatprep.subr.bf16.mxu0 0
      %7084 = vmatpush1.bf16.msra.mxu0 0
      %7085 = vmatprep.subr.bf16.mxu0 0
      %7086 = vmatpush1.bf16.msra.mxu0 0
      %7087 = vmatprep.subr.bf16.mxu0 0
      %7088 = vmatpush1.bf16.msra.mxu0 0
      %7089 = vmatprep.subr.bf16.mxu0 0
      %7090 = vmatpush1.bf16.msra.mxu0 0
      %7091 = vmatprep.subr.bf16.mxu0 0
      %7092 = vmatpush1.bf16.msra.mxu0 0
      %7093 = vmatprep.subr.bf16.mxu0 %v7005
      %7094 = vmatpush1.bf16.msra.mxu0 %v7002
      %7095 = vmatprep.subr.bf16.mxu0 0
      %7096 = vmatpush2.bf16.msra.mxu0 0
      %7097 = vmatprep.subr.bf16.mxu0 0
      %7098 = vmatpush2.bf16.msra.mxu0 0
      %7099 = vmatprep.subr.bf16.mxu0 0
      %7100 = vmatpush2.bf16.msra.mxu0 0
      %7101 = vmatprep.subr.bf16.mxu0 0
      %7102 = vmatpush2.bf16.msra.mxu0 0
      %7103 = vmatprep.subr.bf16.mxu0 0
      %7104 = vmatpush2.bf16.msra.mxu0 0
      %7105 = vmatprep.subr.bf16.mxu0 0
      %7106 = vmatpush2.bf16.msra.mxu0 0
      %7107 = vmatprep.subr.bf16.mxu0 0
      %7108 = vmatpush2.bf16.msra.mxu0 0
      %7109 = vmatprep.subr.bf16.mxu0 0
      %7110 = vmatpush2.bf16.msra.mxu0 0
      %7111 = vmatprep.mubr.bf16.mxu0 0
      %7112 = vmatmul.mubr.bf16.gmra.mxu0 %v6999
      %v7113 = vpop.f32.mrf.mxu0
      %v7114 = vadd.f32 0.0, %v7113
      %v7115 = vpop.f32.mrf.mxu0
      %v7116 = vadd.f32 0.0, %v7115
      %v7117 = vpop.f32.mrf.mxu0
      %v7118 = vpop.f32.mrf.mxu0
      %7119 = vdwg.mxu0
      %7120 = vmatprep.subr.bf16.mxu0 0
      %7121 = vmatpush1.bf16.msra.mxu0 0
      %7122 = vmatprep.subr.bf16.mxu0 0
      %7123 = vmatpush1.bf16.msra.mxu0 0
      %7124 = vmatprep.subr.bf16.mxu0 0
      %7125 = vmatpush1.bf16.msra.mxu0 0
      %7126 = vmatprep.subr.bf16.mxu0 0
      %7127 = vmatpush1.bf16.msra.mxu0 0
      %7128 = vmatprep.subr.bf16.mxu0 0
      %7129 = vmatpush1.bf16.msra.mxu0 0
      %7130 = vmatprep.subr.bf16.mxu0 0
      %7131 = vmatpush1.bf16.msra.mxu0 0
      %7132 = vmatprep.subr.bf16.mxu0 0
      %7133 = vmatpush1.bf16.msra.mxu0 0
      %7134 = vmatprep.subr.bf16.mxu0 %v7011
      %7135 = vmatpush1.bf16.msra.mxu0 %v7008
      %7136 = vmatprep.subr.bf16.mxu0 0
      %7137 = vmatpush2.bf16.msra.mxu0 0
      %7138 = vmatprep.subr.bf16.mxu0 0
      %7139 = vmatpush2.bf16.msra.mxu0 0
      %7140 = vmatprep.subr.bf16.mxu0 0
      %7141 = vmatpush2.bf16.msra.mxu0 0
      %7142 = vmatprep.subr.bf16.mxu0 0
      %7143 = vmatpush2.bf16.msra.mxu0 0
      %7144 = vmatprep.subr.bf16.mxu0 0
      %7145 = vmatpush2.bf16.msra.mxu0 0
      %7146 = vmatprep.subr.bf16.mxu0 0
      %7147 = vmatpush2.bf16.msra.mxu0 0
      %7148 = vmatprep.subr.bf16.mxu0 0
      %7149 = vmatpush2.bf16.msra.mxu0 0
      %7150 = vmatprep.subr.bf16.mxu0 0
      %7151 = vmatpush2.bf16.msra.mxu0 0
      %7152 = vmatprep.mubr.bf16.mxu0 0
      %7153 = vmatmul.mubr.bf16.gmra.mxu0 %v6999
      %v7154 = vpop.f32.mrf.mxu0
      %v7155 = vadd.f32 0.0, %v7154
      %v7156 = vpop.f32.mrf.mxu0
      %v7157 = vadd.f32 0.0, %v7156
      %v7158 = vpop.f32.mrf.mxu0
      %v7159 = vpop.f32.mrf.mxu0
      %7160 = vdwg.mxu0
      %7161 = vmatprep.subr.bf16.mxu0 0
      %7162 = vmatpush1.bf16.msra.mxu0 0
      %7163 = vmatprep.subr.bf16.mxu0 0
      %7164 = vmatpush1.bf16.msra.mxu0 0
      %7165 = vmatprep.subr.bf16.mxu0 0
      %7166 = vmatpush1.bf16.msra.mxu0 0
      %7167 = vmatprep.subr.bf16.mxu0 0
      %7168 = vmatpush1.bf16.msra.mxu0 0
      %7169 = vmatprep.subr.bf16.mxu0 0
      %7170 = vmatpush1.bf16.msra.mxu0 0
      %7171 = vmatprep.subr.bf16.mxu0 0
      %7172 = vmatpush1.bf16.msra.mxu0 0
      %7173 = vmatprep.subr.bf16.mxu0 0
      %7174 = vmatpush1.bf16.msra.mxu0 0
      %7175 = vmatprep.subr.bf16.mxu0 %v7017
      %7176 = vmatpush1.bf16.msra.mxu0 %v7014
      %7177 = vmatprep.subr.bf16.mxu0 0
      %7178 = vmatpush2.bf16.msra.mxu0 0
      %7179 = vmatprep.subr.bf16.mxu0 0
      %7180 = vmatpush2.bf16.msra.mxu0 0
      %7181 = vmatprep.subr.bf16.mxu0 0
      %7182 = vmatpush2.bf16.msra.mxu0 0
      %7183 = vmatprep.subr.bf16.mxu0 0
      %7184 = vmatpush2.bf16.msra.mxu0 0
      %7185 = vmatprep.subr.bf16.mxu0 0
      %7186 = vmatpush2.bf16.msra.mxu0 0
      %7187 = vmatprep.subr.bf16.mxu0 0
      %7188 = vmatpush2.bf16.msra.mxu0 0
      %7189 = vmatprep.subr.bf16.mxu0 0
      %7190 = vmatpush2.bf16.msra.mxu0 0
      %7191 = vmatprep.subr.bf16.mxu0 0
      %7192 = vmatpush2.bf16.msra.mxu0 0
      %7193 = vmatprep.mubr.bf16.mxu0 0
      %7194 = vmatmul.mubr.bf16.gmra.mxu0 %v6999
      %v7195 = vpop.f32.mrf.mxu0
      %v7196 = vadd.f32 0.0, %v7195
      %v7197 = vpop.f32.mrf.mxu0
      %v7198 = vadd.f32 0.0, %v7197
      %v7199 = vpop.f32.mrf.mxu0
      %v7200 = vpop.f32.mrf.mxu0
      %7201 = vdwg.mxu0
      %7202 = vmatprep.subr.bf16.mxu0 0
      %7203 = vmatpush1.bf16.msra.mxu0 0
      %7204 = vmatprep.subr.bf16.mxu0 0
      %7205 = vmatpush1.bf16.msra.mxu0 0
      %7206 = vmatprep.subr.bf16.mxu0 0
      %7207 = vmatpush1.bf16.msra.mxu0 0
      %7208 = vmatprep.subr.bf16.mxu0 0
      %7209 = vmatpush1.bf16.msra.mxu0 0
      %7210 = vmatprep.subr.bf16.mxu0 0
      %7211 = vmatpush1.bf16.msra.mxu0 0
      %7212 = vmatprep.subr.bf16.mxu0 0
      %7213 = vmatpush1.bf16.msra.mxu0 0
      %7214 = vmatprep.subr.bf16.mxu0 0
      %7215 = vmatpush1.bf16.msra.mxu0 0
      %7216 = vmatprep.subr.bf16.mxu0 %v7023
      %7217 = vmatpush1.bf16.msra.mxu0 %v7020
      %7218 = vmatprep.subr.bf16.mxu0 0
      %7219 = vmatpush2.bf16.msra.mxu0 0
      %7220 = vmatprep.subr.bf16.mxu0 0
      %7221 = vmatpush2.bf16.msra.mxu0 0
      %7222 = vmatprep.subr.bf16.mxu0 0
      %7223 = vmatpush2.bf16.msra.mxu0 0
      %7224 = vmatprep.subr.bf16.mxu0 0
      %7225 = vmatpush2.bf16.msra.mxu0 0
      %7226 = vmatprep.subr.bf16.mxu0 0
      %7227 = vmatpush2.bf16.msra.mxu0 0
      %7228 = vmatprep.subr.bf16.mxu0 0
      %7229 = vmatpush2.bf16.msra.mxu0 0
      %7230 = vmatprep.subr.bf16.mxu0 0
      %7231 = vmatpush2.bf16.msra.mxu0 0
      %7232 = vmatprep.subr.bf16.mxu0 0
      %7233 = vmatpush2.bf16.msra.mxu0 0
      %7234 = vmatprep.mubr.bf16.mxu0 0
      %7235 = vmatmul.mubr.bf16.gmra.mxu0 %v6999
      %v7236 = vpop.f32.mrf.mxu0
      %v7237 = vadd.f32 0.0, %v7236
      %v7238 = vpop.f32.mrf.mxu0
      %v7239 = vadd.f32 0.0, %v7238
      %v7240 = vpop.f32.mrf.mxu0
      %v7241 = vpop.f32.mrf.mxu0
      %7242 = vdwg.mxu0
      %7243 = vmatprep.subr.bf16.mxu0 0
      %7244 = vmatpush1.bf16.msra.mxu0 0
      %7245 = vmatprep.subr.bf16.mxu0 0
      %7246 = vmatpush1.bf16.msra.mxu0 0
      %7247 = vmatprep.subr.bf16.mxu0 0
      %7248 = vmatpush1.bf16.msra.mxu0 0
      %7249 = vmatprep.subr.bf16.mxu0 0
      %7250 = vmatpush1.bf16.msra.mxu0 0
      %7251 = vmatprep.subr.bf16.mxu0 0
      %7252 = vmatpush1.bf16.msra.mxu0 0
      %7253 = vmatprep.subr.bf16.mxu0 0
      %7254 = vmatpush1.bf16.msra.mxu0 0
      %7255 = vmatprep.subr.bf16.mxu0 0
      %7256 = vmatpush1.bf16.msra.mxu0 0
      %7257 = vmatprep.subr.bf16.mxu0 %v7029
      %7258 = vmatpush1.bf16.msra.mxu0 %v7026
      %7259 = vmatprep.subr.bf16.mxu0 0
      %7260 = vmatpush2.bf16.msra.mxu0 0
      %7261 = vmatprep.subr.bf16.mxu0 0
      %7262 = vmatpush2.bf16.msra.mxu0 0
      %7263 = vmatprep.subr.bf16.mxu0 0
      %7264 = vmatpush2.bf16.msra.mxu0 0
      %7265 = vmatprep.subr.bf16.mxu0 0
      %7266 = vmatpush2.bf16.msra.mxu0 0
      %7267 = vmatprep.subr.bf16.mxu0 0
      %7268 = vmatpush2.bf16.msra.mxu0 0
      %7269 = vmatprep.subr.bf16.mxu0 0
      %7270 = vmatpush2.bf16.msra.mxu0 0
      %7271 = vmatprep.subr.bf16.mxu0 0
      %7272 = vmatpush2.bf16.msra.mxu0 0
      %7273 = vmatprep.subr.bf16.mxu0 0
      %7274 = vmatpush2.bf16.msra.mxu0 0
      %7275 = vmatprep.mubr.bf16.mxu0 0
      %7276 = vmatmul.mubr.bf16.gmra.mxu0 %v6999
      %v7277 = vpop.f32.mrf.mxu0
      %v7278 = vadd.f32 0.0, %v7277
      %v7279 = vpop.f32.mrf.mxu0
      %v7280 = vadd.f32 0.0, %v7279
      %v7281 = vpop.f32.mrf.mxu0
      %v7282 = vpop.f32.mrf.mxu0
      %7283 = vdwg.mxu0
      %7284 = vmatprep.subr.bf16.mxu0 0
      %7285 = vmatpush1.bf16.msra.mxu0 0
      %7286 = vmatprep.subr.bf16.mxu0 0
      %7287 = vmatpush1.bf16.msra.mxu0 0
      %7288 = vmatprep.subr.bf16.mxu0 0
      %7289 = vmatpush1.bf16.msra.mxu0 0
      %7290 = vmatprep.subr.bf16.mxu0 0
      %7291 = vmatpush1.bf16.msra.mxu0 0
      %7292 = vmatprep.subr.bf16.mxu0 0
      %7293 = vmatpush1.bf16.msra.mxu0 0
      %7294 = vmatprep.subr.bf16.mxu0 0
      %7295 = vmatpush1.bf16.msra.mxu0 0
      %7296 = vmatprep.subr.bf16.mxu0 0
      %7297 = vmatpush1.bf16.msra.mxu0 0
      %7298 = vmatprep.subr.bf16.mxu0 %v7035
      %7299 = vmatpush1.bf16.msra.mxu0 %v7032
      %7300 = vmatprep.subr.bf16.mxu0 0
      %7301 = vmatpush2.bf16.msra.mxu0 0
      %7302 = vmatprep.subr.bf16.mxu0 0
      %7303 = vmatpush2.bf16.msra.mxu0 0
      %7304 = vmatprep.subr.bf16.mxu0 0
      %7305 = vmatpush2.bf16.msra.mxu0 0
      %7306 = vmatprep.subr.bf16.mxu0 0
      %7307 = vmatpush2.bf16.msra.mxu0 0
      %7308 = vmatprep.subr.bf16.mxu0 0
      %7309 = vmatpush2.bf16.msra.mxu0 0
      %7310 = vmatprep.subr.bf16.mxu0 0
      %7311 = vmatpush2.bf16.msra.mxu0 0
      %7312 = vmatprep.subr.bf16.mxu0 0
      %7313 = vmatpush2.bf16.msra.mxu0 0
      %7314 = vmatprep.subr.bf16.mxu0 0
      %7315 = vmatpush2.bf16.msra.mxu0 0
      %7316 = vmatprep.mubr.bf16.mxu0 0
      %7317 = vmatmul.mubr.bf16.gmra.mxu0 %v6999
      %v7318 = vpop.f32.mrf.mxu0
      %v7319 = vadd.f32 0.0, %v7318
      %v7320 = vpop.f32.mrf.mxu0
      %v7321 = vadd.f32 0.0, %v7320
      %v7322 = vpop.f32.mrf.mxu0
      %v7323 = vpop.f32.mrf.mxu0
      %7324 = vdwg.mxu0
      %7325 = vmatprep.subr.bf16.mxu0 0
      %7326 = vmatpush1.bf16.msra.mxu0 0
      %7327 = vmatprep.subr.bf16.mxu0 0
      %7328 = vmatpush1.bf16.msra.mxu0 0
      %7329 = vmatprep.subr.bf16.mxu0 0
      %7330 = vmatpush1.bf16.msra.mxu0 0
      %7331 = vmatprep.subr.bf16.mxu0 0
      %7332 = vmatpush1.bf16.msra.mxu0 0
      %7333 = vmatprep.subr.bf16.mxu0 0
      %7334 = vmatpush1.bf16.msra.mxu0 0
      %7335 = vmatprep.subr.bf16.mxu0 0
      %7336 = vmatpush1.bf16.msra.mxu0 0
      %7337 = vmatprep.subr.bf16.mxu0 0
      %7338 = vmatpush1.bf16.msra.mxu0 0
      %7339 = vmatprep.subr.bf16.mxu0 %v7041
      %7340 = vmatpush1.bf16.msra.mxu0 %v7038
      %7341 = vmatprep.subr.bf16.mxu0 0
      %7342 = vmatpush2.bf16.msra.mxu0 0
      %7343 = vmatprep.subr.bf16.mxu0 0
      %7344 = vmatpush2.bf16.msra.mxu0 0
      %7345 = vmatprep.subr.bf16.mxu0 0
      %7346 = vmatpush2.bf16.msra.mxu0 0
      %7347 = vmatprep.subr.bf16.mxu0 0
      %7348 = vmatpush2.bf16.msra.mxu0 0
      %7349 = vmatprep.subr.bf16.mxu0 0
      %7350 = vmatpush2.bf16.msra.mxu0 0
      %7351 = vmatprep.subr.bf16.mxu0 0
      %7352 = vmatpush2.bf16.msra.mxu0 0
      %7353 = vmatprep.subr.bf16.mxu0 0
      %7354 = vmatpush2.bf16.msra.mxu0 0
      %7355 = vmatprep.subr.bf16.mxu0 0
      %7356 = vmatpush2.bf16.msra.mxu0 0
      %7357 = vmatprep.mubr.bf16.mxu0 0
      %7358 = vmatmul.mubr.bf16.gmra.mxu0 %v6999
      %v7359 = vpop.f32.mrf.mxu0
      %v7360 = vadd.f32 0.0, %v7359
      %v7361 = vpop.f32.mrf.mxu0
      %v7362 = vadd.f32 0.0, %v7361
      %v7363 = vpop.f32.mrf.mxu0
      %v7364 = vpop.f32.mrf.mxu0
      %7365 = vdwg.mxu0
      %7366 = vmatprep.subr.bf16.mxu0 0
      %7367 = vmatpush1.bf16.msra.mxu0 0
      %7368 = vmatprep.subr.bf16.mxu0 0
      %7369 = vmatpush1.bf16.msra.mxu0 0
      %7370 = vmatprep.subr.bf16.mxu0 0
      %7371 = vmatpush1.bf16.msra.mxu0 0
      %7372 = vmatprep.subr.bf16.mxu0 0
      %7373 = vmatpush1.bf16.msra.mxu0 0
      %7374 = vmatprep.subr.bf16.mxu0 0
      %7375 = vmatpush1.bf16.msra.mxu0 0
      %7376 = vmatprep.subr.bf16.mxu0 0
      %7377 = vmatpush1.bf16.msra.mxu0 0
      %7378 = vmatprep.subr.bf16.mxu0 0
      %7379 = vmatpush1.bf16.msra.mxu0 0
      %7380 = vmatprep.subr.bf16.mxu0 %v7047
      %7381 = vmatpush1.bf16.msra.mxu0 %v7044
      %7382 = vmatprep.subr.bf16.mxu0 0
      %7383 = vmatpush2.bf16.msra.mxu0 0
      %7384 = vmatprep.subr.bf16.mxu0 0
      %7385 = vmatpush2.bf16.msra.mxu0 0
      %7386 = vmatprep.subr.bf16.mxu0 0
      %7387 = vmatpush2.bf16.msra.mxu0 0
      %7388 = vmatprep.subr.bf16.mxu0 0
      %7389 = vmatpush2.bf16.msra.mxu0 0
      %7390 = vmatprep.subr.bf16.mxu0 0
      %7391 = vmatpush2.bf16.msra.mxu0 0
      %7392 = vmatprep.subr.bf16.mxu0 0
      %7393 = vmatpush2.bf16.msra.mxu0 0
      %7394 = vmatprep.subr.bf16.mxu0 0
      %7395 = vmatpush2.bf16.msra.mxu0 0
      %7396 = vmatprep.subr.bf16.mxu0 0
      %7397 = vmatpush2.bf16.msra.mxu0 0
      %7398 = vmatprep.mubr.bf16.mxu0 0
      %7399 = vmatmul.mubr.bf16.gmra.mxu0 %v6999
      %v7400 = vpop.f32.mrf.mxu0
      %v7401 = vadd.f32 0.0, %v7400
      %v7402 = vpop.f32.mrf.mxu0
      %v7403 = vadd.f32 0.0, %v7402
      %v7404 = vpop.f32.mrf.mxu0
      %v7405 = vpop.f32.mrf.mxu0
      %7406 = vdwg.mxu0
      %7407 = vmatprep.subr.bf16.mxu0 0
      %7408 = vmatpush1.bf16.msra.mxu0 0
      %7409 = vmatprep.subr.bf16.mxu0 0
      %7410 = vmatpush1.bf16.msra.mxu0 0
      %7411 = vmatprep.subr.bf16.mxu0 0
      %7412 = vmatpush1.bf16.msra.mxu0 0
      %7413 = vmatprep.subr.bf16.mxu0 0
      %7414 = vmatpush1.bf16.msra.mxu0 0
      %7415 = vmatprep.subr.bf16.mxu0 0
      %7416 = vmatpush1.bf16.msra.mxu0 0
      %7417 = vmatprep.subr.bf16.mxu0 0
      %7418 = vmatpush1.bf16.msra.mxu0 0
      %7419 = vmatprep.subr.bf16.mxu0 0
      %7420 = vmatpush1.bf16.msra.mxu0 0
      %7421 = vmatprep.subr.bf16.mxu0 %v7053
      %7422 = vmatpush1.bf16.msra.mxu0 %v7050
      %7423 = vmatprep.subr.bf16.mxu0 0
      %7424 = vmatpush2.bf16.msra.mxu0 0
      %7425 = vmatprep.subr.bf16.mxu0 0
      %7426 = vmatpush2.bf16.msra.mxu0 0
      %7427 = vmatprep.subr.bf16.mxu0 0
      %7428 = vmatpush2.bf16.msra.mxu0 0
      %7429 = vmatprep.subr.bf16.mxu0 0
      %7430 = vmatpush2.bf16.msra.mxu0 0
      %7431 = vmatprep.subr.bf16.mxu0 0
      %7432 = vmatpush2.bf16.msra.mxu0 0
      %7433 = vmatprep.subr.bf16.mxu0 0
      %7434 = vmatpush2.bf16.msra.mxu0 0
      %7435 = vmatprep.subr.bf16.mxu0 0
      %7436 = vmatpush2.bf16.msra.mxu0 0
      %7437 = vmatprep.subr.bf16.mxu0 0
      %7438 = vmatpush2.bf16.msra.mxu0 0
      %7439 = vmatprep.mubr.bf16.mxu0 0
      %7440 = vmatmul.mubr.bf16.gmra.mxu0 %v6999
      %v7441 = vpop.f32.mrf.mxu0
      %v7442 = vadd.f32 0.0, %v7441
      %v7443 = vpop.f32.mrf.mxu0
      %v7444 = vadd.f32 0.0, %v7443
      %v7445 = vpop.f32.mrf.mxu0
      %v7446 = vpop.f32.mrf.mxu0
      %7447 = vdwg.mxu0
      %7448 = vmatprep.subr.bf16.mxu0 0
      %7449 = vmatpush1.bf16.msra.mxu0 0
      %7450 = vmatprep.subr.bf16.mxu0 0
      %7451 = vmatpush1.bf16.msra.mxu0 0
      %7452 = vmatprep.subr.bf16.mxu0 0
      %7453 = vmatpush1.bf16.msra.mxu0 0
      %7454 = vmatprep.subr.bf16.mxu0 0
      %7455 = vmatpush1.bf16.msra.mxu0 0
      %7456 = vmatprep.subr.bf16.mxu0 0
      %7457 = vmatpush1.bf16.msra.mxu0 0
      %7458 = vmatprep.subr.bf16.mxu0 0
      %7459 = vmatpush1.bf16.msra.mxu0 0
      %7460 = vmatprep.subr.bf16.mxu0 0
      %7461 = vmatpush1.bf16.msra.mxu0 0
      %7462 = vmatprep.subr.bf16.mxu0 %v7059
      %7463 = vmatpush1.bf16.msra.mxu0 %v7056
      %7464 = vmatprep.subr.bf16.mxu0 0
      %7465 = vmatpush2.bf16.msra.mxu0 0
      %7466 = vmatprep.subr.bf16.mxu0 0
      %7467 = vmatpush2.bf16.msra.mxu0 0
      %7468 = vmatprep.subr.bf16.mxu0 0
      %7469 = vmatpush2.bf16.msra.mxu0 0
      %7470 = vmatprep.subr.bf16.mxu0 0
      %7471 = vmatpush2.bf16.msra.mxu0 0
      %7472 = vmatprep.subr.bf16.mxu0 0
      %7473 = vmatpush2.bf16.msra.mxu0 0
      %7474 = vmatprep.subr.bf16.mxu0 0
      %7475 = vmatpush2.bf16.msra.mxu0 0
      %7476 = vmatprep.subr.bf16.mxu0 0
      %7477 = vmatpush2.bf16.msra.mxu0 0
      %7478 = vmatprep.subr.bf16.mxu0 0
      %7479 = vmatpush2.bf16.msra.mxu0 0
      %7480 = vmatprep.mubr.bf16.mxu0 0
      %7481 = vmatmul.mubr.bf16.gmra.mxu0 %v6999
      %v7482 = vpop.f32.mrf.mxu0
      %v7483 = vadd.f32 0.0, %v7482
      %v7484 = vpop.f32.mrf.mxu0
      %v7485 = vadd.f32 0.0, %v7484
      %v7486 = vpop.f32.mrf.mxu0
      %v7487 = vpop.f32.mrf.mxu0
      %7488 = vdwg.mxu0
      %7489 = vmatprep.subr.bf16.mxu0 0
      %7490 = vmatpush1.bf16.msra.mxu0 0
      %7491 = vmatprep.subr.bf16.mxu0 0
      %7492 = vmatpush1.bf16.msra.mxu0 0
      %7493 = vmatprep.subr.bf16.mxu0 0
      %7494 = vmatpush1.bf16.msra.mxu0 0
      %7495 = vmatprep.subr.bf16.mxu0 0
      %7496 = vmatpush1.bf16.msra.mxu0 0
      %7497 = vmatprep.subr.bf16.mxu0 0
      %7498 = vmatpush1.bf16.msra.mxu0 0
      %7499 = vmatprep.subr.bf16.mxu0 0
      %7500 = vmatpush1.bf16.msra.mxu0 0
      %7501 = vmatprep.subr.bf16.mxu0 0
      %7502 = vmatpush1.bf16.msra.mxu0 0
      %7503 = vmatprep.subr.bf16.mxu0 %v7065
      %7504 = vmatpush1.bf16.msra.mxu0 %v7062
      %7505 = vmatprep.subr.bf16.mxu0 0
      %7506 = vmatpush2.bf16.msra.mxu0 0
      %7507 = vmatprep.subr.bf16.mxu0 0
      %7508 = vmatpush2.bf16.msra.mxu0 0
      %7509 = vmatprep.subr.bf16.mxu0 0
      %7510 = vmatpush2.bf16.msra.mxu0 0
      %7511 = vmatprep.subr.bf16.mxu0 0
      %7512 = vmatpush2.bf16.msra.mxu0 0
      %7513 = vmatprep.subr.bf16.mxu0 0
      %7514 = vmatpush2.bf16.msra.mxu0 0
      %7515 = vmatprep.subr.bf16.mxu0 0
      %7516 = vmatpush2.bf16.msra.mxu0 0
      %7517 = vmatprep.subr.bf16.mxu0 0
      %7518 = vmatpush2.bf16.msra.mxu0 0
      %7519 = vmatprep.subr.bf16.mxu0 0
      %7520 = vmatpush2.bf16.msra.mxu0 0
      %7521 = vmatprep.mubr.bf16.mxu0 0
      %7522 = vmatmul.mubr.bf16.gmra.mxu0 %v6999
      %v7523 = vpop.f32.mrf.mxu0
      %v7524 = vadd.f32 0.0, %v7523
      %v7525 = vpop.f32.mrf.mxu0
      %v7526 = vadd.f32 0.0, %v7525
      %v7527 = vpop.f32.mrf.mxu0
      %v7528 = vpop.f32.mrf.mxu0
      %7529 = vdwg.mxu0
      %7530 = vmatprep.subr.bf16.mxu0 0
      %7531 = vmatpush1.bf16.msra.mxu0 0
      %7532 = vmatprep.subr.bf16.mxu0 0
      %7533 = vmatpush1.bf16.msra.mxu0 0
      %7534 = vmatprep.subr.bf16.mxu0 0
      %7535 = vmatpush1.bf16.msra.mxu0 0
      %7536 = vmatprep.subr.bf16.mxu0 0
      %7537 = vmatpush1.bf16.msra.mxu0 0
      %7538 = vmatprep.subr.bf16.mxu0 0
      %7539 = vmatpush1.bf16.msra.mxu0 0
      %7540 = vmatprep.subr.bf16.mxu0 0
      %7541 = vmatpush1.bf16.msra.mxu0 0
      %7542 = vmatprep.subr.bf16.mxu0 0
      %7543 = vmatpush1.bf16.msra.mxu0 0
      %7544 = vmatprep.subr.bf16.mxu0 %v7071
      %7545 = vmatpush1.bf16.msra.mxu0 %v7068
      %7546 = vmatprep.subr.bf16.mxu0 0
      %7547 = vmatpush2.bf16.msra.mxu0 0
      %7548 = vmatprep.subr.bf16.mxu0 0
      %7549 = vmatpush2.bf16.msra.mxu0 0
      %7550 = vmatprep.subr.bf16.mxu0 0
      %7551 = vmatpush2.bf16.msra.mxu0 0
      %7552 = vmatprep.subr.bf16.mxu0 0
      %7553 = vmatpush2.bf16.msra.mxu0 0
      %7554 = vmatprep.subr.bf16.mxu0 0
      %7555 = vmatpush2.bf16.msra.mxu0 0
      %7556 = vmatprep.subr.bf16.mxu0 0
      %7557 = vmatpush2.bf16.msra.mxu0 0
      %7558 = vmatprep.subr.bf16.mxu0 0
      %7559 = vmatpush2.bf16.msra.mxu0 0
      %7560 = vmatprep.subr.bf16.mxu0 0
      %7561 = vmatpush2.bf16.msra.mxu0 0
      %7562 = vmatprep.mubr.bf16.mxu0 0
      %7563 = vmatmul.mubr.bf16.gmra.mxu0 %v6999
      %v7564 = vpop.f32.mrf.mxu0
      %v7565 = vadd.f32 0.0, %v7564
      %v7566 = vpop.f32.mrf.mxu0
      %v7567 = vadd.f32 0.0, %v7566
      %v7568 = vpop.f32.mrf.mxu0
      %v7569 = vpop.f32.mrf.mxu0
      %7570 = vdwg.mxu0
      %7571 = vmatprep.subr.bf16.mxu0 0
      %7572 = vmatpush1.bf16.msra.mxu0 0
      %7573 = vmatprep.subr.bf16.mxu0 0
      %7574 = vmatpush1.bf16.msra.mxu0 0
      %7575 = vmatprep.subr.bf16.mxu0 0
      %7576 = vmatpush1.bf16.msra.mxu0 0
      %7577 = vmatprep.subr.bf16.mxu0 0
      %7578 = vmatpush1.bf16.msra.mxu0 0
      %7579 = vmatprep.subr.bf16.mxu0 0
      %7580 = vmatpush1.bf16.msra.mxu0 0
      %7581 = vmatprep.subr.bf16.mxu0 0
      %7582 = vmatpush1.bf16.msra.mxu0 0
      %7583 = vmatprep.subr.bf16.mxu0 0
      %7584 = vmatpush1.bf16.msra.mxu0 0
      %7585 = vmatprep.subr.bf16.mxu0 %v7077
      %7586 = vmatpush1.bf16.msra.mxu0 %v7074
      %7587 = vmatprep.subr.bf16.mxu0 0
      %7588 = vmatpush2.bf16.msra.mxu0 0
      %7589 = vmatprep.subr.bf16.mxu0 0
      %7590 = vmatpush2.bf16.msra.mxu0 0
      %7591 = vmatprep.subr.bf16.mxu0 0
      %7592 = vmatpush2.bf16.msra.mxu0 0
      %7593 = vmatprep.subr.bf16.mxu0 0
      %7594 = vmatpush2.bf16.msra.mxu0 0
      %7595 = vmatprep.subr.bf16.mxu0 0
      %7596 = vmatpush2.bf16.msra.mxu0 0
      %7597 = vmatprep.subr.bf16.mxu0 0
      %7598 = vmatpush2.bf16.msra.mxu0 0
      %7599 = vmatprep.subr.bf16.mxu0 0
      %7600 = vmatpush2.bf16.msra.mxu0 0
      %7601 = vmatprep.subr.bf16.mxu0 0
      %7602 = vmatpush2.bf16.msra.mxu0 0
      %7603 = vmatprep.mubr.bf16.mxu0 0
      %7604 = vmatmul.mubr.bf16.gmra.mxu0 %v6999
      %v7605 = vpop.f32.mrf.mxu0
      %v7606 = vadd.f32 0.0, %v7605
      %v7607 = vpop.f32.mrf.mxu0
      %v7608 = vadd.f32 0.0, %v7607
      %v7609 = vpop.f32.mrf.mxu0
      %v7610 = vpop.f32.mrf.mxu0
      %7611 = vdwg.mxu0
      %v7612 = vadd.f32 %v6768, %v7114
      %v7613 = vadd.f32 %v6769, %v7116
      %v7614 = vadd.f32 %v6770, %v7155
      %v7615 = vadd.f32 %v6771, %v7157
      %v7616 = vadd.f32 %v6772, %v7196
      %v7617 = vadd.f32 %v6773, %v7198
      %v7618 = vadd.f32 %v6774, %v7237
      %v7619 = vadd.f32 %v6775, %v7239
      %v7620 = vadd.f32 %v6776, %v7278
      %v7621 = vadd.f32 %v6777, %v7280
      %v7622 = vadd.f32 %v6778, %v7319
      %v7623 = vadd.f32 %v6779, %v7321
      %v7624 = vadd.f32 %v6780, %v7360
      %v7625 = vadd.f32 %v6781, %v7362
      %v7626 = vadd.f32 %v6782, %v7401
      %v7627 = vadd.f32 %v6783, %v7403
      %v7628 = vadd.f32 %v6784, %v7442
      %v7629 = vadd.f32 %v6785, %v7444
      %v7630 = vadd.f32 %v6786, %v7483
      %v7631 = vadd.f32 %v6787, %v7485
      %v7632 = vadd.f32 %v6788, %v7524
      %v7633 = vadd.f32 %v6789, %v7526
      %v7634 = vadd.f32 %v6790, %v7565
      %v7635 = vadd.f32 %v6791, %v7567
      %v7636 = vadd.f32 %v6792, %v7606
      %v7637 = vadd.f32 %v6793, %v7608
      %v7638 = vld [vmem:[%s2] sm:$0xff]
      %7640 = vset.pattern.permute.xlu0 0
      %7641 = vperm.xlu0 %7640, %v7638
      %v7642 = vpop.permute.xlu0 %7641
      %v7644 = vadd.f32 %v7612, %v7642
      %v7645 = vadd.f32 %v7613, %v7642
      %v7646 = vadd.f32 %v7614, %v7642
      %v7647 = vadd.f32 %v7615, %v7642
      %v7648 = vadd.f32 %v7616, %v7642
      %v7649 = vadd.f32 %v7617, %v7642
      %v7650 = vadd.f32 %v7618, %v7642
      %v7651 = vadd.f32 %v7619, %v7642
      %v7652 = vadd.f32 %v7620, %v7642
      %v7653 = vadd.f32 %v7621, %v7642
      %v7654 = vadd.f32 %v7622, %v7642
      %v7655 = vadd.f32 %v7623, %v7642
      %v7656 = vadd.f32 %v7624, %v7642
      %v7657 = vadd.f32 %v7625, %v7642
      %v7658 = vadd.f32 %v7626, %v7642
      %v7659 = vadd.f32 %v7627, %v7642
      %v7660 = vadd.f32 %v7628, %v7642
      %v7661 = vadd.f32 %v7629, %v7642
      %v7662 = vadd.f32 %v7630, %v7642
      %v7663 = vadd.f32 %v7631, %v7642
      %v7664 = vadd.f32 %v7632, %v7642
      %v7665 = vadd.f32 %v7633, %v7642
      %v7666 = vadd.f32 %v7634, %v7642
      %v7667 = vadd.f32 %v7635, %v7642
      %v7668 = vadd.f32 %v7636, %v7642
      %v7669 = vadd.f32 %v7637, %v7642
      %v7670 = vmax.f32 %v7644, 0.0
      %v7671 = vmax.f32 %v7645, 0.0
      %v7672 = vmax.f32 %v7646, 0.0
      %v7673 = vmax.f32 %v7647, 0.0
      %v7674 = vmax.f32 %v7648, 0.0
      %v7675 = vmax.f32 %v7649, 0.0
      %v7676 = vmax.f32 %v7650, 0.0
      %v7677 = vmax.f32 %v7651, 0.0
      %v7678 = vmax.f32 %v7652, 0.0
      %v7679 = vmax.f32 %v7653, 0.0
      %v7680 = vmax.f32 %v7654, 0.0
      %v7681 = vmax.f32 %v7655, 0.0
      %v7682 = vmax.f32 %v7656, 0.0
      %v7683 = vmax.f32 %v7657, 0.0
      %v7684 = vmax.f32 %v7658, 0.0
      %v7685 = vmax.f32 %v7659, 0.0
      %v7686 = vmax.f32 %v7660, 0.0
      %v7687 = vmax.f32 %v7661, 0.0
      %v7688 = vmax.f32 %v7662, 0.0
      %v7689 = vmax.f32 %v7663, 0.0
      %v7690 = vmax.f32 %v7664, 0.0
      %v7691 = vmax.f32 %v7665, 0.0
      %v7692 = vmax.f32 %v7666, 0.0
      %v7693 = vmax.f32 %v7667, 0.0
      %v7694 = vmax.f32 %v7668, 0.0
      %v7695 = vmax.f32 %v7669, 0.0
      %v7696 = vld [vmem:[%s5] sm:$0xff]
      %v7697 = vld [vmem:[%s5 + $0x8] sm:$0xff]
      %v7698 = vld [vmem:[%s5 + $0x10] sm:$0xff]
      %v7699 = vld [vmem:[%s5 + $0x18] sm:$0xff]
      %v7700 = vld [vmem:[%s5 + $0x20] sm:$0xff]
      %v7701 = vld [vmem:[%s5 + $0x28] sm:$0xff]
      %v7702 = vld [vmem:[%s5 + $0x30] sm:$0xff]
      %v7703 = vld [vmem:[%s5 + $0x38] sm:$0xff]
      %v7704 = vld [vmem:[%s5 + $0x40] sm:$0xff]
      %v7705 = vld [vmem:[%s5 + $0x48] sm:$0xff]
      %v7706 = vld [vmem:[%s5 + $0x50] sm:$0xff]
      %v7707 = vld [vmem:[%s5 + $0x58] sm:$0xff]
      %v7708 = vld [vmem:[%s5 + $0x60] sm:$0xff]
      %v7709 = vld [vmem:[%s5 + $0x68] sm:$0xff]
      %v7710 = vld [vmem:[%s5 + $0x70] sm:$0xff]
      %v7711 = vld [vmem:[%s5 + $0x78] sm:$0xff]
      %v7712 = vld [vmem:[%s5 + $0x80] sm:$0xff]
      %v7713 = vld [vmem:[%s5 + $0x88] sm:$0xff]
      %v7714 = vld [vmem:[%s5 + $0x90] sm:$0xff]
      %v7715 = vld [vmem:[%s5 + $0x98] sm:$0xff]
      %v7716 = vld [vmem:[%s5 + $0xa0] sm:$0xff]
      %v7717 = vld [vmem:[%s5 + $0xa8] sm:$0xff]
      %v7718 = vld [vmem:[%s5 + $0xb0] sm:$0xff]
      %v7719 = vld [vmem:[%s5 + $0xb8] sm:$0xff]
      %v7720 = vld [vmem:[%s5 + $0xc0] sm:$0xff]
      %v7721 = vld [vmem:[%s5 + $0xc8] sm:$0xff]
      %v7722 = vld [vmem:[%s5 + $0xd0] sm:$0x3]
      %v7723 = vld [vmem:[%s5 + $0xd8] sm:$0x3]
      %v7724 = vld [vmem:[%s5 + $0xe0] sm:$0x3]
      %v7725 = vld [vmem:[%s5 + $0xe8] sm:$0x3]
      %v7726 = vld [vmem:[%s5 + $0xf0] sm:$0x3]
      %v7727 = vld [vmem:[%s5 + $0xf8] sm:$0x3]
      %v7728 = vld [vmem:[%s5 + $0x100] sm:$0x3]
      %v7729 = vld [vmem:[%s5 + $0x108] sm:$0x3]
      %v7730 = vld [vmem:[%s5 + $0x110] sm:$0x3]
      %v7731 = vld [vmem:[%s5 + $0x118] sm:$0x3]
      %v7732 = vld [vmem:[%s5 + $0x120] sm:$0x3]
      %v7733 = vld [vmem:[%s5 + $0x128] sm:$0x3]
      %v7734 = vld [vmem:[%s5 + $0x130] sm:$0x3]
      %v7735 = vld [vmem:[%s5 + $0x138] sm:$0x3]
      %v7736 = vld [vmem:[%s5 + $0x140] sm:$0x3]
      %v7737 = vld [vmem:[%s5 + $0x148] sm:$0x3]
      %v7738 = vld [vmem:[%s5 + $0x150] sm:$0x3]
      %v7739 = vld [vmem:[%s5 + $0x158] sm:$0x3]
      %v7740 = vld [vmem:[%s5 + $0x160] sm:$0x3]
      %v7741 = vld [vmem:[%s5 + $0x168] sm:$0x3]
      %v7742 = vld [vmem:[%s5 + $0x170] sm:$0x3]
      %v7743 = vld [vmem:[%s5 + $0x178] sm:$0x3]
      %v7744 = vld [vmem:[%s5 + $0x180] sm:$0x3]
      %v7745 = vld [vmem:[%s5 + $0x188] sm:$0x3]
      %v7746 = vld [vmem:[%s5 + $0x190] sm:$0x3]
      %v7747 = vld [vmem:[%s5 + $0x198] sm:$0x3]
      %vm7748 = vcmask 326656
      %v7750 = vsel %vm7748, %v7721, 0
      %v7753 = vsel %vm7748, %v7747, 0
      %v7756 = vsel %vm7748, %v7695, 0
      %7758 = vmatprep.subr.mxu0 0.0
      %7759 = vmatpush1.xpose.msra.mxu0 0.0
      %7760 = vmatprep.subr.mxu0 0.0
      %7761 = vmatpush1.xpose.msra.mxu0 0.0
      %7762 = vmatprep.subr.mxu0 0.0
      %7763 = vmatpush1.xpose.msra.mxu0 0.0
      %7764 = vmatprep.subr.mxu0 0.0
      %7765 = vmatpush1.xpose.msra.mxu0 0.0
      %7766 = vmatprep.subr.mxu0 0.0
      %7767 = vmatpush1.xpose.msra.mxu0 0.0
      %7768 = vmatprep.subr.mxu0 0.0
      %7769 = vmatpush1.xpose.msra.mxu0 0.0
      %7770 = vmatprep.subr.mxu0 0.0
      %7771 = vmatpush1.xpose.msra.mxu0 0.0
      %7772 = vmatprep.subr.mxu0 0.0
      %7773 = vmatpush1.xpose.msra.mxu0 0.0
      %7774 = vmatprep.subr.mxu0 0.0
      %7775 = vmatpush1.xpose.msra.mxu0 0.0
      %7776 = vmatprep.subr.mxu0 0.0
      %7777 = vmatpush1.xpose.msra.mxu0 0.0
      %7778 = vmatprep.subr.mxu0 0.0
      %7779 = vmatpush1.xpose.msra.mxu0 0.0
      %7780 = vmatprep.subr.mxu0 0.0
      %7781 = vmatpush1.xpose.msra.mxu0 0.0
      %7782 = vmatprep.subr.mxu0 0.0
      %7783 = vmatpush1.xpose.msra.mxu0 0.0
      %7784 = vmatprep.subr.mxu0 0.0
      %7785 = vmatpush1.xpose.msra.mxu0 0.0
      %7786 = vmatprep.subr.mxu0 0.0
      %7787 = vmatpush1.xpose.msra.mxu0 0.0
      %7788 = vmatprep.subr.mxu0 %v7671
      %7789 = vmatpush1.xpose.msra.mxu0 %v7670
      %7790 = vmatprep.subr.mxu0 0.0
      %7791 = vmatpush2.xpose.msra.mxu0 0.0
      %7792 = vmatprep.subr.mxu0 0.0
      %7793 = vmatpush2.xpose.msra.mxu0 0.0
      %7794 = vmatprep.subr.mxu0 0.0
      %7795 = vmatpush2.xpose.msra.mxu0 0.0
      %7796 = vmatprep.subr.mxu0 0.0
      %7797 = vmatpush2.xpose.msra.mxu0 0.0
      %7798 = vmatprep.subr.mxu0 0.0
      %7799 = vmatpush2.xpose.msra.mxu0 0.0
      %7800 = vmatprep.subr.mxu0 0.0
      %7801 = vmatpush2.xpose.msra.mxu0 0.0
      %7802 = vmatprep.subr.mxu0 0.0
      %7803 = vmatpush2.xpose.msra.mxu0 0.0
      %7804 = vmatprep.subr.mxu0 0.0
      %7805 = vmatpush2.xpose.msra.mxu0 0.0
      %7806 = vmatprep.subr.mxu0 0.0
      %7807 = vmatpush2.xpose.msra.mxu0 0.0
      %7808 = vmatprep.subr.mxu0 0.0
      %7809 = vmatpush2.xpose.msra.mxu0 0.0
      %7810 = vmatprep.subr.mxu0 0.0
      %7811 = vmatpush2.xpose.msra.mxu0 0.0
      %7812 = vmatprep.subr.mxu0 0.0
      %7813 = vmatpush2.xpose.msra.mxu0 0.0
      %7814 = vmatprep.subr.mxu0 0.0
      %7815 = vmatpush2.xpose.msra.mxu0 0.0
      %7816 = vmatprep.subr.mxu0 0.0
      %7817 = vmatpush2.xpose.msra.mxu0 0.0
      %7818 = vmatprep.subr.mxu0 0.0
      %7819 = vmatpush2.xpose.msra.mxu0 0.0
      %7820 = vmatprep.subr.mxu0 0.0
      %7821 = vmatpush2.xpose.msra.mxu0 0.0
      %7822 = vmatprep.mubr.f32.mxu0 %v7697
      %7823 = vmatmul.mubr.f32.gmra.mxu0 %v7696
      %v7824 = vpop.f32.mrf.mxu0
      %v7825 = vadd.f32 0.0, %v7824
      %v7826 = vpop.f32.mrf.mxu0
      %7827 = vmatprep.mubr.f32.mxu0 %v7723
      %7828 = vmatmul.mubr.f32.gmra.mxu0 %v7722
      %v7829 = vpop.f32.mrf.mxu0
      %v7830 = vadd.f32 0.0, %v7829
      %v7831 = vpop.f32.mrf.mxu0
      %7832 = vdwg.mxu0
      %7833 = vmatprep.subr.mxu0 0.0
      %7834 = vmatpush1.xpose.msra.mxu0 0.0
      %7835 = vmatprep.subr.mxu0 0.0
      %7836 = vmatpush1.xpose.msra.mxu0 0.0
      %7837 = vmatprep.subr.mxu0 0.0
      %7838 = vmatpush1.xpose.msra.mxu0 0.0
      %7839 = vmatprep.subr.mxu0 0.0
      %7840 = vmatpush1.xpose.msra.mxu0 0.0
      %7841 = vmatprep.subr.mxu0 0.0
      %7842 = vmatpush1.xpose.msra.mxu0 0.0
      %7843 = vmatprep.subr.mxu0 0.0
      %7844 = vmatpush1.xpose.msra.mxu0 0.0
      %7845 = vmatprep.subr.mxu0 0.0
      %7846 = vmatpush1.xpose.msra.mxu0 0.0
      %7847 = vmatprep.subr.mxu0 0.0
      %7848 = vmatpush1.xpose.msra.mxu0 0.0
      %7849 = vmatprep.subr.mxu0 0.0
      %7850 = vmatpush1.xpose.msra.mxu0 0.0
      %7851 = vmatprep.subr.mxu0 0.0
      %7852 = vmatpush1.xpose.msra.mxu0 0.0
      %7853 = vmatprep.subr.mxu0 0.0
      %7854 = vmatpush1.xpose.msra.mxu0 0.0
      %7855 = vmatprep.subr.mxu0 0.0
      %7856 = vmatpush1.xpose.msra.mxu0 0.0
      %7857 = vmatprep.subr.mxu0 0.0
      %7858 = vmatpush1.xpose.msra.mxu0 0.0
      %7859 = vmatprep.subr.mxu0 0.0
      %7860 = vmatpush1.xpose.msra.mxu0 0.0
      %7861 = vmatprep.subr.mxu0 0.0
      %7862 = vmatpush1.xpose.msra.mxu0 0.0
      %7863 = vmatprep.subr.mxu0 %v7673
      %7864 = vmatpush1.xpose.msra.mxu0 %v7672
      %7865 = vmatprep.subr.mxu0 0.0
      %7866 = vmatpush2.xpose.msra.mxu0 0.0
      %7867 = vmatprep.subr.mxu0 0.0
      %7868 = vmatpush2.xpose.msra.mxu0 0.0
      %7869 = vmatprep.subr.mxu0 0.0
      %7870 = vmatpush2.xpose.msra.mxu0 0.0
      %7871 = vmatprep.subr.mxu0 0.0
      %7872 = vmatpush2.xpose.msra.mxu0 0.0
      %7873 = vmatprep.subr.mxu0 0.0
      %7874 = vmatpush2.xpose.msra.mxu0 0.0
      %7875 = vmatprep.subr.mxu0 0.0
      %7876 = vmatpush2.xpose.msra.mxu0 0.0
      %7877 = vmatprep.subr.mxu0 0.0
      %7878 = vmatpush2.xpose.msra.mxu0 0.0
      %7879 = vmatprep.subr.mxu0 0.0
      %7880 = vmatpush2.xpose.msra.mxu0 0.0
      %7881 = vmatprep.subr.mxu0 0.0
      %7882 = vmatpush2.xpose.msra.mxu0 0.0
      %7883 = vmatprep.subr.mxu0 0.0
      %7884 = vmatpush2.xpose.msra.mxu0 0.0
      %7885 = vmatprep.subr.mxu0 0.0
      %7886 = vmatpush2.xpose.msra.mxu0 0.0
      %7887 = vmatprep.subr.mxu0 0.0
      %7888 = vmatpush2.xpose.msra.mxu0 0.0
      %7889 = vmatprep.subr.mxu0 0.0
      %7890 = vmatpush2.xpose.msra.mxu0 0.0
      %7891 = vmatprep.subr.mxu0 0.0
      %7892 = vmatpush2.xpose.msra.mxu0 0.0
      %7893 = vmatprep.subr.mxu0 0.0
      %7894 = vmatpush2.xpose.msra.mxu0 0.0
      %7895 = vmatprep.subr.mxu0 0.0
      %7896 = vmatpush2.xpose.msra.mxu0 0.0
      %7897 = vmatprep.mubr.f32.mxu0 %v7699
      %7898 = vmatmul.mubr.f32.gmra.mxu0 %v7698
      %v7899 = vpop.f32.mrf.mxu0
      %v7900 = vadd.f32 %v7825, %v7899
      %v7901 = vpop.f32.mrf.mxu0
      %7902 = vmatprep.mubr.f32.mxu0 %v7725
      %7903 = vmatmul.mubr.f32.gmra.mxu0 %v7724
      %v7904 = vpop.f32.mrf.mxu0
      %v7905 = vadd.f32 %v7830, %v7904
      %v7906 = vpop.f32.mrf.mxu0
      %7907 = vdwg.mxu0
      %7908 = vmatprep.subr.mxu0 0.0
      %7909 = vmatpush1.xpose.msra.mxu0 0.0
      %7910 = vmatprep.subr.mxu0 0.0
      %7911 = vmatpush1.xpose.msra.mxu0 0.0
      %7912 = vmatprep.subr.mxu0 0.0
      %7913 = vmatpush1.xpose.msra.mxu0 0.0
      %7914 = vmatprep.subr.mxu0 0.0
      %7915 = vmatpush1.xpose.msra.mxu0 0.0
      %7916 = vmatprep.subr.mxu0 0.0
      %7917 = vmatpush1.xpose.msra.mxu0 0.0
      %7918 = vmatprep.subr.mxu0 0.0
      %7919 = vmatpush1.xpose.msra.mxu0 0.0
      %7920 = vmatprep.subr.mxu0 0.0
      %7921 = vmatpush1.xpose.msra.mxu0 0.0
      %7922 = vmatprep.subr.mxu0 0.0
      %7923 = vmatpush1.xpose.msra.mxu0 0.0
      %7924 = vmatprep.subr.mxu0 0.0
      %7925 = vmatpush1.xpose.msra.mxu0 0.0
      %7926 = vmatprep.subr.mxu0 0.0
      %7927 = vmatpush1.xpose.msra.mxu0 0.0
      %7928 = vmatprep.subr.mxu0 0.0
      %7929 = vmatpush1.xpose.msra.mxu0 0.0
      %7930 = vmatprep.subr.mxu0 0.0
      %7931 = vmatpush1.xpose.msra.mxu0 0.0
      %7932 = vmatprep.subr.mxu0 0.0
      %7933 = vmatpush1.xpose.msra.mxu0 0.0
      %7934 = vmatprep.subr.mxu0 0.0
      %7935 = vmatpush1.xpose.msra.mxu0 0.0
      %7936 = vmatprep.subr.mxu0 0.0
      %7937 = vmatpush1.xpose.msra.mxu0 0.0
      %7938 = vmatprep.subr.mxu0 %v7675
      %7939 = vmatpush1.xpose.msra.mxu0 %v7674
      %7940 = vmatprep.subr.mxu0 0.0
      %7941 = vmatpush2.xpose.msra.mxu0 0.0
      %7942 = vmatprep.subr.mxu0 0.0
      %7943 = vmatpush2.xpose.msra.mxu0 0.0
      %7944 = vmatprep.subr.mxu0 0.0
      %7945 = vmatpush2.xpose.msra.mxu0 0.0
      %7946 = vmatprep.subr.mxu0 0.0
      %7947 = vmatpush2.xpose.msra.mxu0 0.0
      %7948 = vmatprep.subr.mxu0 0.0
      %7949 = vmatpush2.xpose.msra.mxu0 0.0
      %7950 = vmatprep.subr.mxu0 0.0
      %7951 = vmatpush2.xpose.msra.mxu0 0.0
      %7952 = vmatprep.subr.mxu0 0.0
      %7953 = vmatpush2.xpose.msra.mxu0 0.0
      %7954 = vmatprep.subr.mxu0 0.0
      %7955 = vmatpush2.xpose.msra.mxu0 0.0
      %7956 = vmatprep.subr.mxu0 0.0
      %7957 = vmatpush2.xpose.msra.mxu0 0.0
      %7958 = vmatprep.subr.mxu0 0.0
      %7959 = vmatpush2.xpose.msra.mxu0 0.0
      %7960 = vmatprep.subr.mxu0 0.0
      %7961 = vmatpush2.xpose.msra.mxu0 0.0
      %7962 = vmatprep.subr.mxu0 0.0
      %7963 = vmatpush2.xpose.msra.mxu0 0.0
      %7964 = vmatprep.subr.mxu0 0.0
      %7965 = vmatpush2.xpose.msra.mxu0 0.0
      %7966 = vmatprep.subr.mxu0 0.0
      %7967 = vmatpush2.xpose.msra.mxu0 0.0
      %7968 = vmatprep.subr.mxu0 0.0
      %7969 = vmatpush2.xpose.msra.mxu0 0.0
      %7970 = vmatprep.subr.mxu0 0.0
      %7971 = vmatpush2.xpose.msra.mxu0 0.0
      %7972 = vmatprep.mubr.f32.mxu0 %v7701
      %7973 = vmatmul.mubr.f32.gmra.mxu0 %v7700
      %v7974 = vpop.f32.mrf.mxu0
      %v7975 = vadd.f32 %v7900, %v7974
      %v7976 = vpop.f32.mrf.mxu0
      %7977 = vmatprep.mubr.f32.mxu0 %v7727
      %7978 = vmatmul.mubr.f32.gmra.mxu0 %v7726
      %v7979 = vpop.f32.mrf.mxu0
      %v7980 = vadd.f32 %v7905, %v7979
      %v7981 = vpop.f32.mrf.mxu0
      %7982 = vdwg.mxu0
      %7983 = vmatprep.subr.mxu0 0.0
      %7984 = vmatpush1.xpose.msra.mxu0 0.0
      %7985 = vmatprep.subr.mxu0 0.0
      %7986 = vmatpush1.xpose.msra.mxu0 0.0
      %7987 = vmatprep.subr.mxu0 0.0
      %7988 = vmatpush1.xpose.msra.mxu0 0.0
      %7989 = vmatprep.subr.mxu0 0.0
      %7990 = vmatpush1.xpose.msra.mxu0 0.0
      %7991 = vmatprep.subr.mxu0 0.0
      %7992 = vmatpush1.xpose.msra.mxu0 0.0
      %7993 = vmatprep.subr.mxu0 0.0
      %7994 = vmatpush1.xpose.msra.mxu0 0.0
      %7995 = vmatprep.subr.mxu0 0.0
      %7996 = vmatpush1.xpose.msra.mxu0 0.0
      %7997 = vmatprep.subr.mxu0 0.0
      %7998 = vmatpush1.xpose.msra.mxu0 0.0
      %7999 = vmatprep.subr.mxu0 0.0
      %8000 = vmatpush1.xpose.msra.mxu0 0.0
      %8001 = vmatprep.subr.mxu0 0.0
      %8002 = vmatpush1.xpose.msra.mxu0 0.0
      %8003 = vmatprep.subr.mxu0 0.0
      %8004 = vmatpush1.xpose.msra.mxu0 0.0
      %8005 = vmatprep.subr.mxu0 0.0
      %8006 = vmatpush1.xpose.msra.mxu0 0.0
      %8007 = vmatprep.subr.mxu0 0.0
      %8008 = vmatpush1.xpose.msra.mxu0 0.0
      %8009 = vmatprep.subr.mxu0 0.0
      %8010 = vmatpush1.xpose.msra.mxu0 0.0
      %8011 = vmatprep.subr.mxu0 0.0
      %8012 = vmatpush1.xpose.msra.mxu0 0.0
      %8013 = vmatprep.subr.mxu0 %v7677
      %8014 = vmatpush1.xpose.msra.mxu0 %v7676
      %8015 = vmatprep.subr.mxu0 0.0
      %8016 = vmatpush2.xpose.msra.mxu0 0.0
      %8017 = vmatprep.subr.mxu0 0.0
      %8018 = vmatpush2.xpose.msra.mxu0 0.0
      %8019 = vmatprep.subr.mxu0 0.0
      %8020 = vmatpush2.xpose.msra.mxu0 0.0
      %8021 = vmatprep.subr.mxu0 0.0
      %8022 = vmatpush2.xpose.msra.mxu0 0.0
      %8023 = vmatprep.subr.mxu0 0.0
      %8024 = vmatpush2.xpose.msra.mxu0 0.0
      %8025 = vmatprep.subr.mxu0 0.0
      %8026 = vmatpush2.xpose.msra.mxu0 0.0
      %8027 = vmatprep.subr.mxu0 0.0
      %8028 = vmatpush2.xpose.msra.mxu0 0.0
      %8029 = vmatprep.subr.mxu0 0.0
      %8030 = vmatpush2.xpose.msra.mxu0 0.0
      %8031 = vmatprep.subr.mxu0 0.0
      %8032 = vmatpush2.xpose.msra.mxu0 0.0
      %8033 = vmatprep.subr.mxu0 0.0
      %8034 = vmatpush2.xpose.msra.mxu0 0.0
      %8035 = vmatprep.subr.mxu0 0.0
      %8036 = vmatpush2.xpose.msra.mxu0 0.0
      %8037 = vmatprep.subr.mxu0 0.0
      %8038 = vmatpush2.xpose.msra.mxu0 0.0
      %8039 = vmatprep.subr.mxu0 0.0
      %8040 = vmatpush2.xpose.msra.mxu0 0.0
      %8041 = vmatprep.subr.mxu0 0.0
      %8042 = vmatpush2.xpose.msra.mxu0 0.0
      %8043 = vmatprep.subr.mxu0 0.0
      %8044 = vmatpush2.xpose.msra.mxu0 0.0
      %8045 = vmatprep.subr.mxu0 0.0
      %8046 = vmatpush2.xpose.msra.mxu0 0.0
      %8047 = vmatprep.mubr.f32.mxu0 %v7703
      %8048 = vmatmul.mubr.f32.gmra.mxu0 %v7702
      %v8049 = vpop.f32.mrf.mxu0
      %v8050 = vadd.f32 %v7975, %v8049
      %v8051 = vpop.f32.mrf.mxu0
      %8052 = vmatprep.mubr.f32.mxu0 %v7729
      %8053 = vmatmul.mubr.f32.gmra.mxu0 %v7728
      %v8054 = vpop.f32.mrf.mxu0
      %v8055 = vadd.f32 %v7980, %v8054
      %v8056 = vpop.f32.mrf.mxu0
      %8057 = vdwg.mxu0
      %8058 = vmatprep.subr.mxu0 0.0
      %8059 = vmatpush1.xpose.msra.mxu0 0.0
      %8060 = vmatprep.subr.mxu0 0.0
      %8061 = vmatpush1.xpose.msra.mxu0 0.0
      %8062 = vmatprep.subr.mxu0 0.0
      %8063 = vmatpush1.xpose.msra.mxu0 0.0
      %8064 = vmatprep.subr.mxu0 0.0
      %8065 = vmatpush1.xpose.msra.mxu0 0.0
      %8066 = vmatprep.subr.mxu0 0.0
      %8067 = vmatpush1.xpose.msra.mxu0 0.0
      %8068 = vmatprep.subr.mxu0 0.0
      %8069 = vmatpush1.xpose.msra.mxu0 0.0
      %8070 = vmatprep.subr.mxu0 0.0
      %8071 = vmatpush1.xpose.msra.mxu0 0.0
      %8072 = vmatprep.subr.mxu0 0.0
      %8073 = vmatpush1.xpose.msra.mxu0 0.0
      %8074 = vmatprep.subr.mxu0 0.0
      %8075 = vmatpush1.xpose.msra.mxu0 0.0
      %8076 = vmatprep.subr.mxu0 0.0
      %8077 = vmatpush1.xpose.msra.mxu0 0.0
      %8078 = vmatprep.subr.mxu0 0.0
      %8079 = vmatpush1.xpose.msra.mxu0 0.0
      %8080 = vmatprep.subr.mxu0 0.0
      %8081 = vmatpush1.xpose.msra.mxu0 0.0
      %8082 = vmatprep.subr.mxu0 0.0
      %8083 = vmatpush1.xpose.msra.mxu0 0.0
      %8084 = vmatprep.subr.mxu0 0.0
      %8085 = vmatpush1.xpose.msra.mxu0 0.0
      %8086 = vmatprep.subr.mxu0 0.0
      %8087 = vmatpush1.xpose.msra.mxu0 0.0
      %8088 = vmatprep.subr.mxu0 %v7679
      %8089 = vmatpush1.xpose.msra.mxu0 %v7678
      %8090 = vmatprep.subr.mxu0 0.0
      %8091 = vmatpush2.xpose.msra.mxu0 0.0
      %8092 = vmatprep.subr.mxu0 0.0
      %8093 = vmatpush2.xpose.msra.mxu0 0.0
      %8094 = vmatprep.subr.mxu0 0.0
      %8095 = vmatpush2.xpose.msra.mxu0 0.0
      %8096 = vmatprep.subr.mxu0 0.0
      %8097 = vmatpush2.xpose.msra.mxu0 0.0
      %8098 = vmatprep.subr.mxu0 0.0
      %8099 = vmatpush2.xpose.msra.mxu0 0.0
      %8100 = vmatprep.subr.mxu0 0.0
      %8101 = vmatpush2.xpose.msra.mxu0 0.0
      %8102 = vmatprep.subr.mxu0 0.0
      %8103 = vmatpush2.xpose.msra.mxu0 0.0
      %8104 = vmatprep.subr.mxu0 0.0
      %8105 = vmatpush2.xpose.msra.mxu0 0.0
      %8106 = vmatprep.subr.mxu0 0.0
      %8107 = vmatpush2.xpose.msra.mxu0 0.0
      %8108 = vmatprep.subr.mxu0 0.0
      %8109 = vmatpush2.xpose.msra.mxu0 0.0
      %8110 = vmatprep.subr.mxu0 0.0
      %8111 = vmatpush2.xpose.msra.mxu0 0.0
      %8112 = vmatprep.subr.mxu0 0.0
      %8113 = vmatpush2.xpose.msra.mxu0 0.0
      %8114 = vmatprep.subr.mxu0 0.0
      %8115 = vmatpush2.xpose.msra.mxu0 0.0
      %8116 = vmatprep.subr.mxu0 0.0
      %8117 = vmatpush2.xpose.msra.mxu0 0.0
      %8118 = vmatprep.subr.mxu0 0.0
      %8119 = vmatpush2.xpose.msra.mxu0 0.0
      %8120 = vmatprep.subr.mxu0 0.0
      %8121 = vmatpush2.xpose.msra.mxu0 0.0
      %8122 = vmatprep.mubr.f32.mxu0 %v7705
      %8123 = vmatmul.mubr.f32.gmra.mxu0 %v7704
      %v8124 = vpop.f32.mrf.mxu0
      %v8125 = vadd.f32 %v8050, %v8124
      %v8126 = vpop.f32.mrf.mxu0
      %8127 = vmatprep.mubr.f32.mxu0 %v7731
      %8128 = vmatmul.mubr.f32.gmra.mxu0 %v7730
      %v8129 = vpop.f32.mrf.mxu0
      %v8130 = vadd.f32 %v8055, %v8129
      %v8131 = vpop.f32.mrf.mxu0
      %8132 = vdwg.mxu0
      %8133 = vmatprep.subr.mxu0 0.0
      %8134 = vmatpush1.xpose.msra.mxu0 0.0
      %8135 = vmatprep.subr.mxu0 0.0
      %8136 = vmatpush1.xpose.msra.mxu0 0.0
      %8137 = vmatprep.subr.mxu0 0.0
      %8138 = vmatpush1.xpose.msra.mxu0 0.0
      %8139 = vmatprep.subr.mxu0 0.0
      %8140 = vmatpush1.xpose.msra.mxu0 0.0
      %8141 = vmatprep.subr.mxu0 0.0
      %8142 = vmatpush1.xpose.msra.mxu0 0.0
      %8143 = vmatprep.subr.mxu0 0.0
      %8144 = vmatpush1.xpose.msra.mxu0 0.0
      %8145 = vmatprep.subr.mxu0 0.0
      %8146 = vmatpush1.xpose.msra.mxu0 0.0
      %8147 = vmatprep.subr.mxu0 0.0
      %8148 = vmatpush1.xpose.msra.mxu0 0.0
      %8149 = vmatprep.subr.mxu0 0.0
      %8150 = vmatpush1.xpose.msra.mxu0 0.0
      %8151 = vmatprep.subr.mxu0 0.0
      %8152 = vmatpush1.xpose.msra.mxu0 0.0
      %8153 = vmatprep.subr.mxu0 0.0
      %8154 = vmatpush1.xpose.msra.mxu0 0.0
      %8155 = vmatprep.subr.mxu0 0.0
      %8156 = vmatpush1.xpose.msra.mxu0 0.0
      %8157 = vmatprep.subr.mxu0 0.0
      %8158 = vmatpush1.xpose.msra.mxu0 0.0
      %8159 = vmatprep.subr.mxu0 0.0
      %8160 = vmatpush1.xpose.msra.mxu0 0.0
      %8161 = vmatprep.subr.mxu0 0.0
      %8162 = vmatpush1.xpose.msra.mxu0 0.0
      %8163 = vmatprep.subr.mxu0 %v7681
      %8164 = vmatpush1.xpose.msra.mxu0 %v7680
      %8165 = vmatprep.subr.mxu0 0.0
      %8166 = vmatpush2.xpose.msra.mxu0 0.0
      %8167 = vmatprep.subr.mxu0 0.0
      %8168 = vmatpush2.xpose.msra.mxu0 0.0
      %8169 = vmatprep.subr.mxu0 0.0
      %8170 = vmatpush2.xpose.msra.mxu0 0.0
      %8171 = vmatprep.subr.mxu0 0.0
      %8172 = vmatpush2.xpose.msra.mxu0 0.0
      %8173 = vmatprep.subr.mxu0 0.0
      %8174 = vmatpush2.xpose.msra.mxu0 0.0
      %8175 = vmatprep.subr.mxu0 0.0
      %8176 = vmatpush2.xpose.msra.mxu0 0.0
      %8177 = vmatprep.subr.mxu0 0.0
      %8178 = vmatpush2.xpose.msra.mxu0 0.0
      %8179 = vmatprep.subr.mxu0 0.0
      %8180 = vmatpush2.xpose.msra.mxu0 0.0
      %8181 = vmatprep.subr.mxu0 0.0
      %8182 = vmatpush2.xpose.msra.mxu0 0.0
      %8183 = vmatprep.subr.mxu0 0.0
      %8184 = vmatpush2.xpose.msra.mxu0 0.0
      %8185 = vmatprep.subr.mxu0 0.0
      %8186 = vmatpush2.xpose.msra.mxu0 0.0
      %8187 = vmatprep.subr.mxu0 0.0
      %8188 = vmatpush2.xpose.msra.mxu0 0.0
      %8189 = vmatprep.subr.mxu0 0.0
      %8190 = vmatpush2.xpose.msra.mxu0 0.0
      %8191 = vmatprep.subr.mxu0 0.0
      %8192 = vmatpush2.xpose.msra.mxu0 0.0
      %8193 = vmatprep.subr.mxu0 0.0
      %8194 = vmatpush2.xpose.msra.mxu0 0.0
      %8195 = vmatprep.subr.mxu0 0.0
      %8196 = vmatpush2.xpose.msra.mxu0 0.0
      %8197 = vmatprep.mubr.f32.mxu0 %v7707
      %8198 = vmatmul.mubr.f32.gmra.mxu0 %v7706
      %v8199 = vpop.f32.mrf.mxu0
      %v8200 = vadd.f32 %v8125, %v8199
      %v8201 = vpop.f32.mrf.mxu0
      %8202 = vmatprep.mubr.f32.mxu0 %v7733
      %8203 = vmatmul.mubr.f32.gmra.mxu0 %v7732
      %v8204 = vpop.f32.mrf.mxu0
      %v8205 = vadd.f32 %v8130, %v8204
      %v8206 = vpop.f32.mrf.mxu0
      %8207 = vdwg.mxu0
      %8208 = vmatprep.subr.mxu0 0.0
      %8209 = vmatpush1.xpose.msra.mxu0 0.0
      %8210 = vmatprep.subr.mxu0 0.0
      %8211 = vmatpush1.xpose.msra.mxu0 0.0
      %8212 = vmatprep.subr.mxu0 0.0
      %8213 = vmatpush1.xpose.msra.mxu0 0.0
      %8214 = vmatprep.subr.mxu0 0.0
      %8215 = vmatpush1.xpose.msra.mxu0 0.0
      %8216 = vmatprep.subr.mxu0 0.0
      %8217 = vmatpush1.xpose.msra.mxu0 0.0
      %8218 = vmatprep.subr.mxu0 0.0
      %8219 = vmatpush1.xpose.msra.mxu0 0.0
      %8220 = vmatprep.subr.mxu0 0.0
      %8221 = vmatpush1.xpose.msra.mxu0 0.0
      %8222 = vmatprep.subr.mxu0 0.0
      %8223 = vmatpush1.xpose.msra.mxu0 0.0
      %8224 = vmatprep.subr.mxu0 0.0
      %8225 = vmatpush1.xpose.msra.mxu0 0.0
      %8226 = vmatprep.subr.mxu0 0.0
      %8227 = vmatpush1.xpose.msra.mxu0 0.0
      %8228 = vmatprep.subr.mxu0 0.0
      %8229 = vmatpush1.xpose.msra.mxu0 0.0
      %8230 = vmatprep.subr.mxu0 0.0
      %8231 = vmatpush1.xpose.msra.mxu0 0.0
      %8232 = vmatprep.subr.mxu0 0.0
      %8233 = vmatpush1.xpose.msra.mxu0 0.0
      %8234 = vmatprep.subr.mxu0 0.0
      %8235 = vmatpush1.xpose.msra.mxu0 0.0
      %8236 = vmatprep.subr.mxu0 0.0
      %8237 = vmatpush1.xpose.msra.mxu0 0.0
      %8238 = vmatprep.subr.mxu0 %v7683
      %8239 = vmatpush1.xpose.msra.mxu0 %v7682
      %8240 = vmatprep.subr.mxu0 0.0
      %8241 = vmatpush2.xpose.msra.mxu0 0.0
      %8242 = vmatprep.subr.mxu0 0.0
      %8243 = vmatpush2.xpose.msra.mxu0 0.0
      %8244 = vmatprep.subr.mxu0 0.0
      %8245 = vmatpush2.xpose.msra.mxu0 0.0
      %8246 = vmatprep.subr.mxu0 0.0
      %8247 = vmatpush2.xpose.msra.mxu0 0.0
      %8248 = vmatprep.subr.mxu0 0.0
      %8249 = vmatpush2.xpose.msra.mxu0 0.0
      %8250 = vmatprep.subr.mxu0 0.0
      %8251 = vmatpush2.xpose.msra.mxu0 0.0
      %8252 = vmatprep.subr.mxu0 0.0
      %8253 = vmatpush2.xpose.msra.mxu0 0.0
      %8254 = vmatprep.subr.mxu0 0.0
      %8255 = vmatpush2.xpose.msra.mxu0 0.0
      %8256 = vmatprep.subr.mxu0 0.0
      %8257 = vmatpush2.xpose.msra.mxu0 0.0
      %8258 = vmatprep.subr.mxu0 0.0
      %8259 = vmatpush2.xpose.msra.mxu0 0.0
      %8260 = vmatprep.subr.mxu0 0.0
      %8261 = vmatpush2.xpose.msra.mxu0 0.0
      %8262 = vmatprep.subr.mxu0 0.0
      %8263 = vmatpush2.xpose.msra.mxu0 0.0
      %8264 = vmatprep.subr.mxu0 0.0
      %8265 = vmatpush2.xpose.msra.mxu0 0.0
      %8266 = vmatprep.subr.mxu0 0.0
      %8267 = vmatpush2.xpose.msra.mxu0 0.0
      %8268 = vmatprep.subr.mxu0 0.0
      %8269 = vmatpush2.xpose.msra.mxu0 0.0
      %8270 = vmatprep.subr.mxu0 0.0
      %8271 = vmatpush2.xpose.msra.mxu0 0.0
      %8272 = vmatprep.mubr.f32.mxu0 %v7709
      %8273 = vmatmul.mubr.f32.gmra.mxu0 %v7708
      %v8274 = vpop.f32.mrf.mxu0
      %v8275 = vadd.f32 %v8200, %v8274
      %v8276 = vpop.f32.mrf.mxu0
      %8277 = vmatprep.mubr.f32.mxu0 %v7735
      %8278 = vmatmul.mubr.f32.gmra.mxu0 %v7734
      %v8279 = vpop.f32.mrf.mxu0
      %v8280 = vadd.f32 %v8205, %v8279
      %v8281 = vpop.f32.mrf.mxu0
      %8282 = vdwg.mxu0
      %8283 = vmatprep.subr.mxu0 0.0
      %8284 = vmatpush1.xpose.msra.mxu0 0.0
      %8285 = vmatprep.subr.mxu0 0.0
      %8286 = vmatpush1.xpose.msra.mxu0 0.0
      %8287 = vmatprep.subr.mxu0 0.0
      %8288 = vmatpush1.xpose.msra.mxu0 0.0
      %8289 = vmatprep.subr.mxu0 0.0
      %8290 = vmatpush1.xpose.msra.mxu0 0.0
      %8291 = vmatprep.subr.mxu0 0.0
      %8292 = vmatpush1.xpose.msra.mxu0 0.0
      %8293 = vmatprep.subr.mxu0 0.0
      %8294 = vmatpush1.xpose.msra.mxu0 0.0
      %8295 = vmatprep.subr.mxu0 0.0
      %8296 = vmatpush1.xpose.msra.mxu0 0.0
      %8297 = vmatprep.subr.mxu0 0.0
      %8298 = vmatpush1.xpose.msra.mxu0 0.0
      %8299 = vmatprep.subr.mxu0 0.0
      %8300 = vmatpush1.xpose.msra.mxu0 0.0
      %8301 = vmatprep.subr.mxu0 0.0
      %8302 = vmatpush1.xpose.msra.mxu0 0.0
      %8303 = vmatprep.subr.mxu0 0.0
      %8304 = vmatpush1.xpose.msra.mxu0 0.0
      %8305 = vmatprep.subr.mxu0 0.0
      %8306 = vmatpush1.xpose.msra.mxu0 0.0
      %8307 = vmatprep.subr.mxu0 0.0
      %8308 = vmatpush1.xpose.msra.mxu0 0.0
      %8309 = vmatprep.subr.mxu0 0.0
      %8310 = vmatpush1.xpose.msra.mxu0 0.0
      %8311 = vmatprep.subr.mxu0 0.0
      %8312 = vmatpush1.xpose.msra.mxu0 0.0
      %8313 = vmatprep.subr.mxu0 %v7685
      %8314 = vmatpush1.xpose.msra.mxu0 %v7684
      %8315 = vmatprep.subr.mxu0 0.0
      %8316 = vmatpush2.xpose.msra.mxu0 0.0
      %8317 = vmatprep.subr.mxu0 0.0
      %8318 = vmatpush2.xpose.msra.mxu0 0.0
      %8319 = vmatprep.subr.mxu0 0.0
      %8320 = vmatpush2.xpose.msra.mxu0 0.0
      %8321 = vmatprep.subr.mxu0 0.0
      %8322 = vmatpush2.xpose.msra.mxu0 0.0
      %8323 = vmatprep.subr.mxu0 0.0
      %8324 = vmatpush2.xpose.msra.mxu0 0.0
      %8325 = vmatprep.subr.mxu0 0.0
      %8326 = vmatpush2.xpose.msra.mxu0 0.0
      %8327 = vmatprep.subr.mxu0 0.0
      %8328 = vmatpush2.xpose.msra.mxu0 0.0
      %8329 = vmatprep.subr.mxu0 0.0
      %8330 = vmatpush2.xpose.msra.mxu0 0.0
      %8331 = vmatprep.subr.mxu0 0.0
      %8332 = vmatpush2.xpose.msra.mxu0 0.0
      %8333 = vmatprep.subr.mxu0 0.0
      %8334 = vmatpush2.xpose.msra.mxu0 0.0
      %8335 = vmatprep.subr.mxu0 0.0
      %8336 = vmatpush2.xpose.msra.mxu0 0.0
      %8337 = vmatprep.subr.mxu0 0.0
      %8338 = vmatpush2.xpose.msra.mxu0 0.0
      %8339 = vmatprep.subr.mxu0 0.0
      %8340 = vmatpush2.xpose.msra.mxu0 0.0
      %8341 = vmatprep.subr.mxu0 0.0
      %8342 = vmatpush2.xpose.msra.mxu0 0.0
      %8343 = vmatprep.subr.mxu0 0.0
      %8344 = vmatpush2.xpose.msra.mxu0 0.0
      %8345 = vmatprep.subr.mxu0 0.0
      %8346 = vmatpush2.xpose.msra.mxu0 0.0
      %8347 = vmatprep.mubr.f32.mxu0 %v7711
      %8348 = vmatmul.mubr.f32.gmra.mxu0 %v7710
      %v8349 = vpop.f32.mrf.mxu0
      %v8350 = vadd.f32 %v8275, %v8349
      %v8351 = vpop.f32.mrf.mxu0
      %8352 = vmatprep.mubr.f32.mxu0 %v7737
      %8353 = vmatmul.mubr.f32.gmra.mxu0 %v7736
      %v8354 = vpop.f32.mrf.mxu0
      %v8355 = vadd.f32 %v8280, %v8354
      %v8356 = vpop.f32.mrf.mxu0
      %8357 = vdwg.mxu0
      %8358 = vmatprep.subr.mxu0 0.0
      %8359 = vmatpush1.xpose.msra.mxu0 0.0
      %8360 = vmatprep.subr.mxu0 0.0
      %8361 = vmatpush1.xpose.msra.mxu0 0.0
      %8362 = vmatprep.subr.mxu0 0.0
      %8363 = vmatpush1.xpose.msra.mxu0 0.0
      %8364 = vmatprep.subr.mxu0 0.0
      %8365 = vmatpush1.xpose.msra.mxu0 0.0
      %8366 = vmatprep.subr.mxu0 0.0
      %8367 = vmatpush1.xpose.msra.mxu0 0.0
      %8368 = vmatprep.subr.mxu0 0.0
      %8369 = vmatpush1.xpose.msra.mxu0 0.0
      %8370 = vmatprep.subr.mxu0 0.0
      %8371 = vmatpush1.xpose.msra.mxu0 0.0
      %8372 = vmatprep.subr.mxu0 0.0
      %8373 = vmatpush1.xpose.msra.mxu0 0.0
      %8374 = vmatprep.subr.mxu0 0.0
      %8375 = vmatpush1.xpose.msra.mxu0 0.0
      %8376 = vmatprep.subr.mxu0 0.0
      %8377 = vmatpush1.xpose.msra.mxu0 0.0
      %8378 = vmatprep.subr.mxu0 0.0
      %8379 = vmatpush1.xpose.msra.mxu0 0.0
      %8380 = vmatprep.subr.mxu0 0.0
      %8381 = vmatpush1.xpose.msra.mxu0 0.0
      %8382 = vmatprep.subr.mxu0 0.0
      %8383 = vmatpush1.xpose.msra.mxu0 0.0
      %8384 = vmatprep.subr.mxu0 0.0
      %8385 = vmatpush1.xpose.msra.mxu0 0.0
      %8386 = vmatprep.subr.mxu0 0.0
      %8387 = vmatpush1.xpose.msra.mxu0 0.0
      %8388 = vmatprep.subr.mxu0 %v7687
      %8389 = vmatpush1.xpose.msra.mxu0 %v7686
      %8390 = vmatprep.subr.mxu0 0.0
      %8391 = vmatpush2.xpose.msra.mxu0 0.0
      %8392 = vmatprep.subr.mxu0 0.0
      %8393 = vmatpush2.xpose.msra.mxu0 0.0
      %8394 = vmatprep.subr.mxu0 0.0
      %8395 = vmatpush2.xpose.msra.mxu0 0.0
      %8396 = vmatprep.subr.mxu0 0.0
      %8397 = vmatpush2.xpose.msra.mxu0 0.0
      %8398 = vmatprep.subr.mxu0 0.0
      %8399 = vmatpush2.xpose.msra.mxu0 0.0
      %8400 = vmatprep.subr.mxu0 0.0
      %8401 = vmatpush2.xpose.msra.mxu0 0.0
      %8402 = vmatprep.subr.mxu0 0.0
      %8403 = vmatpush2.xpose.msra.mxu0 0.0
      %8404 = vmatprep.subr.mxu0 0.0
      %8405 = vmatpush2.xpose.msra.mxu0 0.0
      %8406 = vmatprep.subr.mxu0 0.0
      %8407 = vmatpush2.xpose.msra.mxu0 0.0
      %8408 = vmatprep.subr.mxu0 0.0
      %8409 = vmatpush2.xpose.msra.mxu0 0.0
      %8410 = vmatprep.subr.mxu0 0.0
      %8411 = vmatpush2.xpose.msra.mxu0 0.0
      %8412 = vmatprep.subr.mxu0 0.0
      %8413 = vmatpush2.xpose.msra.mxu0 0.0
      %8414 = vmatprep.subr.mxu0 0.0
      %8415 = vmatpush2.xpose.msra.mxu0 0.0
      %8416 = vmatprep.subr.mxu0 0.0
      %8417 = vmatpush2.xpose.msra.mxu0 0.0
      %8418 = vmatprep.subr.mxu0 0.0
      %8419 = vmatpush2.xpose.msra.mxu0 0.0
      %8420 = vmatprep.subr.mxu0 0.0
      %8421 = vmatpush2.xpose.msra.mxu0 0.0
      %8422 = vmatprep.mubr.f32.mxu0 %v7713
      %8423 = vmatmul.mubr.f32.gmra.mxu0 %v7712
      %v8424 = vpop.f32.mrf.mxu0
      %v8425 = vadd.f32 %v8350, %v8424
      %v8426 = vpop.f32.mrf.mxu0
      %8427 = vmatprep.mubr.f32.mxu0 %v7739
      %8428 = vmatmul.mubr.f32.gmra.mxu0 %v7738
      %v8429 = vpop.f32.mrf.mxu0
      %v8430 = vadd.f32 %v8355, %v8429
      %v8431 = vpop.f32.mrf.mxu0
      %8432 = vdwg.mxu0
      %8433 = vmatprep.subr.mxu0 0.0
      %8434 = vmatpush1.xpose.msra.mxu0 0.0
      %8435 = vmatprep.subr.mxu0 0.0
      %8436 = vmatpush1.xpose.msra.mxu0 0.0
      %8437 = vmatprep.subr.mxu0 0.0
      %8438 = vmatpush1.xpose.msra.mxu0 0.0
      %8439 = vmatprep.subr.mxu0 0.0
      %8440 = vmatpush1.xpose.msra.mxu0 0.0
      %8441 = vmatprep.subr.mxu0 0.0
      %8442 = vmatpush1.xpose.msra.mxu0 0.0
      %8443 = vmatprep.subr.mxu0 0.0
      %8444 = vmatpush1.xpose.msra.mxu0 0.0
      %8445 = vmatprep.subr.mxu0 0.0
      %8446 = vmatpush1.xpose.msra.mxu0 0.0
      %8447 = vmatprep.subr.mxu0 0.0
      %8448 = vmatpush1.xpose.msra.mxu0 0.0
      %8449 = vmatprep.subr.mxu0 0.0
      %8450 = vmatpush1.xpose.msra.mxu0 0.0
      %8451 = vmatprep.subr.mxu0 0.0
      %8452 = vmatpush1.xpose.msra.mxu0 0.0
      %8453 = vmatprep.subr.mxu0 0.0
      %8454 = vmatpush1.xpose.msra.mxu0 0.0
      %8455 = vmatprep.subr.mxu0 0.0
      %8456 = vmatpush1.xpose.msra.mxu0 0.0
      %8457 = vmatprep.subr.mxu0 0.0
      %8458 = vmatpush1.xpose.msra.mxu0 0.0
      %8459 = vmatprep.subr.mxu0 0.0
      %8460 = vmatpush1.xpose.msra.mxu0 0.0
      %8461 = vmatprep.subr.mxu0 0.0
      %8462 = vmatpush1.xpose.msra.mxu0 0.0
      %8463 = vmatprep.subr.mxu0 %v7689
      %8464 = vmatpush1.xpose.msra.mxu0 %v7688
      %8465 = vmatprep.subr.mxu0 0.0
      %8466 = vmatpush2.xpose.msra.mxu0 0.0
      %8467 = vmatprep.subr.mxu0 0.0
      %8468 = vmatpush2.xpose.msra.mxu0 0.0
      %8469 = vmatprep.subr.mxu0 0.0
      %8470 = vmatpush2.xpose.msra.mxu0 0.0
      %8471 = vmatprep.subr.mxu0 0.0
      %8472 = vmatpush2.xpose.msra.mxu0 0.0
      %8473 = vmatprep.subr.mxu0 0.0
      %8474 = vmatpush2.xpose.msra.mxu0 0.0
      %8475 = vmatprep.subr.mxu0 0.0
      %8476 = vmatpush2.xpose.msra.mxu0 0.0
      %8477 = vmatprep.subr.mxu0 0.0
      %8478 = vmatpush2.xpose.msra.mxu0 0.0
      %8479 = vmatprep.subr.mxu0 0.0
      %8480 = vmatpush2.xpose.msra.mxu0 0.0
      %8481 = vmatprep.subr.mxu0 0.0
      %8482 = vmatpush2.xpose.msra.mxu0 0.0
      %8483 = vmatprep.subr.mxu0 0.0
      %8484 = vmatpush2.xpose.msra.mxu0 0.0
      %8485 = vmatprep.subr.mxu0 0.0
      %8486 = vmatpush2.xpose.msra.mxu0 0.0
      %8487 = vmatprep.subr.mxu0 0.0
      %8488 = vmatpush2.xpose.msra.mxu0 0.0
      %8489 = vmatprep.subr.mxu0 0.0
      %8490 = vmatpush2.xpose.msra.mxu0 0.0
      %8491 = vmatprep.subr.mxu0 0.0
      %8492 = vmatpush2.xpose.msra.mxu0 0.0
      %8493 = vmatprep.subr.mxu0 0.0
      %8494 = vmatpush2.xpose.msra.mxu0 0.0
      %8495 = vmatprep.subr.mxu0 0.0
      %8496 = vmatpush2.xpose.msra.mxu0 0.0
      %8497 = vmatprep.mubr.f32.mxu0 %v7715
      %8498 = vmatmul.mubr.f32.gmra.mxu0 %v7714
      %v8499 = vpop.f32.mrf.mxu0
      %v8500 = vadd.f32 %v8425, %v8499
      %v8501 = vpop.f32.mrf.mxu0
      %8502 = vmatprep.mubr.f32.mxu0 %v7741
      %8503 = vmatmul.mubr.f32.gmra.mxu0 %v7740
      %v8504 = vpop.f32.mrf.mxu0
      %v8505 = vadd.f32 %v8430, %v8504
      %v8506 = vpop.f32.mrf.mxu0
      %8507 = vdwg.mxu0
      %8508 = vmatprep.subr.mxu0 0.0
      %8509 = vmatpush1.xpose.msra.mxu0 0.0
      %8510 = vmatprep.subr.mxu0 0.0
      %8511 = vmatpush1.xpose.msra.mxu0 0.0
      %8512 = vmatprep.subr.mxu0 0.0
      %8513 = vmatpush1.xpose.msra.mxu0 0.0
      %8514 = vmatprep.subr.mxu0 0.0
      %8515 = vmatpush1.xpose.msra.mxu0 0.0
      %8516 = vmatprep.subr.mxu0 0.0
      %8517 = vmatpush1.xpose.msra.mxu0 0.0
      %8518 = vmatprep.subr.mxu0 0.0
      %8519 = vmatpush1.xpose.msra.mxu0 0.0
      %8520 = vmatprep.subr.mxu0 0.0
      %8521 = vmatpush1.xpose.msra.mxu0 0.0
      %8522 = vmatprep.subr.mxu0 0.0
      %8523 = vmatpush1.xpose.msra.mxu0 0.0
      %8524 = vmatprep.subr.mxu0 0.0
      %8525 = vmatpush1.xpose.msra.mxu0 0.0
      %8526 = vmatprep.subr.mxu0 0.0
      %8527 = vmatpush1.xpose.msra.mxu0 0.0
      %8528 = vmatprep.subr.mxu0 0.0
      %8529 = vmatpush1.xpose.msra.mxu0 0.0
      %8530 = vmatprep.subr.mxu0 0.0
      %8531 = vmatpush1.xpose.msra.mxu0 0.0
      %8532 = vmatprep.subr.mxu0 0.0
      %8533 = vmatpush1.xpose.msra.mxu0 0.0
      %8534 = vmatprep.subr.mxu0 0.0
      %8535 = vmatpush1.xpose.msra.mxu0 0.0
      %8536 = vmatprep.subr.mxu0 0.0
      %8537 = vmatpush1.xpose.msra.mxu0 0.0
      %8538 = vmatprep.subr.mxu0 %v7691
      %8539 = vmatpush1.xpose.msra.mxu0 %v7690
      %8540 = vmatprep.subr.mxu0 0.0
      %8541 = vmatpush2.xpose.msra.mxu0 0.0
      %8542 = vmatprep.subr.mxu0 0.0
      %8543 = vmatpush2.xpose.msra.mxu0 0.0
      %8544 = vmatprep.subr.mxu0 0.0
      %8545 = vmatpush2.xpose.msra.mxu0 0.0
      %8546 = vmatprep.subr.mxu0 0.0
      %8547 = vmatpush2.xpose.msra.mxu0 0.0
      %8548 = vmatprep.subr.mxu0 0.0
      %8549 = vmatpush2.xpose.msra.mxu0 0.0
      %8550 = vmatprep.subr.mxu0 0.0
      %8551 = vmatpush2.xpose.msra.mxu0 0.0
      %8552 = vmatprep.subr.mxu0 0.0
      %8553 = vmatpush2.xpose.msra.mxu0 0.0
      %8554 = vmatprep.subr.mxu0 0.0
      %8555 = vmatpush2.xpose.msra.mxu0 0.0
      %8556 = vmatprep.subr.mxu0 0.0
      %8557 = vmatpush2.xpose.msra.mxu0 0.0
      %8558 = vmatprep.subr.mxu0 0.0
      %8559 = vmatpush2.xpose.msra.mxu0 0.0
      %8560 = vmatprep.subr.mxu0 0.0
      %8561 = vmatpush2.xpose.msra.mxu0 0.0
      %8562 = vmatprep.subr.mxu0 0.0
      %8563 = vmatpush2.xpose.msra.mxu0 0.0
      %8564 = vmatprep.subr.mxu0 0.0
      %8565 = vmatpush2.xpose.msra.mxu0 0.0
      %8566 = vmatprep.subr.mxu0 0.0
      %8567 = vmatpush2.xpose.msra.mxu0 0.0
      %8568 = vmatprep.subr.mxu0 0.0
      %8569 = vmatpush2.xpose.msra.mxu0 0.0
      %8570 = vmatprep.subr.mxu0 0.0
      %8571 = vmatpush2.xpose.msra.mxu0 0.0
      %8572 = vmatprep.mubr.f32.mxu0 %v7717
      %8573 = vmatmul.mubr.f32.gmra.mxu0 %v7716
      %v8574 = vpop.f32.mrf.mxu0
      %v8575 = vadd.f32 %v8500, %v8574
      %v8576 = vpop.f32.mrf.mxu0
      %8577 = vmatprep.mubr.f32.mxu0 %v7743
      %8578 = vmatmul.mubr.f32.gmra.mxu0 %v7742
      %v8579 = vpop.f32.mrf.mxu0
      %v8580 = vadd.f32 %v8505, %v8579
      %v8581 = vpop.f32.mrf.mxu0
      %8582 = vdwg.mxu0
      %8583 = vmatprep.subr.mxu0 0.0
      %8584 = vmatpush1.xpose.msra.mxu0 0.0
      %8585 = vmatprep.subr.mxu0 0.0
      %8586 = vmatpush1.xpose.msra.mxu0 0.0
      %8587 = vmatprep.subr.mxu0 0.0
      %8588 = vmatpush1.xpose.msra.mxu0 0.0
      %8589 = vmatprep.subr.mxu0 0.0
      %8590 = vmatpush1.xpose.msra.mxu0 0.0
      %8591 = vmatprep.subr.mxu0 0.0
      %8592 = vmatpush1.xpose.msra.mxu0 0.0
      %8593 = vmatprep.subr.mxu0 0.0
      %8594 = vmatpush1.xpose.msra.mxu0 0.0
      %8595 = vmatprep.subr.mxu0 0.0
      %8596 = vmatpush1.xpose.msra.mxu0 0.0
      %8597 = vmatprep.subr.mxu0 0.0
      %8598 = vmatpush1.xpose.msra.mxu0 0.0
      %8599 = vmatprep.subr.mxu0 0.0
      %8600 = vmatpush1.xpose.msra.mxu0 0.0
      %8601 = vmatprep.subr.mxu0 0.0
      %8602 = vmatpush1.xpose.msra.mxu0 0.0
      %8603 = vmatprep.subr.mxu0 0.0
      %8604 = vmatpush1.xpose.msra.mxu0 0.0
      %8605 = vmatprep.subr.mxu0 0.0
      %8606 = vmatpush1.xpose.msra.mxu0 0.0
      %8607 = vmatprep.subr.mxu0 0.0
      %8608 = vmatpush1.xpose.msra.mxu0 0.0
      %8609 = vmatprep.subr.mxu0 0.0
      %8610 = vmatpush1.xpose.msra.mxu0 0.0
      %8611 = vmatprep.subr.mxu0 0.0
      %8612 = vmatpush1.xpose.msra.mxu0 0.0
      %8613 = vmatprep.subr.mxu0 %v7693
      %8614 = vmatpush1.xpose.msra.mxu0 %v7692
      %8615 = vmatprep.subr.mxu0 0.0
      %8616 = vmatpush2.xpose.msra.mxu0 0.0
      %8617 = vmatprep.subr.mxu0 0.0
      %8618 = vmatpush2.xpose.msra.mxu0 0.0
      %8619 = vmatprep.subr.mxu0 0.0
      %8620 = vmatpush2.xpose.msra.mxu0 0.0
      %8621 = vmatprep.subr.mxu0 0.0
      %8622 = vmatpush2.xpose.msra.mxu0 0.0
      %8623 = vmatprep.subr.mxu0 0.0
      %8624 = vmatpush2.xpose.msra.mxu0 0.0
      %8625 = vmatprep.subr.mxu0 0.0
      %8626 = vmatpush2.xpose.msra.mxu0 0.0
      %8627 = vmatprep.subr.mxu0 0.0
      %8628 = vmatpush2.xpose.msra.mxu0 0.0
      %8629 = vmatprep.subr.mxu0 0.0
      %8630 = vmatpush2.xpose.msra.mxu0 0.0
      %8631 = vmatprep.subr.mxu0 0.0
      %8632 = vmatpush2.xpose.msra.mxu0 0.0
      %8633 = vmatprep.subr.mxu0 0.0
      %8634 = vmatpush2.xpose.msra.mxu0 0.0
      %8635 = vmatprep.subr.mxu0 0.0
      %8636 = vmatpush2.xpose.msra.mxu0 0.0
      %8637 = vmatprep.subr.mxu0 0.0
      %8638 = vmatpush2.xpose.msra.mxu0 0.0
      %8639 = vmatprep.subr.mxu0 0.0
      %8640 = vmatpush2.xpose.msra.mxu0 0.0
      %8641 = vmatprep.subr.mxu0 0.0
      %8642 = vmatpush2.xpose.msra.mxu0 0.0
      %8643 = vmatprep.subr.mxu0 0.0
      %8644 = vmatpush2.xpose.msra.mxu0 0.0
      %8645 = vmatprep.subr.mxu0 0.0
      %8646 = vmatpush2.xpose.msra.mxu0 0.0
      %8647 = vmatprep.mubr.f32.mxu0 %v7719
      %8648 = vmatmul.mubr.f32.gmra.mxu0 %v7718
      %v8649 = vpop.f32.mrf.mxu0
      %v8650 = vadd.f32 %v8575, %v8649
      %v8651 = vpop.f32.mrf.mxu0
      %8652 = vmatprep.mubr.f32.mxu0 %v7745
      %8653 = vmatmul.mubr.f32.gmra.mxu0 %v7744
      %v8654 = vpop.f32.mrf.mxu0
      %v8655 = vadd.f32 %v8580, %v8654
      %v8656 = vpop.f32.mrf.mxu0
      %8657 = vdwg.mxu0
      %8658 = vmatprep.subr.mxu0 0.0
      %8659 = vmatpush1.xpose.msra.mxu0 0.0
      %8660 = vmatprep.subr.mxu0 0.0
      %8661 = vmatpush1.xpose.msra.mxu0 0.0
      %8662 = vmatprep.subr.mxu0 0.0
      %8663 = vmatpush1.xpose.msra.mxu0 0.0
      %8664 = vmatprep.subr.mxu0 0.0
      %8665 = vmatpush1.xpose.msra.mxu0 0.0
      %8666 = vmatprep.subr.mxu0 0.0
      %8667 = vmatpush1.xpose.msra.mxu0 0.0
      %8668 = vmatprep.subr.mxu0 0.0
      %8669 = vmatpush1.xpose.msra.mxu0 0.0
      %8670 = vmatprep.subr.mxu0 0.0
      %8671 = vmatpush1.xpose.msra.mxu0 0.0
      %8672 = vmatprep.subr.mxu0 0.0
      %8673 = vmatpush1.xpose.msra.mxu0 0.0
      %8674 = vmatprep.subr.mxu0 0.0
      %8675 = vmatpush1.xpose.msra.mxu0 0.0
      %8676 = vmatprep.subr.mxu0 0.0
      %8677 = vmatpush1.xpose.msra.mxu0 0.0
      %8678 = vmatprep.subr.mxu0 0.0
      %8679 = vmatpush1.xpose.msra.mxu0 0.0
      %8680 = vmatprep.subr.mxu0 0.0
      %8681 = vmatpush1.xpose.msra.mxu0 0.0
      %8682 = vmatprep.subr.mxu0 0.0
      %8683 = vmatpush1.xpose.msra.mxu0 0.0
      %8684 = vmatprep.subr.mxu0 0.0
      %8685 = vmatpush1.xpose.msra.mxu0 0.0
      %8686 = vmatprep.subr.mxu0 0.0
      %8687 = vmatpush1.xpose.msra.mxu0 0.0
      %8688 = vmatprep.subr.mxu0 %v7756
      %8689 = vmatpush1.xpose.msra.mxu0 %v7694
      %8690 = vmatprep.subr.mxu0 0.0
      %8691 = vmatpush2.xpose.msra.mxu0 0.0
      %8692 = vmatprep.subr.mxu0 0.0
      %8693 = vmatpush2.xpose.msra.mxu0 0.0
      %8694 = vmatprep.subr.mxu0 0.0
      %8695 = vmatpush2.xpose.msra.mxu0 0.0
      %8696 = vmatprep.subr.mxu0 0.0
      %8697 = vmatpush2.xpose.msra.mxu0 0.0
      %8698 = vmatprep.subr.mxu0 0.0
      %8699 = vmatpush2.xpose.msra.mxu0 0.0
      %8700 = vmatprep.subr.mxu0 0.0
      %8701 = vmatpush2.xpose.msra.mxu0 0.0
      %8702 = vmatprep.subr.mxu0 0.0
      %8703 = vmatpush2.xpose.msra.mxu0 0.0
      %8704 = vmatprep.subr.mxu0 0.0
      %8705 = vmatpush2.xpose.msra.mxu0 0.0
      %8706 = vmatprep.subr.mxu0 0.0
      %8707 = vmatpush2.xpose.msra.mxu0 0.0
      %8708 = vmatprep.subr.mxu0 0.0
      %8709 = vmatpush2.xpose.msra.mxu0 0.0
      %8710 = vmatprep.subr.mxu0 0.0
      %8711 = vmatpush2.xpose.msra.mxu0 0.0
      %8712 = vmatprep.subr.mxu0 0.0
      %8713 = vmatpush2.xpose.msra.mxu0 0.0
      %8714 = vmatprep.subr.mxu0 0.0
      %8715 = vmatpush2.xpose.msra.mxu0 0.0
      %8716 = vmatprep.subr.mxu0 0.0
      %8717 = vmatpush2.xpose.msra.mxu0 0.0
      %8718 = vmatprep.subr.mxu0 0.0
      %8719 = vmatpush2.xpose.msra.mxu0 0.0
      %8720 = vmatprep.subr.mxu0 0.0
      %8721 = vmatpush2.xpose.msra.mxu0 0.0
      %8722 = vmatprep.mubr.f32.mxu0 %v7750
      %8723 = vmatmul.mubr.f32.gmra.mxu0 %v7720
      %v8724 = vpop.f32.mrf.mxu0
      %v8725 = vadd.f32 %v8650, %v8724
      %v8726 = vpop.f32.mrf.mxu0
      %8727 = vmatprep.mubr.f32.mxu0 %v7753
      %8728 = vmatmul.mubr.f32.gmra.mxu0 %v7746
      %v8729 = vpop.f32.mrf.mxu0
      %v8730 = vadd.f32 %v8655, %v8729
      %v8731 = vpop.f32.mrf.mxu0
      %8732 = vdwg.mxu0
      %v8733 = vld [vmem:[%s3] sm:$0xff]
      %v8734 = vld [vmem:[%s4] sm:$0x1]
      %v8736 = vlaneseq
      %v8737 = vshrl.u32 %v8736, 7
      %v8738 = vsub.s32 0, %v8737
      %v8739 = vrot.slane %v8734, %v8738
      %vm8741 = vcmask 64512
      %v8743 = vsel %vm8741, %v8725, 0
      %v8746 = vsel %vm8741, %v8730, 0
      %8748 = vmatprep.subr.mxu0 0.0
      %8749 = vmatpush1.msra.mxu0 0.0
      %8750 = vmatprep.subr.mxu0 0.0
      %8751 = vmatpush1.msra.mxu0 0.0
      %8752 = vmatprep.subr.mxu0 0.0
      %8753 = vmatpush1.msra.mxu0 0.0
      %8754 = vmatprep.subr.mxu0 0.0
      %8755 = vmatpush1.msra.mxu0 0.0
      %8756 = vmatprep.subr.mxu0 0.0
      %8757 = vmatpush1.msra.mxu0 0.0
      %8758 = vmatprep.subr.mxu0 0.0
      %8759 = vmatpush1.msra.mxu0 0.0
      %8760 = vmatprep.subr.mxu0 0.0
      %8761 = vmatpush1.msra.mxu0 0.0
      %8762 = vmatprep.subr.mxu0 0.0
      %8763 = vmatpush1.msra.mxu0 0.0
      %8764 = vmatprep.subr.mxu0 0.0
      %8765 = vmatpush1.msra.mxu0 0.0
      %8766 = vmatprep.subr.mxu0 0.0
      %8767 = vmatpush1.msra.mxu0 0.0
      %8768 = vmatprep.subr.mxu0 0.0
      %8769 = vmatpush1.msra.mxu0 0.0
      %8770 = vmatprep.subr.mxu0 0.0
      %8771 = vmatpush1.msra.mxu0 0.0
      %8772 = vmatprep.subr.mxu0 0.0
      %8773 = vmatpush1.msra.mxu0 0.0
      %8774 = vmatprep.subr.mxu0 0.0
      %8775 = vmatpush1.msra.mxu0 0.0
      %8776 = vmatprep.subr.mxu0 0.0
      %8777 = vmatpush1.msra.mxu0 0.0
      %8778 = vmatprep.subr.mxu0 0.0
      %8779 = vmatpush1.msra.mxu0 %v8733
      %8780 = vmatprep.subr.mxu0 0.0
      %8781 = vmatpush2.msra.mxu0 0.0
      %8782 = vmatprep.subr.mxu0 0.0
      %8783 = vmatpush2.msra.mxu0 0.0
      %8784 = vmatprep.subr.mxu0 0.0
      %8785 = vmatpush2.msra.mxu0 0.0
      %8786 = vmatprep.subr.mxu0 0.0
      %8787 = vmatpush2.msra.mxu0 0.0
      %8788 = vmatprep.subr.mxu0 0.0
      %8789 = vmatpush2.msra.mxu0 0.0
      %8790 = vmatprep.subr.mxu0 0.0
      %8791 = vmatpush2.msra.mxu0 0.0
      %8792 = vmatprep.subr.mxu0 0.0
      %8793 = vmatpush2.msra.mxu0 0.0
      %8794 = vmatprep.subr.mxu0 0.0
      %8795 = vmatpush2.msra.mxu0 0.0
      %8796 = vmatprep.subr.mxu0 0.0
      %8797 = vmatpush2.msra.mxu0 0.0
      %8798 = vmatprep.subr.mxu0 0.0
      %8799 = vmatpush2.msra.mxu0 0.0
      %8800 = vmatprep.subr.mxu0 0.0
      %8801 = vmatpush2.msra.mxu0 0.0
      %8802 = vmatprep.subr.mxu0 0.0
      %8803 = vmatpush2.msra.mxu0 0.0
      %8804 = vmatprep.subr.mxu0 0.0
      %8805 = vmatpush2.msra.mxu0 0.0
      %8806 = vmatprep.subr.mxu0 0.0
      %8807 = vmatpush2.msra.mxu0 0.0
      %8808 = vmatprep.subr.mxu0 0.0
      %8809 = vmatpush2.msra.mxu0 0.0
      %8810 = vmatprep.subr.mxu0 0.0
      %8811 = vmatpush2.msra.mxu0 0.0
      %8812 = vmatprep.mubr.f32.mxu0 0.0
      %8813 = vmatmul.mubr.f32.gmra.mxu0 %v8743
      %v8814 = vpop.f32.mrf.mxu0
      %v8815 = vadd.f32 %v8739, %v8814
      %v8816 = vpop.f32.mrf.mxu0
      %8817 = vmatprep.mubr.f32.mxu0 0.0
      %8818 = vmatmul.mubr.f32.gmra.mxu0 %v8746
      %v8819 = vpop.f32.mrf.mxu0
      %v8820 = vadd.f32 %v8739, %v8819
      %v8821 = vpop.f32.mrf.mxu0
      %8822 = vdwg.mxu0
      %v8823 = vld [vmem:[%s289] sm:$0x3]
      %vm8824 = vcmask 48128
      %v8826 = vsel %vm8824, %v8823, 0
      %vm8828 = vcmask 1045504
      %v8830 = vsel %vm8828, %v8815, 0
      %8832 = vmatprep.subr.mxu0 0.0
      %8833 = vmatpush1.msra.mxu0 0.0
      %8834 = vmatprep.subr.mxu0 0.0
      %8835 = vmatpush1.msra.mxu0 0.0
      %8836 = vmatprep.subr.mxu0 0.0
      %8837 = vmatpush1.msra.mxu0 0.0
      %8838 = vmatprep.subr.mxu0 0.0
      %8839 = vmatpush1.msra.mxu0 0.0
      %8840 = vmatprep.subr.mxu0 0.0
      %8841 = vmatpush1.msra.mxu0 0.0
      %8842 = vmatprep.subr.mxu0 0.0
      %8843 = vmatpush1.msra.mxu0 0.0
      %8844 = vmatprep.subr.mxu0 0.0
      %8845 = vmatpush1.msra.mxu0 0.0
      %8846 = vmatprep.subr.mxu0 0.0
      %8847 = vmatpush1.msra.mxu0 0.0
      %8848 = vmatprep.subr.mxu0 0.0
      %8849 = vmatpush1.msra.mxu0 0.0
      %8850 = vmatprep.subr.mxu0 0.0
      %8851 = vmatpush1.msra.mxu0 0.0
      %8852 = vmatprep.subr.mxu0 0.0
      %8853 = vmatpush1.msra.mxu0 0.0
      %8854 = vmatprep.subr.mxu0 0.0
      %8855 = vmatpush1.msra.mxu0 0.0
      %8856 = vmatprep.subr.mxu0 0.0
      %8857 = vmatpush1.msra.mxu0 0.0
      %8858 = vmatprep.subr.mxu0 0.0
      %8859 = vmatpush1.msra.mxu0 0.0
      %8860 = vmatprep.subr.mxu0 0.0
      %8861 = vmatpush1.msra.mxu0 0.0
      %8862 = vmatprep.subr.mxu0 0.0
      %8863 = vmatpush1.msra.mxu0 %v8830
      %8864 = vmatprep.subr.mxu0 0.0
      %8865 = vmatpush2.msra.mxu0 0.0
      %8866 = vmatprep.subr.mxu0 0.0
      %8867 = vmatpush2.msra.mxu0 0.0
      %8868 = vmatprep.subr.mxu0 0.0
      %8869 = vmatpush2.msra.mxu0 0.0
      %8870 = vmatprep.subr.mxu0 0.0
      %8871 = vmatpush2.msra.mxu0 0.0
      %8872 = vmatprep.subr.mxu0 0.0
      %8873 = vmatpush2.msra.mxu0 0.0
      %8874 = vmatprep.subr.mxu0 0.0
      %8875 = vmatpush2.msra.mxu0 0.0
      %8876 = vmatprep.subr.mxu0 0.0
      %8877 = vmatpush2.msra.mxu0 0.0
      %8878 = vmatprep.subr.mxu0 0.0
      %8879 = vmatpush2.msra.mxu0 0.0
      %8880 = vmatprep.subr.mxu0 0.0
      %8881 = vmatpush2.msra.mxu0 0.0
      %8882 = vmatprep.subr.mxu0 0.0
      %8883 = vmatpush2.msra.mxu0 0.0
      %8884 = vmatprep.subr.mxu0 0.0
      %8885 = vmatpush2.msra.mxu0 0.0
      %8886 = vmatprep.subr.mxu0 0.0
      %8887 = vmatpush2.msra.mxu0 0.0
      %8888 = vmatprep.subr.mxu0 0.0
      %8889 = vmatpush2.msra.mxu0 0.0
      %8890 = vmatprep.subr.mxu0 0.0
      %8891 = vmatpush2.msra.mxu0 0.0
      %8892 = vmatprep.subr.mxu0 0.0
      %8893 = vmatpush2.msra.mxu0 0.0
      %8894 = vmatprep.subr.mxu0 0.0
      %8895 = vmatpush2.msra.mxu0 0.0
      %8896 = vmatprep.mubr.f32.mxu0 0.0
      %8897 = vmatmul.mubr.f32.gmra.mxu0 %v8826
      %v8898 = vpop.f32.mrf.mxu0
      %v8899 = vadd.f32 0.0, %v8898
      %v8900 = vpop.f32.mrf.mxu0
      %8901 = vdwg.mxu0
      %v8902 = vmul.f32 %v8815, %v8815
      %v8903 = vmul.f32 %v8820, %v8820
      %vm8904 = vcmask 261126
      %v8905 = vsel %vm8904, %v8902, 0.0
      %8906 = vadd.xlane.f32.xlu0 %v8905
      %v8907 = vpop.xlane.xlu0 %8906
      %vm8908 = vcmask 254976
      %v8909 = vsel %vm8908, %v8903, 0.0
      %8910 = vadd.xlane.f32.xlu0 %v8909
      %v8911 = vpop.xlane.xlu0 %8910
      %v8912 = vmul.f32 %v8899, %v8899
      %vm8913 = vcmask 261120
      %v8915 = vsel %vm8913, 1.0, 0
      %v8918 = vsel %vm8913, %v8912, 0
      %8920 = vmatprep.subr.mxu0 0.0
      %8921 = vmatpush1.xpose.msra.mxu0 0.0
      %8922 = vmatprep.subr.mxu0 0.0
      %8923 = vmatpush1.xpose.msra.mxu0 0.0
      %8924 = vmatprep.subr.mxu0 0.0
      %8925 = vmatpush1.xpose.msra.mxu0 0.0
      %8926 = vmatprep.subr.mxu0 0.0
      %8927 = vmatpush1.xpose.msra.mxu0 0.0
      %8928 = vmatprep.subr.mxu0 0.0
      %8929 = vmatpush1.xpose.msra.mxu0 0.0
      %8930 = vmatprep.subr.mxu0 0.0
      %8931 = vmatpush1.xpose.msra.mxu0 0.0
      %8932 = vmatprep.subr.mxu0 0.0
      %8933 = vmatpush1.xpose.msra.mxu0 0.0
      %8934 = vmatprep.subr.mxu0 0.0
      %8935 = vmatpush1.xpose.msra.mxu0 0.0
      %8936 = vmatprep.subr.mxu0 0.0
      %8937 = vmatpush1.xpose.msra.mxu0 0.0
      %8938 = vmatprep.subr.mxu0 0.0
      %8939 = vmatpush1.xpose.msra.mxu0 0.0
      %8940 = vmatprep.subr.mxu0 0.0
      %8941 = vmatpush1.xpose.msra.mxu0 0.0
      %8942 = vmatprep.subr.mxu0 0.0
      %8943 = vmatpush1.xpose.msra.mxu0 0.0
      %8944 = vmatprep.subr.mxu0 0.0
      %8945 = vmatpush1.xpose.msra.mxu0 0.0
      %8946 = vmatprep.subr.mxu0 0.0
      %8947 = vmatpush1.xpose.msra.mxu0 0.0
      %8948 = vmatprep.subr.mxu0 0.0
      %8949 = vmatpush1.xpose.msra.mxu0 0.0
      %8950 = vmatprep.subr.mxu0 0.0
      %8951 = vmatpush1.xpose.msra.mxu0 %v8918
      %8952 = vmatprep.subr.mxu0 0.0
      %8953 = vmatpush2.xpose.msra.mxu0 0.0
      %8954 = vmatprep.subr.mxu0 0.0
      %8955 = vmatpush2.xpose.msra.mxu0 0.0
      %8956 = vmatprep.subr.mxu0 0.0
      %8957 = vmatpush2.xpose.msra.mxu0 0.0
      %8958 = vmatprep.subr.mxu0 0.0
      %8959 = vmatpush2.xpose.msra.mxu0 0.0
      %8960 = vmatprep.subr.mxu0 0.0
      %8961 = vmatpush2.xpose.msra.mxu0 0.0
      %8962 = vmatprep.subr.mxu0 0.0
      %8963 = vmatpush2.xpose.msra.mxu0 0.0
      %8964 = vmatprep.subr.mxu0 0.0
      %8965 = vmatpush2.xpose.msra.mxu0 0.0
      %8966 = vmatprep.subr.mxu0 0.0
      %8967 = vmatpush2.xpose.msra.mxu0 0.0
      %8968 = vmatprep.subr.mxu0 0.0
      %8969 = vmatpush2.xpose.msra.mxu0 0.0
      %8970 = vmatprep.subr.mxu0 0.0
      %8971 = vmatpush2.xpose.msra.mxu0 0.0
      %8972 = vmatprep.subr.mxu0 0.0
      %8973 = vmatpush2.xpose.msra.mxu0 0.0
      %8974 = vmatprep.subr.mxu0 0.0
      %8975 = vmatpush2.xpose.msra.mxu0 0.0
      %8976 = vmatprep.subr.mxu0 0.0
      %8977 = vmatpush2.xpose.msra.mxu0 0.0
      %8978 = vmatprep.subr.mxu0 0.0
      %8979 = vmatpush2.xpose.msra.mxu0 0.0
      %8980 = vmatprep.subr.mxu0 0.0
      %8981 = vmatpush2.xpose.msra.mxu0 0.0
      %8982 = vmatprep.subr.mxu0 0.0
      %8983 = vmatpush2.xpose.msra.mxu0 0.0
      %8984 = vmatprep.mubr.f32.mxu0 0.0
      %8985 = vmatmul.mubr.f32.gmra.mxu0 %v8915
      %v8986 = vpop.f32.mrf.mxu0
      %v8987 = vadd.f32 0.0, %v8986
      %v8988 = vpop.f32.mrf.mxu0
      %8989 = vdwg.mxu0
      %v8991 = vrot.slane %v8815, 6
      %v8992 = vrot.slane %v8820, 6
      %v8993 = vsel %vm504, %v8991, %v8992
      %v8994 = vsel %vm8913, %v8993, 0
      %v8997 = vsel %vm8913, %v8899, 0
      %8999 = vmatprep.subr.mxu0 0.0
      %9000 = vmatpush1.xpose.msra.mxu0 0.0
      %9001 = vmatprep.subr.mxu0 0.0
      %9002 = vmatpush1.xpose.msra.mxu0 0.0
      %9003 = vmatprep.subr.mxu0 0.0
      %9004 = vmatpush1.xpose.msra.mxu0 0.0
      %9005 = vmatprep.subr.mxu0 0.0
      %9006 = vmatpush1.xpose.msra.mxu0 0.0
      %9007 = vmatprep.subr.mxu0 0.0
      %9008 = vmatpush1.xpose.msra.mxu0 0.0
      %9009 = vmatprep.subr.mxu0 0.0
      %9010 = vmatpush1.xpose.msra.mxu0 0.0
      %9011 = vmatprep.subr.mxu0 0.0
      %9012 = vmatpush1.xpose.msra.mxu0 0.0
      %9013 = vmatprep.subr.mxu0 0.0
      %9014 = vmatpush1.xpose.msra.mxu0 0.0
      %9015 = vmatprep.subr.mxu0 0.0
      %9016 = vmatpush1.xpose.msra.mxu0 0.0
      %9017 = vmatprep.subr.mxu0 0.0
      %9018 = vmatpush1.xpose.msra.mxu0 0.0
      %9019 = vmatprep.subr.mxu0 0.0
      %9020 = vmatpush1.xpose.msra.mxu0 0.0
      %9021 = vmatprep.subr.mxu0 0.0
      %9022 = vmatpush1.xpose.msra.mxu0 0.0
      %9023 = vmatprep.subr.mxu0 0.0
      %9024 = vmatpush1.xpose.msra.mxu0 0.0
      %9025 = vmatprep.subr.mxu0 0.0
      %9026 = vmatpush1.xpose.msra.mxu0 0.0
      %9027 = vmatprep.subr.mxu0 0.0
      %9028 = vmatpush1.xpose.msra.mxu0 0.0
      %9029 = vmatprep.subr.mxu0 0.0
      %9030 = vmatpush1.xpose.msra.mxu0 %v8997
      %9031 = vmatprep.subr.mxu0 0.0
      %9032 = vmatpush2.xpose.msra.mxu0 0.0
      %9033 = vmatprep.subr.mxu0 0.0
      %9034 = vmatpush2.xpose.msra.mxu0 0.0
      %9035 = vmatprep.subr.mxu0 0.0
      %9036 = vmatpush2.xpose.msra.mxu0 0.0
      %9037 = vmatprep.subr.mxu0 0.0
      %9038 = vmatpush2.xpose.msra.mxu0 0.0
      %9039 = vmatprep.subr.mxu0 0.0
      %9040 = vmatpush2.xpose.msra.mxu0 0.0
      %9041 = vmatprep.subr.mxu0 0.0
      %9042 = vmatpush2.xpose.msra.mxu0 0.0
      %9043 = vmatprep.subr.mxu0 0.0
      %9044 = vmatpush2.xpose.msra.mxu0 0.0
      %9045 = vmatprep.subr.mxu0 0.0
      %9046 = vmatpush2.xpose.msra.mxu0 0.0
      %9047 = vmatprep.subr.mxu0 0.0
      %9048 = vmatpush2.xpose.msra.mxu0 0.0
      %9049 = vmatprep.subr.mxu0 0.0
      %9050 = vmatpush2.xpose.msra.mxu0 0.0
      %9051 = vmatprep.subr.mxu0 0.0
      %9052 = vmatpush2.xpose.msra.mxu0 0.0
      %9053 = vmatprep.subr.mxu0 0.0
      %9054 = vmatpush2.xpose.msra.mxu0 0.0
      %9055 = vmatprep.subr.mxu0 0.0
      %9056 = vmatpush2.xpose.msra.mxu0 0.0
      %9057 = vmatprep.subr.mxu0 0.0
      %9058 = vmatpush2.xpose.msra.mxu0 0.0
      %9059 = vmatprep.subr.mxu0 0.0
      %9060 = vmatpush2.xpose.msra.mxu0 0.0
      %9061 = vmatprep.subr.mxu0 0.0
      %9062 = vmatpush2.xpose.msra.mxu0 0.0
      %9063 = vmatprep.mubr.f32.mxu0 0.0
      %9064 = vmatmul.mubr.f32.gmra.mxu0 %v8994
      %v9065 = vpop.f32.mrf.mxu0
      %v9066 = vadd.f32 0.0, %v9065
      %v9067 = vpop.f32.mrf.mxu0
      %9068 = vdwg.mxu0
      %v9069 = vlaneseq
      %v9070 = vshrl.u32 %v9069, 7
      %v9071 = vsub.s32 0, %v9070
      %v9072 = vrot.slane %v8987, %v9071
      %v9073 = vadd.f32 %v8907, %v9072
      %v9074 = vadd.f32 %v8911, %v9072
      %v9075 = vmul.f32 %v9066, 2.0
      %v9077 = vrot.slane %v9075, 2
      %v9079 = vsub.f32 %v9073, %v9077
      %v9080 = vsub.f32 %v9074, %v9077
      %v9081 = vmax.f32 %v9079, 0.0
      %v9082 = vmax.f32 %v9080, 0.0
      %v9083 = vrsqrt.pop %v9081
      %v9084 = vmul.f32 %v9081, %v9083
      %vm9085 = vcmp.eq.f32.partialorder %v9081, inf
      %v9086 = vsel %vm9085, %v9081, %v9084
      %vm9087 = vcmp.eq.f32.partialorder %v9081, 0.0
      %v9088 = vand.u32 %v9081, 2147483648
      %v9089 = vsel %vm9087, %v9088, %v9086
      %v9090 = vrsqrt.pop %v9082
      %v9091 = vmul.f32 %v9082, %v9090
      %vm9092 = vcmp.eq.f32.partialorder %v9082, inf
      %v9093 = vsel %vm9092, %v9082, %v9091
      %vm9094 = vcmp.eq.f32.partialorder %v9082, 0.0
      %v9095 = vand.u32 %v9082, 2147483648
      %v9096 = vsel %vm9094, %v9095, %v9093
      %v9097 = vsub.f32 0.0, %v9089
      %v9098 = vsub.f32 0.0, %v9096
      %vm9099 = vcmask 15366
      %9100 = vst.msk [vmem:[%s293 - $0x6] sm:$0xc0] %vm9099, %v9097
      %vm9101 = vcmask 9216
      %9102 = vst.msk [vmem:[%s293 + $0x2] sm:$0x3] %vm9101, %v9098
      %p9103 = scmp.lt.s32.totalorder %s18, 1
      %s9104 = scalar_select %p9103, %s18, 1
      %s9105 = smul.addr %s9104, 4
      %s9106 = scalar_lea.vmem %s7, %s9105
      // Predicated region
      $region49: #{prototypical_forward_batched.1} parent=47 // pred_check
        %p9107 = pneg %p193
      $region50: #{prototypical_forward_batched.1} parent=47 // pred_check_branch
        %9109 = sbr.rel (%p9107) target = $region52
      $region51: #{prototypical_forward_batched.1} parent=47 // pred_region
        _
      $region52: #{prototypical_forward_batched.1} parent=47 // pred_fallthru
        _
    $region48: #{prototypical_forward_batched.1} parent=5 // pred_fallthru
      _
    %p9110 = scmp.le.s32.totalorder 2, %s13
    // Predicated region
    $region53: #{prototypical_forward_batched.1} parent=5 // pred_check
      %p9111 = pneg %p9110
    $region54: #{prototypical_forward_batched.1} parent=5 // pred_check_branch
      %9113 = sbr.rel (%p9111) target = $region56
    $region55: #{prototypical_forward_batched.1} parent=5 // pred_region
      %s9114 = ssub.s32 %s13, 2
      // Predicated region
      $region57: #{prototypical_forward_batched.1} parent=55 // pred_check
        %p9115 = pneg %p199
      $region58: #{prototypical_forward_batched.1} parent=55 // pred_check_branch
        %9117 = sbr.rel (%p9115) target = $region60
      $region59: #{prototypical_forward_batched.1} parent=55 // pred_region
        %p9118 = scmp.lt.s32.totalorder %s19, 1
        %s9119 = scalar_select %p9118, %s19, 1
        %s9120 = smul.addr %s9119, 4
        %s9121 = scalar_lea.vmem %s7, %s9120
      $region60: #{prototypical_forward_batched.1} parent=55 // pred_fallthru
        _
    $region56: #{prototypical_forward_batched.1} parent=5 // pred_fallthru
      _
  $region6: #{prototypical_forward_batched.1} parent=0 // loop_footer
    %s17 = sadd.s32 1, %s13
  $region7: #{prototypical_forward_batched.1} parent=0 // loop_footer_branch
    %12 = sbr.rel target = $region3
  $region8: #{prototypical_forward_batched.1} parent=0 // loop_exit
    _

</llo_original>
